<compile_context>
chip_gen: v6e
topology: v6e:2x2x1
jax: 0.10.0
libtpu: 0.0.40
codegen_flags: <defaults>
</compile_context>

<pallas_src>
import functools
import math

import jax
import jax.numpy as jnp
from jax import lax
from jax.experimental import pallas as pl
from jax.experimental.pallas import tpu as pltpu

BN_EPS = 1e-5     # torch.nn.BatchNorm1d default eps
L2_EPS = 1e-12    # torch.nn.functional.normalize default eps
LANE = 128


def _round_up(v, m):
    return ((v + m - 1) // m) * m


def _bn_rows(v, gamma, beta, n_rows):
    """Single-pass training-mode BatchNorm over axis 0 (rows), biased variance, f32."""
    inv_n = 1.0 / n_rows
    s1 = jnp.sum(v, axis=0, keepdims=True)
    s2 = jnp.sum(v * v, axis=0, keepdims=True)
    mean = s1 * inv_n
    var = jnp.maximum(s2 * inv_n - mean * mean, 0.0)
    scale = gamma * lax.rsqrt(var + BN_EPS)
    return v * scale + (beta - mean * scale)


def netvlad_kernel(x_ref, cw_ref, cw2t_ref, h1_ref, gw_ref, bnk_ref, bno_ref,
                   out_ref, flat_ref, *, k_real):
    x = x_ref[...]                                   # (B, N, D) bf16
    B, N, D = x.shape
    Kp = cw_ref.shape[1]

    # ---- soft assignment: one flat (B*N, D) @ (D, Kp) MXU matmul (bf16 in, f32 acc)
    x2 = x.reshape(B * N, D)
    act = jnp.dot(x2, cw_ref[...], preferred_element_type=jnp.float32)   # (B*N, Kp)

    # ---- BatchNorm1d over the (B*N, Kp) rows, training-mode batch stats, fused
    bnk = bnk_ref[...]
    act = _bn_rows(act, bnk[0:1, :], bnk[1:2, :], float(B * N))

    # ---- softmax over the real clusters (padded columns masked out); EUP reciprocal
    if k_real < Kp:
        col = lax.broadcasted_iota(jnp.int32, act.shape, 1)
        act = jnp.where(col < k_real, act, -1e30)
    act = act - jnp.max(act, axis=-1, keepdims=True)
    p = jnp.exp(act)
    p = p * pl.reciprocal(jnp.sum(p, axis=-1, keepdims=True), approx=True)

    p3 = p.reshape(B, N, Kp).astype(jnp.bfloat16)    # (B, N, Kp) bf16 (MXU operand)

    # ---- vlad[b,k,d] = sum_n p[b,n,k] * x[b,n,d]  — MXU contracts N directly,
    #      no (B,N,K)->(B,K,N) XLU transpose.
    dn = (((1,), (1,)), ((0,), (0,)))                # contract N, batch B
    vlad = lax.dot_general(p3, x, dimension_numbers=dn,
                           preferred_element_type=jnp.float32)           # (B, Kp, D)
    # per-cluster soft counts via the same contraction against a ones column
    ones_n = jnp.ones((B, N, 1), jnp.bfloat16)
    a_sum = lax.dot_general(p3, ones_n, dimension_numbers=dn,
                            preferred_element_type=jnp.float32)          # (B, Kp, 1)
    vlad = vlad - a_sum * cw2t_ref[...]                                  # (B, Kp, D)

    # ---- fused intra-cluster (over D) + global L2 normalization: one scale pass
    ss = jnp.sum(vlad * vlad, axis=2, keepdims=True)        # (B, Kp, 1)
    inv1 = lax.rsqrt(jnp.maximum(ss, L2_EPS * L2_EPS))      # 1 / max(||v||, eps)
    t2 = jnp.sum(ss * inv1 * inv1, axis=1, keepdims=True)   # (B, 1, 1)
    inv2 = lax.rsqrt(jnp.maximum(t2, L2_EPS * L2_EPS))
    vlad = vlad * (inv1 * inv2)

    # ---- hidden projection: assemble lane-contiguous (B, Kp*D) scratch, then ONE
    #      (B, Kp*D) @ (Kp*D, Op) MXU matmul (weight pre-flattened k-major, d-minor).
    for k in range(Kp):
        flat_ref[:, k * D:(k + 1) * D] = vlad[:, k, :]
    out = jnp.dot(flat_ref[...].astype(jnp.bfloat16), h1_ref[...],
                  preferred_element_type=jnp.float32)        # (B, Op)

    # ---- bn2 (training-mode batch stats over B rows), fused
    bno = bno_ref[...]
    out = _bn_rows(out, bno[0:1, :], bno[1:2, :], float(B))

    # ---- context gating: sigmoid(BN(out @ gating_weights)) * out  (EUP sigmoid)
    gates = jnp.dot(out.astype(jnp.bfloat16), gw_ref[...],
                    preferred_element_type=jnp.float32)
    gates = _bn_rows(gates, bno[2:3, :], bno[3:4, :], float(B))
    gates = pl.reciprocal(1.0 + jnp.exp(-gates), approx=True)

    out_ref[...] = (out * gates).astype(out_ref.dtype)       # lane-dense (B, Op) store


def init_params(key, feature_size, cluster_size, output_dim):
    """Parameters with exactly the PyTorch module's shapes / init scaling."""
    D, K, O = feature_size, cluster_size, output_dim
    ks = jax.random.split(key, 4)
    return {
        'cluster_weights':  jax.random.normal(ks[0], (D, K), jnp.float32) / math.sqrt(D),
        'cluster_weights2': jax.random.normal(ks[1], (1, D, K), jnp.float32) / math.sqrt(D),
        'hidden1_weights':  jax.random.normal(ks[2], (K * D, O), jnp.float32) / math.sqrt(D),
        'gating_weights':   jax.random.normal(ks[3], (O, O), jnp.float32) / math.sqrt(O),
        'bn1_gamma': jnp.ones((K,), jnp.float32),
        'bn1_beta':  jnp.zeros((K,), jnp.float32),
        'bn2_gamma': jnp.ones((O,), jnp.float32),
        'bn2_beta':  jnp.zeros((O,), jnp.float32),
        'gating_bn_gamma': jnp.ones((O,), jnp.float32),
        'gating_bn_beta':  jnp.zeros((O,), jnp.float32),
    }


def _pad1(v, n, fill):
    return jnp.full((n,), fill, jnp.float32).at[:v.shape[0]].set(v)


def prepare_params(params, *, feature_size, cluster_size, output_dim):
    """One-time (hoisted) weight transforms: pad K/O to lane multiples, pre-transpose,
    pre-flatten the hidden weight, cast MXU operands to bf16, stack BN params."""
    D, K, O = feature_size, cluster_size, output_dim
    Kp, Op = _round_up(K, LANE), _round_up(O, LANE)

    cw = jnp.zeros((D, Kp), jnp.float32).at[:, :K].set(params['cluster_weights'])
    cw2t = jnp.zeros((Kp, D), jnp.float32).at[:K, :].set(params['cluster_weights2'][0].T)
    # hidden1_weights row index is d*K + k  ->  h1[k, d, o]; flatten k-major, d-minor
    h1 = params['hidden1_weights'].reshape(D, K, O).transpose(1, 0, 2)        # (K, D, O)
    h1p = (jnp.zeros((Kp, D, Op), jnp.float32).at[:K, :, :O].set(h1)
           .reshape(Kp * D, Op))
    gw = jnp.zeros((Op, Op), jnp.float32).at[:O, :O].set(params['gating_weights'])

    bnk = jnp.stack([_pad1(params['bn1_gamma'], Kp, 1.0),
                     _pad1(params['bn1_beta'], Kp, 0.0)])                      # (2, Kp)
    bno = jnp.stack([_pad1(params['bn2_gamma'], Op, 1.0),
                     _pad1(params['bn2_beta'], Op, 0.0),
                     _pad1(params['gating_bn_gamma'], Op, 1.0),
                     _pad1(params['gating_bn_beta'], Op, 0.0)])                # (4, Op)

    return {'cw': cw.astype(jnp.bfloat16), 'cw2t': cw2t,
            'h1': h1p.astype(jnp.bfloat16), 'gw': gw.astype(jnp.bfloat16),
            'bnk': bnk, 'bno': bno,
            'k_real': K, 'o_real': O, 'k_pad': Kp, 'o_pad': Op}


def netvlad_loupe_forward(x_nchw, prep, *, feature_size, max_samples):
    B = x_nchw.shape[0]
    D, N = feature_size, max_samples
    Kp, Op, K, O = prep['k_pad'], prep['o_pad'], prep['k_real'], prep['o_real']

    # glue: NCHW (B, D, N, 1) --transpose(1,3)--> (B, 1, N, D) --view--> (B, N, D)
    x3 = jnp.transpose(x_nchw, (0, 3, 2, 1)).reshape(B, N, D).astype(jnp.bfloat16)

    vmem = pl.BlockSpec(memory_space=pltpu.MemorySpace.VMEM)
    out_p = pl.pallas_call(
        functools.partial(netvlad_kernel, k_real=K),
        out_shape=jax.ShapeDtypeStruct((B, Op), jnp.float32),
        in_specs=[vmem] * 7,
        out_specs=vmem,
        scratch_shapes=[pltpu.VMEM((B, Kp * D), jnp.float32)],   # flat vlad staging
        compiler_params=pltpu.CompilerParams(
            # sized to the actual working set (<< half of v7x's 64 MiB physical VMEM)
            vmem_limit_bytes=16 * 1024 * 1024),
    )(x3, prep['cw'], prep['cw2t'], prep['h1'], prep['gw'], prep['bnk'], prep['bno'])
    return out_p[:, :O]


if __name__ == "__main__":
    # small shapes consistent with the module:
    # x is NCHW = (batch, feature_size, max_samples, 1)
    B, D, N, K, O = 2, 32, 16, 8, 32
    key = jax.random.PRNGKey(0)
    kx, kp = jax.random.split(key)
    x = jax.random.normal(kx, (B, D, N, 1), jnp.float32)

    params = init_params(kp, feature_size=D, cluster_size=K, output_dim=O)
    prep = prepare_params(params, feature_size=D, cluster_size=K, output_dim=O)

    out = netvlad_loupe_forward(x, prep, feature_size=D, max_samples=N)
    jax.block_until_ready(out)
    assert out.shape == (B, O) and out.dtype == jnp.float32
    assert bool(jnp.all(jnp.isfinite(out)))
    print("KERNEL_OK")
</pallas_src>

<mosaic_0001>
module attributes {stable_mosaic.version = 11 : i64} {
  func.func @netvlad_kernel(%arg0: memref<2x16x32xbf16, #tpu.memory_space<vmem>>, %arg1: memref<32x128xbf16, #tpu.memory_space<vmem>>, %arg2: memref<128x32xf32, #tpu.memory_space<vmem>>, %arg3: memref<4096x128xbf16, #tpu.memory_space<vmem>>, %arg4: memref<128x128xbf16, #tpu.memory_space<vmem>>, %arg5: memref<2x128xf32, #tpu.memory_space<vmem>>, %arg6: memref<4x128xf32, #tpu.memory_space<vmem>>, %arg7: memref<2x128xf32, #tpu.memory_space<vmem>>, %arg8: memref<2x4096xf32, #tpu.memory_space<vmem>>) attributes {dimension_semantics = [], scalar_prefetch = 0 : i64, scratch_operands = 1 : i64, tpu.core_type = #tpu.core_type<tc>} {
    %c0 = arith.constant 0 : index
    %c0_0 = arith.constant 0 : index
    %c0_1 = arith.constant 0 : index
    %0 = vector.load %arg0[%c0, %c0_0, %c0_1] : memref<2x16x32xbf16, #tpu.memory_space<vmem>>, vector<2x16x32xbf16>
    %1 = vector.shape_cast %0 : vector<2x16x32xbf16> to vector<32x32xbf16>
    %c0_2 = arith.constant 0 : index
    %c0_3 = arith.constant 0 : index
    %2 = vector.load %arg1[%c0_2, %c0_3] : memref<32x128xbf16, #tpu.memory_space<vmem>>, vector<32x128xbf16>
    %cst = arith.constant dense<0.000000e+00> : vector<32x128xf32>
    %3 = tpu.matmul %1, %2, %cst {dimension_numbers = #tpu.dot_dimension_numbers<[1], [0], [0], [1], [0, 0, 1, 1], [], []>} : vector<32x32xbf16>, vector<32x128xbf16>, vector<32x128xf32> -> vector<32x128xf32>
    %c0_4 = arith.constant 0 : index
    %c0_5 = arith.constant 0 : index
    %4 = vector.load %arg5[%c0_4, %c0_5] : memref<2x128xf32, #tpu.memory_space<vmem>>, vector<2x128xf32>
    %5 = vector.extract_strided_slice %4 {offsets = [0, 0], sizes = [1, 128], strides = [1, 1]} : vector<2x128xf32> to vector<1x128xf32>
    %6 = vector.extract_strided_slice %4 {offsets = [1, 0], sizes = [1, 128], strides = [1, 1]} : vector<2x128xf32> to vector<1x128xf32>
    %cst_6 = arith.constant dense<0.000000e+00> : vector<128xf32>
    %7 = vector.multi_reduction <add>, %3, %cst_6 [0] : vector<32x128xf32> to vector<128xf32>
    %8 = vector.shape_cast %7 : vector<128xf32> to vector<1x128xf32>
    %9 = arith.mulf %3, %3 : vector<32x128xf32>
    %cst_7 = arith.constant dense<0.000000e+00> : vector<128xf32>
    %10 = vector.multi_reduction <add>, %9, %cst_7 [0] : vector<32x128xf32> to vector<128xf32>
    %11 = vector.shape_cast %10 : vector<128xf32> to vector<1x128xf32>
    %cst_8 = arith.constant 3.125000e-02 : f32
    %12 = vector.broadcast %cst_8 : f32 to vector<1x128xf32>
    %13 = arith.mulf %8, %12 : vector<1x128xf32>
    %cst_9 = arith.constant 3.125000e-02 : f32
    %14 = vector.broadcast %cst_9 : f32 to vector<1x128xf32>
    %15 = arith.mulf %11, %14 : vector<1x128xf32>
    %16 = arith.mulf %13, %13 : vector<1x128xf32>
    %17 = arith.subf %15, %16 : vector<1x128xf32>
    %cst_10 = arith.constant 0.000000e+00 : f32
    %18 = vector.broadcast %cst_10 : f32 to vector<1x128xf32>
    %19 = arith.maximumf %17, %18 : vector<1x128xf32>
    %cst_11 = arith.constant 9.99999974E-6 : f32
    %20 = vector.broadcast %cst_11 : f32 to vector<1x128xf32>
    %21 = arith.addf %19, %20 : vector<1x128xf32>
    %22 = math.rsqrt %21 : vector<1x128xf32>
    %23 = arith.mulf %5, %22 : vector<1x128xf32>
    %24 = vector.broadcast %23 : vector<1x128xf32> to vector<32x128xf32>
    %25 = arith.mulf %3, %24 : vector<32x128xf32>
    %26 = arith.mulf %13, %23 : vector<1x128xf32>
    %27 = arith.subf %6, %26 : vector<1x128xf32>
    %28 = vector.broadcast %27 : vector<1x128xf32> to vector<32x128xf32>
    %29 = arith.addf %25, %28 : vector<32x128xf32>
    %30 = tpu.iota {dimensions = array<i32: 1>} : vector<32x128xi32>
    %c8_i32 = arith.constant 8 : i32
    %31 = vector.broadcast %c8_i32 : i32 to vector<32x128xi32>
    %32 = arith.cmpi slt, %30, %31 : vector<32x128xi32>
    %cst_12 = arith.constant -1.000000e+30 : f32
    %33 = vector.broadcast %cst_12 : f32 to vector<32x128xf32>
    %34 = arith.select %32, %29, %33 : vector<32x128xi1>, vector<32x128xf32>
    %cst_13 = arith.constant dense<0xFF800000> : vector<32xf32>
    %35 = vector.multi_reduction <maximumf>, %34, %cst_13 [1] : vector<32x128xf32> to vector<32xf32>
    %36 = vector.shape_cast %35 : vector<32xf32> to vector<32x1xf32>
    %37 = vector.broadcast %36 : vector<32x1xf32> to vector<32x128xf32>
    %38 = arith.subf %34, %37 : vector<32x128xf32>
    %39 = math.exp %38 : vector<32x128xf32>
    %cst_14 = arith.constant dense<0.000000e+00> : vector<32xf32>
    %40 = vector.multi_reduction <add>, %39, %cst_14 [1] : vector<32x128xf32> to vector<32xf32>
    %41 = vector.shape_cast %40 : vector<32xf32> to vector<32x1xf32>
    %42 = tpu.reciprocal %41 {approx = true} : vector<32x1xf32> -> vector<32x1xf32>
    %43 = vector.broadcast %42 : vector<32x1xf32> to vector<32x128xf32>
    %44 = arith.mulf %39, %43 : vector<32x128xf32>
    %45 = vector.shape_cast %44 : vector<32x128xf32> to vector<2x16x128xf32>
    %46 = arith.truncf %45 : vector<2x16x128xf32> to vector<2x16x128xbf16>
    %cst_15 = arith.constant dense<0.000000e+00> : vector<2x128x32xf32>
    %47 = tpu.matmul %46, %0, %cst_15 {dimension_numbers = #tpu.dot_dimension_numbers<[1], [1], [2], [2], [0, 0, 0, 2, 1, 2], [0], [0]>} : vector<2x16x128xbf16>, vector<2x16x32xbf16>, vector<2x128x32xf32> -> vector<2x128x32xf32>
    %cst_16 = arith.constant 1.000000e+00 : bf16
    %48 = vector.broadcast %cst_16 : bf16 to vector<2x16x1xbf16>
    %cst_17 = arith.constant dense<0.000000e+00> : vector<2x128x1xf32>
    %49 = tpu.matmul %46, %48, %cst_17 {dimension_numbers = #tpu.dot_dimension_numbers<[1], [1], [2], [2], [0, 0, 0, 2, 1, 2], [0], [0]>} : vector<2x16x128xbf16>, vector<2x16x1xbf16>, vector<2x128x1xf32> -> vector<2x128x1xf32>
    %c0_18 = arith.constant 0 : index
    %c0_19 = arith.constant 0 : index
    %50 = vector.load %arg2[%c0_18, %c0_19] : memref<128x32xf32, #tpu.memory_space<vmem>>, vector<128x32xf32>
    %51 = vector.shape_cast %50 : vector<128x32xf32> to vector<1x128x32xf32>
    %52 = vector.broadcast %49 : vector<2x128x1xf32> to vector<2x128x32xf32>
    %53 = vector.broadcast %51 : vector<1x128x32xf32> to vector<2x128x32xf32>
    %54 = arith.mulf %52, %53 : vector<2x128x32xf32>
    %55 = arith.subf %47, %54 : vector<2x128x32xf32>
    %56 = arith.mulf %55, %55 : vector<2x128x32xf32>
    %cst_20 = arith.constant dense<0.000000e+00> : vector<2x128xf32>
    %57 = vector.multi_reduction <add>, %56, %cst_20 [2] : vector<2x128x32xf32> to vector<2x128xf32>
    %58 = vector.shape_cast %57 : vector<2x128xf32> to vector<2x128x1xf32>
    %cst_21 = arith.constant 1.000000e-24 : f32
    %59 = vector.broadcast %cst_21 : f32 to vector<2x128x1xf32>
    %60 = arith.maximumf %58, %59 : vector<2x128x1xf32>
    %61 = math.rsqrt %60 : vector<2x128x1xf32>
    %62 = arith.mulf %58, %61 : vector<2x128x1xf32>
    %63 = arith.mulf %62, %61 : vector<2x128x1xf32>
    %cst_22 = arith.constant dense<0.000000e+00> : vector<2x1xf32>
    %64 = vector.multi_reduction <add>, %63, %cst_22 [1] : vector<2x128x1xf32> to vector<2x1xf32>
    %65 = vector.shape_cast %64 : vector<2x1xf32> to vector<2x1x1xf32>
    %cst_23 = arith.constant 1.000000e-24 : f32
    %66 = vector.broadcast %cst_23 : f32 to vector<2x1x1xf32>
    %67 = arith.maximumf %65, %66 : vector<2x1x1xf32>
    %68 = math.rsqrt %67 : vector<2x1x1xf32>
    %69 = vector.broadcast %68 : vector<2x1x1xf32> to vector<2x128x1xf32>
    %70 = arith.mulf %61, %69 : vector<2x128x1xf32>
    %71 = vector.broadcast %70 : vector<2x128x1xf32> to vector<2x128x32xf32>
    %72 = arith.mulf %55, %71 : vector<2x128x32xf32>
    %73 = vector.extract_strided_slice %72 {offsets = [0, 0, 0], sizes = [2, 1, 32], strides = [1, 1, 1]} : vector<2x128x32xf32> to vector<2x1x32xf32>
    %74 = vector.shape_cast %73 : vector<2x1x32xf32> to vector<2x32xf32>
    %c0_24 = arith.constant 0 : index
    %c0_25 = arith.constant 0 : index
    %75 = vector.load %arg8[%c0_24, %c0_25] : memref<2x4096xf32, #tpu.memory_space<vmem>>, vector<2x32xf32>
    tpu.vector_store %arg8[%c0_24, %c0_25], %74 {strides = array<i32>} : memref<2x4096xf32, #tpu.memory_space<vmem>>, vector<2x32xf32>,
    %76 = vector.extract_strided_slice %72 {offsets = [0, 1, 0], sizes = [2, 1, 32], strides = [1, 1, 1]} : vector<2x128x32xf32> to vector<2x1x32xf32>
    %77 = vector.shape_cast %76 : vector<2x1x32xf32> to vector<2x32xf32>
    %c0_26 = arith.constant 0 : index
    %c32 = arith.constant 32 : index
    %78 = vector.load %arg8[%c0_26, %c32] : memref<2x4096xf32, #tpu.memory_space<vmem>>, vector<2x32xf32>
    tpu.vector_store %arg8[%c0_26, %c32], %77 {strides = array<i32>} : memref<2x4096xf32, #tpu.memory_space<vmem>>, vector<2x32xf32>,
    %79 = vector.extract_strided_slice %72 {offsets = [0, 2, 0], sizes = [2, 1, 32], strides = [1, 1, 1]} : vector<2x128x32xf32> to vector<2x1x32xf32>
    %80 = vector.shape_cast %79 : vector<2x1x32xf32> to vector<2x32xf32>
    %c0_27 = arith.constant 0 : index
    %c64 = arith.constant 64 : index
    %81 = vector.load %arg8[%c0_27, %c64] : memref<2x4096xf32, #tpu.memory_space<vmem>>, vector<2x32xf32>
    tpu.vector_store %arg8[%c0_27, %c64], %80 {strides = array<i32>} : memref<2x4096xf32, #tpu.memory_space<vmem>>, vector<2x32xf32>,
    %82 = vector.extract_strided_slice %72 {offsets = [0, 3, 0], sizes = [2, 1, 32], strides = [1, 1, 1]} : vector<2x128x32xf32> to vector<2x1x32xf32>
    %83 = vector.shape_cast %82 : vector<2x1x32xf32> to vector<2x32xf32>
    %c0_28 = arith.constant 0 : index
    %c96 = arith.constant 96 : index
    %84 = vector.load %arg8[%c0_28, %c96] : memref<2x4096xf32, #tpu.memory_space<vmem>>, vector<2x32xf32>
    tpu.vector_store %arg8[%c0_28, %c96], %83 {strides = array<i32>} : memref<2x4096xf32, #tpu.memory_space<vmem>>, vector<2x32xf32>,
    %85 = vector.extract_strided_slice %72 {offsets = [0, 4, 0], sizes = [2, 1, 32], strides = [1, 1, 1]} : vector<2x128x32xf32> to vector<2x1x32xf32>
    %86 = vector.shape_cast %85 : vector<2x1x32xf32> to vector<2x32xf32>
    %c0_29 = arith.constant 0 : index
    %c128 = arith.constant 128 : index
    %87 = vector.load %arg8[%c0_29, %c128] : memref<2x4096xf32, #tpu.memory_space<vmem>>, vector<2x32xf32>
    tpu.vector_store %arg8[%c0_29, %c128], %86 {strides = array<i32>} : memref<2x4096xf32, #tpu.memory_space<vmem>>, vector<2x32xf32>,
    %88 = vector.extract_strided_slice %72 {offsets = [0, 5, 0], sizes = [2, 1, 32], strides = [1, 1, 1]} : vector<2x128x32xf32> to vector<2x1x32xf32>
    %89 = vector.shape_cast %88 : vector<2x1x32xf32> to vector<2x32xf32>
    %c0_30 = arith.constant 0 : index
    %c160 = arith.constant 160 : index
    %90 = vector.load %arg8[%c0_30, %c160] : memref<2x4096xf32, #tpu.memory_space<vmem>>, vector<2x32xf32>
    tpu.vector_store %arg8[%c0_30, %c160], %89 {strides = array<i32>} : memref<2x4096xf32, #tpu.memory_space<vmem>>, vector<2x32xf32>,
    %91 = vector.extract_strided_slice %72 {offsets = [0, 6, 0], sizes = [2, 1, 32], strides = [1, 1, 1]} : vector<2x128x32xf32> to vector<2x1x32xf32>
    %92 = vector.shape_cast %91 : vector<2x1x32xf32> to vector<2x32xf32>
    %c0_31 = arith.constant 0 : index
    %c192 = arith.constant 192 : index
    %93 = vector.load %arg8[%c0_31, %c192] : memref<2x4096xf32, #tpu.memory_space<vmem>>, vector<2x32xf32>
    tpu.vector_store %arg8[%c0_31, %c192], %92 {strides = array<i32>} : memref<2x4096xf32, #tpu.memory_space<vmem>>, vector<2x32xf32>,
    %94 = vector.extract_strided_slice %72 {offsets = [0, 7, 0], sizes = [2, 1, 32], strides = [1, 1, 1]} : vector<2x128x32xf32> to vector<2x1x32xf32>
    %95 = vector.shape_cast %94 : vector<2x1x32xf32> to vector<2x32xf32>
    %c0_32 = arith.constant 0 : index
    %c224 = arith.constant 224 : index
    %96 = vector.load %arg8[%c0_32, %c224] : memref<2x4096xf32, #tpu.memory_space<vmem>>, vector<2x32xf32>
    tpu.vector_store %arg8[%c0_32, %c224], %95 {strides = array<i32>} : memref<2x4096xf32, #tpu.memory_space<vmem>>, vector<2x32xf32>,
    %97 = vector.extract_strided_slice %72 {offsets = [0, 8, 0], sizes = [2, 1, 32], strides = [1, 1, 1]} : vector<2x128x32xf32> to vector<2x1x32xf32>
    %98 = vector.shape_cast %97 : vector<2x1x32xf32> to vector<2x32xf32>
    %c0_33 = arith.constant 0 : index
    %c256 = arith.constant 256 : index
    %99 = vector.load %arg8[%c0_33, %c256] : memref<2x4096xf32, #tpu.memory_space<vmem>>, vector<2x32xf32>
    tpu.vector_store %arg8[%c0_33, %c256], %98 {strides = array<i32>} : memref<2x4096xf32, #tpu.memory_space<vmem>>, vector<2x32xf32>,
    %100 = vector.extract_strided_slice %72 {offsets = [0, 9, 0], sizes = [2, 1, 32], strides = [1, 1, 1]} : vector<2x128x32xf32> to vector<2x1x32xf32>
    %101 = vector.shape_cast %100 : vector<2x1x32xf32> to vector<2x32xf32>
    %c0_34 = arith.constant 0 : index
    %c288 = arith.constant 288 : index
    %102 = vector.load %arg8[%c0_34, %c288] : memref<2x4096xf32, #tpu.memory_space<vmem>>, vector<2x32xf32>
    tpu.vector_store %arg8[%c0_34, %c288], %101 {strides = array<i32>} : memref<2x4096xf32, #tpu.memory_space<vmem>>, vector<2x32xf32>,
    %103 = vector.extract_strided_slice %72 {offsets = [0, 10, 0], sizes = [2, 1, 32], strides = [1, 1, 1]} : vector<2x128x32xf32> to vector<2x1x32xf32>
    %104 = vector.shape_cast %103 : vector<2x1x32xf32> to vector<2x32xf32>
    %c0_35 = arith.constant 0 : index
    %c320 = arith.constant 320 : index
    %105 = vector.load %arg8[%c0_35, %c320] : memref<2x4096xf32, #tpu.memory_space<vmem>>, vector<2x32xf32>
    tpu.vector_store %arg8[%c0_35, %c320], %104 {strides = array<i32>} : memref<2x4096xf32, #tpu.memory_space<vmem>>, vector<2x32xf32>,
    %106 = vector.extract_strided_slice %72 {offsets = [0, 11, 0], sizes = [2, 1, 32], strides = [1, 1, 1]} : vector<2x128x32xf32> to vector<2x1x32xf32>
    %107 = vector.shape_cast %106 : vector<2x1x32xf32> to vector<2x32xf32>
    %c0_36 = arith.constant 0 : index
    %c352 = arith.constant 352 : index
    %108 = vector.load %arg8[%c0_36, %c352] : memref<2x4096xf32, #tpu.memory_space<vmem>>, vector<2x32xf32>
    tpu.vector_store %arg8[%c0_36, %c352], %107 {strides = array<i32>} : memref<2x4096xf32, #tpu.memory_space<vmem>>, vector<2x32xf32>,
    %109 = vector.extract_strided_slice %72 {offsets = [0, 12, 0], sizes = [2, 1, 32], strides = [1, 1, 1]} : vector<2x128x32xf32> to vector<2x1x32xf32>
    %110 = vector.shape_cast %109 : vector<2x1x32xf32> to vector<2x32xf32>
    %c0_37 = arith.constant 0 : index
    %c384 = arith.constant 384 : index
    %111 = vector.load %arg8[%c0_37, %c384] : memref<2x4096xf32, #tpu.memory_space<vmem>>, vector<2x32xf32>
    tpu.vector_store %arg8[%c0_37, %c384], %110 {strides = array<i32>} : memref<2x4096xf32, #tpu.memory_space<vmem>>, vector<2x32xf32>,
    %112 = vector.extract_strided_slice %72 {offsets = [0, 13, 0], sizes = [2, 1, 32], strides = [1, 1, 1]} : vector<2x128x32xf32> to vector<2x1x32xf32>
    %113 = vector.shape_cast %112 : vector<2x1x32xf32> to vector<2x32xf32>
    %c0_38 = arith.constant 0 : index
    %c416 = arith.constant 416 : index
    %114 = vector.load %arg8[%c0_38, %c416] : memref<2x4096xf32, #tpu.memory_space<vmem>>, vector<2x32xf32>
    tpu.vector_store %arg8[%c0_38, %c416], %113 {strides = array<i32>} : memref<2x4096xf32, #tpu.memory_space<vmem>>, vector<2x32xf32>,
    %115 = vector.extract_strided_slice %72 {offsets = [0, 14, 0], sizes = [2, 1, 32], strides = [1, 1, 1]} : vector<2x128x32xf32> to vector<2x1x32xf32>
    %116 = vector.shape_cast %115 : vector<2x1x32xf32> to vector<2x32xf32>
    %c0_39 = arith.constant 0 : index
    %c448 = arith.constant 448 : index
    %117 = vector.load %arg8[%c0_39, %c448] : memref<2x4096xf32, #tpu.memory_space<vmem>>, vector<2x32xf32>
    tpu.vector_store %arg8[%c0_39, %c448], %116 {strides = array<i32>} : memref<2x4096xf32, #tpu.memory_space<vmem>>, vector<2x32xf32>,
    %118 = vector.extract_strided_slice %72 {offsets = [0, 15, 0], sizes = [2, 1, 32], strides = [1, 1, 1]} : vector<2x128x32xf32> to vector<2x1x32xf32>
    %119 = vector.shape_cast %118 : vector<2x1x32xf32> to vector<2x32xf32>
    %c0_40 = arith.constant 0 : index
    %c480 = arith.constant 480 : index
    %120 = vector.load %arg8[%c0_40, %c480] : memref<2x4096xf32, #tpu.memory_space<vmem>>, vector<2x32xf32>
    tpu.vector_store %arg8[%c0_40, %c480], %119 {strides = array<i32>} : memref<2x4096xf32, #tpu.memory_space<vmem>>, vector<2x32xf32>,
    %121 = vector.extract_strided_slice %72 {offsets = [0, 16, 0], sizes = [2, 1, 32], strides = [1, 1, 1]} : vector<2x128x32xf32> to vector<2x1x32xf32>
    %122 = vector.shape_cast %121 : vector<2x1x32xf32> to vector<2x32xf32>
    %c0_41 = arith.constant 0 : index
    %c512 = arith.constant 512 : index
    %123 = vector.load %arg8[%c0_41, %c512] : memref<2x4096xf32, #tpu.memory_space<vmem>>, vector<2x32xf32>
    tpu.vector_store %arg8[%c0_41, %c512], %122 {strides = array<i32>} : memref<2x4096xf32, #tpu.memory_space<vmem>>, vector<2x32xf32>,
    %124 = vector.extract_strided_slice %72 {offsets = [0, 17, 0], sizes = [2, 1, 32], strides = [1, 1, 1]} : vector<2x128x32xf32> to vector<2x1x32xf32>
    %125 = vector.shape_cast %124 : vector<2x1x32xf32> to vector<2x32xf32>
    %c0_42 = arith.constant 0 : index
    %c544 = arith.constant 544 : index
    %126 = vector.load %arg8[%c0_42, %c544] : memref<2x4096xf32, #tpu.memory_space<vmem>>, vector<2x32xf32>
    tpu.vector_store %arg8[%c0_42, %c544], %125 {strides = array<i32>} : memref<2x4096xf32, #tpu.memory_space<vmem>>, vector<2x32xf32>,
    %127 = vector.extract_strided_slice %72 {offsets = [0, 18, 0], sizes = [2, 1, 32], strides = [1, 1, 1]} : vector<2x128x32xf32> to vector<2x1x32xf32>
    %128 = vector.shape_cast %127 : vector<2x1x32xf32> to vector<2x32xf32>
    %c0_43 = arith.constant 0 : index
    %c576 = arith.constant 576 : index
    %129 = vector.load %arg8[%c0_43, %c576] : memref<2x4096xf32, #tpu.memory_space<vmem>>, vector<2x32xf32>
    tpu.vector_store %arg8[%c0_43, %c576], %128 {strides = array<i32>} : memref<2x4096xf32, #tpu.memory_space<vmem>>, vector<2x32xf32>,
    %130 = vector.extract_strided_slice %72 {offsets = [0, 19, 0], sizes = [2, 1, 32], strides = [1, 1, 1]} : vector<2x128x32xf32> to vector<2x1x32xf32>
    %131 = vector.shape_cast %130 : vector<2x1x32xf32> to vector<2x32xf32>
    %c0_44 = arith.constant 0 : index
    %c608 = arith.constant 608 : index
    %132 = vector.load %arg8[%c0_44, %c608] : memref<2x4096xf32, #tpu.memory_space<vmem>>, vector<2x32xf32>
    tpu.vector_store %arg8[%c0_44, %c608], %131 {strides = array<i32>} : memref<2x4096xf32, #tpu.memory_space<vmem>>, vector<2x32xf32>,
    %133 = vector.extract_strided_slice %72 {offsets = [0, 20, 0], sizes = [2, 1, 32], strides = [1, 1, 1]} : vector<2x128x32xf32> to vector<2x1x32xf32>
    %134 = vector.shape_cast %133 : vector<2x1x32xf32> to vector<2x32xf32>
    %c0_45 = arith.constant 0 : index
    %c640 = arith.constant 640 : index
    %135 = vector.load %arg8[%c0_45, %c640] : memref<2x4096xf32, #tpu.memory_space<vmem>>, vector<2x32xf32>
    tpu.vector_store %arg8[%c0_45, %c640], %134 {strides = array<i32>} : memref<2x4096xf32, #tpu.memory_space<vmem>>, vector<2x32xf32>,
    %136 = vector.extract_strided_slice %72 {offsets = [0, 21, 0], sizes = [2, 1, 32], strides = [1, 1, 1]} : vector<2x128x32xf32> to vector<2x1x32xf32>
    %137 = vector.shape_cast %136 : vector<2x1x32xf32> to vector<2x32xf32>
    %c0_46 = arith.constant 0 : index
    %c672 = arith.constant 672 : index
    %138 = vector.load %arg8[%c0_46, %c672] : memref<2x4096xf32, #tpu.memory_space<vmem>>, vector<2x32xf32>
    tpu.vector_store %arg8[%c0_46, %c672], %137 {strides = array<i32>} : memref<2x4096xf32, #tpu.memory_space<vmem>>, vector<2x32xf32>,
    %139 = vector.extract_strided_slice %72 {offsets = [0, 22, 0], sizes = [2, 1, 32], strides = [1, 1, 1]} : vector<2x128x32xf32> to vector<2x1x32xf32>
    %140 = vector.shape_cast %139 : vector<2x1x32xf32> to vector<2x32xf32>
    %c0_47 = arith.constant 0 : index
    %c704 = arith.constant 704 : index
    %141 = vector.load %arg8[%c0_47, %c704] : memref<2x4096xf32, #tpu.memory_space<vmem>>, vector<2x32xf32>
    tpu.vector_store %arg8[%c0_47, %c704], %140 {strides = array<i32>} : memref<2x4096xf32, #tpu.memory_space<vmem>>, vector<2x32xf32>,
    %142 = vector.extract_strided_slice %72 {offsets = [0, 23, 0], sizes = [2, 1, 32], strides = [1, 1, 1]} : vector<2x128x32xf32> to vector<2x1x32xf32>
    %143 = vector.shape_cast %142 : vector<2x1x32xf32> to vector<2x32xf32>
    %c0_48 = arith.constant 0 : index
    %c736 = arith.constant 736 : index
    %144 = vector.load %arg8[%c0_48, %c736] : memref<2x4096xf32, #tpu.memory_space<vmem>>, vector<2x32xf32>
    tpu.vector_store %arg8[%c0_48, %c736], %143 {strides = array<i32>} : memref<2x4096xf32, #tpu.memory_space<vmem>>, vector<2x32xf32>,
    %145 = vector.extract_strided_slice %72 {offsets = [0, 24, 0], sizes = [2, 1, 32], strides = [1, 1, 1]} : vector<2x128x32xf32> to vector<2x1x32xf32>
    %146 = vector.shape_cast %145 : vector<2x1x32xf32> to vector<2x32xf32>
    %c0_49 = arith.constant 0 : index
    %c768 = arith.constant 768 : index
    %147 = vector.load %arg8[%c0_49, %c768] : memref<2x4096xf32, #tpu.memory_space<vmem>>, vector<2x32xf32>
    tpu.vector_store %arg8[%c0_49, %c768], %146 {strides = array<i32>} : memref<2x4096xf32, #tpu.memory_space<vmem>>, vector<2x32xf32>,
    %148 = vector.extract_strided_slice %72 {offsets = [0, 25, 0], sizes = [2, 1, 32], strides = [1, 1, 1]} : vector<2x128x32xf32> to vector<2x1x32xf32>
    %149 = vector.shape_cast %148 : vector<2x1x32xf32> to vector<2x32xf32>
    %c0_50 = arith.constant 0 : index
    %c800 = arith.constant 800 : index
    %150 = vector.load %arg8[%c0_50, %c800] : memref<2x4096xf32, #tpu.memory_space<vmem>>, vector<2x32xf32>
    tpu.vector_store %arg8[%c0_50, %c800], %149 {strides = array<i32>} : memref<2x4096xf32, #tpu.memory_space<vmem>>, vector<2x32xf32>,
    %151 = vector.extract_strided_slice %72 {offsets = [0, 26, 0], sizes = [2, 1, 32], strides = [1, 1, 1]} : vector<2x128x32xf32> to vector<2x1x32xf32>
    %152 = vector.shape_cast %151 : vector<2x1x32xf32> to vector<2x32xf32>
    %c0_51 = arith.constant 0 : index
    %c832 = arith.constant 832 : index
    %153 = vector.load %arg8[%c0_51, %c832] : memref<2x4096xf32, #tpu.memory_space<vmem>>, vector<2x32xf32>
    tpu.vector_store %arg8[%c0_51, %c832], %152 {strides = array<i32>} : memref<2x4096xf32, #tpu.memory_space<vmem>>, vector<2x32xf32>,
    %154 = vector.extract_strided_slice %72 {offsets = [0, 27, 0], sizes = [2, 1, 32], strides = [1, 1, 1]} : vector<2x128x32xf32> to vector<2x1x32xf32>
    %155 = vector.shape_cast %154 : vector<2x1x32xf32> to vector<2x32xf32>
    %c0_52 = arith.constant 0 : index
    %c864 = arith.constant 864 : index
    %156 = vector.load %arg8[%c0_52, %c864] : memref<2x4096xf32, #tpu.memory_space<vmem>>, vector<2x32xf32>
    tpu.vector_store %arg8[%c0_52, %c864], %155 {strides = array<i32>} : memref<2x4096xf32, #tpu.memory_space<vmem>>, vector<2x32xf32>,
    %157 = vector.extract_strided_slice %72 {offsets = [0, 28, 0], sizes = [2, 1, 32], strides = [1, 1, 1]} : vector<2x128x32xf32> to vector<2x1x32xf32>
    %158 = vector.shape_cast %157 : vector<2x1x32xf32> to vector<2x32xf32>
    %c0_53 = arith.constant 0 : index
    %c896 = arith.constant 896 : index
    %159 = vector.load %arg8[%c0_53, %c896] : memref<2x4096xf32, #tpu.memory_space<vmem>>, vector<2x32xf32>
    tpu.vector_store %arg8[%c0_53, %c896], %158 {strides = array<i32>} : memref<2x4096xf32, #tpu.memory_space<vmem>>, vector<2x32xf32>,
    %160 = vector.extract_strided_slice %72 {offsets = [0, 29, 0], sizes = [2, 1, 32], strides = [1, 1, 1]} : vector<2x128x32xf32> to vector<2x1x32xf32>
    %161 = vector.shape_cast %160 : vector<2x1x32xf32> to vector<2x32xf32>
    %c0_54 = arith.constant 0 : index
    %c928 = arith.constant 928 : index
    %162 = vector.load %arg8[%c0_54, %c928] : memref<2x4096xf32, #tpu.memory_space<vmem>>, vector<2x32xf32>
    tpu.vector_store %arg8[%c0_54, %c928], %161 {strides = array<i32>} : memref<2x4096xf32, #tpu.memory_space<vmem>>, vector<2x32xf32>,
    %163 = vector.extract_strided_slice %72 {offsets = [0, 30, 0], sizes = [2, 1, 32], strides = [1, 1, 1]} : vector<2x128x32xf32> to vector<2x1x32xf32>
    %164 = vector.shape_cast %163 : vector<2x1x32xf32> to vector<2x32xf32>
    %c0_55 = arith.constant 0 : index
    %c960 = arith.constant 960 : index
    %165 = vector.load %arg8[%c0_55, %c960] : memref<2x4096xf32, #tpu.memory_space<vmem>>, vector<2x32xf32>
    tpu.vector_store %arg8[%c0_55, %c960], %164 {strides = array<i32>} : memref<2x4096xf32, #tpu.memory_space<vmem>>, vector<2x32xf32>,
    %166 = vector.extract_strided_slice %72 {offsets = [0, 31, 0], sizes = [2, 1, 32], strides = [1, 1, 1]} : vector<2x128x32xf32> to vector<2x1x32xf32>
    %167 = vector.shape_cast %166 : vector<2x1x32xf32> to vector<2x32xf32>
    %c0_56 = arith.constant 0 : index
    %c992 = arith.constant 992 : index
    %168 = vector.load %arg8[%c0_56, %c992] : memref<2x4096xf32, #tpu.memory_space<vmem>>, vector<2x32xf32>
    tpu.vector_store %arg8[%c0_56, %c992], %167 {strides = array<i32>} : memref<2x4096xf32, #tpu.memory_space<vmem>>, vector<2x32xf32>,
    %169 = vector.extract_strided_slice %72 {offsets = [0, 32, 0], sizes = [2, 1, 32], strides = [1, 1, 1]} : vector<2x128x32xf32> to vector<2x1x32xf32>
    %170 = vector.shape_cast %169 : vector<2x1x32xf32> to vector<2x32xf32>
    %c0_57 = arith.constant 0 : index
    %c1024 = arith.constant 1024 : index
    %171 = vector.load %arg8[%c0_57, %c1024] : memref<2x4096xf32, #tpu.memory_space<vmem>>, vector<2x32xf32>
    tpu.vector_store %arg8[%c0_57, %c1024], %170 {strides = array<i32>} : memref<2x4096xf32, #tpu.memory_space<vmem>>, vector<2x32xf32>,
    %172 = vector.extract_strided_slice %72 {offsets = [0, 33, 0], sizes = [2, 1, 32], strides = [1, 1, 1]} : vector<2x128x32xf32> to vector<2x1x32xf32>
    %173 = vector.shape_cast %172 : vector<2x1x32xf32> to vector<2x32xf32>
    %c0_58 = arith.constant 0 : index
    %c1056 = arith.constant 1056 : index
    %174 = vector.load %arg8[%c0_58, %c1056] : memref<2x4096xf32, #tpu.memory_space<vmem>>, vector<2x32xf32>
    tpu.vector_store %arg8[%c0_58, %c1056], %173 {strides = array<i32>} : memref<2x4096xf32, #tpu.memory_space<vmem>>, vector<2x32xf32>,
    %175 = vector.extract_strided_slice %72 {offsets = [0, 34, 0], sizes = [2, 1, 32], strides = [1, 1, 1]} : vector<2x128x32xf32> to vector<2x1x32xf32>
    %176 = vector.shape_cast %175 : vector<2x1x32xf32> to vector<2x32xf32>
    %c0_59 = arith.constant 0 : index
    %c1088 = arith.constant 1088 : index
    %177 = vector.load %arg8[%c0_59, %c1088] : memref<2x4096xf32, #tpu.memory_space<vmem>>, vector<2x32xf32>
    tpu.vector_store %arg8[%c0_59, %c1088], %176 {strides = array<i32>} : memref<2x4096xf32, #tpu.memory_space<vmem>>, vector<2x32xf32>,
    %178 = vector.extract_strided_slice %72 {offsets = [0, 35, 0], sizes = [2, 1, 32], strides = [1, 1, 1]} : vector<2x128x32xf32> to vector<2x1x32xf32>
    %179 = vector.shape_cast %178 : vector<2x1x32xf32> to vector<2x32xf32>
    %c0_60 = arith.constant 0 : index
    %c1120 = arith.constant 1120 : index
    %180 = vector.load %arg8[%c0_60, %c1120] : memref<2x4096xf32, #tpu.memory_space<vmem>>, vector<2x32xf32>
    tpu.vector_store %arg8[%c0_60, %c1120], %179 {strides = array<i32>} : memref<2x4096xf32, #tpu.memory_space<vmem>>, vector<2x32xf32>,
    %181 = vector.extract_strided_slice %72 {offsets = [0, 36, 0], sizes = [2, 1, 32], strides = [1, 1, 1]} : vector<2x128x32xf32> to vector<2x1x32xf32>
    %182 = vector.shape_cast %181 : vector<2x1x32xf32> to vector<2x32xf32>
    %c0_61 = arith.constant 0 : index
    %c1152 = arith.constant 1152 : index
    %183 = vector.load %arg8[%c0_61, %c1152] : memref<2x4096xf32, #tpu.memory_space<vmem>>, vector<2x32xf32>
    tpu.vector_store %arg8[%c0_61, %c1152], %182 {strides = array<i32>} : memref<2x4096xf32, #tpu.memory_space<vmem>>, vector<2x32xf32>,
    %184 = vector.extract_strided_slice %72 {offsets = [0, 37, 0], sizes = [2, 1, 32], strides = [1, 1, 1]} : vector<2x128x32xf32> to vector<2x1x32xf32>
    %185 = vector.shape_cast %184 : vector<2x1x32xf32> to vector<2x32xf32>
    %c0_62 = arith.constant 0 : index
    %c1184 = arith.constant 1184 : index
    %186 = vector.load %arg8[%c0_62, %c1184] : memref<2x4096xf32, #tpu.memory_space<vmem>>, vector<2x32xf32>
    tpu.vector_store %arg8[%c0_62, %c1184], %185 {strides = array<i32>} : memref<2x4096xf32, #tpu.memory_space<vmem>>, vector<2x32xf32>,
    %187 = vector.extract_strided_slice %72 {offsets = [0, 38, 0], sizes = [2, 1, 32], strides = [1, 1, 1]} : vector<2x128x32xf32> to vector<2x1x32xf32>
    %188 = vector.shape_cast %187 : vector<2x1x32xf32> to vector<2x32xf32>
    %c0_63 = arith.constant 0 : index
    %c1216 = arith.constant 1216 : index
    %189 = vector.load %arg8[%c0_63, %c1216] : memref<2x4096xf32, #tpu.memory_space<vmem>>, vector<2x32xf32>
    tpu.vector_store %arg8[%c0_63, %c1216], %188 {strides = array<i32>} : memref<2x4096xf32, #tpu.memory_space<vmem>>, vector<2x32xf32>,
    %190 = vector.extract_strided_slice %72 {offsets = [0, 39, 0], sizes = [2, 1, 32], strides = [1, 1, 1]} : vector<2x128x32xf32> to vector<2x1x32xf32>
    %191 = vector.shape_cast %190 : vector<2x1x32xf32> to vector<2x32xf32>
    %c0_64 = arith.constant 0 : index
    %c1248 = arith.constant 1248 : index
    %192 = vector.load %arg8[%c0_64, %c1248] : memref<2x4096xf32, #tpu.memory_space<vmem>>, vector<2x32xf32>
    tpu.vector_store %arg8[%c0_64, %c1248], %191 {strides = array<i32>} : memref<2x4096xf32, #tpu.memory_space<vmem>>, vector<2x32xf32>,
    %193 = vector.extract_strided_slice %72 {offsets = [0, 40, 0], sizes = [2, 1, 32], strides = [1, 1, 1]} : vector<2x128x32xf32> to vector<2x1x32xf32>
    %194 = vector.shape_cast %193 : vector<2x1x32xf32> to vector<2x32xf32>
    %c0_65 = arith.constant 0 : index
    %c1280 = arith.constant 1280 : index
    %195 = vector.load %arg8[%c0_65, %c1280] : memref<2x4096xf32, #tpu.memory_space<vmem>>, vector<2x32xf32>
    tpu.vector_store %arg8[%c0_65, %c1280], %194 {strides = array<i32>} : memref<2x4096xf32, #tpu.memory_space<vmem>>, vector<2x32xf32>,
    %196 = vector.extract_strided_slice %72 {offsets = [0, 41, 0], sizes = [2, 1, 32], strides = [1, 1, 1]} : vector<2x128x32xf32> to vector<2x1x32xf32>
    %197 = vector.shape_cast %196 : vector<2x1x32xf32> to vector<2x32xf32>
    %c0_66 = arith.constant 0 : index
    %c1312 = arith.constant 1312 : index
    %198 = vector.load %arg8[%c0_66, %c1312] : memref<2x4096xf32, #tpu.memory_space<vmem>>, vector<2x32xf32>
    tpu.vector_store %arg8[%c0_66, %c1312], %197 {strides = array<i32>} : memref<2x4096xf32, #tpu.memory_space<vmem>>, vector<2x32xf32>,
    %199 = vector.extract_strided_slice %72 {offsets = [0, 42, 0], sizes = [2, 1, 32], strides = [1, 1, 1]} : vector<2x128x32xf32> to vector<2x1x32xf32>
    %200 = vector.shape_cast %199 : vector<2x1x32xf32> to vector<2x32xf32>
    %c0_67 = arith.constant 0 : index
    %c1344 = arith.constant 1344 : index
    %201 = vector.load %arg8[%c0_67, %c1344] : memref<2x4096xf32, #tpu.memory_space<vmem>>, vector<2x32xf32>
    tpu.vector_store %arg8[%c0_67, %c1344], %200 {strides = array<i32>} : memref<2x4096xf32, #tpu.memory_space<vmem>>, vector<2x32xf32>,
    %202 = vector.extract_strided_slice %72 {offsets = [0, 43, 0], sizes = [2, 1, 32], strides = [1, 1, 1]} : vector<2x128x32xf32> to vector<2x1x32xf32>
    %203 = vector.shape_cast %202 : vector<2x1x32xf32> to vector<2x32xf32>
    %c0_68 = arith.constant 0 : index
    %c1376 = arith.constant 1376 : index
    %204 = vector.load %arg8[%c0_68, %c1376] : memref<2x4096xf32, #tpu.memory_space<vmem>>, vector<2x32xf32>
    tpu.vector_store %arg8[%c0_68, %c1376], %203 {strides = array<i32>} : memref<2x4096xf32, #tpu.memory_space<vmem>>, vector<2x32xf32>,
    %205 = vector.extract_strided_slice %72 {offsets = [0, 44, 0], sizes = [2, 1, 32], strides = [1, 1, 1]} : vector<2x128x32xf32> to vector<2x1x32xf32>
    %206 = vector.shape_cast %205 : vector<2x1x32xf32> to vector<2x32xf32>
    %c0_69 = arith.constant 0 : index
    %c1408 = arith.constant 1408 : index
    %207 = vector.load %arg8[%c0_69, %c1408] : memref<2x4096xf32, #tpu.memory_space<vmem>>, vector<2x32xf32>
    tpu.vector_store %arg8[%c0_69, %c1408], %206 {strides = array<i32>} : memref<2x4096xf32, #tpu.memory_space<vmem>>, vector<2x32xf32>,
    %208 = vector.extract_strided_slice %72 {offsets = [0, 45, 0], sizes = [2, 1, 32], strides = [1, 1, 1]} : vector<2x128x32xf32> to vector<2x1x32xf32>
    %209 = vector.shape_cast %208 : vector<2x1x32xf32> to vector<2x32xf32>
    %c0_70 = arith.constant 0 : index
    %c1440 = arith.constant 1440 : index
    %210 = vector.load %arg8[%c0_70, %c1440] : memref<2x4096xf32, #tpu.memory_space<vmem>>, vector<2x32xf32>
    tpu.vector_store %arg8[%c0_70, %c1440], %209 {strides = array<i32>} : memref<2x4096xf32, #tpu.memory_space<vmem>>, vector<2x32xf32>,
    %211 = vector.extract_strided_slice %72 {offsets = [0, 46, 0], sizes = [2, 1, 32], strides = [1, 1, 1]} : vector<2x128x32xf32> to vector<2x1x32xf32>
    %212 = vector.shape_cast %211 : vector<2x1x32xf32> to vector<2x32xf32>
    %c0_71 = arith.constant 0 : index
    %c1472 = arith.constant 1472 : index
    %213 = vector.load %arg8[%c0_71, %c1472] : memref<2x4096xf32, #tpu.memory_space<vmem>>, vector<2x32xf32>
    tpu.vector_store %arg8[%c0_71, %c1472], %212 {strides = array<i32>} : memref<2x4096xf32, #tpu.memory_space<vmem>>, vector<2x32xf32>,
    %214 = vector.extract_strided_slice %72 {offsets = [0, 47, 0], sizes = [2, 1, 32], strides = [1, 1, 1]} : vector<2x128x32xf32> to vector<2x1x32xf32>
    %215 = vector.shape_cast %214 : vector<2x1x32xf32> to vector<2x32xf32>
    %c0_72 = arith.constant 0 : index
    %c1504 = arith.constant 1504 : index
    %216 = vector.load %arg8[%c0_72, %c1504] : memref<2x4096xf32, #tpu.memory_space<vmem>>, vector<2x32xf32>
    tpu.vector_store %arg8[%c0_72, %c1504], %215 {strides = array<i32>} : memref<2x4096xf32, #tpu.memory_space<vmem>>, vector<2x32xf32>,
    %217 = vector.extract_strided_slice %72 {offsets = [0, 48, 0], sizes = [2, 1, 32], strides = [1, 1, 1]} : vector<2x128x32xf32> to vector<2x1x32xf32>
    %218 = vector.shape_cast %217 : vector<2x1x32xf32> to vector<2x32xf32>
    %c0_73 = arith.constant 0 : index
    %c1536 = arith.constant 1536 : index
    %219 = vector.load %arg8[%c0_73, %c1536] : memref<2x4096xf32, #tpu.memory_space<vmem>>, vector<2x32xf32>
    tpu.vector_store %arg8[%c0_73, %c1536], %218 {strides = array<i32>} : memref<2x4096xf32, #tpu.memory_space<vmem>>, vector<2x32xf32>,
    %220 = vector.extract_strided_slice %72 {offsets = [0, 49, 0], sizes = [2, 1, 32], strides = [1, 1, 1]} : vector<2x128x32xf32> to vector<2x1x32xf32>
    %221 = vector.shape_cast %220 : vector<2x1x32xf32> to vector<2x32xf32>
    %c0_74 = arith.constant 0 : index
    %c1568 = arith.constant 1568 : index
    %222 = vector.load %arg8[%c0_74, %c1568] : memref<2x4096xf32, #tpu.memory_space<vmem>>, vector<2x32xf32>
    tpu.vector_store %arg8[%c0_74, %c1568], %221 {strides = array<i32>} : memref<2x4096xf32, #tpu.memory_space<vmem>>, vector<2x32xf32>,
    %223 = vector.extract_strided_slice %72 {offsets = [0, 50, 0], sizes = [2, 1, 32], strides = [1, 1, 1]} : vector<2x128x32xf32> to vector<2x1x32xf32>
    %224 = vector.shape_cast %223 : vector<2x1x32xf32> to vector<2x32xf32>
    %c0_75 = arith.constant 0 : index
    %c1600 = arith.constant 1600 : index
    %225 = vector.load %arg8[%c0_75, %c1600] : memref<2x4096xf32, #tpu.memory_space<vmem>>, vector<2x32xf32>
    tpu.vector_store %arg8[%c0_75, %c1600], %224 {strides = array<i32>} : memref<2x4096xf32, #tpu.memory_space<vmem>>, vector<2x32xf32>,
    %226 = vector.extract_strided_slice %72 {offsets = [0, 51, 0], sizes = [2, 1, 32], strides = [1, 1, 1]} : vector<2x128x32xf32> to vector<2x1x32xf32>
    %227 = vector.shape_cast %226 : vector<2x1x32xf32> to vector<2x32xf32>
    %c0_76 = arith.constant 0 : index
    %c1632 = arith.constant 1632 : index
    %228 = vector.load %arg8[%c0_76, %c1632] : memref<2x4096xf32, #tpu.memory_space<vmem>>, vector<2x32xf32>
    tpu.vector_store %arg8[%c0_76, %c1632], %227 {strides = array<i32>} : memref<2x4096xf32, #tpu.memory_space<vmem>>, vector<2x32xf32>,
    %229 = vector.extract_strided_slice %72 {offsets = [0, 52, 0], sizes = [2, 1, 32], strides = [1, 1, 1]} : vector<2x128x32xf32> to vector<2x1x32xf32>
    %230 = vector.shape_cast %229 : vector<2x1x32xf32> to vector<2x32xf32>
    %c0_77 = arith.constant 0 : index
    %c1664 = arith.constant 1664 : index
    %231 = vector.load %arg8[%c0_77, %c1664] : memref<2x4096xf32, #tpu.memory_space<vmem>>, vector<2x32xf32>
    tpu.vector_store %arg8[%c0_77, %c1664], %230 {strides = array<i32>} : memref<2x4096xf32, #tpu.memory_space<vmem>>, vector<2x32xf32>,
    %232 = vector.extract_strided_slice %72 {offsets = [0, 53, 0], sizes = [2, 1, 32], strides = [1, 1, 1]} : vector<2x128x32xf32> to vector<2x1x32xf32>
    %233 = vector.shape_cast %232 : vector<2x1x32xf32> to vector<2x32xf32>
    %c0_78 = arith.constant 0 : index
    %c1696 = arith.constant 1696 : index
    %234 = vector.load %arg8[%c0_78, %c1696] : memref<2x4096xf32, #tpu.memory_space<vmem>>, vector<2x32xf32>
    tpu.vector_store %arg8[%c0_78, %c1696], %233 {strides = array<i32>} : memref<2x4096xf32, #tpu.memory_space<vmem>>, vector<2x32xf32>,
    %235 = vector.extract_strided_slice %72 {offsets = [0, 54, 0], sizes = [2, 1, 32], strides = [1, 1, 1]} : vector<2x128x32xf32> to vector<2x1x32xf32>
    %236 = vector.shape_cast %235 : vector<2x1x32xf32> to vector<2x32xf32>
    %c0_79 = arith.constant 0 : index
    %c1728 = arith.constant 1728 : index
    %237 = vector.load %arg8[%c0_79, %c1728] : memref<2x4096xf32, #tpu.memory_space<vmem>>, vector<2x32xf32>
    tpu.vector_store %arg8[%c0_79, %c1728], %236 {strides = array<i32>} : memref<2x4096xf32, #tpu.memory_space<vmem>>, vector<2x32xf32>,
    %238 = vector.extract_strided_slice %72 {offsets = [0, 55, 0], sizes = [2, 1, 32], strides = [1, 1, 1]} : vector<2x128x32xf32> to vector<2x1x32xf32>
    %239 = vector.shape_cast %238 : vector<2x1x32xf32> to vector<2x32xf32>
    %c0_80 = arith.constant 0 : index
    %c1760 = arith.constant 1760 : index
    %240 = vector.load %arg8[%c0_80, %c1760] : memref<2x4096xf32, #tpu.memory_space<vmem>>, vector<2x32xf32>
    tpu.vector_store %arg8[%c0_80, %c1760], %239 {strides = array<i32>} : memref<2x4096xf32, #tpu.memory_space<vmem>>, vector<2x32xf32>,
    %241 = vector.extract_strided_slice %72 {offsets = [0, 56, 0], sizes = [2, 1, 32], strides = [1, 1, 1]} : vector<2x128x32xf32> to vector<2x1x32xf32>
    %242 = vector.shape_cast %241 : vector<2x1x32xf32> to vector<2x32xf32>
    %c0_81 = arith.constant 0 : index
    %c1792 = arith.constant 1792 : index
    %243 = vector.load %arg8[%c0_81, %c1792] : memref<2x4096xf32, #tpu.memory_space<vmem>>, vector<2x32xf32>
    tpu.vector_store %arg8[%c0_81, %c1792], %242 {strides = array<i32>} : memref<2x4096xf32, #tpu.memory_space<vmem>>, vector<2x32xf32>,
    %244 = vector.extract_strided_slice %72 {offsets = [0, 57, 0], sizes = [2, 1, 32], strides = [1, 1, 1]} : vector<2x128x32xf32> to vector<2x1x32xf32>
    %245 = vector.shape_cast %244 : vector<2x1x32xf32> to vector<2x32xf32>
    %c0_82 = arith.constant 0 : index
    %c1824 = arith.constant 1824 : index
    %246 = vector.load %arg8[%c0_82, %c1824] : memref<2x4096xf32, #tpu.memory_space<vmem>>, vector<2x32xf32>
    tpu.vector_store %arg8[%c0_82, %c1824], %245 {strides = array<i32>} : memref<2x4096xf32, #tpu.memory_space<vmem>>, vector<2x32xf32>,
    %247 = vector.extract_strided_slice %72 {offsets = [0, 58, 0], sizes = [2, 1, 32], strides = [1, 1, 1]} : vector<2x128x32xf32> to vector<2x1x32xf32>
    %248 = vector.shape_cast %247 : vector<2x1x32xf32> to vector<2x32xf32>
    %c0_83 = arith.constant 0 : index
    %c1856 = arith.constant 1856 : index
    %249 = vector.load %arg8[%c0_83, %c1856] : memref<2x4096xf32, #tpu.memory_space<vmem>>, vector<2x32xf32>
    tpu.vector_store %arg8[%c0_83, %c1856], %248 {strides = array<i32>} : memref<2x4096xf32, #tpu.memory_space<vmem>>, vector<2x32xf32>,
    %250 = vector.extract_strided_slice %72 {offsets = [0, 59, 0], sizes = [2, 1, 32], strides = [1, 1, 1]} : vector<2x128x32xf32> to vector<2x1x32xf32>
    %251 = vector.shape_cast %250 : vector<2x1x32xf32> to vector<2x32xf32>
    %c0_84 = arith.constant 0 : index
    %c1888 = arith.constant 1888 : index
    %252 = vector.load %arg8[%c0_84, %c1888] : memref<2x4096xf32, #tpu.memory_space<vmem>>, vector<2x32xf32>
    tpu.vector_store %arg8[%c0_84, %c1888], %251 {strides = array<i32>} : memref<2x4096xf32, #tpu.memory_space<vmem>>, vector<2x32xf32>,
    %253 = vector.extract_strided_slice %72 {offsets = [0, 60, 0], sizes = [2, 1, 32], strides = [1, 1, 1]} : vector<2x128x32xf32> to vector<2x1x32xf32>
    %254 = vector.shape_cast %253 : vector<2x1x32xf32> to vector<2x32xf32>
    %c0_85 = arith.constant 0 : index
    %c1920 = arith.constant 1920 : index
    %255 = vector.load %arg8[%c0_85, %c1920] : memref<2x4096xf32, #tpu.memory_space<vmem>>, vector<2x32xf32>
    tpu.vector_store %arg8[%c0_85, %c1920], %254 {strides = array<i32>} : memref<2x4096xf32, #tpu.memory_space<vmem>>, vector<2x32xf32>,
    %256 = vector.extract_strided_slice %72 {offsets = [0, 61, 0], sizes = [2, 1, 32], strides = [1, 1, 1]} : vector<2x128x32xf32> to vector<2x1x32xf32>
    %257 = vector.shape_cast %256 : vector<2x1x32xf32> to vector<2x32xf32>
    %c0_86 = arith.constant 0 : index
    %c1952 = arith.constant 1952 : index
    %258 = vector.load %arg8[%c0_86, %c1952] : memref<2x4096xf32, #tpu.memory_space<vmem>>, vector<2x32xf32>
    tpu.vector_store %arg8[%c0_86, %c1952], %257 {strides = array<i32>} : memref<2x4096xf32, #tpu.memory_space<vmem>>, vector<2x32xf32>,
    %259 = vector.extract_strided_slice %72 {offsets = [0, 62, 0], sizes = [2, 1, 32], strides = [1, 1, 1]} : vector<2x128x32xf32> to vector<2x1x32xf32>
    %260 = vector.shape_cast %259 : vector<2x1x32xf32> to vector<2x32xf32>
    %c0_87 = arith.constant 0 : index
    %c1984 = arith.constant 1984 : index
    %261 = vector.load %arg8[%c0_87, %c1984] : memref<2x4096xf32, #tpu.memory_space<vmem>>, vector<2x32xf32>
    tpu.vector_store %arg8[%c0_87, %c1984], %260 {strides = array<i32>} : memref<2x4096xf32, #tpu.memory_space<vmem>>, vector<2x32xf32>,
    %262 = vector.extract_strided_slice %72 {offsets = [0, 63, 0], sizes = [2, 1, 32], strides = [1, 1, 1]} : vector<2x128x32xf32> to vector<2x1x32xf32>
    %263 = vector.shape_cast %262 : vector<2x1x32xf32> to vector<2x32xf32>
    %c0_88 = arith.constant 0 : index
    %c2016 = arith.constant 2016 : index
    %264 = vector.load %arg8[%c0_88, %c2016] : memref<2x4096xf32, #tpu.memory_space<vmem>>, vector<2x32xf32>
    tpu.vector_store %arg8[%c0_88, %c2016], %263 {strides = array<i32>} : memref<2x4096xf32, #tpu.memory_space<vmem>>, vector<2x32xf32>,
    %265 = vector.extract_strided_slice %72 {offsets = [0, 64, 0], sizes = [2, 1, 32], strides = [1, 1, 1]} : vector<2x128x32xf32> to vector<2x1x32xf32>
    %266 = vector.shape_cast %265 : vector<2x1x32xf32> to vector<2x32xf32>
    %c0_89 = arith.constant 0 : index
    %c2048 = arith.constant 2048 : index
    %267 = vector.load %arg8[%c0_89, %c2048] : memref<2x4096xf32, #tpu.memory_space<vmem>>, vector<2x32xf32>
    tpu.vector_store %arg8[%c0_89, %c2048], %266 {strides = array<i32>} : memref<2x4096xf32, #tpu.memory_space<vmem>>, vector<2x32xf32>,
    %268 = vector.extract_strided_slice %72 {offsets = [0, 65, 0], sizes = [2, 1, 32], strides = [1, 1, 1]} : vector<2x128x32xf32> to vector<2x1x32xf32>
    %269 = vector.shape_cast %268 : vector<2x1x32xf32> to vector<2x32xf32>
    %c0_90 = arith.constant 0 : index
    %c2080 = arith.constant 2080 : index
    %270 = vector.load %arg8[%c0_90, %c2080] : memref<2x4096xf32, #tpu.memory_space<vmem>>, vector<2x32xf32>
    tpu.vector_store %arg8[%c0_90, %c2080], %269 {strides = array<i32>} : memref<2x4096xf32, #tpu.memory_space<vmem>>, vector<2x32xf32>,
    %271 = vector.extract_strided_slice %72 {offsets = [0, 66, 0], sizes = [2, 1, 32], strides = [1, 1, 1]} : vector<2x128x32xf32> to vector<2x1x32xf32>
    %272 = vector.shape_cast %271 : vector<2x1x32xf32> to vector<2x32xf32>
    %c0_91 = arith.constant 0 : index
    %c2112 = arith.constant 2112 : index
    %273 = vector.load %arg8[%c0_91, %c2112] : memref<2x4096xf32, #tpu.memory_space<vmem>>, vector<2x32xf32>
    tpu.vector_store %arg8[%c0_91, %c2112], %272 {strides = array<i32>} : memref<2x4096xf32, #tpu.memory_space<vmem>>, vector<2x32xf32>,
    %274 = vector.extract_strided_slice %72 {offsets = [0, 67, 0], sizes = [2, 1, 32], strides = [1, 1, 1]} : vector<2x128x32xf32> to vector<2x1x32xf32>
    %275 = vector.shape_cast %274 : vector<2x1x32xf32> to vector<2x32xf32>
    %c0_92 = arith.constant 0 : index
    %c2144 = arith.constant 2144 : index
    %276 = vector.load %arg8[%c0_92, %c2144] : memref<2x4096xf32, #tpu.memory_space<vmem>>, vector<2x32xf32>
    tpu.vector_store %arg8[%c0_92, %c2144], %275 {strides = array<i32>} : memref<2x4096xf32, #tpu.memory_space<vmem>>, vector<2x32xf32>,
    %277 = vector.extract_strided_slice %72 {offsets = [0, 68, 0], sizes = [2, 1, 32], strides = [1, 1, 1]} : vector<2x128x32xf32> to vector<2x1x32xf32>
    %278 = vector.shape_cast %277 : vector<2x1x32xf32> to vector<2x32xf32>
    %c0_93 = arith.constant 0 : index
    %c2176 = arith.constant 2176 : index
    %279 = vector.load %arg8[%c0_93, %c2176] : memref<2x4096xf32, #tpu.memory_space<vmem>>, vector<2x32xf32>
    tpu.vector_store %arg8[%c0_93, %c2176], %278 {strides = array<i32>} : memref<2x4096xf32, #tpu.memory_space<vmem>>, vector<2x32xf32>,
    %280 = vector.extract_strided_slice %72 {offsets = [0, 69, 0], sizes = [2, 1, 32], strides = [1, 1, 1]} : vector<2x128x32xf32> to vector<2x1x32xf32>
    %281 = vector.shape_cast %280 : vector<2x1x32xf32> to vector<2x32xf32>
    %c0_94 = arith.constant 0 : index
    %c2208 = arith.constant 2208 : index
    %282 = vector.load %arg8[%c0_94, %c2208] : memref<2x4096xf32, #tpu.memory_space<vmem>>, vector<2x32xf32>
    tpu.vector_store %arg8[%c0_94, %c2208], %281 {strides = array<i32>} : memref<2x4096xf32, #tpu.memory_space<vmem>>, vector<2x32xf32>,
    %283 = vector.extract_strided_slice %72 {offsets = [0, 70, 0], sizes = [2, 1, 32], strides = [1, 1, 1]} : vector<2x128x32xf32> to vector<2x1x32xf32>
    %284 = vector.shape_cast %283 : vector<2x1x32xf32> to vector<2x32xf32>
    %c0_95 = arith.constant 0 : index
    %c2240 = arith.constant 2240 : index
    %285 = vector.load %arg8[%c0_95, %c2240] : memref<2x4096xf32, #tpu.memory_space<vmem>>, vector<2x32xf32>
    tpu.vector_store %arg8[%c0_95, %c2240], %284 {strides = array<i32>} : memref<2x4096xf32, #tpu.memory_space<vmem>>, vector<2x32xf32>,
    %286 = vector.extract_strided_slice %72 {offsets = [0, 71, 0], sizes = [2, 1, 32], strides = [1, 1, 1]} : vector<2x128x32xf32> to vector<2x1x32xf32>
    %287 = vector.shape_cast %286 : vector<2x1x32xf32> to vector<2x32xf32>
    %c0_96 = arith.constant 0 : index
    %c2272 = arith.constant 2272 : index
    %288 = vector.load %arg8[%c0_96, %c2272] : memref<2x4096xf32, #tpu.memory_space<vmem>>, vector<2x32xf32>
    tpu.vector_store %arg8[%c0_96, %c2272], %287 {strides = array<i32>} : memref<2x4096xf32, #tpu.memory_space<vmem>>, vector<2x32xf32>,
    %289 = vector.extract_strided_slice %72 {offsets = [0, 72, 0], sizes = [2, 1, 32], strides = [1, 1, 1]} : vector<2x128x32xf32> to vector<2x1x32xf32>
    %290 = vector.shape_cast %289 : vector<2x1x32xf32> to vector<2x32xf32>
    %c0_97 = arith.constant 0 : index
    %c2304 = arith.constant 2304 : index
    %291 = vector.load %arg8[%c0_97, %c2304] : memref<2x4096xf32, #tpu.memory_space<vmem>>, vector<2x32xf32>
    tpu.vector_store %arg8[%c0_97, %c2304], %290 {strides = array<i32>} : memref<2x4096xf32, #tpu.memory_space<vmem>>, vector<2x32xf32>,
    %292 = vector.extract_strided_slice %72 {offsets = [0, 73, 0], sizes = [2, 1, 32], strides = [1, 1, 1]} : vector<2x128x32xf32> to vector<2x1x32xf32>
    %293 = vector.shape_cast %292 : vector<2x1x32xf32> to vector<2x32xf32>
    %c0_98 = arith.constant 0 : index
    %c2336 = arith.constant 2336 : index
    %294 = vector.load %arg8[%c0_98, %c2336] : memref<2x4096xf32, #tpu.memory_space<vmem>>, vector<2x32xf32>
    tpu.vector_store %arg8[%c0_98, %c2336], %293 {strides = array<i32>} : memref<2x4096xf32, #tpu.memory_space<vmem>>, vector<2x32xf32>,
    %295 = vector.extract_strided_slice %72 {offsets = [0, 74, 0], sizes = [2, 1, 32], strides = [1, 1, 1]} : vector<2x128x32xf32> to vector<2x1x32xf32>
    %296 = vector.shape_cast %295 : vector<2x1x32xf32> to vector<2x32xf32>
    %c0_99 = arith.constant 0 : index
    %c2368 = arith.constant 2368 : index
    %297 = vector.load %arg8[%c0_99, %c2368] : memref<2x4096xf32, #tpu.memory_space<vmem>>, vector<2x32xf32>
    tpu.vector_store %arg8[%c0_99, %c2368], %296 {strides = array<i32>} : memref<2x4096xf32, #tpu.memory_space<vmem>>, vector<2x32xf32>,
    %298 = vector.extract_strided_slice %72 {offsets = [0, 75, 0], sizes = [2, 1, 32], strides = [1, 1, 1]} : vector<2x128x32xf32> to vector<2x1x32xf32>
    %299 = vector.shape_cast %298 : vector<2x1x32xf32> to vector<2x32xf32>
    %c0_100 = arith.constant 0 : index
    %c2400 = arith.constant 2400 : index
    %300 = vector.load %arg8[%c0_100, %c2400] : memref<2x4096xf32, #tpu.memory_space<vmem>>, vector<2x32xf32>
    tpu.vector_store %arg8[%c0_100, %c2400], %299 {strides = array<i32>} : memref<2x4096xf32, #tpu.memory_space<vmem>>, vector<2x32xf32>,
    %301 = vector.extract_strided_slice %72 {offsets = [0, 76, 0], sizes = [2, 1, 32], strides = [1, 1, 1]} : vector<2x128x32xf32> to vector<2x1x32xf32>
    %302 = vector.shape_cast %301 : vector<2x1x32xf32> to vector<2x32xf32>
    %c0_101 = arith.constant 0 : index
    %c2432 = arith.constant 2432 : index
    %303 = vector.load %arg8[%c0_101, %c2432] : memref<2x4096xf32, #tpu.memory_space<vmem>>, vector<2x32xf32>
    tpu.vector_store %arg8[%c0_101, %c2432], %302 {strides = array<i32>} : memref<2x4096xf32, #tpu.memory_space<vmem>>, vector<2x32xf32>,
    %304 = vector.extract_strided_slice %72 {offsets = [0, 77, 0], sizes = [2, 1, 32], strides = [1, 1, 1]} : vector<2x128x32xf32> to vector<2x1x32xf32>
    %305 = vector.shape_cast %304 : vector<2x1x32xf32> to vector<2x32xf32>
    %c0_102 = arith.constant 0 : index
    %c2464 = arith.constant 2464 : index
    %306 = vector.load %arg8[%c0_102, %c2464] : memref<2x4096xf32, #tpu.memory_space<vmem>>, vector<2x32xf32>
    tpu.vector_store %arg8[%c0_102, %c2464], %305 {strides = array<i32>} : memref<2x4096xf32, #tpu.memory_space<vmem>>, vector<2x32xf32>,
    %307 = vector.extract_strided_slice %72 {offsets = [0, 78, 0], sizes = [2, 1, 32], strides = [1, 1, 1]} : vector<2x128x32xf32> to vector<2x1x32xf32>
    %308 = vector.shape_cast %307 : vector<2x1x32xf32> to vector<2x32xf32>
    %c0_103 = arith.constant 0 : index
    %c2496 = arith.constant 2496 : index
    %309 = vector.load %arg8[%c0_103, %c2496] : memref<2x4096xf32, #tpu.memory_space<vmem>>, vector<2x32xf32>
    tpu.vector_store %arg8[%c0_103, %c2496], %308 {strides = array<i32>} : memref<2x4096xf32, #tpu.memory_space<vmem>>, vector<2x32xf32>,
    %310 = vector.extract_strided_slice %72 {offsets = [0, 79, 0], sizes = [2, 1, 32], strides = [1, 1, 1]} : vector<2x128x32xf32> to vector<2x1x32xf32>
    %311 = vector.shape_cast %310 : vector<2x1x32xf32> to vector<2x32xf32>
    %c0_104 = arith.constant 0 : index
    %c2528 = arith.constant 2528 : index
    %312 = vector.load %arg8[%c0_104, %c2528] : memref<2x4096xf32, #tpu.memory_space<vmem>>, vector<2x32xf32>
    tpu.vector_store %arg8[%c0_104, %c2528], %311 {strides = array<i32>} : memref<2x4096xf32, #tpu.memory_space<vmem>>, vector<2x32xf32>,
    %313 = vector.extract_strided_slice %72 {offsets = [0, 80, 0], sizes = [2, 1, 32], strides = [1, 1, 1]} : vector<2x128x32xf32> to vector<2x1x32xf32>
    %314 = vector.shape_cast %313 : vector<2x1x32xf32> to vector<2x32xf32>
    %c0_105 = arith.constant 0 : index
    %c2560 = arith.constant 2560 : index
    %315 = vector.load %arg8[%c0_105, %c2560] : memref<2x4096xf32, #tpu.memory_space<vmem>>, vector<2x32xf32>
    tpu.vector_store %arg8[%c0_105, %c2560], %314 {strides = array<i32>} : memref<2x4096xf32, #tpu.memory_space<vmem>>, vector<2x32xf32>,
    %316 = vector.extract_strided_slice %72 {offsets = [0, 81, 0], sizes = [2, 1, 32], strides = [1, 1, 1]} : vector<2x128x32xf32> to vector<2x1x32xf32>
    %317 = vector.shape_cast %316 : vector<2x1x32xf32> to vector<2x32xf32>
    %c0_106 = arith.constant 0 : index
    %c2592 = arith.constant 2592 : index
    %318 = vector.load %arg8[%c0_106, %c2592] : memref<2x4096xf32, #tpu.memory_space<vmem>>, vector<2x32xf32>
    tpu.vector_store %arg8[%c0_106, %c2592], %317 {strides = array<i32>} : memref<2x4096xf32, #tpu.memory_space<vmem>>, vector<2x32xf32>,
    %319 = vector.extract_strided_slice %72 {offsets = [0, 82, 0], sizes = [2, 1, 32], strides = [1, 1, 1]} : vector<2x128x32xf32> to vector<2x1x32xf32>
    %320 = vector.shape_cast %319 : vector<2x1x32xf32> to vector<2x32xf32>
    %c0_107 = arith.constant 0 : index
    %c2624 = arith.constant 2624 : index
    %321 = vector.load %arg8[%c0_107, %c2624] : memref<2x4096xf32, #tpu.memory_space<vmem>>, vector<2x32xf32>
    tpu.vector_store %arg8[%c0_107, %c2624], %320 {strides = array<i32>} : memref<2x4096xf32, #tpu.memory_space<vmem>>, vector<2x32xf32>,
    %322 = vector.extract_strided_slice %72 {offsets = [0, 83, 0], sizes = [2, 1, 32], strides = [1, 1, 1]} : vector<2x128x32xf32> to vector<2x1x32xf32>
    %323 = vector.shape_cast %322 : vector<2x1x32xf32> to vector<2x32xf32>
    %c0_108 = arith.constant 0 : index
    %c2656 = arith.constant 2656 : index
    %324 = vector.load %arg8[%c0_108, %c2656] : memref<2x4096xf32, #tpu.memory_space<vmem>>, vector<2x32xf32>
    tpu.vector_store %arg8[%c0_108, %c2656], %323 {strides = array<i32>} : memref<2x4096xf32, #tpu.memory_space<vmem>>, vector<2x32xf32>,
    %325 = vector.extract_strided_slice %72 {offsets = [0, 84, 0], sizes = [2, 1, 32], strides = [1, 1, 1]} : vector<2x128x32xf32> to vector<2x1x32xf32>
    %326 = vector.shape_cast %325 : vector<2x1x32xf32> to vector<2x32xf32>
    %c0_109 = arith.constant 0 : index
    %c2688 = arith.constant 2688 : index
    %327 = vector.load %arg8[%c0_109, %c2688] : memref<2x4096xf32, #tpu.memory_space<vmem>>, vector<2x32xf32>
    tpu.vector_store %arg8[%c0_109, %c2688], %326 {strides = array<i32>} : memref<2x4096xf32, #tpu.memory_space<vmem>>, vector<2x32xf32>,
    %328 = vector.extract_strided_slice %72 {offsets = [0, 85, 0], sizes = [2, 1, 32], strides = [1, 1, 1]} : vector<2x128x32xf32> to vector<2x1x32xf32>
    %329 = vector.shape_cast %328 : vector<2x1x32xf32> to vector<2x32xf32>
    %c0_110 = arith.constant 0 : index
    %c2720 = arith.constant 2720 : index
    %330 = vector.load %arg8[%c0_110, %c2720] : memref<2x4096xf32, #tpu.memory_space<vmem>>, vector<2x32xf32>
    tpu.vector_store %arg8[%c0_110, %c2720], %329 {strides = array<i32>} : memref<2x4096xf32, #tpu.memory_space<vmem>>, vector<2x32xf32>,
    %331 = vector.extract_strided_slice %72 {offsets = [0, 86, 0], sizes = [2, 1, 32], strides = [1, 1, 1]} : vector<2x128x32xf32> to vector<2x1x32xf32>
    %332 = vector.shape_cast %331 : vector<2x1x32xf32> to vector<2x32xf32>
    %c0_111 = arith.constant 0 : index
    %c2752 = arith.constant 2752 : index
    %333 = vector.load %arg8[%c0_111, %c2752] : memref<2x4096xf32, #tpu.memory_space<vmem>>, vector<2x32xf32>
    tpu.vector_store %arg8[%c0_111, %c2752], %332 {strides = array<i32>} : memref<2x4096xf32, #tpu.memory_space<vmem>>, vector<2x32xf32>,
    %334 = vector.extract_strided_slice %72 {offsets = [0, 87, 0], sizes = [2, 1, 32], strides = [1, 1, 1]} : vector<2x128x32xf32> to vector<2x1x32xf32>
    %335 = vector.shape_cast %334 : vector<2x1x32xf32> to vector<2x32xf32>
    %c0_112 = arith.constant 0 : index
    %c2784 = arith.constant 2784 : index
    %336 = vector.load %arg8[%c0_112, %c2784] : memref<2x4096xf32, #tpu.memory_space<vmem>>, vector<2x32xf32>
    tpu.vector_store %arg8[%c0_112, %c2784], %335 {strides = array<i32>} : memref<2x4096xf32, #tpu.memory_space<vmem>>, vector<2x32xf32>,
    %337 = vector.extract_strided_slice %72 {offsets = [0, 88, 0], sizes = [2, 1, 32], strides = [1, 1, 1]} : vector<2x128x32xf32> to vector<2x1x32xf32>
    %338 = vector.shape_cast %337 : vector<2x1x32xf32> to vector<2x32xf32>
    %c0_113 = arith.constant 0 : index
    %c2816 = arith.constant 2816 : index
    %339 = vector.load %arg8[%c0_113, %c2816] : memref<2x4096xf32, #tpu.memory_space<vmem>>, vector<2x32xf32>
    tpu.vector_store %arg8[%c0_113, %c2816], %338 {strides = array<i32>} : memref<2x4096xf32, #tpu.memory_space<vmem>>, vector<2x32xf32>,
    %340 = vector.extract_strided_slice %72 {offsets = [0, 89, 0], sizes = [2, 1, 32], strides = [1, 1, 1]} : vector<2x128x32xf32> to vector<2x1x32xf32>
    %341 = vector.shape_cast %340 : vector<2x1x32xf32> to vector<2x32xf32>
    %c0_114 = arith.constant 0 : index
    %c2848 = arith.constant 2848 : index
    %342 = vector.load %arg8[%c0_114, %c2848] : memref<2x4096xf32, #tpu.memory_space<vmem>>, vector<2x32xf32>
    tpu.vector_store %arg8[%c0_114, %c2848], %341 {strides = array<i32>} : memref<2x4096xf32, #tpu.memory_space<vmem>>, vector<2x32xf32>,
    %343 = vector.extract_strided_slice %72 {offsets = [0, 90, 0], sizes = [2, 1, 32], strides = [1, 1, 1]} : vector<2x128x32xf32> to vector<2x1x32xf32>
    %344 = vector.shape_cast %343 : vector<2x1x32xf32> to vector<2x32xf32>
    %c0_115 = arith.constant 0 : index
    %c2880 = arith.constant 2880 : index
    %345 = vector.load %arg8[%c0_115, %c2880] : memref<2x4096xf32, #tpu.memory_space<vmem>>, vector<2x32xf32>
    tpu.vector_store %arg8[%c0_115, %c2880], %344 {strides = array<i32>} : memref<2x4096xf32, #tpu.memory_space<vmem>>, vector<2x32xf32>,
    %346 = vector.extract_strided_slice %72 {offsets = [0, 91, 0], sizes = [2, 1, 32], strides = [1, 1, 1]} : vector<2x128x32xf32> to vector<2x1x32xf32>
    %347 = vector.shape_cast %346 : vector<2x1x32xf32> to vector<2x32xf32>
    %c0_116 = arith.constant 0 : index
    %c2912 = arith.constant 2912 : index
    %348 = vector.load %arg8[%c0_116, %c2912] : memref<2x4096xf32, #tpu.memory_space<vmem>>, vector<2x32xf32>
    tpu.vector_store %arg8[%c0_116, %c2912], %347 {strides = array<i32>} : memref<2x4096xf32, #tpu.memory_space<vmem>>, vector<2x32xf32>,
    %349 = vector.extract_strided_slice %72 {offsets = [0, 92, 0], sizes = [2, 1, 32], strides = [1, 1, 1]} : vector<2x128x32xf32> to vector<2x1x32xf32>
    %350 = vector.shape_cast %349 : vector<2x1x32xf32> to vector<2x32xf32>
    %c0_117 = arith.constant 0 : index
    %c2944 = arith.constant 2944 : index
    %351 = vector.load %arg8[%c0_117, %c2944] : memref<2x4096xf32, #tpu.memory_space<vmem>>, vector<2x32xf32>
    tpu.vector_store %arg8[%c0_117, %c2944], %350 {strides = array<i32>} : memref<2x4096xf32, #tpu.memory_space<vmem>>, vector<2x32xf32>,
    %352 = vector.extract_strided_slice %72 {offsets = [0, 93, 0], sizes = [2, 1, 32], strides = [1, 1, 1]} : vector<2x128x32xf32> to vector<2x1x32xf32>
    %353 = vector.shape_cast %352 : vector<2x1x32xf32> to vector<2x32xf32>
    %c0_118 = arith.constant 0 : index
    %c2976 = arith.constant 2976 : index
    %354 = vector.load %arg8[%c0_118, %c2976] : memref<2x4096xf32, #tpu.memory_space<vmem>>, vector<2x32xf32>
    tpu.vector_store %arg8[%c0_118, %c2976], %353 {strides = array<i32>} : memref<2x4096xf32, #tpu.memory_space<vmem>>, vector<2x32xf32>,
    %355 = vector.extract_strided_slice %72 {offsets = [0, 94, 0], sizes = [2, 1, 32], strides = [1, 1, 1]} : vector<2x128x32xf32> to vector<2x1x32xf32>
    %356 = vector.shape_cast %355 : vector<2x1x32xf32> to vector<2x32xf32>
    %c0_119 = arith.constant 0 : index
    %c3008 = arith.constant 3008 : index
    %357 = vector.load %arg8[%c0_119, %c3008] : memref<2x4096xf32, #tpu.memory_space<vmem>>, vector<2x32xf32>
    tpu.vector_store %arg8[%c0_119, %c3008], %356 {strides = array<i32>} : memref<2x4096xf32, #tpu.memory_space<vmem>>, vector<2x32xf32>,
    %358 = vector.extract_strided_slice %72 {offsets = [0, 95, 0], sizes = [2, 1, 32], strides = [1, 1, 1]} : vector<2x128x32xf32> to vector<2x1x32xf32>
    %359 = vector.shape_cast %358 : vector<2x1x32xf32> to vector<2x32xf32>
    %c0_120 = arith.constant 0 : index
    %c3040 = arith.constant 3040 : index
    %360 = vector.load %arg8[%c0_120, %c3040] : memref<2x4096xf32, #tpu.memory_space<vmem>>, vector<2x32xf32>
    tpu.vector_store %arg8[%c0_120, %c3040], %359 {strides = array<i32>} : memref<2x4096xf32, #tpu.memory_space<vmem>>, vector<2x32xf32>,
    %361 = vector.extract_strided_slice %72 {offsets = [0, 96, 0], sizes = [2, 1, 32], strides = [1, 1, 1]} : vector<2x128x32xf32> to vector<2x1x32xf32>
    %362 = vector.shape_cast %361 : vector<2x1x32xf32> to vector<2x32xf32>
    %c0_121 = arith.constant 0 : index
    %c3072 = arith.constant 3072 : index
    %363 = vector.load %arg8[%c0_121, %c3072] : memref<2x4096xf32, #tpu.memory_space<vmem>>, vector<2x32xf32>
    tpu.vector_store %arg8[%c0_121, %c3072], %362 {strides = array<i32>} : memref<2x4096xf32, #tpu.memory_space<vmem>>, vector<2x32xf32>,
    %364 = vector.extract_strided_slice %72 {offsets = [0, 97, 0], sizes = [2, 1, 32], strides = [1, 1, 1]} : vector<2x128x32xf32> to vector<2x1x32xf32>
    %365 = vector.shape_cast %364 : vector<2x1x32xf32> to vector<2x32xf32>
    %c0_122 = arith.constant 0 : index
    %c3104 = arith.constant 3104 : index
    %366 = vector.load %arg8[%c0_122, %c3104] : memref<2x4096xf32, #tpu.memory_space<vmem>>, vector<2x32xf32>
    tpu.vector_store %arg8[%c0_122, %c3104], %365 {strides = array<i32>} : memref<2x4096xf32, #tpu.memory_space<vmem>>, vector<2x32xf32>,
    %367 = vector.extract_strided_slice %72 {offsets = [0, 98, 0], sizes = [2, 1, 32], strides = [1, 1, 1]} : vector<2x128x32xf32> to vector<2x1x32xf32>
    %368 = vector.shape_cast %367 : vector<2x1x32xf32> to vector<2x32xf32>
    %c0_123 = arith.constant 0 : index
    %c3136 = arith.constant 3136 : index
    %369 = vector.load %arg8[%c0_123, %c3136] : memref<2x4096xf32, #tpu.memory_space<vmem>>, vector<2x32xf32>
    tpu.vector_store %arg8[%c0_123, %c3136], %368 {strides = array<i32>} : memref<2x4096xf32, #tpu.memory_space<vmem>>, vector<2x32xf32>,
    %370 = vector.extract_strided_slice %72 {offsets = [0, 99, 0], sizes = [2, 1, 32], strides = [1, 1, 1]} : vector<2x128x32xf32> to vector<2x1x32xf32>
    %371 = vector.shape_cast %370 : vector<2x1x32xf32> to vector<2x32xf32>
    %c0_124 = arith.constant 0 : index
    %c3168 = arith.constant 3168 : index
    %372 = vector.load %arg8[%c0_124, %c3168] : memref<2x4096xf32, #tpu.memory_space<vmem>>, vector<2x32xf32>
    tpu.vector_store %arg8[%c0_124, %c3168], %371 {strides = array<i32>} : memref<2x4096xf32, #tpu.memory_space<vmem>>, vector<2x32xf32>,
    %373 = vector.extract_strided_slice %72 {offsets = [0, 100, 0], sizes = [2, 1, 32], strides = [1, 1, 1]} : vector<2x128x32xf32> to vector<2x1x32xf32>
    %374 = vector.shape_cast %373 : vector<2x1x32xf32> to vector<2x32xf32>
    %c0_125 = arith.constant 0 : index
    %c3200 = arith.constant 3200 : index
    %375 = vector.load %arg8[%c0_125, %c3200] : memref<2x4096xf32, #tpu.memory_space<vmem>>, vector<2x32xf32>
    tpu.vector_store %arg8[%c0_125, %c3200], %374 {strides = array<i32>} : memref<2x4096xf32, #tpu.memory_space<vmem>>, vector<2x32xf32>,
    %376 = vector.extract_strided_slice %72 {offsets = [0, 101, 0], sizes = [2, 1, 32], strides = [1, 1, 1]} : vector<2x128x32xf32> to vector<2x1x32xf32>
    %377 = vector.shape_cast %376 : vector<2x1x32xf32> to vector<2x32xf32>
    %c0_126 = arith.constant 0 : index
    %c3232 = arith.constant 3232 : index
    %378 = vector.load %arg8[%c0_126, %c3232] : memref<2x4096xf32, #tpu.memory_space<vmem>>, vector<2x32xf32>
    tpu.vector_store %arg8[%c0_126, %c3232], %377 {strides = array<i32>} : memref<2x4096xf32, #tpu.memory_space<vmem>>, vector<2x32xf32>,
    %379 = vector.extract_strided_slice %72 {offsets = [0, 102, 0], sizes = [2, 1, 32], strides = [1, 1, 1]} : vector<2x128x32xf32> to vector<2x1x32xf32>
    %380 = vector.shape_cast %379 : vector<2x1x32xf32> to vector<2x32xf32>
    %c0_127 = arith.constant 0 : index
    %c3264 = arith.constant 3264 : index
    %381 = vector.load %arg8[%c0_127, %c3264] : memref<2x4096xf32, #tpu.memory_space<vmem>>, vector<2x32xf32>
    tpu.vector_store %arg8[%c0_127, %c3264], %380 {strides = array<i32>} : memref<2x4096xf32, #tpu.memory_space<vmem>>, vector<2x32xf32>,
    %382 = vector.extract_strided_slice %72 {offsets = [0, 103, 0], sizes = [2, 1, 32], strides = [1, 1, 1]} : vector<2x128x32xf32> to vector<2x1x32xf32>
    %383 = vector.shape_cast %382 : vector<2x1x32xf32> to vector<2x32xf32>
    %c0_128 = arith.constant 0 : index
    %c3296 = arith.constant 3296 : index
    %384 = vector.load %arg8[%c0_128, %c3296] : memref<2x4096xf32, #tpu.memory_space<vmem>>, vector<2x32xf32>
    tpu.vector_store %arg8[%c0_128, %c3296], %383 {strides = array<i32>} : memref<2x4096xf32, #tpu.memory_space<vmem>>, vector<2x32xf32>,
    %385 = vector.extract_strided_slice %72 {offsets = [0, 104, 0], sizes = [2, 1, 32], strides = [1, 1, 1]} : vector<2x128x32xf32> to vector<2x1x32xf32>
    %386 = vector.shape_cast %385 : vector<2x1x32xf32> to vector<2x32xf32>
    %c0_129 = arith.constant 0 : index
    %c3328 = arith.constant 3328 : index
    %387 = vector.load %arg8[%c0_129, %c3328] : memref<2x4096xf32, #tpu.memory_space<vmem>>, vector<2x32xf32>
    tpu.vector_store %arg8[%c0_129, %c3328], %386 {strides = array<i32>} : memref<2x4096xf32, #tpu.memory_space<vmem>>, vector<2x32xf32>,
    %388 = vector.extract_strided_slice %72 {offsets = [0, 105, 0], sizes = [2, 1, 32], strides = [1, 1, 1]} : vector<2x128x32xf32> to vector<2x1x32xf32>
    %389 = vector.shape_cast %388 : vector<2x1x32xf32> to vector<2x32xf32>
    %c0_130 = arith.constant 0 : index
    %c3360 = arith.constant 3360 : index
    %390 = vector.load %arg8[%c0_130, %c3360] : memref<2x4096xf32, #tpu.memory_space<vmem>>, vector<2x32xf32>
    tpu.vector_store %arg8[%c0_130, %c3360], %389 {strides = array<i32>} : memref<2x4096xf32, #tpu.memory_space<vmem>>, vector<2x32xf32>,
    %391 = vector.extract_strided_slice %72 {offsets = [0, 106, 0], sizes = [2, 1, 32], strides = [1, 1, 1]} : vector<2x128x32xf32> to vector<2x1x32xf32>
    %392 = vector.shape_cast %391 : vector<2x1x32xf32> to vector<2x32xf32>
    %c0_131 = arith.constant 0 : index
    %c3392 = arith.constant 3392 : index
    %393 = vector.load %arg8[%c0_131, %c3392] : memref<2x4096xf32, #tpu.memory_space<vmem>>, vector<2x32xf32>
    tpu.vector_store %arg8[%c0_131, %c3392], %392 {strides = array<i32>} : memref<2x4096xf32, #tpu.memory_space<vmem>>, vector<2x32xf32>,
    %394 = vector.extract_strided_slice %72 {offsets = [0, 107, 0], sizes = [2, 1, 32], strides = [1, 1, 1]} : vector<2x128x32xf32> to vector<2x1x32xf32>
    %395 = vector.shape_cast %394 : vector<2x1x32xf32> to vector<2x32xf32>
    %c0_132 = arith.constant 0 : index
    %c3424 = arith.constant 3424 : index
    %396 = vector.load %arg8[%c0_132, %c3424] : memref<2x4096xf32, #tpu.memory_space<vmem>>, vector<2x32xf32>
    tpu.vector_store %arg8[%c0_132, %c3424], %395 {strides = array<i32>} : memref<2x4096xf32, #tpu.memory_space<vmem>>, vector<2x32xf32>,
    %397 = vector.extract_strided_slice %72 {offsets = [0, 108, 0], sizes = [2, 1, 32], strides = [1, 1, 1]} : vector<2x128x32xf32> to vector<2x1x32xf32>
    %398 = vector.shape_cast %397 : vector<2x1x32xf32> to vector<2x32xf32>
    %c0_133 = arith.constant 0 : index
    %c3456 = arith.constant 3456 : index
    %399 = vector.load %arg8[%c0_133, %c3456] : memref<2x4096xf32, #tpu.memory_space<vmem>>, vector<2x32xf32>
    tpu.vector_store %arg8[%c0_133, %c3456], %398 {strides = array<i32>} : memref<2x4096xf32, #tpu.memory_space<vmem>>, vector<2x32xf32>,
    %400 = vector.extract_strided_slice %72 {offsets = [0, 109, 0], sizes = [2, 1, 32], strides = [1, 1, 1]} : vector<2x128x32xf32> to vector<2x1x32xf32>
    %401 = vector.shape_cast %400 : vector<2x1x32xf32> to vector<2x32xf32>
    %c0_134 = arith.constant 0 : index
    %c3488 = arith.constant 3488 : index
    %402 = vector.load %arg8[%c0_134, %c3488] : memref<2x4096xf32, #tpu.memory_space<vmem>>, vector<2x32xf32>
    tpu.vector_store %arg8[%c0_134, %c3488], %401 {strides = array<i32>} : memref<2x4096xf32, #tpu.memory_space<vmem>>, vector<2x32xf32>,
    %403 = vector.extract_strided_slice %72 {offsets = [0, 110, 0], sizes = [2, 1, 32], strides = [1, 1, 1]} : vector<2x128x32xf32> to vector<2x1x32xf32>
    %404 = vector.shape_cast %403 : vector<2x1x32xf32> to vector<2x32xf32>
    %c0_135 = arith.constant 0 : index
    %c3520 = arith.constant 3520 : index
    %405 = vector.load %arg8[%c0_135, %c3520] : memref<2x4096xf32, #tpu.memory_space<vmem>>, vector<2x32xf32>
    tpu.vector_store %arg8[%c0_135, %c3520], %404 {strides = array<i32>} : memref<2x4096xf32, #tpu.memory_space<vmem>>, vector<2x32xf32>,
    %406 = vector.extract_strided_slice %72 {offsets = [0, 111, 0], sizes = [2, 1, 32], strides = [1, 1, 1]} : vector<2x128x32xf32> to vector<2x1x32xf32>
    %407 = vector.shape_cast %406 : vector<2x1x32xf32> to vector<2x32xf32>
    %c0_136 = arith.constant 0 : index
    %c3552 = arith.constant 3552 : index
    %408 = vector.load %arg8[%c0_136, %c3552] : memref<2x4096xf32, #tpu.memory_space<vmem>>, vector<2x32xf32>
    tpu.vector_store %arg8[%c0_136, %c3552], %407 {strides = array<i32>} : memref<2x4096xf32, #tpu.memory_space<vmem>>, vector<2x32xf32>,
    %409 = vector.extract_strided_slice %72 {offsets = [0, 112, 0], sizes = [2, 1, 32], strides = [1, 1, 1]} : vector<2x128x32xf32> to vector<2x1x32xf32>
    %410 = vector.shape_cast %409 : vector<2x1x32xf32> to vector<2x32xf32>
    %c0_137 = arith.constant 0 : index
    %c3584 = arith.constant 3584 : index
    %411 = vector.load %arg8[%c0_137, %c3584] : memref<2x4096xf32, #tpu.memory_space<vmem>>, vector<2x32xf32>
    tpu.vector_store %arg8[%c0_137, %c3584], %410 {strides = array<i32>} : memref<2x4096xf32, #tpu.memory_space<vmem>>, vector<2x32xf32>,
    %412 = vector.extract_strided_slice %72 {offsets = [0, 113, 0], sizes = [2, 1, 32], strides = [1, 1, 1]} : vector<2x128x32xf32> to vector<2x1x32xf32>
    %413 = vector.shape_cast %412 : vector<2x1x32xf32> to vector<2x32xf32>
    %c0_138 = arith.constant 0 : index
    %c3616 = arith.constant 3616 : index
    %414 = vector.load %arg8[%c0_138, %c3616] : memref<2x4096xf32, #tpu.memory_space<vmem>>, vector<2x32xf32>
    tpu.vector_store %arg8[%c0_138, %c3616], %413 {strides = array<i32>} : memref<2x4096xf32, #tpu.memory_space<vmem>>, vector<2x32xf32>,
    %415 = vector.extract_strided_slice %72 {offsets = [0, 114, 0], sizes = [2, 1, 32], strides = [1, 1, 1]} : vector<2x128x32xf32> to vector<2x1x32xf32>
    %416 = vector.shape_cast %415 : vector<2x1x32xf32> to vector<2x32xf32>
    %c0_139 = arith.constant 0 : index
    %c3648 = arith.constant 3648 : index
    %417 = vector.load %arg8[%c0_139, %c3648] : memref<2x4096xf32, #tpu.memory_space<vmem>>, vector<2x32xf32>
    tpu.vector_store %arg8[%c0_139, %c3648], %416 {strides = array<i32>} : memref<2x4096xf32, #tpu.memory_space<vmem>>, vector<2x32xf32>,
    %418 = vector.extract_strided_slice %72 {offsets = [0, 115, 0], sizes = [2, 1, 32], strides = [1, 1, 1]} : vector<2x128x32xf32> to vector<2x1x32xf32>
    %419 = vector.shape_cast %418 : vector<2x1x32xf32> to vector<2x32xf32>
    %c0_140 = arith.constant 0 : index
    %c3680 = arith.constant 3680 : index
    %420 = vector.load %arg8[%c0_140, %c3680] : memref<2x4096xf32, #tpu.memory_space<vmem>>, vector<2x32xf32>
    tpu.vector_store %arg8[%c0_140, %c3680], %419 {strides = array<i32>} : memref<2x4096xf32, #tpu.memory_space<vmem>>, vector<2x32xf32>,
    %421 = vector.extract_strided_slice %72 {offsets = [0, 116, 0], sizes = [2, 1, 32], strides = [1, 1, 1]} : vector<2x128x32xf32> to vector<2x1x32xf32>
    %422 = vector.shape_cast %421 : vector<2x1x32xf32> to vector<2x32xf32>
    %c0_141 = arith.constant 0 : index
    %c3712 = arith.constant 3712 : index
    %423 = vector.load %arg8[%c0_141, %c3712] : memref<2x4096xf32, #tpu.memory_space<vmem>>, vector<2x32xf32>
    tpu.vector_store %arg8[%c0_141, %c3712], %422 {strides = array<i32>} : memref<2x4096xf32, #tpu.memory_space<vmem>>, vector<2x32xf32>,
    %424 = vector.extract_strided_slice %72 {offsets = [0, 117, 0], sizes = [2, 1, 32], strides = [1, 1, 1]} : vector<2x128x32xf32> to vector<2x1x32xf32>
    %425 = vector.shape_cast %424 : vector<2x1x32xf32> to vector<2x32xf32>
    %c0_142 = arith.constant 0 : index
    %c3744 = arith.constant 3744 : index
    %426 = vector.load %arg8[%c0_142, %c3744] : memref<2x4096xf32, #tpu.memory_space<vmem>>, vector<2x32xf32>
    tpu.vector_store %arg8[%c0_142, %c3744], %425 {strides = array<i32>} : memref<2x4096xf32, #tpu.memory_space<vmem>>, vector<2x32xf32>,
    %427 = vector.extract_strided_slice %72 {offsets = [0, 118, 0], sizes = [2, 1, 32], strides = [1, 1, 1]} : vector<2x128x32xf32> to vector<2x1x32xf32>
    %428 = vector.shape_cast %427 : vector<2x1x32xf32> to vector<2x32xf32>
    %c0_143 = arith.constant 0 : index
    %c3776 = arith.constant 3776 : index
    %429 = vector.load %arg8[%c0_143, %c3776] : memref<2x4096xf32, #tpu.memory_space<vmem>>, vector<2x32xf32>
    tpu.vector_store %arg8[%c0_143, %c3776], %428 {strides = array<i32>} : memref<2x4096xf32, #tpu.memory_space<vmem>>, vector<2x32xf32>,
    %430 = vector.extract_strided_slice %72 {offsets = [0, 119, 0], sizes = [2, 1, 32], strides = [1, 1, 1]} : vector<2x128x32xf32> to vector<2x1x32xf32>
    %431 = vector.shape_cast %430 : vector<2x1x32xf32> to vector<2x32xf32>
    %c0_144 = arith.constant 0 : index
    %c3808 = arith.constant 3808 : index
    %432 = vector.load %arg8[%c0_144, %c3808] : memref<2x4096xf32, #tpu.memory_space<vmem>>, vector<2x32xf32>
    tpu.vector_store %arg8[%c0_144, %c3808], %431 {strides = array<i32>} : memref<2x4096xf32, #tpu.memory_space<vmem>>, vector<2x32xf32>,
    %433 = vector.extract_strided_slice %72 {offsets = [0, 120, 0], sizes = [2, 1, 32], strides = [1, 1, 1]} : vector<2x128x32xf32> to vector<2x1x32xf32>
    %434 = vector.shape_cast %433 : vector<2x1x32xf32> to vector<2x32xf32>
    %c0_145 = arith.constant 0 : index
    %c3840 = arith.constant 3840 : index
    %435 = vector.load %arg8[%c0_145, %c3840] : memref<2x4096xf32, #tpu.memory_space<vmem>>, vector<2x32xf32>
    tpu.vector_store %arg8[%c0_145, %c3840], %434 {strides = array<i32>} : memref<2x4096xf32, #tpu.memory_space<vmem>>, vector<2x32xf32>,
    %436 = vector.extract_strided_slice %72 {offsets = [0, 121, 0], sizes = [2, 1, 32], strides = [1, 1, 1]} : vector<2x128x32xf32> to vector<2x1x32xf32>
    %437 = vector.shape_cast %436 : vector<2x1x32xf32> to vector<2x32xf32>
    %c0_146 = arith.constant 0 : index
    %c3872 = arith.constant 3872 : index
    %438 = vector.load %arg8[%c0_146, %c3872] : memref<2x4096xf32, #tpu.memory_space<vmem>>, vector<2x32xf32>
    tpu.vector_store %arg8[%c0_146, %c3872], %437 {strides = array<i32>} : memref<2x4096xf32, #tpu.memory_space<vmem>>, vector<2x32xf32>,
    %439 = vector.extract_strided_slice %72 {offsets = [0, 122, 0], sizes = [2, 1, 32], strides = [1, 1, 1]} : vector<2x128x32xf32> to vector<2x1x32xf32>
    %440 = vector.shape_cast %439 : vector<2x1x32xf32> to vector<2x32xf32>
    %c0_147 = arith.constant 0 : index
    %c3904 = arith.constant 3904 : index
    %441 = vector.load %arg8[%c0_147, %c3904] : memref<2x4096xf32, #tpu.memory_space<vmem>>, vector<2x32xf32>
    tpu.vector_store %arg8[%c0_147, %c3904], %440 {strides = array<i32>} : memref<2x4096xf32, #tpu.memory_space<vmem>>, vector<2x32xf32>,
    %442 = vector.extract_strided_slice %72 {offsets = [0, 123, 0], sizes = [2, 1, 32], strides = [1, 1, 1]} : vector<2x128x32xf32> to vector<2x1x32xf32>
    %443 = vector.shape_cast %442 : vector<2x1x32xf32> to vector<2x32xf32>
    %c0_148 = arith.constant 0 : index
    %c3936 = arith.constant 3936 : index
    %444 = vector.load %arg8[%c0_148, %c3936] : memref<2x4096xf32, #tpu.memory_space<vmem>>, vector<2x32xf32>
    tpu.vector_store %arg8[%c0_148, %c3936], %443 {strides = array<i32>} : memref<2x4096xf32, #tpu.memory_space<vmem>>, vector<2x32xf32>,
    %445 = vector.extract_strided_slice %72 {offsets = [0, 124, 0], sizes = [2, 1, 32], strides = [1, 1, 1]} : vector<2x128x32xf32> to vector<2x1x32xf32>
    %446 = vector.shape_cast %445 : vector<2x1x32xf32> to vector<2x32xf32>
    %c0_149 = arith.constant 0 : index
    %c3968 = arith.constant 3968 : index
    %447 = vector.load %arg8[%c0_149, %c3968] : memref<2x4096xf32, #tpu.memory_space<vmem>>, vector<2x32xf32>
    tpu.vector_store %arg8[%c0_149, %c3968], %446 {strides = array<i32>} : memref<2x4096xf32, #tpu.memory_space<vmem>>, vector<2x32xf32>,
    %448 = vector.extract_strided_slice %72 {offsets = [0, 125, 0], sizes = [2, 1, 32], strides = [1, 1, 1]} : vector<2x128x32xf32> to vector<2x1x32xf32>
    %449 = vector.shape_cast %448 : vector<2x1x32xf32> to vector<2x32xf32>
    %c0_150 = arith.constant 0 : index
    %c4000 = arith.constant 4000 : index
    %450 = vector.load %arg8[%c0_150, %c4000] : memref<2x4096xf32, #tpu.memory_space<vmem>>, vector<2x32xf32>
    tpu.vector_store %arg8[%c0_150, %c4000], %449 {strides = array<i32>} : memref<2x4096xf32, #tpu.memory_space<vmem>>, vector<2x32xf32>,
    %451 = vector.extract_strided_slice %72 {offsets = [0, 126, 0], sizes = [2, 1, 32], strides = [1, 1, 1]} : vector<2x128x32xf32> to vector<2x1x32xf32>
    %452 = vector.shape_cast %451 : vector<2x1x32xf32> to vector<2x32xf32>
    %c0_151 = arith.constant 0 : index
    %c4032 = arith.constant 4032 : index
    %453 = vector.load %arg8[%c0_151, %c4032] : memref<2x4096xf32, #tpu.memory_space<vmem>>, vector<2x32xf32>
    tpu.vector_store %arg8[%c0_151, %c4032], %452 {strides = array<i32>} : memref<2x4096xf32, #tpu.memory_space<vmem>>, vector<2x32xf32>,
    %454 = vector.extract_strided_slice %72 {offsets = [0, 127, 0], sizes = [2, 1, 32], strides = [1, 1, 1]} : vector<2x128x32xf32> to vector<2x1x32xf32>
    %455 = vector.shape_cast %454 : vector<2x1x32xf32> to vector<2x32xf32>
    %c0_152 = arith.constant 0 : index
    %c4064 = arith.constant 4064 : index
    %456 = vector.load %arg8[%c0_152, %c4064] : memref<2x4096xf32, #tpu.memory_space<vmem>>, vector<2x32xf32>
    tpu.vector_store %arg8[%c0_152, %c4064], %455 {strides = array<i32>} : memref<2x4096xf32, #tpu.memory_space<vmem>>, vector<2x32xf32>,
    %c0_153 = arith.constant 0 : index
    %c0_154 = arith.constant 0 : index
    %457 = vector.load %arg8[%c0_153, %c0_154] : memref<2x4096xf32, #tpu.memory_space<vmem>>, vector<2x4096xf32>
    %458 = arith.truncf %457 : vector<2x4096xf32> to vector<2x4096xbf16>
    %c0_155 = arith.constant 0 : index
    %c0_156 = arith.constant 0 : index
    %459 = vector.load %arg3[%c0_155, %c0_156] : memref<4096x128xbf16, #tpu.memory_space<vmem>>, vector<4096x128xbf16>
    %cst_157 = arith.constant dense<0.000000e+00> : vector<2x128xf32>
    %460 = tpu.matmul %458, %459, %cst_157 {dimension_numbers = #tpu.dot_dimension_numbers<[1], [0], [0], [1], [0, 0, 1, 1], [], []>} : vector<2x4096xbf16>, vector<4096x128xbf16>, vector<2x128xf32> -> vector<2x128xf32>
    %c0_158 = arith.constant 0 : index
    %c0_159 = arith.constant 0 : index
    %461 = vector.load %arg6[%c0_158, %c0_159] : memref<4x128xf32, #tpu.memory_space<vmem>>, vector<4x128xf32>
    %462 = vector.extract_strided_slice %461 {offsets = [0, 0], sizes = [1, 128], strides = [1, 1]} : vector<4x128xf32> to vector<1x128xf32>
    %463 = vector.extract_strided_slice %461 {offsets = [1, 0], sizes = [1, 128], strides = [1, 1]} : vector<4x128xf32> to vector<1x128xf32>
    %cst_160 = arith.constant dense<0.000000e+00> : vector<128xf32>
    %464 = vector.multi_reduction <add>, %460, %cst_160 [0] : vector<2x128xf32> to vector<128xf32>
    %465 = vector.shape_cast %464 : vector<128xf32> to vector<1x128xf32>
    %466 = arith.mulf %460, %460 : vector<2x128xf32>
    %cst_161 = arith.constant dense<0.000000e+00> : vector<128xf32>
    %467 = vector.multi_reduction <add>, %466, %cst_161 [0] : vector<2x128xf32> to vector<128xf32>
    %468 = vector.shape_cast %467 : vector<128xf32> to vector<1x128xf32>
    %cst_162 = arith.constant 5.000000e-01 : f32
    %469 = vector.broadcast %cst_162 : f32 to vector<1x128xf32>
    %470 = arith.mulf %465, %469 : vector<1x128xf32>
    %cst_163 = arith.constant 5.000000e-01 : f32
    %471 = vector.broadcast %cst_163 : f32 to vector<1x128xf32>
    %472 = arith.mulf %468, %471 : vector<1x128xf32>
    %473 = arith.mulf %470, %470 : vector<1x128xf32>
    %474 = arith.subf %472, %473 : vector<1x128xf32>
    %cst_164 = arith.constant 0.000000e+00 : f32
    %475 = vector.broadcast %cst_164 : f32 to vector<1x128xf32>
    %476 = arith.maximumf %474, %475 : vector<1x128xf32>
    %cst_165 = arith.constant 9.99999974E-6 : f32
    %477 = vector.broadcast %cst_165 : f32 to vector<1x128xf32>
    %478 = arith.addf %476, %477 : vector<1x128xf32>
    %479 = math.rsqrt %478 : vector<1x128xf32>
    %480 = arith.mulf %462, %479 : vector<1x128xf32>
    %481 = vector.broadcast %480 : vector<1x128xf32> to vector<2x128xf32>
    %482 = arith.mulf %460, %481 : vector<2x128xf32>
    %483 = arith.mulf %470, %480 : vector<1x128xf32>
    %484 = arith.subf %463, %483 : vector<1x128xf32>
    %485 = vector.broadcast %484 : vector<1x128xf32> to vector<2x128xf32>
    %486 = arith.addf %482, %485 : vector<2x128xf32>
    %487 = arith.truncf %486 : vector<2x128xf32> to vector<2x128xbf16>
    %c0_166 = arith.constant 0 : index
    %c0_167 = arith.constant 0 : index
    %488 = vector.load %arg4[%c0_166, %c0_167] : memref<128x128xbf16, #tpu.memory_space<vmem>>, vector<128x128xbf16>
    %cst_168 = arith.constant dense<0.000000e+00> : vector<2x128xf32>
    %489 = tpu.matmul %487, %488, %cst_168 {dimension_numbers = #tpu.dot_dimension_numbers<[1], [0], [0], [1], [0, 0, 1, 1], [], []>} : vector<2x128xbf16>, vector<128x128xbf16>, vector<2x128xf32> -> vector<2x128xf32>
    %490 = vector.extract_strided_slice %461 {offsets = [2, 0], sizes = [1, 128], strides = [1, 1]} : vector<4x128xf32> to vector<1x128xf32>
    %491 = vector.extract_strided_slice %461 {offsets = [3, 0], sizes = [1, 128], strides = [1, 1]} : vector<4x128xf32> to vector<1x128xf32>
    %cst_169 = arith.constant dense<0.000000e+00> : vector<128xf32>
    %492 = vector.multi_reduction <add>, %489, %cst_169 [0] : vector<2x128xf32> to vector<128xf32>
    %493 = vector.shape_cast %492 : vector<128xf32> to vector<1x128xf32>
    %494 = arith.mulf %489, %489 : vector<2x128xf32>
    %cst_170 = arith.constant dense<0.000000e+00> : vector<128xf32>
    %495 = vector.multi_reduction <add>, %494, %cst_170 [0] : vector<2x128xf32> to vector<128xf32>
    %496 = vector.shape_cast %495 : vector<128xf32> to vector<1x128xf32>
    %cst_171 = arith.constant 5.000000e-01 : f32
    %497 = vector.broadcast %cst_171 : f32 to vector<1x128xf32>
    %498 = arith.mulf %493, %497 : vector<1x128xf32>
    %cst_172 = arith.constant 5.000000e-01 : f32
    %499 = vector.broadcast %cst_172 : f32 to vector<1x128xf32>
    %500 = arith.mulf %496, %499 : vector<1x128xf32>
    %501 = arith.mulf %498, %498 : vector<1x128xf32>
    %502 = arith.subf %500, %501 : vector<1x128xf32>
    %cst_173 = arith.constant 0.000000e+00 : f32
    %503 = vector.broadcast %cst_173 : f32 to vector<1x128xf32>
    %504 = arith.maximumf %502, %503 : vector<1x128xf32>
    %cst_174 = arith.constant 9.99999974E-6 : f32
    %505 = vector.broadcast %cst_174 : f32 to vector<1x128xf32>
    %506 = arith.addf %504, %505 : vector<1x128xf32>
    %507 = math.rsqrt %506 : vector<1x128xf32>
    %508 = arith.mulf %490, %507 : vector<1x128xf32>
    %509 = vector.broadcast %508 : vector<1x128xf32> to vector<2x128xf32>
    %510 = arith.mulf %489, %509 : vector<2x128xf32>
    %511 = arith.mulf %498, %508 : vector<1x128xf32>
    %512 = arith.subf %491, %511 : vector<1x128xf32>
    %513 = vector.broadcast %512 : vector<1x128xf32> to vector<2x128xf32>
    %514 = arith.addf %510, %513 : vector<2x128xf32>
    %cst_175 = arith.constant 0.000000e+00 : f32
    %515 = vector.broadcast %cst_175 : f32 to vector<2x128xf32>
    %516 = arith.subf %515, %514 : vector<2x128xf32>
    %517 = math.exp %516 : vector<2x128xf32>
    %cst_176 = arith.constant 1.000000e+00 : f32
    %518 = vector.broadcast %cst_176 : f32 to vector<2x128xf32>
    %519 = arith.addf %518, %517 : vector<2x128xf32>
    %520 = tpu.reciprocal %519 {approx = true} : vector<2x128xf32> -> vector<2x128xf32>
    %521 = arith.mulf %486, %520 : vector<2x128xf32>
    %c0_177 = arith.constant 0 : index
    %c0_178 = arith.constant 0 : index
    %522 = vector.load %arg7[%c0_177, %c0_178] : memref<2x128xf32, #tpu.memory_space<vmem>>, vector<2x128xf32>
    tpu.vector_store %arg7[%c0_177, %c0_178], %521 {strides = array<i32>} : memref<2x128xf32, #tpu.memory_space<vmem>>, vector<2x128xf32>,
    return
  }
}

</mosaic_0001>

<llo_original>
// kernel: tpu_custom_call.1
$region0: #{tpu_custom_call.1}
  #allocation0 [shape = 'u32[]', space=smem, size = 0x4, offset = 0x4, fixed_abs, tag = 'smem constant byte address 0x4 - core index']
  #allocation1 [shape = 'u32[144,128]{1,0:T(1,128)}', space=vmem, size = 0x12000, scoped, tag = 'internal scratch']
  #allocation2 [shape = 'f32[2,4096]{1,0:T(2,128)}', space=vmem, size = 0x8000, scoped, tag = 'scratch operand']
  %s0 = inlined_call_operand.vmem [shape: bf16[2,16,32], index: 0, kind: input, shape index: {}]
  %s1 = inlined_call_operand.vmem [shape: bf16[32,128], index: 1, kind: input, shape index: {}]
  %s2 = inlined_call_operand.vmem [shape: f32[128,32], index: 2, kind: input, shape index: {}]
  %s3 = inlined_call_operand.hbm [shape: bf16[4096,128], index: 3, kind: input, shape index: {}]
  %s4 = inlined_call_operand.vmem [shape: bf16[128,128], index: 4, kind: input, shape index: {}]
  %s5 = inlined_call_operand.vmem [shape: f32[2,128], index: 5, kind: input, shape index: {}]
  %s6 = inlined_call_operand.vmem [shape: f32[4,128], index: 6, kind: input, shape index: {}]
  %s7 = inlined_call_operand.hbm [shape: f32[2,128], index: 7, kind: output, shape index: {}]
  %s8 = sld [smem:[#allocation0]]
  $region42: #{tpu_custom_call.1} parent=0
    _
  %s10 = ssub.s32 1, %s8
  %s11 = scalar_select 0, %s10, %s8
  $region1: #{tpu_custom_call.1} parent=0
    #allocation3 [shape = 'u8[1048576]{0}', space=vmem, size = 0x100000, scoped, tag = 'input window, operand 3, single buffered']
    #allocation4 [shape = 's32[1]{0}', space=sflag, size = 0x4, scoped, tag = 'scoped memory for tpu_custom_call.1']
    #allocation5 [shape = 's32[1]{0}', space=sflag, size = 0x4, scoped, tag = 'scoped memory for tpu_custom_call.1']
    #allocation6 [shape = 'u8[1024]{0}', space=vmem, size = 0x400, scoped, tag = 'output window, operand 0, single buffered']
    %12 = vsyncpa [#allocation4], 0
    %13 = vsyncpa [#allocation5], 0
    // Predicated region
    $region2: #{tpu_custom_call.1} parent=1 // pred_check
      _
    $region3: #{tpu_custom_call.1} parent=1 // pred_check_branch
      %15 = sbr.rel (0) target = $region5
    $region4: #{tpu_custom_call.1} parent=1 // pred_region
      _
    $region5: #{tpu_custom_call.1} parent=1 // pred_fallthru
      _
    // Predicated region
    $region6: #{tpu_custom_call.1} parent=1 // pred_check
      _
    $region7: #{tpu_custom_call.1} parent=1 // pred_check_branch
      %17 = sbr.rel (0) target = $region9
    $region8: #{tpu_custom_call.1} parent=1 // pred_region
      _
    $region9: #{tpu_custom_call.1} parent=1 // pred_fallthru
      _
    // Predicated region
    $region10: #{tpu_custom_call.1} parent=1 // pred_check
      _
    $region11: #{tpu_custom_call.1} parent=1 // pred_check_branch
      %19 = sbr.rel (0) target = $region13
    $region12: #{tpu_custom_call.1} parent=1 // pred_region
      _
    $region13: #{tpu_custom_call.1} parent=1 // pred_fallthru
      _
    // Predicated region
    $region14: #{tpu_custom_call.1} parent=1 // pred_check
      _
    $region15: #{tpu_custom_call.1} parent=1 // pred_check_branch
      %21 = sbr.rel (0) target = $region17
    $region16: #{tpu_custom_call.1} parent=1 // pred_region
      %s23 = ssub.s32 32768, 32768
      %24 = vsyncadd [#allocation4], %s23
      %s25 = sshll.u32 [#allocation3], 4
      %s26 = int_to_ptr.vmem [resolvable:$true] %s25
      %31 = dma.hbm_to_vmem [thread:$0]  %s3, 32768, %s26, [#allocation4], 64, 64, 4
    $region17: #{tpu_custom_call.1} parent=1 // pred_fallthru
      _
    // Predicated region
    $region18: #{tpu_custom_call.1} parent=1 // pred_check
      _
    $region19: #{tpu_custom_call.1} parent=1 // pred_check_branch
      %33 = sbr.rel (0) target = $region21
    $region20: #{tpu_custom_call.1} parent=1 // pred_region
      _
    $region21: #{tpu_custom_call.1} parent=1 // pred_fallthru
      _
    // Predicated region
    $region22: #{tpu_custom_call.1} parent=1 // pred_check
      _
    $region23: #{tpu_custom_call.1} parent=1 // pred_check_branch
      %35 = sbr.rel (0) target = $region25
    $region24: #{tpu_custom_call.1} parent=1 // pred_region
      _
    $region25: #{tpu_custom_call.1} parent=1 // pred_fallthru
      _
    // Predicated region
    $region26: #{tpu_custom_call.1} parent=1 // pred_check
      _
    $region27: #{tpu_custom_call.1} parent=1 // pred_check_branch
      %37 = sbr.rel (0) target = $region29
    $region28: #{tpu_custom_call.1} parent=1 // pred_region
      _
    $region29: #{tpu_custom_call.1} parent=1 // pred_fallthru
      _
    // Predicated region
    $region30: #{tpu_custom_call.1} parent=1 // pred_check
      _
    $region31: #{tpu_custom_call.1} parent=1 // pred_check_branch
      %39 = sbr.rel (0) target = $region33
    $region32: #{tpu_custom_call.1} parent=1 // pred_region
      %40 = dma.done [#allocation4], 32768
    $region33: #{tpu_custom_call.1} parent=1 // pred_fallthru
      _
    %v43 = vld [vmem:[%s0] sm:$0xf]
    %v44 = vld [vmem:[%s0 + $0x4] sm:$0xf]
    %v45 = vld [vmem:[%s0 + $0x8] sm:$0xf]
    %v46 = vld [vmem:[%s0 + $0xc] sm:$0xf]
    %v47 = vld [vmem:[%s1] sm:$0xf]
    %v48 = vld [vmem:[%s1 + $0x4] sm:$0xf]
    %v49 = vld [vmem:[%s1 + $0x8] sm:$0xf]
    %v50 = vld [vmem:[%s1 + $0xc] sm:$0xf]
    %v55 = vunpack.c.l.b16 %v43
    %v56 = vunpack.c.l.b16 %v44
    %v57 = vunpack.c.l.b16 %v45
    %v58 = vunpack.c.l.b16 %v46
    %v59 = vpack.c.b16 %v56, %v55
    %v60 = vpack.c.b16 %v58, %v57
    %v65 = vunpack.c.l.b16 %v47
    %v66 = vunpack.c.l.b16 %v48
    %v67 = vunpack.c.l.b16 %v49
    %v68 = vunpack.c.l.b16 %v50
    %v69 = vpack.c.b16 %v66, %v65
    %v70 = vpack.c.b16 %v68, %v67
    %vm73 = vcmask 261120
    %v75 = vsel %vm73, %v59, 0
    %v78 = vsel %vm73, %v60, 0
    %80 = vmatprep.subr.bf16.mxu0 0
    %81 = vmatpush1.bf16.msra.mxu0 0
    %82 = vmatprep.subr.bf16.mxu0 0
    %83 = vmatpush1.bf16.msra.mxu0 0
    %84 = vmatprep.subr.bf16.mxu0 0
    %85 = vmatpush1.bf16.msra.mxu0 0
    %86 = vmatprep.subr.bf16.mxu0 0
    %87 = vmatpush1.bf16.msra.mxu0 0
    %88 = vmatprep.subr.bf16.mxu0 0
    %89 = vmatpush1.bf16.msra.mxu0 0
    %90 = vmatprep.subr.bf16.mxu0 0
    %91 = vmatpush1.bf16.msra.mxu0 0
    %92 = vmatprep.subr.bf16.mxu0 0
    %93 = vmatpush1.bf16.msra.mxu0 %v70
    %94 = vmatprep.subr.bf16.mxu0 0
    %95 = vmatpush1.bf16.msra.mxu0 %v69
    %96 = vmatprep.subr.bf16.mxu0 0
    %97 = vmatpush2.bf16.msra.mxu0 0
    %98 = vmatprep.subr.bf16.mxu0 0
    %99 = vmatpush2.bf16.msra.mxu0 0
    %100 = vmatprep.subr.bf16.mxu0 0
    %101 = vmatpush2.bf16.msra.mxu0 0
    %102 = vmatprep.subr.bf16.mxu0 0
    %103 = vmatpush2.bf16.msra.mxu0 0
    %104 = vmatprep.subr.bf16.mxu0 0
    %105 = vmatpush2.bf16.msra.mxu0 0
    %106 = vmatprep.subr.bf16.mxu0 0
    %107 = vmatpush2.bf16.msra.mxu0 0
    %108 = vmatprep.subr.bf16.mxu0 0
    %109 = vmatpush2.bf16.msra.mxu0 0
    %110 = vmatprep.subr.bf16.mxu0 0
    %111 = vmatpush2.bf16.msra.mxu0 0
    %112 = vmatprep.mubr.bf16.mxu0 0
    %113 = vmatmul.mubr.bf16.gmra.mxu0 %v75
    %v114 = vpop.f32.mrf.mxu0
    %v115 = vadd.f32 0.0, %v114
    %v116 = vpop.f32.mrf.mxu0
    %v117 = vpop.f32.mrf.mxu0
    %v118 = vadd.f32 0.0, %v117
    %v119 = vpop.f32.mrf.mxu0
    %120 = vmatprep.mubr.bf16.mxu0 0
    %121 = vmatmul.mubr.bf16.gmra.mxu0 %v78
    %v122 = vpop.f32.mrf.mxu0
    %v123 = vadd.f32 0.0, %v122
    %v124 = vpop.f32.mrf.mxu0
    %v125 = vpop.f32.mrf.mxu0
    %v126 = vadd.f32 0.0, %v125
    %v127 = vpop.f32.mrf.mxu0
    %128 = vdwg.mxu0
    %v129 = vld [vmem:[%s5] sm:$0x3]
    %v130 = vadd.f32 %v115, %v118
    %v131 = vadd.f32 %v130, %v123
    %v132 = vadd.f32 %v131, %v126
    %v133 = vrot.slane %v132, 4
    %v134 = vadd.f32 %v132, %v133
    %v135 = vrot.slane %v134, 2
    %v136 = vadd.f32 %v134, %v135
    %v137 = vrot.slane %v136, 1
    %v138 = vadd.f32 %v136, %v137
    %v139 = vmul.f32 %v115, %v115
    %v140 = vmul.f32 %v118, %v118
    %v141 = vmul.f32 %v123, %v123
    %v142 = vmul.f32 %v126, %v126
    %v143 = vadd.f32 %v139, %v140
    %v144 = vadd.f32 %v143, %v141
    %v145 = vadd.f32 %v144, %v142
    %v146 = vrot.slane %v145, 4
    %v147 = vadd.f32 %v145, %v146
    %v148 = vrot.slane %v147, 2
    %v149 = vadd.f32 %v147, %v148
    %v150 = vrot.slane %v149, 1
    %v151 = vadd.f32 %v149, %v150
    %v152 = vmul.f32 %v138, 0.03125
    %v153 = vmul.f32 %v151, 0.03125
    %v154 = vmul.f32 %v152, %v152
    %v155 = vsub.f32 %v153, %v154
    %v156 = vmax.f32 %v155, 0.0
    %v157 = vadd.f32 %v156, 1e-05
    %v158 = vrsqrt.pop %v157
    %v159 = vmul.f32 %v129, %v158
    %v160 = vlaneseq
    %v161 = vshrl.u32 %v160, 7
    %v162 = vsub.s32 0, %v161
    %v163 = vrot.slane %v159, %v162
    %v164 = vmul.f32 %v115, %v163
    %v165 = vmul.f32 %v118, %v163
    %v166 = vmul.f32 %v123, %v163
    %v167 = vmul.f32 %v126, %v163
    %v168 = vmul.f32 %v152, %v159
    %v170 = vrot.slane %v168, 7
    %v172 = vsub.f32 %v129, %v170
    %v173 = vlaneseq
    %v174 = vshrl.u32 %v173, 7
    %v175 = vsub.s32 1, %v174
    %v176 = vrot.slane %v172, %v175
    %v177 = vadd.f32 %v164, %v176
    %v178 = vadd.f32 %v165, %v176
    %v179 = vadd.f32 %v166, %v176
    %v180 = vadd.f32 %v167, %v176
    %v181 = vlaneseq
    %v182 = vand.u32 %v181, 127
    %vm183 = vcmp.lt.s32.totalorder %v182, 8
    %v184 = vsel %vm183, %v177, -1e+30
    %v185 = vsel %vm183, %v178, -1e+30
    %v186 = vsel %vm183, %v179, -1e+30
    %v187 = vsel %vm183, %v180, -1e+30
    %188 = vmax.xlane.f32.xlu0 %v184
    %v189 = vpop.xlane.xlu0 %188
    %190 = vmax.xlane.f32.xlu0 %v185
    %v191 = vpop.xlane.xlu0 %190
    %192 = vmax.xlane.f32.xlu0 %v186
    %v193 = vpop.xlane.xlu0 %192
    %194 = vmax.xlane.f32.xlu0 %v187
    %v195 = vpop.xlane.xlu0 %194
    %v196 = vsub.f32 %v184, %v189
    %v197 = vsub.f32 %v185, %v191
    %v198 = vsub.f32 %v186, %v193
    %v199 = vsub.f32 %v187, %v195
    %v200 = vmul.f32 %v196, 1.442695
    %v201 = vpow.pop %v200
    %v202 = vmul.f32 %v197, 1.442695
    %v203 = vpow.pop %v202
    %v204 = vmul.f32 %v198, 1.442695
    %v205 = vpow.pop %v204
    %v206 = vmul.f32 %v199, 1.442695
    %v207 = vpow.pop %v206
    %208 = vadd.xlane.f32.xlu0 %v201
    %v209 = vpop.xlane.xlu0 %208
    %210 = vadd.xlane.f32.xlu0 %v203
    %v211 = vpop.xlane.xlu0 %210
    %212 = vadd.xlane.f32.xlu0 %v205
    %v213 = vpop.xlane.xlu0 %212
    %214 = vadd.xlane.f32.xlu0 %v207
    %v215 = vpop.xlane.xlu0 %214
    %v216 = vrcp.pop %v209
    %v217 = vrcp.pop %v211
    %v218 = vrcp.pop %v213
    %v219 = vrcp.pop %v215
    %v220 = vmul.f32 %v201, %v216
    %v221 = vmul.f32 %v203, %v217
    %v222 = vmul.f32 %v205, %v218
    %v223 = vmul.f32 %v207, %v219
    %v224 = vpack.c.bf16 %v221, %v220
    %v225 = vpack.c.bf16 %v223, %v222
    %226 = vxpose.xlu0.c.b16.start [1/8] %v224, 128
    %227 = vxpose.xlu0.c.b16.cont [2/8] 0, 128
    %228 = vxpose.xlu0.c.b16.cont [3/8] 0, 128
    %229 = vxpose.xlu0.c.b16.cont [4/8] 0, 128
    %230 = vxpose.xlu0.c.b16.cont [5/8] 0, 128
    %231 = vxpose.xlu0.c.b16.cont [6/8] 0, 128
    %232 = vxpose.xlu0.c.b16.cont [7/8] 0, 128
    %233 = vxpose.xlu0.c.b16.end [8/8] 0, 128
    %v234 = vpop.trf.xlu0
    %v235 = vpop.trf.xlu0
    %v236 = vpop.trf.xlu0
    %v237 = vpop.trf.xlu0
    %v238 = vpop.trf.xlu0
    %v239 = vpop.trf.xlu0
    %v240 = vpop.trf.xlu0
    %v241 = vpop.trf.xlu0
    %vm243 = vcmask 130048
    %v245 = vsel %vm243, %v234, 0
    %v248 = vsel %vm243, %v235, 0
    %v251 = vsel %vm243, %v236, 0
    %v254 = vsel %vm243, %v237, 0
    %v257 = vsel %vm243, %v238, 0
    %v260 = vsel %vm243, %v239, 0
    %v263 = vsel %vm243, %v240, 0
    %v266 = vsel %vm243, %v241, 0
    %268 = vmatprep.subr.bf16.mxu0 0
    %269 = vmatpush1.bf16.msra.mxu0 0
    %270 = vmatprep.subr.bf16.mxu0 0
    %271 = vmatpush1.bf16.msra.mxu0 0
    %272 = vmatprep.subr.bf16.mxu0 0
    %273 = vmatpush1.bf16.msra.mxu0 0
    %274 = vmatprep.subr.bf16.mxu0 0
    %275 = vmatpush1.bf16.msra.mxu0 0
    %276 = vmatprep.subr.bf16.mxu0 0
    %277 = vmatpush1.bf16.msra.mxu0 0
    %278 = vmatprep.subr.bf16.mxu0 0
    %279 = vmatpush1.bf16.msra.mxu0 0
    %280 = vmatprep.subr.bf16.mxu0 0
    %281 = vmatpush1.bf16.msra.mxu0 0
    %282 = vmatprep.subr.bf16.mxu0 0
    %283 = vmatpush1.bf16.msra.mxu0 %v59
    %284 = vmatprep.subr.bf16.mxu0 0
    %285 = vmatpush2.bf16.msra.mxu0 0
    %286 = vmatprep.subr.bf16.mxu0 0
    %287 = vmatpush2.bf16.msra.mxu0 0
    %288 = vmatprep.subr.bf16.mxu0 0
    %289 = vmatpush2.bf16.msra.mxu0 0
    %290 = vmatprep.subr.bf16.mxu0 0
    %291 = vmatpush2.bf16.msra.mxu0 0
    %292 = vmatprep.subr.bf16.mxu0 0
    %293 = vmatpush2.bf16.msra.mxu0 0
    %294 = vmatprep.subr.bf16.mxu0 0
    %295 = vmatpush2.bf16.msra.mxu0 0
    %296 = vmatprep.subr.bf16.mxu0 0
    %297 = vmatpush2.bf16.msra.mxu0 0
    %298 = vmatprep.subr.bf16.mxu0 0
    %299 = vmatpush2.bf16.msra.mxu0 0
    %300 = vmatprep.mubr.bf16.mxu0 0
    %301 = vmatmul.mubr.bf16.gmra.mxu0 %v245
    %v302 = vpop.f32.mrf.mxu0
    %v303 = vadd.f32 0.0, %v302
    %v304 = vpop.f32.mrf.mxu0
    %v305 = vpop.f32.mrf.mxu0
    %v306 = vadd.f32 0.0, %v305
    %v307 = vpop.f32.mrf.mxu0
    %308 = vmatprep.mubr.bf16.mxu0 0
    %309 = vmatmul.mubr.bf16.gmra.mxu0 %v248
    %v310 = vpop.f32.mrf.mxu0
    %v311 = vadd.f32 0.0, %v310
    %v312 = vpop.f32.mrf.mxu0
    %v313 = vpop.f32.mrf.mxu0
    %v314 = vadd.f32 0.0, %v313
    %v315 = vpop.f32.mrf.mxu0
    %316 = vmatprep.mubr.bf16.mxu0 0
    %317 = vmatmul.mubr.bf16.gmra.mxu0 %v251
    %v318 = vpop.f32.mrf.mxu0
    %v319 = vadd.f32 0.0, %v318
    %v320 = vpop.f32.mrf.mxu0
    %v321 = vpop.f32.mrf.mxu0
    %v322 = vadd.f32 0.0, %v321
    %v323 = vpop.f32.mrf.mxu0
    %324 = vmatprep.mubr.bf16.mxu0 0
    %325 = vmatmul.mubr.bf16.gmra.mxu0 %v254
    %v326 = vpop.f32.mrf.mxu0
    %v327 = vadd.f32 0.0, %v326
    %v328 = vpop.f32.mrf.mxu0
    %v329 = vpop.f32.mrf.mxu0
    %v330 = vadd.f32 0.0, %v329
    %v331 = vpop.f32.mrf.mxu0
    %332 = vmatprep.mubr.bf16.mxu0 0
    %333 = vmatmul.mubr.bf16.gmra.mxu0 %v257
    %v334 = vpop.f32.mrf.mxu0
    %v335 = vadd.f32 0.0, %v334
    %v336 = vpop.f32.mrf.mxu0
    %v337 = vpop.f32.mrf.mxu0
    %v338 = vadd.f32 0.0, %v337
    %v339 = vpop.f32.mrf.mxu0
    %340 = vmatprep.mubr.bf16.mxu0 0
    %341 = vmatmul.mubr.bf16.gmra.mxu0 %v260
    %v342 = vpop.f32.mrf.mxu0
    %v343 = vadd.f32 0.0, %v342
    %v344 = vpop.f32.mrf.mxu0
    %v345 = vpop.f32.mrf.mxu0
    %v346 = vadd.f32 0.0, %v345
    %v347 = vpop.f32.mrf.mxu0
    %348 = vmatprep.mubr.bf16.mxu0 0
    %349 = vmatmul.mubr.bf16.gmra.mxu0 %v263
    %v350 = vpop.f32.mrf.mxu0
    %v351 = vadd.f32 0.0, %v350
    %v352 = vpop.f32.mrf.mxu0
    %v353 = vpop.f32.mrf.mxu0
    %v354 = vadd.f32 0.0, %v353
    %v355 = vpop.f32.mrf.mxu0
    %356 = vmatprep.mubr.bf16.mxu0 0
    %357 = vmatmul.mubr.bf16.gmra.mxu0 %v266
    %v358 = vpop.f32.mrf.mxu0
    %v359 = vadd.f32 0.0, %v358
    %v360 = vpop.f32.mrf.mxu0
    %v361 = vpop.f32.mrf.mxu0
    %v362 = vadd.f32 0.0, %v361
    %v363 = vpop.f32.mrf.mxu0
    %364 = vdwg.mxu0
    %365 = vxpose.xlu0.c.b16.start [1/8] %v225, 128
    %366 = vxpose.xlu0.c.b16.cont [2/8] 0, 128
    %367 = vxpose.xlu0.c.b16.cont [3/8] 0, 128
    %368 = vxpose.xlu0.c.b16.cont [4/8] 0, 128
    %369 = vxpose.xlu0.c.b16.cont [5/8] 0, 128
    %370 = vxpose.xlu0.c.b16.cont [6/8] 0, 128
    %371 = vxpose.xlu0.c.b16.cont [7/8] 0, 128
    %372 = vxpose.xlu0.c.b16.end [8/8] 0, 128
    %v373 = vpop.trf.xlu0
    %v374 = vpop.trf.xlu0
    %v375 = vpop.trf.xlu0
    %v376 = vpop.trf.xlu0
    %v377 = vpop.trf.xlu0
    %v378 = vpop.trf.xlu0
    %v379 = vpop.trf.xlu0
    %v380 = vpop.trf.xlu0
    %v383 = vsel %vm243, %v373, 0
    %v386 = vsel %vm243, %v374, 0
    %v389 = vsel %vm243, %v375, 0
    %v392 = vsel %vm243, %v376, 0
    %v395 = vsel %vm243, %v377, 0
    %v398 = vsel %vm243, %v378, 0
    %v401 = vsel %vm243, %v379, 0
    %v404 = vsel %vm243, %v380, 0
    %406 = vmatprep.subr.bf16.mxu0 0
    %407 = vmatpush1.bf16.msra.mxu0 0
    %408 = vmatprep.subr.bf16.mxu0 0
    %409 = vmatpush1.bf16.msra.mxu0 0
    %410 = vmatprep.subr.bf16.mxu0 0
    %411 = vmatpush1.bf16.msra.mxu0 0
    %412 = vmatprep.subr.bf16.mxu0 0
    %413 = vmatpush1.bf16.msra.mxu0 0
    %414 = vmatprep.subr.bf16.mxu0 0
    %415 = vmatpush1.bf16.msra.mxu0 0
    %416 = vmatprep.subr.bf16.mxu0 0
    %417 = vmatpush1.bf16.msra.mxu0 0
    %418 = vmatprep.subr.bf16.mxu0 0
    %419 = vmatpush1.bf16.msra.mxu0 0
    %420 = vmatprep.subr.bf16.mxu0 0
    %421 = vmatpush1.bf16.msra.mxu0 %v60
    %422 = vmatprep.subr.bf16.mxu0 0
    %423 = vmatpush2.bf16.msra.mxu0 0
    %424 = vmatprep.subr.bf16.mxu0 0
    %425 = vmatpush2.bf16.msra.mxu0 0
    %426 = vmatprep.subr.bf16.mxu0 0
    %427 = vmatpush2.bf16.msra.mxu0 0
    %428 = vmatprep.subr.bf16.mxu0 0
    %429 = vmatpush2.bf16.msra.mxu0 0
    %430 = vmatprep.subr.bf16.mxu0 0
    %431 = vmatpush2.bf16.msra.mxu0 0
    %432 = vmatprep.subr.bf16.mxu0 0
    %433 = vmatpush2.bf16.msra.mxu0 0
    %434 = vmatprep.subr.bf16.mxu0 0
    %435 = vmatpush2.bf16.msra.mxu0 0
    %436 = vmatprep.subr.bf16.mxu0 0
    %437 = vmatpush2.bf16.msra.mxu0 0
    %438 = vmatprep.mubr.bf16.mxu0 0
    %439 = vmatmul.mubr.bf16.gmra.mxu0 %v383
    %v440 = vpop.f32.mrf.mxu0
    %v441 = vadd.f32 0.0, %v440
    %v442 = vpop.f32.mrf.mxu0
    %v443 = vpop.f32.mrf.mxu0
    %v444 = vadd.f32 0.0, %v443
    %v445 = vpop.f32.mrf.mxu0
    %446 = vmatprep.mubr.bf16.mxu0 0
    %447 = vmatmul.mubr.bf16.gmra.mxu0 %v386
    %v448 = vpop.f32.mrf.mxu0
    %v449 = vadd.f32 0.0, %v448
    %v450 = vpop.f32.mrf.mxu0
    %v451 = vpop.f32.mrf.mxu0
    %v452 = vadd.f32 0.0, %v451
    %v453 = vpop.f32.mrf.mxu0
    %454 = vmatprep.mubr.bf16.mxu0 0
    %455 = vmatmul.mubr.bf16.gmra.mxu0 %v389
    %v456 = vpop.f32.mrf.mxu0
    %v457 = vadd.f32 0.0, %v456
    %v458 = vpop.f32.mrf.mxu0
    %v459 = vpop.f32.mrf.mxu0
    %v460 = vadd.f32 0.0, %v459
    %v461 = vpop.f32.mrf.mxu0
    %462 = vmatprep.mubr.bf16.mxu0 0
    %463 = vmatmul.mubr.bf16.gmra.mxu0 %v392
    %v464 = vpop.f32.mrf.mxu0
    %v465 = vadd.f32 0.0, %v464
    %v466 = vpop.f32.mrf.mxu0
    %v467 = vpop.f32.mrf.mxu0
    %v468 = vadd.f32 0.0, %v467
    %v469 = vpop.f32.mrf.mxu0
    %470 = vmatprep.mubr.bf16.mxu0 0
    %471 = vmatmul.mubr.bf16.gmra.mxu0 %v395
    %v472 = vpop.f32.mrf.mxu0
    %v473 = vadd.f32 0.0, %v472
    %v474 = vpop.f32.mrf.mxu0
    %v475 = vpop.f32.mrf.mxu0
    %v476 = vadd.f32 0.0, %v475
    %v477 = vpop.f32.mrf.mxu0
    %478 = vmatprep.mubr.bf16.mxu0 0
    %479 = vmatmul.mubr.bf16.gmra.mxu0 %v398
    %v480 = vpop.f32.mrf.mxu0
    %v481 = vadd.f32 0.0, %v480
    %v482 = vpop.f32.mrf.mxu0
    %v483 = vpop.f32.mrf.mxu0
    %v484 = vadd.f32 0.0, %v483
    %v485 = vpop.f32.mrf.mxu0
    %486 = vmatprep.mubr.bf16.mxu0 0
    %487 = vmatmul.mubr.bf16.gmra.mxu0 %v401
    %v488 = vpop.f32.mrf.mxu0
    %v489 = vadd.f32 0.0, %v488
    %v490 = vpop.f32.mrf.mxu0
    %v491 = vpop.f32.mrf.mxu0
    %v492 = vadd.f32 0.0, %v491
    %v493 = vpop.f32.mrf.mxu0
    %494 = vmatprep.mubr.bf16.mxu0 0
    %495 = vmatmul.mubr.bf16.gmra.mxu0 %v404
    %v496 = vpop.f32.mrf.mxu0
    %v497 = vadd.f32 0.0, %v496
    %v498 = vpop.f32.mrf.mxu0
    %v499 = vpop.f32.mrf.mxu0
    %v500 = vadd.f32 0.0, %v499
    %v501 = vpop.f32.mrf.mxu0
    %502 = vdwg.mxu0
    %503 = vmatprep.subr.bf16.mxu0 0
    %504 = vmatpush1.bf16.msra.mxu0 0
    %505 = vmatprep.subr.bf16.mxu0 0
    %506 = vmatpush1.bf16.msra.mxu0 0
    %507 = vmatprep.subr.bf16.mxu0 0
    %508 = vmatpush1.bf16.msra.mxu0 0
    %509 = vmatprep.subr.bf16.mxu0 0
    %510 = vmatpush1.bf16.msra.mxu0 0
    %511 = vmatprep.subr.bf16.mxu0 0
    %512 = vmatpush1.bf16.msra.mxu0 0
    %513 = vmatprep.subr.bf16.mxu0 0
    %514 = vmatpush1.bf16.msra.mxu0 0
    %515 = vmatprep.subr.bf16.mxu0 0
    %516 = vmatpush1.bf16.msra.mxu0 0
    %517 = vmatprep.subr.bf16.mxu0 0
    %518 = vmatpush1.bf16.msra.mxu0 1065369472
    %519 = vmatprep.subr.bf16.mxu0 0
    %520 = vmatpush2.bf16.msra.mxu0 0
    %521 = vmatprep.subr.bf16.mxu0 0
    %522 = vmatpush2.bf16.msra.mxu0 0
    %523 = vmatprep.subr.bf16.mxu0 0
    %524 = vmatpush2.bf16.msra.mxu0 0
    %525 = vmatprep.subr.bf16.mxu0 0
    %526 = vmatpush2.bf16.msra.mxu0 0
    %527 = vmatprep.subr.bf16.mxu0 0
    %528 = vmatpush2.bf16.msra.mxu0 0
    %529 = vmatprep.subr.bf16.mxu0 0
    %530 = vmatpush2.bf16.msra.mxu0 0
    %531 = vmatprep.subr.bf16.mxu0 0
    %532 = vmatpush2.bf16.msra.mxu0 0
    %533 = vmatprep.subr.bf16.mxu0 0
    %534 = vmatpush2.bf16.msra.mxu0 0
    %535 = vmatprep.mubr.bf16.mxu0 0
    %536 = vmatmul.mubr.bf16.gmra.mxu0 %v245
    %v537 = vpop.f32.mrf.mxu0
    %v538 = vadd.f32 0.0, %v537
    %v539 = vpop.f32.mrf.mxu0
    %v540 = vpop.f32.mrf.mxu0
    %v541 = vadd.f32 0.0, %v540
    %v542 = vpop.f32.mrf.mxu0
    %543 = vmatprep.mubr.bf16.mxu0 0
    %544 = vmatmul.mubr.bf16.gmra.mxu0 %v248
    %v545 = vpop.f32.mrf.mxu0
    %v546 = vadd.f32 0.0, %v545
    %v547 = vpop.f32.mrf.mxu0
    %v548 = vpop.f32.mrf.mxu0
    %v549 = vadd.f32 0.0, %v548
    %v550 = vpop.f32.mrf.mxu0
    %551 = vmatprep.mubr.bf16.mxu0 0
    %552 = vmatmul.mubr.bf16.gmra.mxu0 %v251
    %v553 = vpop.f32.mrf.mxu0
    %v554 = vadd.f32 0.0, %v553
    %v555 = vpop.f32.mrf.mxu0
    %v556 = vpop.f32.mrf.mxu0
    %v557 = vadd.f32 0.0, %v556
    %v558 = vpop.f32.mrf.mxu0
    %559 = vmatprep.mubr.bf16.mxu0 0
    %560 = vmatmul.mubr.bf16.gmra.mxu0 %v254
    %v561 = vpop.f32.mrf.mxu0
    %v562 = vadd.f32 0.0, %v561
    %v563 = vpop.f32.mrf.mxu0
    %v564 = vpop.f32.mrf.mxu0
    %v565 = vadd.f32 0.0, %v564
    %v566 = vpop.f32.mrf.mxu0
    %567 = vmatprep.mubr.bf16.mxu0 0
    %568 = vmatmul.mubr.bf16.gmra.mxu0 %v257
    %v569 = vpop.f32.mrf.mxu0
    %v570 = vadd.f32 0.0, %v569
    %v571 = vpop.f32.mrf.mxu0
    %v572 = vpop.f32.mrf.mxu0
    %v573 = vadd.f32 0.0, %v572
    %v574 = vpop.f32.mrf.mxu0
    %575 = vmatprep.mubr.bf16.mxu0 0
    %576 = vmatmul.mubr.bf16.gmra.mxu0 %v260
    %v577 = vpop.f32.mrf.mxu0
    %v578 = vadd.f32 0.0, %v577
    %v579 = vpop.f32.mrf.mxu0
    %v580 = vpop.f32.mrf.mxu0
    %v581 = vadd.f32 0.0, %v580
    %v582 = vpop.f32.mrf.mxu0
    %583 = vmatprep.mubr.bf16.mxu0 0
    %584 = vmatmul.mubr.bf16.gmra.mxu0 %v263
    %v585 = vpop.f32.mrf.mxu0
    %v586 = vadd.f32 0.0, %v585
    %v587 = vpop.f32.mrf.mxu0
    %v588 = vpop.f32.mrf.mxu0
    %v589 = vadd.f32 0.0, %v588
    %v590 = vpop.f32.mrf.mxu0
    %591 = vmatprep.mubr.bf16.mxu0 0
    %592 = vmatmul.mubr.bf16.gmra.mxu0 %v266
    %v593 = vpop.f32.mrf.mxu0
    %v594 = vadd.f32 0.0, %v593
    %v595 = vpop.f32.mrf.mxu0
    %v596 = vpop.f32.mrf.mxu0
    %v597 = vadd.f32 0.0, %v596
    %v598 = vpop.f32.mrf.mxu0
    %599 = vdwg.mxu0
    %600 = vmatprep.subr.bf16.mxu0 0
    %601 = vmatpush1.bf16.msra.mxu0 0
    %602 = vmatprep.subr.bf16.mxu0 0
    %603 = vmatpush1.bf16.msra.mxu0 0
    %604 = vmatprep.subr.bf16.mxu0 0
    %605 = vmatpush1.bf16.msra.mxu0 0
    %606 = vmatprep.subr.bf16.mxu0 0
    %607 = vmatpush1.bf16.msra.mxu0 0
    %608 = vmatprep.subr.bf16.mxu0 0
    %609 = vmatpush1.bf16.msra.mxu0 0
    %610 = vmatprep.subr.bf16.mxu0 0
    %611 = vmatpush1.bf16.msra.mxu0 0
    %612 = vmatprep.subr.bf16.mxu0 0
    %613 = vmatpush1.bf16.msra.mxu0 0
    %614 = vmatprep.subr.bf16.mxu0 0
    %615 = vmatpush1.bf16.msra.mxu0 1065369472
    %616 = vmatprep.subr.bf16.mxu0 0
    %617 = vmatpush2.bf16.msra.mxu0 0
    %618 = vmatprep.subr.bf16.mxu0 0
    %619 = vmatpush2.bf16.msra.mxu0 0
    %620 = vmatprep.subr.bf16.mxu0 0
    %621 = vmatpush2.bf16.msra.mxu0 0
    %622 = vmatprep.subr.bf16.mxu0 0
    %623 = vmatpush2.bf16.msra.mxu0 0
    %624 = vmatprep.subr.bf16.mxu0 0
    %625 = vmatpush2.bf16.msra.mxu0 0
    %626 = vmatprep.subr.bf16.mxu0 0
    %627 = vmatpush2.bf16.msra.mxu0 0
    %628 = vmatprep.subr.bf16.mxu0 0
    %629 = vmatpush2.bf16.msra.mxu0 0
    %630 = vmatprep.subr.bf16.mxu0 0
    %631 = vmatpush2.bf16.msra.mxu0 0
    %632 = vmatprep.mubr.bf16.mxu0 0
    %633 = vmatmul.mubr.bf16.gmra.mxu0 %v383
    %v634 = vpop.f32.mrf.mxu0
    %v635 = vadd.f32 0.0, %v634
    %v636 = vpop.f32.mrf.mxu0
    %v637 = vpop.f32.mrf.mxu0
    %v638 = vadd.f32 0.0, %v637
    %v639 = vpop.f32.mrf.mxu0
    %640 = vmatprep.mubr.bf16.mxu0 0
    %641 = vmatmul.mubr.bf16.gmra.mxu0 %v386
    %v642 = vpop.f32.mrf.mxu0
    %v643 = vadd.f32 0.0, %v642
    %v644 = vpop.f32.mrf.mxu0
    %v645 = vpop.f32.mrf.mxu0
    %v646 = vadd.f32 0.0, %v645
    %v647 = vpop.f32.mrf.mxu0
    %648 = vmatprep.mubr.bf16.mxu0 0
    %649 = vmatmul.mubr.bf16.gmra.mxu0 %v389
    %v650 = vpop.f32.mrf.mxu0
    %v651 = vadd.f32 0.0, %v650
    %v652 = vpop.f32.mrf.mxu0
    %v653 = vpop.f32.mrf.mxu0
    %v654 = vadd.f32 0.0, %v653
    %v655 = vpop.f32.mrf.mxu0
    %656 = vmatprep.mubr.bf16.mxu0 0
    %657 = vmatmul.mubr.bf16.gmra.mxu0 %v392
    %v658 = vpop.f32.mrf.mxu0
    %v659 = vadd.f32 0.0, %v658
    %v660 = vpop.f32.mrf.mxu0
    %v661 = vpop.f32.mrf.mxu0
    %v662 = vadd.f32 0.0, %v661
    %v663 = vpop.f32.mrf.mxu0
    %664 = vmatprep.mubr.bf16.mxu0 0
    %665 = vmatmul.mubr.bf16.gmra.mxu0 %v395
    %v666 = vpop.f32.mrf.mxu0
    %v667 = vadd.f32 0.0, %v666
    %v668 = vpop.f32.mrf.mxu0
    %v669 = vpop.f32.mrf.mxu0
    %v670 = vadd.f32 0.0, %v669
    %v671 = vpop.f32.mrf.mxu0
    %672 = vmatprep.mubr.bf16.mxu0 0
    %673 = vmatmul.mubr.bf16.gmra.mxu0 %v398
    %v674 = vpop.f32.mrf.mxu0
    %v675 = vadd.f32 0.0, %v674
    %v676 = vpop.f32.mrf.mxu0
    %v677 = vpop.f32.mrf.mxu0
    %v678 = vadd.f32 0.0, %v677
    %v679 = vpop.f32.mrf.mxu0
    %680 = vmatprep.mubr.bf16.mxu0 0
    %681 = vmatmul.mubr.bf16.gmra.mxu0 %v401
    %v682 = vpop.f32.mrf.mxu0
    %v683 = vadd.f32 0.0, %v682
    %v684 = vpop.f32.mrf.mxu0
    %v685 = vpop.f32.mrf.mxu0
    %v686 = vadd.f32 0.0, %v685
    %v687 = vpop.f32.mrf.mxu0
    %688 = vmatprep.mubr.bf16.mxu0 0
    %689 = vmatmul.mubr.bf16.gmra.mxu0 %v404
    %v690 = vpop.f32.mrf.mxu0
    %v691 = vadd.f32 0.0, %v690
    %v692 = vpop.f32.mrf.mxu0
    %v693 = vpop.f32.mrf.mxu0
    %v694 = vadd.f32 0.0, %v693
    %v695 = vpop.f32.mrf.mxu0
    %696 = vdwg.mxu0
    %v697 = vld [vmem:[%s2] sm:$0xff]
    %v698 = vld [vmem:[%s2 + $0x8] sm:$0xff]
    %v699 = vld [vmem:[%s2 + $0x10] sm:$0xff]
    %v700 = vld [vmem:[%s2 + $0x18] sm:$0xff]
    %v701 = vld [vmem:[%s2 + $0x20] sm:$0xff]
    %v702 = vld [vmem:[%s2 + $0x28] sm:$0xff]
    %v703 = vld [vmem:[%s2 + $0x30] sm:$0xff]
    %v704 = vld [vmem:[%s2 + $0x38] sm:$0xff]
    %v705 = vld [vmem:[%s2 + $0x40] sm:$0xff]
    %v706 = vld [vmem:[%s2 + $0x48] sm:$0xff]
    %v707 = vld [vmem:[%s2 + $0x50] sm:$0xff]
    %v708 = vld [vmem:[%s2 + $0x58] sm:$0xff]
    %v709 = vld [vmem:[%s2 + $0x60] sm:$0xff]
    %v710 = vld [vmem:[%s2 + $0x68] sm:$0xff]
    %v711 = vld [vmem:[%s2 + $0x70] sm:$0xff]
    %v712 = vld [vmem:[%s2 + $0x78] sm:$0xff]
    %714 = vset.pattern.permute.xlu0 0
    %715 = vperm.xlu0 %714, %v538
    %v716 = vpop.permute.xlu0 %715
    %719 = vset.pattern.permute.xlu0 0
    %720 = vperm.xlu0 %719, %v541
    %v721 = vpop.permute.xlu0 %720
    %724 = vset.pattern.permute.xlu0 0
    %725 = vperm.xlu0 %724, %v546
    %v726 = vpop.permute.xlu0 %725
    %729 = vset.pattern.permute.xlu0 0
    %730 = vperm.xlu0 %729, %v549
    %v731 = vpop.permute.xlu0 %730
    %734 = vset.pattern.permute.xlu0 0
    %735 = vperm.xlu0 %734, %v554
    %v736 = vpop.permute.xlu0 %735
    %739 = vset.pattern.permute.xlu0 0
    %740 = vperm.xlu0 %739, %v557
    %v741 = vpop.permute.xlu0 %740
    %744 = vset.pattern.permute.xlu0 0
    %745 = vperm.xlu0 %744, %v562
    %v746 = vpop.permute.xlu0 %745
    %749 = vset.pattern.permute.xlu0 0
    %750 = vperm.xlu0 %749, %v565
    %v751 = vpop.permute.xlu0 %750
    %754 = vset.pattern.permute.xlu0 0
    %755 = vperm.xlu0 %754, %v570
    %v756 = vpop.permute.xlu0 %755
    %759 = vset.pattern.permute.xlu0 0
    %760 = vperm.xlu0 %759, %v573
    %v761 = vpop.permute.xlu0 %760
    %764 = vset.pattern.permute.xlu0 0
    %765 = vperm.xlu0 %764, %v578
    %v766 = vpop.permute.xlu0 %765
    %769 = vset.pattern.permute.xlu0 0
    %770 = vperm.xlu0 %769, %v581
    %v771 = vpop.permute.xlu0 %770
    %774 = vset.pattern.permute.xlu0 0
    %775 = vperm.xlu0 %774, %v586
    %v776 = vpop.permute.xlu0 %775
    %779 = vset.pattern.permute.xlu0 0
    %780 = vperm.xlu0 %779, %v589
    %v781 = vpop.permute.xlu0 %780
    %784 = vset.pattern.permute.xlu0 0
    %785 = vperm.xlu0 %784, %v594
    %v786 = vpop.permute.xlu0 %785
    %789 = vset.pattern.permute.xlu0 0
    %790 = vperm.xlu0 %789, %v597
    %v791 = vpop.permute.xlu0 %790
    %794 = vset.pattern.permute.xlu0 0
    %795 = vperm.xlu0 %794, %v635
    %v796 = vpop.permute.xlu0 %795
    %799 = vset.pattern.permute.xlu0 0
    %800 = vperm.xlu0 %799, %v638
    %v801 = vpop.permute.xlu0 %800
    %804 = vset.pattern.permute.xlu0 0
    %805 = vperm.xlu0 %804, %v643
    %v806 = vpop.permute.xlu0 %805
    %809 = vset.pattern.permute.xlu0 0
    %810 = vperm.xlu0 %809, %v646
    %v811 = vpop.permute.xlu0 %810
    %814 = vset.pattern.permute.xlu0 0
    %815 = vperm.xlu0 %814, %v651
    %v816 = vpop.permute.xlu0 %815
    %819 = vset.pattern.permute.xlu0 0
    %820 = vperm.xlu0 %819, %v654
    %v821 = vpop.permute.xlu0 %820
    %824 = vset.pattern.permute.xlu0 0
    %825 = vperm.xlu0 %824, %v659
    %v826 = vpop.permute.xlu0 %825
    %829 = vset.pattern.permute.xlu0 0
    %830 = vperm.xlu0 %829, %v662
    %v831 = vpop.permute.xlu0 %830
    %834 = vset.pattern.permute.xlu0 0
    %835 = vperm.xlu0 %834, %v667
    %v836 = vpop.permute.xlu0 %835
    %839 = vset.pattern.permute.xlu0 0
    %840 = vperm.xlu0 %839, %v670
    %v841 = vpop.permute.xlu0 %840
    %844 = vset.pattern.permute.xlu0 0
    %845 = vperm.xlu0 %844, %v675
    %v846 = vpop.permute.xlu0 %845
    %849 = vset.pattern.permute.xlu0 0
    %850 = vperm.xlu0 %849, %v678
    %v851 = vpop.permute.xlu0 %850
    %854 = vset.pattern.permute.xlu0 0
    %855 = vperm.xlu0 %854, %v683
    %v856 = vpop.permute.xlu0 %855
    %859 = vset.pattern.permute.xlu0 0
    %860 = vperm.xlu0 %859, %v686
    %v861 = vpop.permute.xlu0 %860
    %864 = vset.pattern.permute.xlu0 0
    %865 = vperm.xlu0 %864, %v691
    %v866 = vpop.permute.xlu0 %865
    %869 = vset.pattern.permute.xlu0 0
    %870 = vperm.xlu0 %869, %v694
    %v871 = vpop.permute.xlu0 %870
    %v873 = vmul.f32 %v716, %v697
    %v874 = vmul.f32 %v721, %v698
    %v875 = vmul.f32 %v726, %v699
    %v876 = vmul.f32 %v731, %v700
    %v877 = vmul.f32 %v736, %v701
    %v878 = vmul.f32 %v741, %v702
    %v879 = vmul.f32 %v746, %v703
    %v880 = vmul.f32 %v751, %v704
    %v881 = vmul.f32 %v756, %v705
    %v882 = vmul.f32 %v761, %v706
    %v883 = vmul.f32 %v766, %v707
    %v884 = vmul.f32 %v771, %v708
    %v885 = vmul.f32 %v776, %v709
    %v886 = vmul.f32 %v781, %v710
    %v887 = vmul.f32 %v786, %v711
    %v888 = vmul.f32 %v791, %v712
    %v889 = vmul.f32 %v796, %v697
    %v890 = vmul.f32 %v801, %v698
    %v891 = vmul.f32 %v806, %v699
    %v892 = vmul.f32 %v811, %v700
    %v893 = vmul.f32 %v816, %v701
    %v894 = vmul.f32 %v821, %v702
    %v895 = vmul.f32 %v826, %v703
    %v896 = vmul.f32 %v831, %v704
    %v897 = vmul.f32 %v836, %v705
    %v898 = vmul.f32 %v841, %v706
    %v899 = vmul.f32 %v846, %v707
    %v900 = vmul.f32 %v851, %v708
    %v901 = vmul.f32 %v856, %v709
    %v902 = vmul.f32 %v861, %v710
    %v903 = vmul.f32 %v866, %v711
    %v904 = vmul.f32 %v871, %v712
    %v905 = vsub.f32 %v303, %v873
    %v906 = vsub.f32 %v306, %v874
    %v907 = vsub.f32 %v311, %v875
    %v908 = vsub.f32 %v314, %v876
    %v909 = vsub.f32 %v319, %v877
    %v910 = vsub.f32 %v322, %v878
    %v911 = vsub.f32 %v327, %v879
    %v912 = vsub.f32 %v330, %v880
    %v913 = vsub.f32 %v335, %v881
    %v914 = vsub.f32 %v338, %v882
    %v915 = vsub.f32 %v343, %v883
    %v916 = vsub.f32 %v346, %v884
    %v917 = vsub.f32 %v351, %v885
    %v918 = vsub.f32 %v354, %v886
    %v919 = vsub.f32 %v359, %v887
    %v920 = vsub.f32 %v362, %v888
    %v921 = vsub.f32 %v441, %v889
    %v922 = vsub.f32 %v444, %v890
    %v923 = vsub.f32 %v449, %v891
    %v924 = vsub.f32 %v452, %v892
    %v925 = vsub.f32 %v457, %v893
    %v926 = vsub.f32 %v460, %v894
    %v927 = vsub.f32 %v465, %v895
    %v928 = vsub.f32 %v468, %v896
    %v929 = vsub.f32 %v473, %v897
    %v930 = vsub.f32 %v476, %v898
    %v931 = vsub.f32 %v481, %v899
    %v932 = vsub.f32 %v484, %v900
    %v933 = vsub.f32 %v489, %v901
    %v934 = vsub.f32 %v492, %v902
    %v935 = vsub.f32 %v497, %v903
    %v936 = vsub.f32 %v500, %v904
    %v937 = vmul.f32 %v905, %v905
    %v938 = vmul.f32 %v906, %v906
    %v939 = vmul.f32 %v907, %v907
    %v940 = vmul.f32 %v908, %v908
    %v941 = vmul.f32 %v909, %v909
    %v942 = vmul.f32 %v910, %v910
    %v943 = vmul.f32 %v911, %v911
    %v944 = vmul.f32 %v912, %v912
    %v945 = vmul.f32 %v913, %v913
    %v946 = vmul.f32 %v914, %v914
    %v947 = vmul.f32 %v915, %v915
    %v948 = vmul.f32 %v916, %v916
    %v949 = vmul.f32 %v917, %v917
    %v950 = vmul.f32 %v918, %v918
    %v951 = vmul.f32 %v919, %v919
    %v952 = vmul.f32 %v920, %v920
    %v953 = vmul.f32 %v921, %v921
    %v954 = vmul.f32 %v922, %v922
    %v955 = vmul.f32 %v923, %v923
    %v956 = vmul.f32 %v924, %v924
    %v957 = vmul.f32 %v925, %v925
    %v958 = vmul.f32 %v926, %v926
    %v959 = vmul.f32 %v927, %v927
    %v960 = vmul.f32 %v928, %v928
    %v961 = vmul.f32 %v929, %v929
    %v962 = vmul.f32 %v930, %v930
    %v963 = vmul.f32 %v931, %v931
    %v964 = vmul.f32 %v932, %v932
    %v965 = vmul.f32 %v933, %v933
    %v966 = vmul.f32 %v934, %v934
    %v967 = vmul.f32 %v935, %v935
    %v968 = vmul.f32 %v936, %v936
    %v969 = vsel %vm73, %v937, 0.0
    %970 = vadd.xlane.f32.xlu0 %v969
    %v971 = vpop.xlane.xlu0 %970
    %v972 = vsel %vm73, %v938, 0.0
    %973 = vadd.xlane.f32.xlu0 %v972
    %v974 = vpop.xlane.xlu0 %973
    %v975 = vsel %vm73, %v939, 0.0
    %976 = vadd.xlane.f32.xlu0 %v975
    %v977 = vpop.xlane.xlu0 %976
    %v978 = vsel %vm73, %v940, 0.0
    %979 = vadd.xlane.f32.xlu0 %v978
    %v980 = vpop.xlane.xlu0 %979
    %v981 = vsel %vm73, %v941, 0.0
    %982 = vadd.xlane.f32.xlu0 %v981
    %v983 = vpop.xlane.xlu0 %982
    %v984 = vsel %vm73, %v942, 0.0
    %985 = vadd.xlane.f32.xlu0 %v984
    %v986 = vpop.xlane.xlu0 %985
    %v987 = vsel %vm73, %v943, 0.0
    %988 = vadd.xlane.f32.xlu0 %v987
    %v989 = vpop.xlane.xlu0 %988
    %v990 = vsel %vm73, %v944, 0.0
    %991 = vadd.xlane.f32.xlu0 %v990
    %v992 = vpop.xlane.xlu0 %991
    %v993 = vsel %vm73, %v945, 0.0
    %994 = vadd.xlane.f32.xlu0 %v993
    %v995 = vpop.xlane.xlu0 %994
    %v996 = vsel %vm73, %v946, 0.0
    %997 = vadd.xlane.f32.xlu0 %v996
    %v998 = vpop.xlane.xlu0 %997
    %v999 = vsel %vm73, %v947, 0.0
    %1000 = vadd.xlane.f32.xlu0 %v999
    %v1001 = vpop.xlane.xlu0 %1000
    %v1002 = vsel %vm73, %v948, 0.0
    %1003 = vadd.xlane.f32.xlu0 %v1002
    %v1004 = vpop.xlane.xlu0 %1003
    %v1005 = vsel %vm73, %v949, 0.0
    %1006 = vadd.xlane.f32.xlu0 %v1005
    %v1007 = vpop.xlane.xlu0 %1006
    %v1008 = vsel %vm73, %v950, 0.0
    %1009 = vadd.xlane.f32.xlu0 %v1008
    %v1010 = vpop.xlane.xlu0 %1009
    %v1011 = vsel %vm73, %v951, 0.0
    %1012 = vadd.xlane.f32.xlu0 %v1011
    %v1013 = vpop.xlane.xlu0 %1012
    %v1014 = vsel %vm73, %v952, 0.0
    %1015 = vadd.xlane.f32.xlu0 %v1014
    %v1016 = vpop.xlane.xlu0 %1015
    %v1017 = vsel %vm73, %v953, 0.0
    %1018 = vadd.xlane.f32.xlu0 %v1017
    %v1019 = vpop.xlane.xlu0 %1018
    %v1020 = vsel %vm73, %v954, 0.0
    %1021 = vadd.xlane.f32.xlu0 %v1020
    %v1022 = vpop.xlane.xlu0 %1021
    %v1023 = vsel %vm73, %v955, 0.0
    %1024 = vadd.xlane.f32.xlu0 %v1023
    %v1025 = vpop.xlane.xlu0 %1024
    %v1026 = vsel %vm73, %v956, 0.0
    %1027 = vadd.xlane.f32.xlu0 %v1026
    %v1028 = vpop.xlane.xlu0 %1027
    %v1029 = vsel %vm73, %v957, 0.0
    %1030 = vadd.xlane.f32.xlu0 %v1029
    %v1031 = vpop.xlane.xlu0 %1030
    %v1032 = vsel %vm73, %v958, 0.0
    %1033 = vadd.xlane.f32.xlu0 %v1032
    %v1034 = vpop.xlane.xlu0 %1033
    %v1035 = vsel %vm73, %v959, 0.0
    %1036 = vadd.xlane.f32.xlu0 %v1035
    %v1037 = vpop.xlane.xlu0 %1036
    %v1038 = vsel %vm73, %v960, 0.0
    %1039 = vadd.xlane.f32.xlu0 %v1038
    %v1040 = vpop.xlane.xlu0 %1039
    %v1041 = vsel %vm73, %v961, 0.0
    %1042 = vadd.xlane.f32.xlu0 %v1041
    %v1043 = vpop.xlane.xlu0 %1042
    %v1044 = vsel %vm73, %v962, 0.0
    %1045 = vadd.xlane.f32.xlu0 %v1044
    %v1046 = vpop.xlane.xlu0 %1045
    %v1047 = vsel %vm73, %v963, 0.0
    %1048 = vadd.xlane.f32.xlu0 %v1047
    %v1049 = vpop.xlane.xlu0 %1048
    %v1050 = vsel %vm73, %v964, 0.0
    %1051 = vadd.xlane.f32.xlu0 %v1050
    %v1052 = vpop.xlane.xlu0 %1051
    %v1053 = vsel %vm73, %v965, 0.0
    %1054 = vadd.xlane.f32.xlu0 %v1053
    %v1055 = vpop.xlane.xlu0 %1054
    %v1056 = vsel %vm73, %v966, 0.0
    %1057 = vadd.xlane.f32.xlu0 %v1056
    %v1058 = vpop.xlane.xlu0 %1057
    %v1059 = vsel %vm73, %v967, 0.0
    %1060 = vadd.xlane.f32.xlu0 %v1059
    %v1061 = vpop.xlane.xlu0 %1060
    %v1062 = vsel %vm73, %v968, 0.0
    %1063 = vadd.xlane.f32.xlu0 %v1062
    %v1064 = vpop.xlane.xlu0 %1063
    %v1065 = vmax.f32 %v971, 1e-24
    %v1066 = vmax.f32 %v974, 1e-24
    %v1067 = vmax.f32 %v977, 1e-24
    %v1068 = vmax.f32 %v980, 1e-24
    %v1069 = vmax.f32 %v983, 1e-24
    %v1070 = vmax.f32 %v986, 1e-24
    %v1071 = vmax.f32 %v989, 1e-24
    %v1072 = vmax.f32 %v992, 1e-24
    %v1073 = vmax.f32 %v995, 1e-24
    %v1074 = vmax.f32 %v998, 1e-24
    %v1075 = vmax.f32 %v1001, 1e-24
    %v1076 = vmax.f32 %v1004, 1e-24
    %v1077 = vmax.f32 %v1007, 1e-24
    %v1078 = vmax.f32 %v1010, 1e-24
    %v1079 = vmax.f32 %v1013, 1e-24
    %v1080 = vmax.f32 %v1016, 1e-24
    %v1081 = vmax.f32 %v1019, 1e-24
    %v1082 = vmax.f32 %v1022, 1e-24
    %v1083 = vmax.f32 %v1025, 1e-24
    %v1084 = vmax.f32 %v1028, 1e-24
    %v1085 = vmax.f32 %v1031, 1e-24
    %v1086 = vmax.f32 %v1034, 1e-24
    %v1087 = vmax.f32 %v1037, 1e-24
    %v1088 = vmax.f32 %v1040, 1e-24
    %v1089 = vmax.f32 %v1043, 1e-24
    %v1090 = vmax.f32 %v1046, 1e-24
    %v1091 = vmax.f32 %v1049, 1e-24
    %v1092 = vmax.f32 %v1052, 1e-24
    %v1093 = vmax.f32 %v1055, 1e-24
    %v1094 = vmax.f32 %v1058, 1e-24
    %v1095 = vmax.f32 %v1061, 1e-24
    %v1096 = vmax.f32 %v1064, 1e-24
    %v1097 = vrsqrt.pop %v1065
    %v1098 = vrsqrt.pop %v1066
    %v1099 = vrsqrt.pop %v1067
    %v1100 = vrsqrt.pop %v1068
    %v1101 = vrsqrt.pop %v1069
    %v1102 = vrsqrt.pop %v1070
    %v1103 = vrsqrt.pop %v1071
    %v1104 = vrsqrt.pop %v1072
    %v1105 = vrsqrt.pop %v1073
    %v1106 = vrsqrt.pop %v1074
    %v1107 = vrsqrt.pop %v1075
    %v1108 = vrsqrt.pop %v1076
    %v1109 = vrsqrt.pop %v1077
    %v1110 = vrsqrt.pop %v1078
    %v1111 = vrsqrt.pop %v1079
    %v1112 = vrsqrt.pop %v1080
    %v1113 = vrsqrt.pop %v1081
    %v1114 = vrsqrt.pop %v1082
    %v1115 = vrsqrt.pop %v1083
    %v1116 = vrsqrt.pop %v1084
    %v1117 = vrsqrt.pop %v1085
    %v1118 = vrsqrt.pop %v1086
    %v1119 = vrsqrt.pop %v1087
    %v1120 = vrsqrt.pop %v1088
    %v1121 = vrsqrt.pop %v1089
    %v1122 = vrsqrt.pop %v1090
    %v1123 = vrsqrt.pop %v1091
    %v1124 = vrsqrt.pop %v1092
    %v1125 = vrsqrt.pop %v1093
    %v1126 = vrsqrt.pop %v1094
    %v1127 = vrsqrt.pop %v1095
    %v1128 = vrsqrt.pop %v1096
    %v1129 = vmul.f32 %v971, %v1097
    %v1130 = vmul.f32 %v974, %v1098
    %v1131 = vmul.f32 %v977, %v1099
    %v1132 = vmul.f32 %v980, %v1100
    %v1133 = vmul.f32 %v983, %v1101
    %v1134 = vmul.f32 %v986, %v1102
    %v1135 = vmul.f32 %v989, %v1103
    %v1136 = vmul.f32 %v992, %v1104
    %v1137 = vmul.f32 %v995, %v1105
    %v1138 = vmul.f32 %v998, %v1106
    %v1139 = vmul.f32 %v1001, %v1107
    %v1140 = vmul.f32 %v1004, %v1108
    %v1141 = vmul.f32 %v1007, %v1109
    %v1142 = vmul.f32 %v1010, %v1110
    %v1143 = vmul.f32 %v1013, %v1111
    %v1144 = vmul.f32 %v1016, %v1112
    %v1145 = vmul.f32 %v1019, %v1113
    %v1146 = vmul.f32 %v1022, %v1114
    %v1147 = vmul.f32 %v1025, %v1115
    %v1148 = vmul.f32 %v1028, %v1116
    %v1149 = vmul.f32 %v1031, %v1117
    %v1150 = vmul.f32 %v1034, %v1118
    %v1151 = vmul.f32 %v1037, %v1119
    %v1152 = vmul.f32 %v1040, %v1120
    %v1153 = vmul.f32 %v1043, %v1121
    %v1154 = vmul.f32 %v1046, %v1122
    %v1155 = vmul.f32 %v1049, %v1123
    %v1156 = vmul.f32 %v1052, %v1124
    %v1157 = vmul.f32 %v1055, %v1125
    %v1158 = vmul.f32 %v1058, %v1126
    %v1159 = vmul.f32 %v1061, %v1127
    %v1160 = vmul.f32 %v1064, %v1128
    %v1161 = vmul.f32 %v1129, %v1097
    %v1162 = vmul.f32 %v1130, %v1098
    %v1163 = vmul.f32 %v1131, %v1099
    %v1164 = vmul.f32 %v1132, %v1100
    %v1165 = vmul.f32 %v1133, %v1101
    %v1166 = vmul.f32 %v1134, %v1102
    %v1167 = vmul.f32 %v1135, %v1103
    %v1168 = vmul.f32 %v1136, %v1104
    %v1169 = vmul.f32 %v1137, %v1105
    %v1170 = vmul.f32 %v1138, %v1106
    %v1171 = vmul.f32 %v1139, %v1107
    %v1172 = vmul.f32 %v1140, %v1108
    %v1173 = vmul.f32 %v1141, %v1109
    %v1174 = vmul.f32 %v1142, %v1110
    %v1175 = vmul.f32 %v1143, %v1111
    %v1176 = vmul.f32 %v1144, %v1112
    %v1177 = vmul.f32 %v1145, %v1113
    %v1178 = vmul.f32 %v1146, %v1114
    %v1179 = vmul.f32 %v1147, %v1115
    %v1180 = vmul.f32 %v1148, %v1116
    %v1181 = vmul.f32 %v1149, %v1117
    %v1182 = vmul.f32 %v1150, %v1118
    %v1183 = vmul.f32 %v1151, %v1119
    %v1184 = vmul.f32 %v1152, %v1120
    %v1185 = vmul.f32 %v1153, %v1121
    %v1186 = vmul.f32 %v1154, %v1122
    %v1187 = vmul.f32 %v1155, %v1123
    %v1188 = vmul.f32 %v1156, %v1124
    %v1189 = vmul.f32 %v1157, %v1125
    %v1190 = vmul.f32 %v1158, %v1126
    %v1191 = vmul.f32 %v1159, %v1127
    %v1192 = vmul.f32 %v1160, %v1128
    %v1193 = vadd.f32 %v1161, %v1162
    %v1194 = vadd.f32 %v1193, %v1163
    %v1195 = vadd.f32 %v1194, %v1164
    %v1196 = vadd.f32 %v1195, %v1165
    %v1197 = vadd.f32 %v1196, %v1166
    %v1198 = vadd.f32 %v1197, %v1167
    %v1199 = vadd.f32 %v1198, %v1168
    %v1200 = vadd.f32 %v1199, %v1169
    %v1201 = vadd.f32 %v1200, %v1170
    %v1202 = vadd.f32 %v1201, %v1171
    %v1203 = vadd.f32 %v1202, %v1172
    %v1204 = vadd.f32 %v1203, %v1173
    %v1205 = vadd.f32 %v1204, %v1174
    %v1206 = vadd.f32 %v1205, %v1175
    %v1207 = vadd.f32 %v1206, %v1176
    %v1208 = vrot.slane %v1207, 4
    %v1209 = vadd.f32 %v1207, %v1208
    %v1210 = vrot.slane %v1209, 2
    %v1211 = vadd.f32 %v1209, %v1210
    %v1212 = vrot.slane %v1211, 1
    %v1213 = vadd.f32 %v1211, %v1212
    %v1214 = vadd.f32 %v1177, %v1178
    %v1215 = vadd.f32 %v1214, %v1179
    %v1216 = vadd.f32 %v1215, %v1180
    %v1217 = vadd.f32 %v1216, %v1181
    %v1218 = vadd.f32 %v1217, %v1182
    %v1219 = vadd.f32 %v1218, %v1183
    %v1220 = vadd.f32 %v1219, %v1184
    %v1221 = vadd.f32 %v1220, %v1185
    %v1222 = vadd.f32 %v1221, %v1186
    %v1223 = vadd.f32 %v1222, %v1187
    %v1224 = vadd.f32 %v1223, %v1188
    %v1225 = vadd.f32 %v1224, %v1189
    %v1226 = vadd.f32 %v1225, %v1190
    %v1227 = vadd.f32 %v1226, %v1191
    %v1228 = vadd.f32 %v1227, %v1192
    %v1229 = vrot.slane %v1228, 4
    %v1230 = vadd.f32 %v1228, %v1229
    %v1231 = vrot.slane %v1230, 2
    %v1232 = vadd.f32 %v1230, %v1231
    %v1233 = vrot.slane %v1232, 1
    %v1234 = vadd.f32 %v1232, %v1233
    %v1235 = vmax.f32 %v1213, 1e-24
    %v1236 = vmax.f32 %v1234, 1e-24
    %v1237 = vrsqrt.pop %v1235
    %v1238 = vrsqrt.pop %v1236
    %v1239 = vmul.f32 %v1097, %v1237
    %v1240 = vmul.f32 %v1098, %v1237
    %v1241 = vmul.f32 %v1099, %v1237
    %v1242 = vmul.f32 %v1100, %v1237
    %v1243 = vmul.f32 %v1101, %v1237
    %v1244 = vmul.f32 %v1102, %v1237
    %v1245 = vmul.f32 %v1103, %v1237
    %v1246 = vmul.f32 %v1104, %v1237
    %v1247 = vmul.f32 %v1105, %v1237
    %v1248 = vmul.f32 %v1106, %v1237
    %v1249 = vmul.f32 %v1107, %v1237
    %v1250 = vmul.f32 %v1108, %v1237
    %v1251 = vmul.f32 %v1109, %v1237
    %v1252 = vmul.f32 %v1110, %v1237
    %v1253 = vmul.f32 %v1111, %v1237
    %v1254 = vmul.f32 %v1112, %v1237
    %v1255 = vmul.f32 %v1113, %v1238
    %v1256 = vmul.f32 %v1114, %v1238
    %v1257 = vmul.f32 %v1115, %v1238
    %v1258 = vmul.f32 %v1116, %v1238
    %v1259 = vmul.f32 %v1117, %v1238
    %v1260 = vmul.f32 %v1118, %v1238
    %v1261 = vmul.f32 %v1119, %v1238
    %v1262 = vmul.f32 %v1120, %v1238
    %v1263 = vmul.f32 %v1121, %v1238
    %v1264 = vmul.f32 %v1122, %v1238
    %v1265 = vmul.f32 %v1123, %v1238
    %v1266 = vmul.f32 %v1124, %v1238
    %v1267 = vmul.f32 %v1125, %v1238
    %v1268 = vmul.f32 %v1126, %v1238
    %v1269 = vmul.f32 %v1127, %v1238
    %v1270 = vmul.f32 %v1128, %v1238
    %v1271 = vmul.f32 %v905, %v1239
    %v1272 = vmul.f32 %v906, %v1240
    %v1273 = vmul.f32 %v907, %v1241
    %v1274 = vmul.f32 %v908, %v1242
    %v1275 = vmul.f32 %v909, %v1243
    %v1276 = vmul.f32 %v910, %v1244
    %v1277 = vmul.f32 %v911, %v1245
    %v1278 = vmul.f32 %v912, %v1246
    %v1279 = vmul.f32 %v913, %v1247
    %v1280 = vmul.f32 %v914, %v1248
    %v1281 = vmul.f32 %v915, %v1249
    %v1282 = vmul.f32 %v916, %v1250
    %v1283 = vmul.f32 %v917, %v1251
    %v1284 = vmul.f32 %v918, %v1252
    %v1285 = vmul.f32 %v919, %v1253
    %v1286 = vmul.f32 %v920, %v1254
    %v1287 = vmul.f32 %v921, %v1255
    %v1288 = vmul.f32 %v922, %v1256
    %v1289 = vmul.f32 %v923, %v1257
    %v1290 = vmul.f32 %v924, %v1258
    %v1291 = vmul.f32 %v925, %v1259
    %v1292 = vmul.f32 %v926, %v1260
    %v1293 = vmul.f32 %v927, %v1261
    %v1294 = vmul.f32 %v928, %v1262
    %v1295 = vmul.f32 %v929, %v1263
    %v1296 = vmul.f32 %v930, %v1264
    %v1297 = vmul.f32 %v931, %v1265
    %v1298 = vmul.f32 %v932, %v1266
    %v1299 = vmul.f32 %v933, %v1267
    %v1300 = vmul.f32 %v934, %v1268
    %v1301 = vmul.f32 %v935, %v1269
    %v1302 = vmul.f32 %v936, %v1270
    %v1306 = vunpack.c.l.s4 1983009808
    %v1307 = vunpack.c.0.s8 %v1306
    %v1308 = vlaneseq
    %v1309 = vshrl.u32 %v1308, 7
    %v1310 = vsub.s32 %v1307, %v1309
    %v1311 = vrot.slane %v1271, %v1310
    %v1313 = vunpack.c.l.s4 1983009808
    %v1314 = vunpack.c.0.s8 %v1313
    %v1315 = vlaneseq
    %v1316 = vshrl.u32 %v1315, 7
    %v1317 = vsub.s32 %v1314, %v1316
    %v1318 = vrot.slane %v1287, %v1317
    %vm1319 = vcmask 1044484
    %v1320 = vsel %vm1319, %v1311, %v1311
    %vm1321 = vcmask 1046534
    %v1322 = vsel %vm1321, %v1311, %v1320
    %v1323 = vrot.slane %v1318, 7
    %vm1324 = vcmask 1041409
    %v1325 = vsel %vm1324, %v1323, %v1322
    %vm1326 = vcmask 1043459
    %v1327 = vsel %vm1326, %v1323, %v1325
    %vm1328 = vcmask 1045509
    %v1329 = vsel %vm1328, %v1323, %v1327
    %vm1330 = vcmask 1047559
    %v1331 = vsel %vm1330, %v1323, %v1329
    %vm1333 = vcmask 254976
    %1334 = vst.msk [vmem:[#allocation2] sm:$0x3] %vm1333, %v1331
    %v1335 = vrot.slane %v1311, 1
    %v1336 = vsel %vm1319, %v1335, %v1335
    %v1337 = vsel %vm1321, %v1335, %v1336
    %v1338 = vsel %vm1324, %v1318, %v1337
    %v1339 = vsel %vm1326, %v1318, %v1338
    %v1340 = vsel %vm1328, %v1318, %v1339
    %v1341 = vsel %vm1330, %v1318, %v1340
    %1342 = vrot.lane.b32.xlu0 %v1341, 32
    %v1343 = vpop.permute.xlu0 %1342
    %vm1345 = vcmask 517376
    %1346 = vst.msk [vmem:[#allocation2] sm:$0x3] %vm1345, %v1343
    %v1347 = vcombine.high %v1311, %v1311
    %v1348 = vcombine.high %v1318, %v1318
    %v1349 = vsel %vm1319, %v1347, %v1347
    %v1350 = vsel %vm1321, %v1347, %v1349
    %v1351 = vrot.slane %v1348, 7
    %v1352 = vsel %vm1324, %v1351, %v1350
    %v1353 = vsel %vm1326, %v1351, %v1352
    %v1354 = vsel %vm1328, %v1351, %v1353
    %v1355 = vsel %vm1330, %v1351, %v1354
    %1356 = vrot.lane.b32.xlu0 %v1355, 64
    %v1357 = vpop.permute.xlu0 %1356
    %vm1359 = vcmask 779776
    %1360 = vst.msk [vmem:[#allocation2] sm:$0x3] %vm1359, %v1357
    %v1361 = vrot.slane %v1347, 1
    %v1362 = vsel %vm1319, %v1361, %v1361
    %v1363 = vsel %vm1321, %v1361, %v1362
    %v1364 = vsel %vm1324, %v1348, %v1363
    %v1365 = vsel %vm1326, %v1348, %v1364
    %v1366 = vsel %vm1328, %v1348, %v1365
    %v1367 = vsel %vm1330, %v1348, %v1366
    %1368 = vrot.lane.b32.xlu0 %v1367, 96
    %v1369 = vpop.permute.xlu0 %1368
    %vm1371 = vcmask 1042176
    %1372 = vst.msk [vmem:[#allocation2] sm:$0x3] %vm1371, %v1369
    %v1373 = vcombine.high %v1271, %v1271
    %v1375 = vunpack.c.l.s4 1983009808
    %v1376 = vunpack.c.0.s8 %v1375
    %v1377 = vlaneseq
    %v1378 = vshrl.u32 %v1377, 7
    %v1379 = vsub.s32 %v1376, %v1378
    %v1380 = vrot.slane %v1373, %v1379
    %v1381 = vcombine.high %v1287, %v1287
    %v1383 = vunpack.c.l.s4 1983009808
    %v1384 = vunpack.c.0.s8 %v1383
    %v1385 = vlaneseq
    %v1386 = vshrl.u32 %v1385, 7
    %v1387 = vsub.s32 %v1384, %v1386
    %v1388 = vrot.slane %v1381, %v1387
    %v1389 = vsel %vm1319, %v1380, %v1380
    %v1390 = vsel %vm1321, %v1380, %v1389
    %v1391 = vrot.slane %v1388, 7
    %v1392 = vsel %vm1324, %v1391, %v1390
    %v1393 = vsel %vm1326, %v1391, %v1392
    %v1394 = vsel %vm1328, %v1391, %v1393
    %v1395 = vsel %vm1330, %v1391, %v1394
    %1397 = vst.msk [vmem:[#allocation2 + $0x2] sm:$0x3] %vm1333, %v1395
    %v1398 = vrot.slane %v1380, 1
    %v1399 = vsel %vm1319, %v1398, %v1398
    %v1400 = vsel %vm1321, %v1398, %v1399
    %v1401 = vsel %vm1324, %v1388, %v1400
    %v1402 = vsel %vm1326, %v1388, %v1401
    %v1403 = vsel %vm1328, %v1388, %v1402
    %v1404 = vsel %vm1330, %v1388, %v1403
    %1405 = vrot.lane.b32.xlu0 %v1404, 32
    %v1406 = vpop.permute.xlu0 %1405
    %1408 = vst.msk [vmem:[#allocation2 + $0x2] sm:$0x3] %vm1345, %v1406
    %v1409 = vcombine.high %v1380, %v1380
    %v1410 = vcombine.high %v1388, %v1388
    %v1411 = vsel %vm1319, %v1409, %v1409
    %v1412 = vsel %vm1321, %v1409, %v1411
    %v1413 = vrot.slane %v1410, 7
    %v1414 = vsel %vm1324, %v1413, %v1412
    %v1415 = vsel %vm1326, %v1413, %v1414
    %v1416 = vsel %vm1328, %v1413, %v1415
    %v1417 = vsel %vm1330, %v1413, %v1416
    %1418 = vrot.lane.b32.xlu0 %v1417, 64
    %v1419 = vpop.permute.xlu0 %1418
    %1421 = vst.msk [vmem:[#allocation2 + $0x2] sm:$0x3] %vm1359, %v1419
    %v1422 = vrot.slane %v1409, 1
    %v1423 = vsel %vm1319, %v1422, %v1422
    %v1424 = vsel %vm1321, %v1422, %v1423
    %v1425 = vsel %vm1324, %v1410, %v1424
    %v1426 = vsel %vm1326, %v1410, %v1425
    %v1427 = vsel %vm1328, %v1410, %v1426
    %v1428 = vsel %vm1330, %v1410, %v1427
    %1429 = vrot.lane.b32.xlu0 %v1428, 96
    %v1430 = vpop.permute.xlu0 %1429
    %1432 = vst.msk [vmem:[#allocation2 + $0x2] sm:$0x3] %vm1371, %v1430
    %v1436 = vunpack.c.l.s4 1983009808
    %v1437 = vunpack.c.0.s8 %v1436
    %v1438 = vlaneseq
    %v1439 = vshrl.u32 %v1438, 7
    %v1440 = vsub.s32 %v1437, %v1439
    %v1441 = vrot.slane %v1272, %v1440
    %v1443 = vunpack.c.l.s4 1983009808
    %v1444 = vunpack.c.0.s8 %v1443
    %v1445 = vlaneseq
    %v1446 = vshrl.u32 %v1445, 7
    %v1447 = vsub.s32 %v1444, %v1446
    %v1448 = vrot.slane %v1288, %v1447
    %v1449 = vsel %vm1319, %v1441, %v1441
    %v1450 = vsel %vm1321, %v1441, %v1449
    %v1451 = vrot.slane %v1448, 7
    %v1452 = vsel %vm1324, %v1451, %v1450
    %v1453 = vsel %vm1326, %v1451, %v1452
    %v1454 = vsel %vm1328, %v1451, %v1453
    %v1455 = vsel %vm1330, %v1451, %v1454
    %1457 = vst.msk [vmem:[#allocation2 + $0x4] sm:$0x3] %vm1333, %v1455
    %v1458 = vrot.slane %v1441, 1
    %v1459 = vsel %vm1319, %v1458, %v1458
    %v1460 = vsel %vm1321, %v1458, %v1459
    %v1461 = vsel %vm1324, %v1448, %v1460
    %v1462 = vsel %vm1326, %v1448, %v1461
    %v1463 = vsel %vm1328, %v1448, %v1462
    %v1464 = vsel %vm1330, %v1448, %v1463
    %1465 = vrot.lane.b32.xlu0 %v1464, 32
    %v1466 = vpop.permute.xlu0 %1465
    %1468 = vst.msk [vmem:[#allocation2 + $0x4] sm:$0x3] %vm1345, %v1466
    %v1469 = vcombine.high %v1441, %v1441
    %v1470 = vcombine.high %v1448, %v1448
    %v1471 = vsel %vm1319, %v1469, %v1469
    %v1472 = vsel %vm1321, %v1469, %v1471
    %v1473 = vrot.slane %v1470, 7
    %v1474 = vsel %vm1324, %v1473, %v1472
    %v1475 = vsel %vm1326, %v1473, %v1474
    %v1476 = vsel %vm1328, %v1473, %v1475
    %v1477 = vsel %vm1330, %v1473, %v1476
    %1478 = vrot.lane.b32.xlu0 %v1477, 64
    %v1479 = vpop.permute.xlu0 %1478
    %1481 = vst.msk [vmem:[#allocation2 + $0x4] sm:$0x3] %vm1359, %v1479
    %v1482 = vrot.slane %v1469, 1
    %v1483 = vsel %vm1319, %v1482, %v1482
    %v1484 = vsel %vm1321, %v1482, %v1483
    %v1485 = vsel %vm1324, %v1470, %v1484
    %v1486 = vsel %vm1326, %v1470, %v1485
    %v1487 = vsel %vm1328, %v1470, %v1486
    %v1488 = vsel %vm1330, %v1470, %v1487
    %1489 = vrot.lane.b32.xlu0 %v1488, 96
    %v1490 = vpop.permute.xlu0 %1489
    %1492 = vst.msk [vmem:[#allocation2 + $0x4] sm:$0x3] %vm1371, %v1490
    %v1493 = vcombine.high %v1272, %v1272
    %v1495 = vunpack.c.l.s4 1983009808
    %v1496 = vunpack.c.0.s8 %v1495
    %v1497 = vlaneseq
    %v1498 = vshrl.u32 %v1497, 7
    %v1499 = vsub.s32 %v1496, %v1498
    %v1500 = vrot.slane %v1493, %v1499
    %v1501 = vcombine.high %v1288, %v1288
    %v1503 = vunpack.c.l.s4 1983009808
    %v1504 = vunpack.c.0.s8 %v1503
    %v1505 = vlaneseq
    %v1506 = vshrl.u32 %v1505, 7
    %v1507 = vsub.s32 %v1504, %v1506
    %v1508 = vrot.slane %v1501, %v1507
    %v1509 = vsel %vm1319, %v1500, %v1500
    %v1510 = vsel %vm1321, %v1500, %v1509
    %v1511 = vrot.slane %v1508, 7
    %v1512 = vsel %vm1324, %v1511, %v1510
    %v1513 = vsel %vm1326, %v1511, %v1512
    %v1514 = vsel %vm1328, %v1511, %v1513
    %v1515 = vsel %vm1330, %v1511, %v1514
    %1517 = vst.msk [vmem:[#allocation2 + $0x6] sm:$0x3] %vm1333, %v1515
    %v1518 = vrot.slane %v1500, 1
    %v1519 = vsel %vm1319, %v1518, %v1518
    %v1520 = vsel %vm1321, %v1518, %v1519
    %v1521 = vsel %vm1324, %v1508, %v1520
    %v1522 = vsel %vm1326, %v1508, %v1521
    %v1523 = vsel %vm1328, %v1508, %v1522
    %v1524 = vsel %vm1330, %v1508, %v1523
    %1525 = vrot.lane.b32.xlu0 %v1524, 32
    %v1526 = vpop.permute.xlu0 %1525
    %1528 = vst.msk [vmem:[#allocation2 + $0x6] sm:$0x3] %vm1345, %v1526
    %v1529 = vcombine.high %v1500, %v1500
    %v1530 = vcombine.high %v1508, %v1508
    %v1531 = vsel %vm1319, %v1529, %v1529
    %v1532 = vsel %vm1321, %v1529, %v1531
    %v1533 = vrot.slane %v1530, 7
    %v1534 = vsel %vm1324, %v1533, %v1532
    %v1535 = vsel %vm1326, %v1533, %v1534
    %v1536 = vsel %vm1328, %v1533, %v1535
    %v1537 = vsel %vm1330, %v1533, %v1536
    %1538 = vrot.lane.b32.xlu0 %v1537, 64
    %v1539 = vpop.permute.xlu0 %1538
    %1541 = vst.msk [vmem:[#allocation2 + $0x6] sm:$0x3] %vm1359, %v1539
    %v1542 = vrot.slane %v1529, 1
    %v1543 = vsel %vm1319, %v1542, %v1542
    %v1544 = vsel %vm1321, %v1542, %v1543
    %v1545 = vsel %vm1324, %v1530, %v1544
    %v1546 = vsel %vm1326, %v1530, %v1545
    %v1547 = vsel %vm1328, %v1530, %v1546
    %v1548 = vsel %vm1330, %v1530, %v1547
    %1549 = vrot.lane.b32.xlu0 %v1548, 96
    %v1550 = vpop.permute.xlu0 %1549
    %1552 = vst.msk [vmem:[#allocation2 + $0x6] sm:$0x3] %vm1371, %v1550
    %v1556 = vunpack.c.l.s4 1983009808
    %v1557 = vunpack.c.0.s8 %v1556
    %v1558 = vlaneseq
    %v1559 = vshrl.u32 %v1558, 7
    %v1560 = vsub.s32 %v1557, %v1559
    %v1561 = vrot.slane %v1273, %v1560
    %v1563 = vunpack.c.l.s4 1983009808
    %v1564 = vunpack.c.0.s8 %v1563
    %v1565 = vlaneseq
    %v1566 = vshrl.u32 %v1565, 7
    %v1567 = vsub.s32 %v1564, %v1566
    %v1568 = vrot.slane %v1289, %v1567
    %v1569 = vsel %vm1319, %v1561, %v1561
    %v1570 = vsel %vm1321, %v1561, %v1569
    %v1571 = vrot.slane %v1568, 7
    %v1572 = vsel %vm1324, %v1571, %v1570
    %v1573 = vsel %vm1326, %v1571, %v1572
    %v1574 = vsel %vm1328, %v1571, %v1573
    %v1575 = vsel %vm1330, %v1571, %v1574
    %1577 = vst.msk [vmem:[#allocation2 + $0x8] sm:$0x3] %vm1333, %v1575
    %v1578 = vrot.slane %v1561, 1
    %v1579 = vsel %vm1319, %v1578, %v1578
    %v1580 = vsel %vm1321, %v1578, %v1579
    %v1581 = vsel %vm1324, %v1568, %v1580
    %v1582 = vsel %vm1326, %v1568, %v1581
    %v1583 = vsel %vm1328, %v1568, %v1582
    %v1584 = vsel %vm1330, %v1568, %v1583
    %1585 = vrot.lane.b32.xlu0 %v1584, 32
    %v1586 = vpop.permute.xlu0 %1585
    %1588 = vst.msk [vmem:[#allocation2 + $0x8] sm:$0x3] %vm1345, %v1586
    %v1589 = vcombine.high %v1561, %v1561
    %v1590 = vcombine.high %v1568, %v1568
    %v1591 = vsel %vm1319, %v1589, %v1589
    %v1592 = vsel %vm1321, %v1589, %v1591
    %v1593 = vrot.slane %v1590, 7
    %v1594 = vsel %vm1324, %v1593, %v1592
    %v1595 = vsel %vm1326, %v1593, %v1594
    %v1596 = vsel %vm1328, %v1593, %v1595
    %v1597 = vsel %vm1330, %v1593, %v1596
    %1598 = vrot.lane.b32.xlu0 %v1597, 64
    %v1599 = vpop.permute.xlu0 %1598
    %1601 = vst.msk [vmem:[#allocation2 + $0x8] sm:$0x3] %vm1359, %v1599
    %v1602 = vrot.slane %v1589, 1
    %v1603 = vsel %vm1319, %v1602, %v1602
    %v1604 = vsel %vm1321, %v1602, %v1603
    %v1605 = vsel %vm1324, %v1590, %v1604
    %v1606 = vsel %vm1326, %v1590, %v1605
    %v1607 = vsel %vm1328, %v1590, %v1606
    %v1608 = vsel %vm1330, %v1590, %v1607
    %1609 = vrot.lane.b32.xlu0 %v1608, 96
    %v1610 = vpop.permute.xlu0 %1609
    %1612 = vst.msk [vmem:[#allocation2 + $0x8] sm:$0x3] %vm1371, %v1610
    %v1613 = vcombine.high %v1273, %v1273
    %v1615 = vunpack.c.l.s4 1983009808
    %v1616 = vunpack.c.0.s8 %v1615
    %v1617 = vlaneseq
    %v1618 = vshrl.u32 %v1617, 7
    %v1619 = vsub.s32 %v1616, %v1618
    %v1620 = vrot.slane %v1613, %v1619
    %v1621 = vcombine.high %v1289, %v1289
    %v1623 = vunpack.c.l.s4 1983009808
    %v1624 = vunpack.c.0.s8 %v1623
    %v1625 = vlaneseq
    %v1626 = vshrl.u32 %v1625, 7
    %v1627 = vsub.s32 %v1624, %v1626
    %v1628 = vrot.slane %v1621, %v1627
    %v1629 = vsel %vm1319, %v1620, %v1620
    %v1630 = vsel %vm1321, %v1620, %v1629
    %v1631 = vrot.slane %v1628, 7
    %v1632 = vsel %vm1324, %v1631, %v1630
    %v1633 = vsel %vm1326, %v1631, %v1632
    %v1634 = vsel %vm1328, %v1631, %v1633
    %v1635 = vsel %vm1330, %v1631, %v1634
    %1637 = vst.msk [vmem:[#allocation2 + $0xa] sm:$0x3] %vm1333, %v1635
    %v1638 = vrot.slane %v1620, 1
    %v1639 = vsel %vm1319, %v1638, %v1638
    %v1640 = vsel %vm1321, %v1638, %v1639
    %v1641 = vsel %vm1324, %v1628, %v1640
    %v1642 = vsel %vm1326, %v1628, %v1641
    %v1643 = vsel %vm1328, %v1628, %v1642
    %v1644 = vsel %vm1330, %v1628, %v1643
    %1645 = vrot.lane.b32.xlu0 %v1644, 32
    %v1646 = vpop.permute.xlu0 %1645
    %1648 = vst.msk [vmem:[#allocation2 + $0xa] sm:$0x3] %vm1345, %v1646
    %v1649 = vcombine.high %v1620, %v1620
    %v1650 = vcombine.high %v1628, %v1628
    %v1651 = vsel %vm1319, %v1649, %v1649
    %v1652 = vsel %vm1321, %v1649, %v1651
    %v1653 = vrot.slane %v1650, 7
    %v1654 = vsel %vm1324, %v1653, %v1652
    %v1655 = vsel %vm1326, %v1653, %v1654
    %v1656 = vsel %vm1328, %v1653, %v1655
    %v1657 = vsel %vm1330, %v1653, %v1656
    %1658 = vrot.lane.b32.xlu0 %v1657, 64
    %v1659 = vpop.permute.xlu0 %1658
    %1661 = vst.msk [vmem:[#allocation2 + $0xa] sm:$0x3] %vm1359, %v1659
    %v1662 = vrot.slane %v1649, 1
    %v1663 = vsel %vm1319, %v1662, %v1662
    %v1664 = vsel %vm1321, %v1662, %v1663
    %v1665 = vsel %vm1324, %v1650, %v1664
    %v1666 = vsel %vm1326, %v1650, %v1665
    %v1667 = vsel %vm1328, %v1650, %v1666
    %v1668 = vsel %vm1330, %v1650, %v1667
    %1669 = vrot.lane.b32.xlu0 %v1668, 96
    %v1670 = vpop.permute.xlu0 %1669
    %1672 = vst.msk [vmem:[#allocation2 + $0xa] sm:$0x3] %vm1371, %v1670
    %v1676 = vunpack.c.l.s4 1983009808
    %v1677 = vunpack.c.0.s8 %v1676
    %v1678 = vlaneseq
    %v1679 = vshrl.u32 %v1678, 7
    %v1680 = vsub.s32 %v1677, %v1679
    %v1681 = vrot.slane %v1274, %v1680
    %v1683 = vunpack.c.l.s4 1983009808
    %v1684 = vunpack.c.0.s8 %v1683
    %v1685 = vlaneseq
    %v1686 = vshrl.u32 %v1685, 7
    %v1687 = vsub.s32 %v1684, %v1686
    %v1688 = vrot.slane %v1290, %v1687
    %v1689 = vsel %vm1319, %v1681, %v1681
    %v1690 = vsel %vm1321, %v1681, %v1689
    %v1691 = vrot.slane %v1688, 7
    %v1692 = vsel %vm1324, %v1691, %v1690
    %v1693 = vsel %vm1326, %v1691, %v1692
    %v1694 = vsel %vm1328, %v1691, %v1693
    %v1695 = vsel %vm1330, %v1691, %v1694
    %1697 = vst.msk [vmem:[#allocation2 + $0xc] sm:$0x3] %vm1333, %v1695
    %v1698 = vrot.slane %v1681, 1
    %v1699 = vsel %vm1319, %v1698, %v1698
    %v1700 = vsel %vm1321, %v1698, %v1699
    %v1701 = vsel %vm1324, %v1688, %v1700
    %v1702 = vsel %vm1326, %v1688, %v1701
    %v1703 = vsel %vm1328, %v1688, %v1702
    %v1704 = vsel %vm1330, %v1688, %v1703
    %1705 = vrot.lane.b32.xlu0 %v1704, 32
    %v1706 = vpop.permute.xlu0 %1705
    %1708 = vst.msk [vmem:[#allocation2 + $0xc] sm:$0x3] %vm1345, %v1706
    %v1709 = vcombine.high %v1681, %v1681
    %v1710 = vcombine.high %v1688, %v1688
    %v1711 = vsel %vm1319, %v1709, %v1709
    %v1712 = vsel %vm1321, %v1709, %v1711
    %v1713 = vrot.slane %v1710, 7
    %v1714 = vsel %vm1324, %v1713, %v1712
    %v1715 = vsel %vm1326, %v1713, %v1714
    %v1716 = vsel %vm1328, %v1713, %v1715
    %v1717 = vsel %vm1330, %v1713, %v1716
    %1718 = vrot.lane.b32.xlu0 %v1717, 64
    %v1719 = vpop.permute.xlu0 %1718
    %1721 = vst.msk [vmem:[#allocation2 + $0xc] sm:$0x3] %vm1359, %v1719
    %v1722 = vrot.slane %v1709, 1
    %v1723 = vsel %vm1319, %v1722, %v1722
    %v1724 = vsel %vm1321, %v1722, %v1723
    %v1725 = vsel %vm1324, %v1710, %v1724
    %v1726 = vsel %vm1326, %v1710, %v1725
    %v1727 = vsel %vm1328, %v1710, %v1726
    %v1728 = vsel %vm1330, %v1710, %v1727
    %1729 = vrot.lane.b32.xlu0 %v1728, 96
    %v1730 = vpop.permute.xlu0 %1729
    %1732 = vst.msk [vmem:[#allocation2 + $0xc] sm:$0x3] %vm1371, %v1730
    %v1733 = vcombine.high %v1274, %v1274
    %v1735 = vunpack.c.l.s4 1983009808
    %v1736 = vunpack.c.0.s8 %v1735
    %v1737 = vlaneseq
    %v1738 = vshrl.u32 %v1737, 7
    %v1739 = vsub.s32 %v1736, %v1738
    %v1740 = vrot.slane %v1733, %v1739
    %v1741 = vcombine.high %v1290, %v1290
    %v1743 = vunpack.c.l.s4 1983009808
    %v1744 = vunpack.c.0.s8 %v1743
    %v1745 = vlaneseq
    %v1746 = vshrl.u32 %v1745, 7
    %v1747 = vsub.s32 %v1744, %v1746
    %v1748 = vrot.slane %v1741, %v1747
    %v1749 = vsel %vm1319, %v1740, %v1740
    %v1750 = vsel %vm1321, %v1740, %v1749
    %v1751 = vrot.slane %v1748, 7
    %v1752 = vsel %vm1324, %v1751, %v1750
    %v1753 = vsel %vm1326, %v1751, %v1752
    %v1754 = vsel %vm1328, %v1751, %v1753
    %v1755 = vsel %vm1330, %v1751, %v1754
    %1757 = vst.msk [vmem:[#allocation2 + $0xe] sm:$0x3] %vm1333, %v1755
    %v1758 = vrot.slane %v1740, 1
    %v1759 = vsel %vm1319, %v1758, %v1758
    %v1760 = vsel %vm1321, %v1758, %v1759
    %v1761 = vsel %vm1324, %v1748, %v1760
    %v1762 = vsel %vm1326, %v1748, %v1761
    %v1763 = vsel %vm1328, %v1748, %v1762
    %v1764 = vsel %vm1330, %v1748, %v1763
    %1765 = vrot.lane.b32.xlu0 %v1764, 32
    %v1766 = vpop.permute.xlu0 %1765
    %1768 = vst.msk [vmem:[#allocation2 + $0xe] sm:$0x3] %vm1345, %v1766
    %v1769 = vcombine.high %v1740, %v1740
    %v1770 = vcombine.high %v1748, %v1748
    %v1771 = vsel %vm1319, %v1769, %v1769
    %v1772 = vsel %vm1321, %v1769, %v1771
    %v1773 = vrot.slane %v1770, 7
    %v1774 = vsel %vm1324, %v1773, %v1772
    %v1775 = vsel %vm1326, %v1773, %v1774
    %v1776 = vsel %vm1328, %v1773, %v1775
    %v1777 = vsel %vm1330, %v1773, %v1776
    %1778 = vrot.lane.b32.xlu0 %v1777, 64
    %v1779 = vpop.permute.xlu0 %1778
    %1781 = vst.msk [vmem:[#allocation2 + $0xe] sm:$0x3] %vm1359, %v1779
    %v1782 = vrot.slane %v1769, 1
    %v1783 = vsel %vm1319, %v1782, %v1782
    %v1784 = vsel %vm1321, %v1782, %v1783
    %v1785 = vsel %vm1324, %v1770, %v1784
    %v1786 = vsel %vm1326, %v1770, %v1785
    %v1787 = vsel %vm1328, %v1770, %v1786
    %v1788 = vsel %vm1330, %v1770, %v1787
    %1789 = vrot.lane.b32.xlu0 %v1788, 96
    %v1790 = vpop.permute.xlu0 %1789
    %1792 = vst.msk [vmem:[#allocation2 + $0xe] sm:$0x3] %vm1371, %v1790
    %v1796 = vunpack.c.l.s4 1983009808
    %v1797 = vunpack.c.0.s8 %v1796
    %v1798 = vlaneseq
    %v1799 = vshrl.u32 %v1798, 7
    %v1800 = vsub.s32 %v1797, %v1799
    %v1801 = vrot.slane %v1275, %v1800
    %v1803 = vunpack.c.l.s4 1983009808
    %v1804 = vunpack.c.0.s8 %v1803
    %v1805 = vlaneseq
    %v1806 = vshrl.u32 %v1805, 7
    %v1807 = vsub.s32 %v1804, %v1806
    %v1808 = vrot.slane %v1291, %v1807
    %v1809 = vsel %vm1319, %v1801, %v1801
    %v1810 = vsel %vm1321, %v1801, %v1809
    %v1811 = vrot.slane %v1808, 7
    %v1812 = vsel %vm1324, %v1811, %v1810
    %v1813 = vsel %vm1326, %v1811, %v1812
    %v1814 = vsel %vm1328, %v1811, %v1813
    %v1815 = vsel %vm1330, %v1811, %v1814
    %1817 = vst.msk [vmem:[#allocation2 + $0x10] sm:$0x3] %vm1333, %v1815
    %v1818 = vrot.slane %v1801, 1
    %v1819 = vsel %vm1319, %v1818, %v1818
    %v1820 = vsel %vm1321, %v1818, %v1819
    %v1821 = vsel %vm1324, %v1808, %v1820
    %v1822 = vsel %vm1326, %v1808, %v1821
    %v1823 = vsel %vm1328, %v1808, %v1822
    %v1824 = vsel %vm1330, %v1808, %v1823
    %1825 = vrot.lane.b32.xlu0 %v1824, 32
    %v1826 = vpop.permute.xlu0 %1825
    %1828 = vst.msk [vmem:[#allocation2 + $0x10] sm:$0x3] %vm1345, %v1826
    %v1829 = vcombine.high %v1801, %v1801
    %v1830 = vcombine.high %v1808, %v1808
    %v1831 = vsel %vm1319, %v1829, %v1829
    %v1832 = vsel %vm1321, %v1829, %v1831
    %v1833 = vrot.slane %v1830, 7
    %v1834 = vsel %vm1324, %v1833, %v1832
    %v1835 = vsel %vm1326, %v1833, %v1834
    %v1836 = vsel %vm1328, %v1833, %v1835
    %v1837 = vsel %vm1330, %v1833, %v1836
    %1838 = vrot.lane.b32.xlu0 %v1837, 64
    %v1839 = vpop.permute.xlu0 %1838
    %1841 = vst.msk [vmem:[#allocation2 + $0x10] sm:$0x3] %vm1359, %v1839
    %v1842 = vrot.slane %v1829, 1
    %v1843 = vsel %vm1319, %v1842, %v1842
    %v1844 = vsel %vm1321, %v1842, %v1843
    %v1845 = vsel %vm1324, %v1830, %v1844
    %v1846 = vsel %vm1326, %v1830, %v1845
    %v1847 = vsel %vm1328, %v1830, %v1846
    %v1848 = vsel %vm1330, %v1830, %v1847
    %1849 = vrot.lane.b32.xlu0 %v1848, 96
    %v1850 = vpop.permute.xlu0 %1849
    %1852 = vst.msk [vmem:[#allocation2 + $0x10] sm:$0x3] %vm1371, %v1850
    %v1853 = vcombine.high %v1275, %v1275
    %v1855 = vunpack.c.l.s4 1983009808
    %v1856 = vunpack.c.0.s8 %v1855
    %v1857 = vlaneseq
    %v1858 = vshrl.u32 %v1857, 7
    %v1859 = vsub.s32 %v1856, %v1858
    %v1860 = vrot.slane %v1853, %v1859
    %v1861 = vcombine.high %v1291, %v1291
    %v1863 = vunpack.c.l.s4 1983009808
    %v1864 = vunpack.c.0.s8 %v1863
    %v1865 = vlaneseq
    %v1866 = vshrl.u32 %v1865, 7
    %v1867 = vsub.s32 %v1864, %v1866
    %v1868 = vrot.slane %v1861, %v1867
    %v1869 = vsel %vm1319, %v1860, %v1860
    %v1870 = vsel %vm1321, %v1860, %v1869
    %v1871 = vrot.slane %v1868, 7
    %v1872 = vsel %vm1324, %v1871, %v1870
    %v1873 = vsel %vm1326, %v1871, %v1872
    %v1874 = vsel %vm1328, %v1871, %v1873
    %v1875 = vsel %vm1330, %v1871, %v1874
    %1877 = vst.msk [vmem:[#allocation2 + $0x12] sm:$0x3] %vm1333, %v1875
    %v1878 = vrot.slane %v1860, 1
    %v1879 = vsel %vm1319, %v1878, %v1878
    %v1880 = vsel %vm1321, %v1878, %v1879
    %v1881 = vsel %vm1324, %v1868, %v1880
    %v1882 = vsel %vm1326, %v1868, %v1881
    %v1883 = vsel %vm1328, %v1868, %v1882
    %v1884 = vsel %vm1330, %v1868, %v1883
    %1885 = vrot.lane.b32.xlu0 %v1884, 32
    %v1886 = vpop.permute.xlu0 %1885
    %1888 = vst.msk [vmem:[#allocation2 + $0x12] sm:$0x3] %vm1345, %v1886
    %v1889 = vcombine.high %v1860, %v1860
    %v1890 = vcombine.high %v1868, %v1868
    %v1891 = vsel %vm1319, %v1889, %v1889
    %v1892 = vsel %vm1321, %v1889, %v1891
    %v1893 = vrot.slane %v1890, 7
    %v1894 = vsel %vm1324, %v1893, %v1892
    %v1895 = vsel %vm1326, %v1893, %v1894
    %v1896 = vsel %vm1328, %v1893, %v1895
    %v1897 = vsel %vm1330, %v1893, %v1896
    %1898 = vrot.lane.b32.xlu0 %v1897, 64
    %v1899 = vpop.permute.xlu0 %1898
    %1901 = vst.msk [vmem:[#allocation2 + $0x12] sm:$0x3] %vm1359, %v1899
    %v1902 = vrot.slane %v1889, 1
    %v1903 = vsel %vm1319, %v1902, %v1902
    %v1904 = vsel %vm1321, %v1902, %v1903
    %v1905 = vsel %vm1324, %v1890, %v1904
    %v1906 = vsel %vm1326, %v1890, %v1905
    %v1907 = vsel %vm1328, %v1890, %v1906
    %v1908 = vsel %vm1330, %v1890, %v1907
    %1909 = vrot.lane.b32.xlu0 %v1908, 96
    %v1910 = vpop.permute.xlu0 %1909
    %1912 = vst.msk [vmem:[#allocation2 + $0x12] sm:$0x3] %vm1371, %v1910
    %v1916 = vunpack.c.l.s4 1983009808
    %v1917 = vunpack.c.0.s8 %v1916
    %v1918 = vlaneseq
    %v1919 = vshrl.u32 %v1918, 7
    %v1920 = vsub.s32 %v1917, %v1919
    %v1921 = vrot.slane %v1276, %v1920
    %v1923 = vunpack.c.l.s4 1983009808
    %v1924 = vunpack.c.0.s8 %v1923
    %v1925 = vlaneseq
    %v1926 = vshrl.u32 %v1925, 7
    %v1927 = vsub.s32 %v1924, %v1926
    %v1928 = vrot.slane %v1292, %v1927
    %v1929 = vsel %vm1319, %v1921, %v1921
    %v1930 = vsel %vm1321, %v1921, %v1929
    %v1931 = vrot.slane %v1928, 7
    %v1932 = vsel %vm1324, %v1931, %v1930
    %v1933 = vsel %vm1326, %v1931, %v1932
    %v1934 = vsel %vm1328, %v1931, %v1933
    %v1935 = vsel %vm1330, %v1931, %v1934
    %1937 = vst.msk [vmem:[#allocation2 + $0x14] sm:$0x3] %vm1333, %v1935
    %v1938 = vrot.slane %v1921, 1
    %v1939 = vsel %vm1319, %v1938, %v1938
    %v1940 = vsel %vm1321, %v1938, %v1939
    %v1941 = vsel %vm1324, %v1928, %v1940
    %v1942 = vsel %vm1326, %v1928, %v1941
    %v1943 = vsel %vm1328, %v1928, %v1942
    %v1944 = vsel %vm1330, %v1928, %v1943
    %1945 = vrot.lane.b32.xlu0 %v1944, 32
    %v1946 = vpop.permute.xlu0 %1945
    %1948 = vst.msk [vmem:[#allocation2 + $0x14] sm:$0x3] %vm1345, %v1946
    %v1949 = vcombine.high %v1921, %v1921
    %v1950 = vcombine.high %v1928, %v1928
    %v1951 = vsel %vm1319, %v1949, %v1949
    %v1952 = vsel %vm1321, %v1949, %v1951
    %v1953 = vrot.slane %v1950, 7
    %v1954 = vsel %vm1324, %v1953, %v1952
    %v1955 = vsel %vm1326, %v1953, %v1954
    %v1956 = vsel %vm1328, %v1953, %v1955
    %v1957 = vsel %vm1330, %v1953, %v1956
    %1958 = vrot.lane.b32.xlu0 %v1957, 64
    %v1959 = vpop.permute.xlu0 %1958
    %1961 = vst.msk [vmem:[#allocation2 + $0x14] sm:$0x3] %vm1359, %v1959
    %v1962 = vrot.slane %v1949, 1
    %v1963 = vsel %vm1319, %v1962, %v1962
    %v1964 = vsel %vm1321, %v1962, %v1963
    %v1965 = vsel %vm1324, %v1950, %v1964
    %v1966 = vsel %vm1326, %v1950, %v1965
    %v1967 = vsel %vm1328, %v1950, %v1966
    %v1968 = vsel %vm1330, %v1950, %v1967
    %1969 = vrot.lane.b32.xlu0 %v1968, 96
    %v1970 = vpop.permute.xlu0 %1969
    %1972 = vst.msk [vmem:[#allocation2 + $0x14] sm:$0x3] %vm1371, %v1970
    %v1973 = vcombine.high %v1276, %v1276
    %v1975 = vunpack.c.l.s4 1983009808
    %v1976 = vunpack.c.0.s8 %v1975
    %v1977 = vlaneseq
    %v1978 = vshrl.u32 %v1977, 7
    %v1979 = vsub.s32 %v1976, %v1978
    %v1980 = vrot.slane %v1973, %v1979
    %v1981 = vcombine.high %v1292, %v1292
    %v1983 = vunpack.c.l.s4 1983009808
    %v1984 = vunpack.c.0.s8 %v1983
    %v1985 = vlaneseq
    %v1986 = vshrl.u32 %v1985, 7
    %v1987 = vsub.s32 %v1984, %v1986
    %v1988 = vrot.slane %v1981, %v1987
    %v1989 = vsel %vm1319, %v1980, %v1980
    %v1990 = vsel %vm1321, %v1980, %v1989
    %v1991 = vrot.slane %v1988, 7
    %v1992 = vsel %vm1324, %v1991, %v1990
    %v1993 = vsel %vm1326, %v1991, %v1992
    %v1994 = vsel %vm1328, %v1991, %v1993
    %v1995 = vsel %vm1330, %v1991, %v1994
    %1997 = vst.msk [vmem:[#allocation2 + $0x16] sm:$0x3] %vm1333, %v1995
    %v1998 = vrot.slane %v1980, 1
    %v1999 = vsel %vm1319, %v1998, %v1998
    %v2000 = vsel %vm1321, %v1998, %v1999
    %v2001 = vsel %vm1324, %v1988, %v2000
    %v2002 = vsel %vm1326, %v1988, %v2001
    %v2003 = vsel %vm1328, %v1988, %v2002
    %v2004 = vsel %vm1330, %v1988, %v2003
    %2005 = vrot.lane.b32.xlu0 %v2004, 32
    %v2006 = vpop.permute.xlu0 %2005
    %2008 = vst.msk [vmem:[#allocation2 + $0x16] sm:$0x3] %vm1345, %v2006
    %v2009 = vcombine.high %v1980, %v1980
    %v2010 = vcombine.high %v1988, %v1988
    %v2011 = vsel %vm1319, %v2009, %v2009
    %v2012 = vsel %vm1321, %v2009, %v2011
    %v2013 = vrot.slane %v2010, 7
    %v2014 = vsel %vm1324, %v2013, %v2012
    %v2015 = vsel %vm1326, %v2013, %v2014
    %v2016 = vsel %vm1328, %v2013, %v2015
    %v2017 = vsel %vm1330, %v2013, %v2016
    %2018 = vrot.lane.b32.xlu0 %v2017, 64
    %v2019 = vpop.permute.xlu0 %2018
    %2021 = vst.msk [vmem:[#allocation2 + $0x16] sm:$0x3] %vm1359, %v2019
    %v2022 = vrot.slane %v2009, 1
    %v2023 = vsel %vm1319, %v2022, %v2022
    %v2024 = vsel %vm1321, %v2022, %v2023
    %v2025 = vsel %vm1324, %v2010, %v2024
    %v2026 = vsel %vm1326, %v2010, %v2025
    %v2027 = vsel %vm1328, %v2010, %v2026
    %v2028 = vsel %vm1330, %v2010, %v2027
    %2029 = vrot.lane.b32.xlu0 %v2028, 96
    %v2030 = vpop.permute.xlu0 %2029
    %2032 = vst.msk [vmem:[#allocation2 + $0x16] sm:$0x3] %vm1371, %v2030
    %v2036 = vunpack.c.l.s4 1983009808
    %v2037 = vunpack.c.0.s8 %v2036
    %v2038 = vlaneseq
    %v2039 = vshrl.u32 %v2038, 7
    %v2040 = vsub.s32 %v2037, %v2039
    %v2041 = vrot.slane %v1277, %v2040
    %v2043 = vunpack.c.l.s4 1983009808
    %v2044 = vunpack.c.0.s8 %v2043
    %v2045 = vlaneseq
    %v2046 = vshrl.u32 %v2045, 7
    %v2047 = vsub.s32 %v2044, %v2046
    %v2048 = vrot.slane %v1293, %v2047
    %v2049 = vsel %vm1319, %v2041, %v2041
    %v2050 = vsel %vm1321, %v2041, %v2049
    %v2051 = vrot.slane %v2048, 7
    %v2052 = vsel %vm1324, %v2051, %v2050
    %v2053 = vsel %vm1326, %v2051, %v2052
    %v2054 = vsel %vm1328, %v2051, %v2053
    %v2055 = vsel %vm1330, %v2051, %v2054
    %2057 = vst.msk [vmem:[#allocation2 + $0x18] sm:$0x3] %vm1333, %v2055
    %v2058 = vrot.slane %v2041, 1
    %v2059 = vsel %vm1319, %v2058, %v2058
    %v2060 = vsel %vm1321, %v2058, %v2059
    %v2061 = vsel %vm1324, %v2048, %v2060
    %v2062 = vsel %vm1326, %v2048, %v2061
    %v2063 = vsel %vm1328, %v2048, %v2062
    %v2064 = vsel %vm1330, %v2048, %v2063
    %2065 = vrot.lane.b32.xlu0 %v2064, 32
    %v2066 = vpop.permute.xlu0 %2065
    %2068 = vst.msk [vmem:[#allocation2 + $0x18] sm:$0x3] %vm1345, %v2066
    %v2069 = vcombine.high %v2041, %v2041
    %v2070 = vcombine.high %v2048, %v2048
    %v2071 = vsel %vm1319, %v2069, %v2069
    %v2072 = vsel %vm1321, %v2069, %v2071
    %v2073 = vrot.slane %v2070, 7
    %v2074 = vsel %vm1324, %v2073, %v2072
    %v2075 = vsel %vm1326, %v2073, %v2074
    %v2076 = vsel %vm1328, %v2073, %v2075
    %v2077 = vsel %vm1330, %v2073, %v2076
    %2078 = vrot.lane.b32.xlu0 %v2077, 64
    %v2079 = vpop.permute.xlu0 %2078
    %2081 = vst.msk [vmem:[#allocation2 + $0x18] sm:$0x3] %vm1359, %v2079
    %v2082 = vrot.slane %v2069, 1
    %v2083 = vsel %vm1319, %v2082, %v2082
    %v2084 = vsel %vm1321, %v2082, %v2083
    %v2085 = vsel %vm1324, %v2070, %v2084
    %v2086 = vsel %vm1326, %v2070, %v2085
    %v2087 = vsel %vm1328, %v2070, %v2086
    %v2088 = vsel %vm1330, %v2070, %v2087
    %2089 = vrot.lane.b32.xlu0 %v2088, 96
    %v2090 = vpop.permute.xlu0 %2089
    %2092 = vst.msk [vmem:[#allocation2 + $0x18] sm:$0x3] %vm1371, %v2090
    %v2093 = vcombine.high %v1277, %v1277
    %v2095 = vunpack.c.l.s4 1983009808
    %v2096 = vunpack.c.0.s8 %v2095
    %v2097 = vlaneseq
    %v2098 = vshrl.u32 %v2097, 7
    %v2099 = vsub.s32 %v2096, %v2098
    %v2100 = vrot.slane %v2093, %v2099
    %v2101 = vcombine.high %v1293, %v1293
    %v2103 = vunpack.c.l.s4 1983009808
    %v2104 = vunpack.c.0.s8 %v2103
    %v2105 = vlaneseq
    %v2106 = vshrl.u32 %v2105, 7
    %v2107 = vsub.s32 %v2104, %v2106
    %v2108 = vrot.slane %v2101, %v2107
    %v2109 = vsel %vm1319, %v2100, %v2100
    %v2110 = vsel %vm1321, %v2100, %v2109
    %v2111 = vrot.slane %v2108, 7
    %v2112 = vsel %vm1324, %v2111, %v2110
    %v2113 = vsel %vm1326, %v2111, %v2112
    %v2114 = vsel %vm1328, %v2111, %v2113
    %v2115 = vsel %vm1330, %v2111, %v2114
    %2117 = vst.msk [vmem:[#allocation2 + $0x1a] sm:$0x3] %vm1333, %v2115
    %v2118 = vrot.slane %v2100, 1
    %v2119 = vsel %vm1319, %v2118, %v2118
    %v2120 = vsel %vm1321, %v2118, %v2119
    %v2121 = vsel %vm1324, %v2108, %v2120
    %v2122 = vsel %vm1326, %v2108, %v2121
    %v2123 = vsel %vm1328, %v2108, %v2122
    %v2124 = vsel %vm1330, %v2108, %v2123
    %2125 = vrot.lane.b32.xlu0 %v2124, 32
    %v2126 = vpop.permute.xlu0 %2125
    %2128 = vst.msk [vmem:[#allocation2 + $0x1a] sm:$0x3] %vm1345, %v2126
    %v2129 = vcombine.high %v2100, %v2100
    %v2130 = vcombine.high %v2108, %v2108
    %v2131 = vsel %vm1319, %v2129, %v2129
    %v2132 = vsel %vm1321, %v2129, %v2131
    %v2133 = vrot.slane %v2130, 7
    %v2134 = vsel %vm1324, %v2133, %v2132
    %v2135 = vsel %vm1326, %v2133, %v2134
    %v2136 = vsel %vm1328, %v2133, %v2135
    %v2137 = vsel %vm1330, %v2133, %v2136
    %2138 = vrot.lane.b32.xlu0 %v2137, 64
    %v2139 = vpop.permute.xlu0 %2138
    %2141 = vst.msk [vmem:[#allocation2 + $0x1a] sm:$0x3] %vm1359, %v2139
    %v2142 = vrot.slane %v2129, 1
    %v2143 = vsel %vm1319, %v2142, %v2142
    %v2144 = vsel %vm1321, %v2142, %v2143
    %v2145 = vsel %vm1324, %v2130, %v2144
    %v2146 = vsel %vm1326, %v2130, %v2145
    %v2147 = vsel %vm1328, %v2130, %v2146
    %v2148 = vsel %vm1330, %v2130, %v2147
    %2149 = vrot.lane.b32.xlu0 %v2148, 96
    %v2150 = vpop.permute.xlu0 %2149
    %2152 = vst.msk [vmem:[#allocation2 + $0x1a] sm:$0x3] %vm1371, %v2150
    %v2156 = vunpack.c.l.s4 1983009808
    %v2157 = vunpack.c.0.s8 %v2156
    %v2158 = vlaneseq
    %v2159 = vshrl.u32 %v2158, 7
    %v2160 = vsub.s32 %v2157, %v2159
    %v2161 = vrot.slane %v1278, %v2160
    %v2163 = vunpack.c.l.s4 1983009808
    %v2164 = vunpack.c.0.s8 %v2163
    %v2165 = vlaneseq
    %v2166 = vshrl.u32 %v2165, 7
    %v2167 = vsub.s32 %v2164, %v2166
    %v2168 = vrot.slane %v1294, %v2167
    %v2169 = vsel %vm1319, %v2161, %v2161
    %v2170 = vsel %vm1321, %v2161, %v2169
    %v2171 = vrot.slane %v2168, 7
    %v2172 = vsel %vm1324, %v2171, %v2170
    %v2173 = vsel %vm1326, %v2171, %v2172
    %v2174 = vsel %vm1328, %v2171, %v2173
    %v2175 = vsel %vm1330, %v2171, %v2174
    %2177 = vst.msk [vmem:[#allocation2 + $0x1c] sm:$0x3] %vm1333, %v2175
    %v2178 = vrot.slane %v2161, 1
    %v2179 = vsel %vm1319, %v2178, %v2178
    %v2180 = vsel %vm1321, %v2178, %v2179
    %v2181 = vsel %vm1324, %v2168, %v2180
    %v2182 = vsel %vm1326, %v2168, %v2181
    %v2183 = vsel %vm1328, %v2168, %v2182
    %v2184 = vsel %vm1330, %v2168, %v2183
    %2185 = vrot.lane.b32.xlu0 %v2184, 32
    %v2186 = vpop.permute.xlu0 %2185
    %2188 = vst.msk [vmem:[#allocation2 + $0x1c] sm:$0x3] %vm1345, %v2186
    %v2189 = vcombine.high %v2161, %v2161
    %v2190 = vcombine.high %v2168, %v2168
    %v2191 = vsel %vm1319, %v2189, %v2189
    %v2192 = vsel %vm1321, %v2189, %v2191
    %v2193 = vrot.slane %v2190, 7
    %v2194 = vsel %vm1324, %v2193, %v2192
    %v2195 = vsel %vm1326, %v2193, %v2194
    %v2196 = vsel %vm1328, %v2193, %v2195
    %v2197 = vsel %vm1330, %v2193, %v2196
    %2198 = vrot.lane.b32.xlu0 %v2197, 64
    %v2199 = vpop.permute.xlu0 %2198
    %2201 = vst.msk [vmem:[#allocation2 + $0x1c] sm:$0x3] %vm1359, %v2199
    %v2202 = vrot.slane %v2189, 1
    %v2203 = vsel %vm1319, %v2202, %v2202
    %v2204 = vsel %vm1321, %v2202, %v2203
    %v2205 = vsel %vm1324, %v2190, %v2204
    %v2206 = vsel %vm1326, %v2190, %v2205
    %v2207 = vsel %vm1328, %v2190, %v2206
    %v2208 = vsel %vm1330, %v2190, %v2207
    %2209 = vrot.lane.b32.xlu0 %v2208, 96
    %v2210 = vpop.permute.xlu0 %2209
    %2212 = vst.msk [vmem:[#allocation2 + $0x1c] sm:$0x3] %vm1371, %v2210
    %v2213 = vcombine.high %v1278, %v1278
    %v2215 = vunpack.c.l.s4 1983009808
    %v2216 = vunpack.c.0.s8 %v2215
    %v2217 = vlaneseq
    %v2218 = vshrl.u32 %v2217, 7
    %v2219 = vsub.s32 %v2216, %v2218
    %v2220 = vrot.slane %v2213, %v2219
    %v2221 = vcombine.high %v1294, %v1294
    %v2223 = vunpack.c.l.s4 1983009808
    %v2224 = vunpack.c.0.s8 %v2223
    %v2225 = vlaneseq
    %v2226 = vshrl.u32 %v2225, 7
    %v2227 = vsub.s32 %v2224, %v2226
    %v2228 = vrot.slane %v2221, %v2227
    %v2229 = vsel %vm1319, %v2220, %v2220
    %v2230 = vsel %vm1321, %v2220, %v2229
    %v2231 = vrot.slane %v2228, 7
    %v2232 = vsel %vm1324, %v2231, %v2230
    %v2233 = vsel %vm1326, %v2231, %v2232
    %v2234 = vsel %vm1328, %v2231, %v2233
    %v2235 = vsel %vm1330, %v2231, %v2234
    %2237 = vst.msk [vmem:[#allocation2 + $0x1e] sm:$0x3] %vm1333, %v2235
    %v2238 = vrot.slane %v2220, 1
    %v2239 = vsel %vm1319, %v2238, %v2238
    %v2240 = vsel %vm1321, %v2238, %v2239
    %v2241 = vsel %vm1324, %v2228, %v2240
    %v2242 = vsel %vm1326, %v2228, %v2241
    %v2243 = vsel %vm1328, %v2228, %v2242
    %v2244 = vsel %vm1330, %v2228, %v2243
    %2245 = vrot.lane.b32.xlu0 %v2244, 32
    %v2246 = vpop.permute.xlu0 %2245
    %2248 = vst.msk [vmem:[#allocation2 + $0x1e] sm:$0x3] %vm1345, %v2246
    %v2249 = vcombine.high %v2220, %v2220
    %v2250 = vcombine.high %v2228, %v2228
    %v2251 = vsel %vm1319, %v2249, %v2249
    %v2252 = vsel %vm1321, %v2249, %v2251
    %v2253 = vrot.slane %v2250, 7
    %v2254 = vsel %vm1324, %v2253, %v2252
    %v2255 = vsel %vm1326, %v2253, %v2254
    %v2256 = vsel %vm1328, %v2253, %v2255
    %v2257 = vsel %vm1330, %v2253, %v2256
    %2258 = vrot.lane.b32.xlu0 %v2257, 64
    %v2259 = vpop.permute.xlu0 %2258
    %2261 = vst.msk [vmem:[#allocation2 + $0x1e] sm:$0x3] %vm1359, %v2259
    %v2262 = vrot.slane %v2249, 1
    %v2263 = vsel %vm1319, %v2262, %v2262
    %v2264 = vsel %vm1321, %v2262, %v2263
    %v2265 = vsel %vm1324, %v2250, %v2264
    %v2266 = vsel %vm1326, %v2250, %v2265
    %v2267 = vsel %vm1328, %v2250, %v2266
    %v2268 = vsel %vm1330, %v2250, %v2267
    %2269 = vrot.lane.b32.xlu0 %v2268, 96
    %v2270 = vpop.permute.xlu0 %2269
    %2272 = vst.msk [vmem:[#allocation2 + $0x1e] sm:$0x3] %vm1371, %v2270
    %v2276 = vunpack.c.l.s4 1983009808
    %v2277 = vunpack.c.0.s8 %v2276
    %v2278 = vlaneseq
    %v2279 = vshrl.u32 %v2278, 7
    %v2280 = vsub.s32 %v2277, %v2279
    %v2281 = vrot.slane %v1279, %v2280
    %v2283 = vunpack.c.l.s4 1983009808
    %v2284 = vunpack.c.0.s8 %v2283
    %v2285 = vlaneseq
    %v2286 = vshrl.u32 %v2285, 7
    %v2287 = vsub.s32 %v2284, %v2286
    %v2288 = vrot.slane %v1295, %v2287
    %v2289 = vsel %vm1319, %v2281, %v2281
    %v2290 = vsel %vm1321, %v2281, %v2289
    %v2291 = vrot.slane %v2288, 7
    %v2292 = vsel %vm1324, %v2291, %v2290
    %v2293 = vsel %vm1326, %v2291, %v2292
    %v2294 = vsel %vm1328, %v2291, %v2293
    %v2295 = vsel %vm1330, %v2291, %v2294
    %2297 = vst.msk [vmem:[#allocation2 + $0x20] sm:$0x3] %vm1333, %v2295
    %v2298 = vrot.slane %v2281, 1
    %v2299 = vsel %vm1319, %v2298, %v2298
    %v2300 = vsel %vm1321, %v2298, %v2299
    %v2301 = vsel %vm1324, %v2288, %v2300
    %v2302 = vsel %vm1326, %v2288, %v2301
    %v2303 = vsel %vm1328, %v2288, %v2302
    %v2304 = vsel %vm1330, %v2288, %v2303
    %2305 = vrot.lane.b32.xlu0 %v2304, 32
    %v2306 = vpop.permute.xlu0 %2305
    %2308 = vst.msk [vmem:[#allocation2 + $0x20] sm:$0x3] %vm1345, %v2306
    %v2309 = vcombine.high %v2281, %v2281
    %v2310 = vcombine.high %v2288, %v2288
    %v2311 = vsel %vm1319, %v2309, %v2309
    %v2312 = vsel %vm1321, %v2309, %v2311
    %v2313 = vrot.slane %v2310, 7
    %v2314 = vsel %vm1324, %v2313, %v2312
    %v2315 = vsel %vm1326, %v2313, %v2314
    %v2316 = vsel %vm1328, %v2313, %v2315
    %v2317 = vsel %vm1330, %v2313, %v2316
    %2318 = vrot.lane.b32.xlu0 %v2317, 64
    %v2319 = vpop.permute.xlu0 %2318
    %2321 = vst.msk [vmem:[#allocation2 + $0x20] sm:$0x3] %vm1359, %v2319
    %v2322 = vrot.slane %v2309, 1
    %v2323 = vsel %vm1319, %v2322, %v2322
    %v2324 = vsel %vm1321, %v2322, %v2323
    %v2325 = vsel %vm1324, %v2310, %v2324
    %v2326 = vsel %vm1326, %v2310, %v2325
    %v2327 = vsel %vm1328, %v2310, %v2326
    %v2328 = vsel %vm1330, %v2310, %v2327
    %2329 = vrot.lane.b32.xlu0 %v2328, 96
    %v2330 = vpop.permute.xlu0 %2329
    %2332 = vst.msk [vmem:[#allocation2 + $0x20] sm:$0x3] %vm1371, %v2330
    %v2333 = vcombine.high %v1279, %v1279
    %v2335 = vunpack.c.l.s4 1983009808
    %v2336 = vunpack.c.0.s8 %v2335
    %v2337 = vlaneseq
    %v2338 = vshrl.u32 %v2337, 7
    %v2339 = vsub.s32 %v2336, %v2338
    %v2340 = vrot.slane %v2333, %v2339
    %v2341 = vcombine.high %v1295, %v1295
    %v2343 = vunpack.c.l.s4 1983009808
    %v2344 = vunpack.c.0.s8 %v2343
    %v2345 = vlaneseq
    %v2346 = vshrl.u32 %v2345, 7
    %v2347 = vsub.s32 %v2344, %v2346
    %v2348 = vrot.slane %v2341, %v2347
    %v2349 = vsel %vm1319, %v2340, %v2340
    %v2350 = vsel %vm1321, %v2340, %v2349
    %v2351 = vrot.slane %v2348, 7
    %v2352 = vsel %vm1324, %v2351, %v2350
    %v2353 = vsel %vm1326, %v2351, %v2352
    %v2354 = vsel %vm1328, %v2351, %v2353
    %v2355 = vsel %vm1330, %v2351, %v2354
    %2357 = vst.msk [vmem:[#allocation2 + $0x22] sm:$0x3] %vm1333, %v2355
    %v2358 = vrot.slane %v2340, 1
    %v2359 = vsel %vm1319, %v2358, %v2358
    %v2360 = vsel %vm1321, %v2358, %v2359
    %v2361 = vsel %vm1324, %v2348, %v2360
    %v2362 = vsel %vm1326, %v2348, %v2361
    %v2363 = vsel %vm1328, %v2348, %v2362
    %v2364 = vsel %vm1330, %v2348, %v2363
    %2365 = vrot.lane.b32.xlu0 %v2364, 32
    %v2366 = vpop.permute.xlu0 %2365
    %2368 = vst.msk [vmem:[#allocation2 + $0x22] sm:$0x3] %vm1345, %v2366
    %v2369 = vcombine.high %v2340, %v2340
    %v2370 = vcombine.high %v2348, %v2348
    %v2371 = vsel %vm1319, %v2369, %v2369
    %v2372 = vsel %vm1321, %v2369, %v2371
    %v2373 = vrot.slane %v2370, 7
    %v2374 = vsel %vm1324, %v2373, %v2372
    %v2375 = vsel %vm1326, %v2373, %v2374
    %v2376 = vsel %vm1328, %v2373, %v2375
    %v2377 = vsel %vm1330, %v2373, %v2376
    %2378 = vrot.lane.b32.xlu0 %v2377, 64
    %v2379 = vpop.permute.xlu0 %2378
    %2381 = vst.msk [vmem:[#allocation2 + $0x22] sm:$0x3] %vm1359, %v2379
    %v2382 = vrot.slane %v2369, 1
    %v2383 = vsel %vm1319, %v2382, %v2382
    %v2384 = vsel %vm1321, %v2382, %v2383
    %v2385 = vsel %vm1324, %v2370, %v2384
    %v2386 = vsel %vm1326, %v2370, %v2385
    %v2387 = vsel %vm1328, %v2370, %v2386
    %v2388 = vsel %vm1330, %v2370, %v2387
    %2389 = vrot.lane.b32.xlu0 %v2388, 96
    %v2390 = vpop.permute.xlu0 %2389
    %2392 = vst.msk [vmem:[#allocation2 + $0x22] sm:$0x3] %vm1371, %v2390
    %v2396 = vunpack.c.l.s4 1983009808
    %v2397 = vunpack.c.0.s8 %v2396
    %v2398 = vlaneseq
    %v2399 = vshrl.u32 %v2398, 7
    %v2400 = vsub.s32 %v2397, %v2399
    %v2401 = vrot.slane %v1280, %v2400
    %v2403 = vunpack.c.l.s4 1983009808
    %v2404 = vunpack.c.0.s8 %v2403
    %v2405 = vlaneseq
    %v2406 = vshrl.u32 %v2405, 7
    %v2407 = vsub.s32 %v2404, %v2406
    %v2408 = vrot.slane %v1296, %v2407
    %v2409 = vsel %vm1319, %v2401, %v2401
    %v2410 = vsel %vm1321, %v2401, %v2409
    %v2411 = vrot.slane %v2408, 7
    %v2412 = vsel %vm1324, %v2411, %v2410
    %v2413 = vsel %vm1326, %v2411, %v2412
    %v2414 = vsel %vm1328, %v2411, %v2413
    %v2415 = vsel %vm1330, %v2411, %v2414
    %2417 = vst.msk [vmem:[#allocation2 + $0x24] sm:$0x3] %vm1333, %v2415
    %v2418 = vrot.slane %v2401, 1
    %v2419 = vsel %vm1319, %v2418, %v2418
    %v2420 = vsel %vm1321, %v2418, %v2419
    %v2421 = vsel %vm1324, %v2408, %v2420
    %v2422 = vsel %vm1326, %v2408, %v2421
    %v2423 = vsel %vm1328, %v2408, %v2422
    %v2424 = vsel %vm1330, %v2408, %v2423
    %2425 = vrot.lane.b32.xlu0 %v2424, 32
    %v2426 = vpop.permute.xlu0 %2425
    %2428 = vst.msk [vmem:[#allocation2 + $0x24] sm:$0x3] %vm1345, %v2426
    %v2429 = vcombine.high %v2401, %v2401
    %v2430 = vcombine.high %v2408, %v2408
    %v2431 = vsel %vm1319, %v2429, %v2429
    %v2432 = vsel %vm1321, %v2429, %v2431
    %v2433 = vrot.slane %v2430, 7
    %v2434 = vsel %vm1324, %v2433, %v2432
    %v2435 = vsel %vm1326, %v2433, %v2434
    %v2436 = vsel %vm1328, %v2433, %v2435
    %v2437 = vsel %vm1330, %v2433, %v2436
    %2438 = vrot.lane.b32.xlu0 %v2437, 64
    %v2439 = vpop.permute.xlu0 %2438
    %2441 = vst.msk [vmem:[#allocation2 + $0x24] sm:$0x3] %vm1359, %v2439
    %v2442 = vrot.slane %v2429, 1
    %v2443 = vsel %vm1319, %v2442, %v2442
    %v2444 = vsel %vm1321, %v2442, %v2443
    %v2445 = vsel %vm1324, %v2430, %v2444
    %v2446 = vsel %vm1326, %v2430, %v2445
    %v2447 = vsel %vm1328, %v2430, %v2446
    %v2448 = vsel %vm1330, %v2430, %v2447
    %2449 = vrot.lane.b32.xlu0 %v2448, 96
    %v2450 = vpop.permute.xlu0 %2449
    %2452 = vst.msk [vmem:[#allocation2 + $0x24] sm:$0x3] %vm1371, %v2450
    %v2453 = vcombine.high %v1280, %v1280
    %v2455 = vunpack.c.l.s4 1983009808
    %v2456 = vunpack.c.0.s8 %v2455
    %v2457 = vlaneseq
    %v2458 = vshrl.u32 %v2457, 7
    %v2459 = vsub.s32 %v2456, %v2458
    %v2460 = vrot.slane %v2453, %v2459
    %v2461 = vcombine.high %v1296, %v1296
    %v2463 = vunpack.c.l.s4 1983009808
    %v2464 = vunpack.c.0.s8 %v2463
    %v2465 = vlaneseq
    %v2466 = vshrl.u32 %v2465, 7
    %v2467 = vsub.s32 %v2464, %v2466
    %v2468 = vrot.slane %v2461, %v2467
    %v2469 = vsel %vm1319, %v2460, %v2460
    %v2470 = vsel %vm1321, %v2460, %v2469
    %v2471 = vrot.slane %v2468, 7
    %v2472 = vsel %vm1324, %v2471, %v2470
    %v2473 = vsel %vm1326, %v2471, %v2472
    %v2474 = vsel %vm1328, %v2471, %v2473
    %v2475 = vsel %vm1330, %v2471, %v2474
    %2477 = vst.msk [vmem:[#allocation2 + $0x26] sm:$0x3] %vm1333, %v2475
    %v2478 = vrot.slane %v2460, 1
    %v2479 = vsel %vm1319, %v2478, %v2478
    %v2480 = vsel %vm1321, %v2478, %v2479
    %v2481 = vsel %vm1324, %v2468, %v2480
    %v2482 = vsel %vm1326, %v2468, %v2481
    %v2483 = vsel %vm1328, %v2468, %v2482
    %v2484 = vsel %vm1330, %v2468, %v2483
    %2485 = vrot.lane.b32.xlu0 %v2484, 32
    %v2486 = vpop.permute.xlu0 %2485
    %2488 = vst.msk [vmem:[#allocation2 + $0x26] sm:$0x3] %vm1345, %v2486
    %v2489 = vcombine.high %v2460, %v2460
    %v2490 = vcombine.high %v2468, %v2468
    %v2491 = vsel %vm1319, %v2489, %v2489
    %v2492 = vsel %vm1321, %v2489, %v2491
    %v2493 = vrot.slane %v2490, 7
    %v2494 = vsel %vm1324, %v2493, %v2492
    %v2495 = vsel %vm1326, %v2493, %v2494
    %v2496 = vsel %vm1328, %v2493, %v2495
    %v2497 = vsel %vm1330, %v2493, %v2496
    %2498 = vrot.lane.b32.xlu0 %v2497, 64
    %v2499 = vpop.permute.xlu0 %2498
    %2501 = vst.msk [vmem:[#allocation2 + $0x26] sm:$0x3] %vm1359, %v2499
    %v2502 = vrot.slane %v2489, 1
    %v2503 = vsel %vm1319, %v2502, %v2502
    %v2504 = vsel %vm1321, %v2502, %v2503
    %v2505 = vsel %vm1324, %v2490, %v2504
    %v2506 = vsel %vm1326, %v2490, %v2505
    %v2507 = vsel %vm1328, %v2490, %v2506
    %v2508 = vsel %vm1330, %v2490, %v2507
    %2509 = vrot.lane.b32.xlu0 %v2508, 96
    %v2510 = vpop.permute.xlu0 %2509
    %2512 = vst.msk [vmem:[#allocation2 + $0x26] sm:$0x3] %vm1371, %v2510
    %v2516 = vunpack.c.l.s4 1983009808
    %v2517 = vunpack.c.0.s8 %v2516
    %v2518 = vlaneseq
    %v2519 = vshrl.u32 %v2518, 7
    %v2520 = vsub.s32 %v2517, %v2519
    %v2521 = vrot.slane %v1281, %v2520
    %v2523 = vunpack.c.l.s4 1983009808
    %v2524 = vunpack.c.0.s8 %v2523
    %v2525 = vlaneseq
    %v2526 = vshrl.u32 %v2525, 7
    %v2527 = vsub.s32 %v2524, %v2526
    %v2528 = vrot.slane %v1297, %v2527
    %v2529 = vsel %vm1319, %v2521, %v2521
    %v2530 = vsel %vm1321, %v2521, %v2529
    %v2531 = vrot.slane %v2528, 7
    %v2532 = vsel %vm1324, %v2531, %v2530
    %v2533 = vsel %vm1326, %v2531, %v2532
    %v2534 = vsel %vm1328, %v2531, %v2533
    %v2535 = vsel %vm1330, %v2531, %v2534
    %2537 = vst.msk [vmem:[#allocation2 + $0x28] sm:$0x3] %vm1333, %v2535
    %v2538 = vrot.slane %v2521, 1
    %v2539 = vsel %vm1319, %v2538, %v2538
    %v2540 = vsel %vm1321, %v2538, %v2539
    %v2541 = vsel %vm1324, %v2528, %v2540
    %v2542 = vsel %vm1326, %v2528, %v2541
    %v2543 = vsel %vm1328, %v2528, %v2542
    %v2544 = vsel %vm1330, %v2528, %v2543
    %2545 = vrot.lane.b32.xlu0 %v2544, 32
    %v2546 = vpop.permute.xlu0 %2545
    %2548 = vst.msk [vmem:[#allocation2 + $0x28] sm:$0x3] %vm1345, %v2546
    %v2549 = vcombine.high %v2521, %v2521
    %v2550 = vcombine.high %v2528, %v2528
    %v2551 = vsel %vm1319, %v2549, %v2549
    %v2552 = vsel %vm1321, %v2549, %v2551
    %v2553 = vrot.slane %v2550, 7
    %v2554 = vsel %vm1324, %v2553, %v2552
    %v2555 = vsel %vm1326, %v2553, %v2554
    %v2556 = vsel %vm1328, %v2553, %v2555
    %v2557 = vsel %vm1330, %v2553, %v2556
    %2558 = vrot.lane.b32.xlu0 %v2557, 64
    %v2559 = vpop.permute.xlu0 %2558
    %2561 = vst.msk [vmem:[#allocation2 + $0x28] sm:$0x3] %vm1359, %v2559
    %v2562 = vrot.slane %v2549, 1
    %v2563 = vsel %vm1319, %v2562, %v2562
    %v2564 = vsel %vm1321, %v2562, %v2563
    %v2565 = vsel %vm1324, %v2550, %v2564
    %v2566 = vsel %vm1326, %v2550, %v2565
    %v2567 = vsel %vm1328, %v2550, %v2566
    %v2568 = vsel %vm1330, %v2550, %v2567
    %2569 = vrot.lane.b32.xlu0 %v2568, 96
    %v2570 = vpop.permute.xlu0 %2569
    %2572 = vst.msk [vmem:[#allocation2 + $0x28] sm:$0x3] %vm1371, %v2570
    %v2573 = vcombine.high %v1281, %v1281
    %v2575 = vunpack.c.l.s4 1983009808
    %v2576 = vunpack.c.0.s8 %v2575
    %v2577 = vlaneseq
    %v2578 = vshrl.u32 %v2577, 7
    %v2579 = vsub.s32 %v2576, %v2578
    %v2580 = vrot.slane %v2573, %v2579
    %v2581 = vcombine.high %v1297, %v1297
    %v2583 = vunpack.c.l.s4 1983009808
    %v2584 = vunpack.c.0.s8 %v2583
    %v2585 = vlaneseq
    %v2586 = vshrl.u32 %v2585, 7
    %v2587 = vsub.s32 %v2584, %v2586
    %v2588 = vrot.slane %v2581, %v2587
    %v2589 = vsel %vm1319, %v2580, %v2580
    %v2590 = vsel %vm1321, %v2580, %v2589
    %v2591 = vrot.slane %v2588, 7
    %v2592 = vsel %vm1324, %v2591, %v2590
    %v2593 = vsel %vm1326, %v2591, %v2592
    %v2594 = vsel %vm1328, %v2591, %v2593
    %v2595 = vsel %vm1330, %v2591, %v2594
    %2597 = vst.msk [vmem:[#allocation2 + $0x2a] sm:$0x3] %vm1333, %v2595
    %v2598 = vrot.slane %v2580, 1
    %v2599 = vsel %vm1319, %v2598, %v2598
    %v2600 = vsel %vm1321, %v2598, %v2599
    %v2601 = vsel %vm1324, %v2588, %v2600
    %v2602 = vsel %vm1326, %v2588, %v2601
    %v2603 = vsel %vm1328, %v2588, %v2602
    %v2604 = vsel %vm1330, %v2588, %v2603
    %2605 = vrot.lane.b32.xlu0 %v2604, 32
    %v2606 = vpop.permute.xlu0 %2605
    %2608 = vst.msk [vmem:[#allocation2 + $0x2a] sm:$0x3] %vm1345, %v2606
    %v2609 = vcombine.high %v2580, %v2580
    %v2610 = vcombine.high %v2588, %v2588
    %v2611 = vsel %vm1319, %v2609, %v2609
    %v2612 = vsel %vm1321, %v2609, %v2611
    %v2613 = vrot.slane %v2610, 7
    %v2614 = vsel %vm1324, %v2613, %v2612
    %v2615 = vsel %vm1326, %v2613, %v2614
    %v2616 = vsel %vm1328, %v2613, %v2615
    %v2617 = vsel %vm1330, %v2613, %v2616
    %2618 = vrot.lane.b32.xlu0 %v2617, 64
    %v2619 = vpop.permute.xlu0 %2618
    %2621 = vst.msk [vmem:[#allocation2 + $0x2a] sm:$0x3] %vm1359, %v2619
    %v2622 = vrot.slane %v2609, 1
    %v2623 = vsel %vm1319, %v2622, %v2622
    %v2624 = vsel %vm1321, %v2622, %v2623
    %v2625 = vsel %vm1324, %v2610, %v2624
    %v2626 = vsel %vm1326, %v2610, %v2625
    %v2627 = vsel %vm1328, %v2610, %v2626
    %v2628 = vsel %vm1330, %v2610, %v2627
    %2629 = vrot.lane.b32.xlu0 %v2628, 96
    %v2630 = vpop.permute.xlu0 %2629
    %2632 = vst.msk [vmem:[#allocation2 + $0x2a] sm:$0x3] %vm1371, %v2630
    %v2636 = vunpack.c.l.s4 1983009808
    %v2637 = vunpack.c.0.s8 %v2636
    %v2638 = vlaneseq
    %v2639 = vshrl.u32 %v2638, 7
    %v2640 = vsub.s32 %v2637, %v2639
    %v2641 = vrot.slane %v1282, %v2640
    %v2643 = vunpack.c.l.s4 1983009808
    %v2644 = vunpack.c.0.s8 %v2643
    %v2645 = vlaneseq
    %v2646 = vshrl.u32 %v2645, 7
    %v2647 = vsub.s32 %v2644, %v2646
    %v2648 = vrot.slane %v1298, %v2647
    %v2649 = vsel %vm1319, %v2641, %v2641
    %v2650 = vsel %vm1321, %v2641, %v2649
    %v2651 = vrot.slane %v2648, 7
    %v2652 = vsel %vm1324, %v2651, %v2650
    %v2653 = vsel %vm1326, %v2651, %v2652
    %v2654 = vsel %vm1328, %v2651, %v2653
    %v2655 = vsel %vm1330, %v2651, %v2654
    %2657 = vst.msk [vmem:[#allocation2 + $0x2c] sm:$0x3] %vm1333, %v2655
    %v2658 = vrot.slane %v2641, 1
    %v2659 = vsel %vm1319, %v2658, %v2658
    %v2660 = vsel %vm1321, %v2658, %v2659
    %v2661 = vsel %vm1324, %v2648, %v2660
    %v2662 = vsel %vm1326, %v2648, %v2661
    %v2663 = vsel %vm1328, %v2648, %v2662
    %v2664 = vsel %vm1330, %v2648, %v2663
    %2665 = vrot.lane.b32.xlu0 %v2664, 32
    %v2666 = vpop.permute.xlu0 %2665
    %2668 = vst.msk [vmem:[#allocation2 + $0x2c] sm:$0x3] %vm1345, %v2666
    %v2669 = vcombine.high %v2641, %v2641
    %v2670 = vcombine.high %v2648, %v2648
    %v2671 = vsel %vm1319, %v2669, %v2669
    %v2672 = vsel %vm1321, %v2669, %v2671
    %v2673 = vrot.slane %v2670, 7
    %v2674 = vsel %vm1324, %v2673, %v2672
    %v2675 = vsel %vm1326, %v2673, %v2674
    %v2676 = vsel %vm1328, %v2673, %v2675
    %v2677 = vsel %vm1330, %v2673, %v2676
    %2678 = vrot.lane.b32.xlu0 %v2677, 64
    %v2679 = vpop.permute.xlu0 %2678
    %2681 = vst.msk [vmem:[#allocation2 + $0x2c] sm:$0x3] %vm1359, %v2679
    %v2682 = vrot.slane %v2669, 1
    %v2683 = vsel %vm1319, %v2682, %v2682
    %v2684 = vsel %vm1321, %v2682, %v2683
    %v2685 = vsel %vm1324, %v2670, %v2684
    %v2686 = vsel %vm1326, %v2670, %v2685
    %v2687 = vsel %vm1328, %v2670, %v2686
    %v2688 = vsel %vm1330, %v2670, %v2687
    %2689 = vrot.lane.b32.xlu0 %v2688, 96
    %v2690 = vpop.permute.xlu0 %2689
    %2692 = vst.msk [vmem:[#allocation2 + $0x2c] sm:$0x3] %vm1371, %v2690
    %v2693 = vcombine.high %v1282, %v1282
    %v2695 = vunpack.c.l.s4 1983009808
    %v2696 = vunpack.c.0.s8 %v2695
    %v2697 = vlaneseq
    %v2698 = vshrl.u32 %v2697, 7
    %v2699 = vsub.s32 %v2696, %v2698
    %v2700 = vrot.slane %v2693, %v2699
    %v2701 = vcombine.high %v1298, %v1298
    %v2703 = vunpack.c.l.s4 1983009808
    %v2704 = vunpack.c.0.s8 %v2703
    %v2705 = vlaneseq
    %v2706 = vshrl.u32 %v2705, 7
    %v2707 = vsub.s32 %v2704, %v2706
    %v2708 = vrot.slane %v2701, %v2707
    %v2709 = vsel %vm1319, %v2700, %v2700
    %v2710 = vsel %vm1321, %v2700, %v2709
    %v2711 = vrot.slane %v2708, 7
    %v2712 = vsel %vm1324, %v2711, %v2710
    %v2713 = vsel %vm1326, %v2711, %v2712
    %v2714 = vsel %vm1328, %v2711, %v2713
    %v2715 = vsel %vm1330, %v2711, %v2714
    %2717 = vst.msk [vmem:[#allocation2 + $0x2e] sm:$0x3] %vm1333, %v2715
    %v2718 = vrot.slane %v2700, 1
    %v2719 = vsel %vm1319, %v2718, %v2718
    %v2720 = vsel %vm1321, %v2718, %v2719
    %v2721 = vsel %vm1324, %v2708, %v2720
    %v2722 = vsel %vm1326, %v2708, %v2721
    %v2723 = vsel %vm1328, %v2708, %v2722
    %v2724 = vsel %vm1330, %v2708, %v2723
    %2725 = vrot.lane.b32.xlu0 %v2724, 32
    %v2726 = vpop.permute.xlu0 %2725
    %2728 = vst.msk [vmem:[#allocation2 + $0x2e] sm:$0x3] %vm1345, %v2726
    %v2729 = vcombine.high %v2700, %v2700
    %v2730 = vcombine.high %v2708, %v2708
    %v2731 = vsel %vm1319, %v2729, %v2729
    %v2732 = vsel %vm1321, %v2729, %v2731
    %v2733 = vrot.slane %v2730, 7
    %v2734 = vsel %vm1324, %v2733, %v2732
    %v2735 = vsel %vm1326, %v2733, %v2734
    %v2736 = vsel %vm1328, %v2733, %v2735
    %v2737 = vsel %vm1330, %v2733, %v2736
    %2738 = vrot.lane.b32.xlu0 %v2737, 64
    %v2739 = vpop.permute.xlu0 %2738
    %2741 = vst.msk [vmem:[#allocation2 + $0x2e] sm:$0x3] %vm1359, %v2739
    %v2742 = vrot.slane %v2729, 1
    %v2743 = vsel %vm1319, %v2742, %v2742
    %v2744 = vsel %vm1321, %v2742, %v2743
    %v2745 = vsel %vm1324, %v2730, %v2744
    %v2746 = vsel %vm1326, %v2730, %v2745
    %v2747 = vsel %vm1328, %v2730, %v2746
    %v2748 = vsel %vm1330, %v2730, %v2747
    %2749 = vrot.lane.b32.xlu0 %v2748, 96
    %v2750 = vpop.permute.xlu0 %2749
    %2752 = vst.msk [vmem:[#allocation2 + $0x2e] sm:$0x3] %vm1371, %v2750
    %v2756 = vunpack.c.l.s4 1983009808
    %v2757 = vunpack.c.0.s8 %v2756
    %v2758 = vlaneseq
    %v2759 = vshrl.u32 %v2758, 7
    %v2760 = vsub.s32 %v2757, %v2759
    %v2761 = vrot.slane %v1283, %v2760
    %v2763 = vunpack.c.l.s4 1983009808
    %v2764 = vunpack.c.0.s8 %v2763
    %v2765 = vlaneseq
    %v2766 = vshrl.u32 %v2765, 7
    %v2767 = vsub.s32 %v2764, %v2766
    %v2768 = vrot.slane %v1299, %v2767
    %v2769 = vsel %vm1319, %v2761, %v2761
    %v2770 = vsel %vm1321, %v2761, %v2769
    %v2771 = vrot.slane %v2768, 7
    %v2772 = vsel %vm1324, %v2771, %v2770
    %v2773 = vsel %vm1326, %v2771, %v2772
    %v2774 = vsel %vm1328, %v2771, %v2773
    %v2775 = vsel %vm1330, %v2771, %v2774
    %2777 = vst.msk [vmem:[#allocation2 + $0x30] sm:$0x3] %vm1333, %v2775
    %v2778 = vrot.slane %v2761, 1
    %v2779 = vsel %vm1319, %v2778, %v2778
    %v2780 = vsel %vm1321, %v2778, %v2779
    %v2781 = vsel %vm1324, %v2768, %v2780
    %v2782 = vsel %vm1326, %v2768, %v2781
    %v2783 = vsel %vm1328, %v2768, %v2782
    %v2784 = vsel %vm1330, %v2768, %v2783
    %2785 = vrot.lane.b32.xlu0 %v2784, 32
    %v2786 = vpop.permute.xlu0 %2785
    %2788 = vst.msk [vmem:[#allocation2 + $0x30] sm:$0x3] %vm1345, %v2786
    %v2789 = vcombine.high %v2761, %v2761
    %v2790 = vcombine.high %v2768, %v2768
    %v2791 = vsel %vm1319, %v2789, %v2789
    %v2792 = vsel %vm1321, %v2789, %v2791
    %v2793 = vrot.slane %v2790, 7
    %v2794 = vsel %vm1324, %v2793, %v2792
    %v2795 = vsel %vm1326, %v2793, %v2794
    %v2796 = vsel %vm1328, %v2793, %v2795
    %v2797 = vsel %vm1330, %v2793, %v2796
    %2798 = vrot.lane.b32.xlu0 %v2797, 64
    %v2799 = vpop.permute.xlu0 %2798
    %2801 = vst.msk [vmem:[#allocation2 + $0x30] sm:$0x3] %vm1359, %v2799
    %v2802 = vrot.slane %v2789, 1
    %v2803 = vsel %vm1319, %v2802, %v2802
    %v2804 = vsel %vm1321, %v2802, %v2803
    %v2805 = vsel %vm1324, %v2790, %v2804
    %v2806 = vsel %vm1326, %v2790, %v2805
    %v2807 = vsel %vm1328, %v2790, %v2806
    %v2808 = vsel %vm1330, %v2790, %v2807
    %2809 = vrot.lane.b32.xlu0 %v2808, 96
    %v2810 = vpop.permute.xlu0 %2809
    %2812 = vst.msk [vmem:[#allocation2 + $0x30] sm:$0x3] %vm1371, %v2810
    %v2813 = vcombine.high %v1283, %v1283
    %v2815 = vunpack.c.l.s4 1983009808
    %v2816 = vunpack.c.0.s8 %v2815
    %v2817 = vlaneseq
    %v2818 = vshrl.u32 %v2817, 7
    %v2819 = vsub.s32 %v2816, %v2818
    %v2820 = vrot.slane %v2813, %v2819
    %v2821 = vcombine.high %v1299, %v1299
    %v2823 = vunpack.c.l.s4 1983009808
    %v2824 = vunpack.c.0.s8 %v2823
    %v2825 = vlaneseq
    %v2826 = vshrl.u32 %v2825, 7
    %v2827 = vsub.s32 %v2824, %v2826
    %v2828 = vrot.slane %v2821, %v2827
    %v2829 = vsel %vm1319, %v2820, %v2820
    %v2830 = vsel %vm1321, %v2820, %v2829
    %v2831 = vrot.slane %v2828, 7
    %v2832 = vsel %vm1324, %v2831, %v2830
    %v2833 = vsel %vm1326, %v2831, %v2832
    %v2834 = vsel %vm1328, %v2831, %v2833
    %v2835 = vsel %vm1330, %v2831, %v2834
    %2837 = vst.msk [vmem:[#allocation2 + $0x32] sm:$0x3] %vm1333, %v2835
    %v2838 = vrot.slane %v2820, 1
    %v2839 = vsel %vm1319, %v2838, %v2838
    %v2840 = vsel %vm1321, %v2838, %v2839
    %v2841 = vsel %vm1324, %v2828, %v2840
    %v2842 = vsel %vm1326, %v2828, %v2841
    %v2843 = vsel %vm1328, %v2828, %v2842
    %v2844 = vsel %vm1330, %v2828, %v2843
    %2845 = vrot.lane.b32.xlu0 %v2844, 32
    %v2846 = vpop.permute.xlu0 %2845
    %2848 = vst.msk [vmem:[#allocation2 + $0x32] sm:$0x3] %vm1345, %v2846
    %v2849 = vcombine.high %v2820, %v2820
    %v2850 = vcombine.high %v2828, %v2828
    %v2851 = vsel %vm1319, %v2849, %v2849
    %v2852 = vsel %vm1321, %v2849, %v2851
    %v2853 = vrot.slane %v2850, 7
    %v2854 = vsel %vm1324, %v2853, %v2852
    %v2855 = vsel %vm1326, %v2853, %v2854
    %v2856 = vsel %vm1328, %v2853, %v2855
    %v2857 = vsel %vm1330, %v2853, %v2856
    %2858 = vrot.lane.b32.xlu0 %v2857, 64
    %v2859 = vpop.permute.xlu0 %2858
    %2861 = vst.msk [vmem:[#allocation2 + $0x32] sm:$0x3] %vm1359, %v2859
    %v2862 = vrot.slane %v2849, 1
    %v2863 = vsel %vm1319, %v2862, %v2862
    %v2864 = vsel %vm1321, %v2862, %v2863
    %v2865 = vsel %vm1324, %v2850, %v2864
    %v2866 = vsel %vm1326, %v2850, %v2865
    %v2867 = vsel %vm1328, %v2850, %v2866
    %v2868 = vsel %vm1330, %v2850, %v2867
    %2869 = vrot.lane.b32.xlu0 %v2868, 96
    %v2870 = vpop.permute.xlu0 %2869
    %2872 = vst.msk [vmem:[#allocation2 + $0x32] sm:$0x3] %vm1371, %v2870
    %v2876 = vunpack.c.l.s4 1983009808
    %v2877 = vunpack.c.0.s8 %v2876
    %v2878 = vlaneseq
    %v2879 = vshrl.u32 %v2878, 7
    %v2880 = vsub.s32 %v2877, %v2879
    %v2881 = vrot.slane %v1284, %v2880
    %v2883 = vunpack.c.l.s4 1983009808
    %v2884 = vunpack.c.0.s8 %v2883
    %v2885 = vlaneseq
    %v2886 = vshrl.u32 %v2885, 7
    %v2887 = vsub.s32 %v2884, %v2886
    %v2888 = vrot.slane %v1300, %v2887
    %v2889 = vsel %vm1319, %v2881, %v2881
    %v2890 = vsel %vm1321, %v2881, %v2889
    %v2891 = vrot.slane %v2888, 7
    %v2892 = vsel %vm1324, %v2891, %v2890
    %v2893 = vsel %vm1326, %v2891, %v2892
    %v2894 = vsel %vm1328, %v2891, %v2893
    %v2895 = vsel %vm1330, %v2891, %v2894
    %2897 = vst.msk [vmem:[#allocation2 + $0x34] sm:$0x3] %vm1333, %v2895
    %v2898 = vrot.slane %v2881, 1
    %v2899 = vsel %vm1319, %v2898, %v2898
    %v2900 = vsel %vm1321, %v2898, %v2899
    %v2901 = vsel %vm1324, %v2888, %v2900
    %v2902 = vsel %vm1326, %v2888, %v2901
    %v2903 = vsel %vm1328, %v2888, %v2902
    %v2904 = vsel %vm1330, %v2888, %v2903
    %2905 = vrot.lane.b32.xlu0 %v2904, 32
    %v2906 = vpop.permute.xlu0 %2905
    %2908 = vst.msk [vmem:[#allocation2 + $0x34] sm:$0x3] %vm1345, %v2906
    %v2909 = vcombine.high %v2881, %v2881
    %v2910 = vcombine.high %v2888, %v2888
    %v2911 = vsel %vm1319, %v2909, %v2909
    %v2912 = vsel %vm1321, %v2909, %v2911
    %v2913 = vrot.slane %v2910, 7
    %v2914 = vsel %vm1324, %v2913, %v2912
    %v2915 = vsel %vm1326, %v2913, %v2914
    %v2916 = vsel %vm1328, %v2913, %v2915
    %v2917 = vsel %vm1330, %v2913, %v2916
    %2918 = vrot.lane.b32.xlu0 %v2917, 64
    %v2919 = vpop.permute.xlu0 %2918
    %2921 = vst.msk [vmem:[#allocation2 + $0x34] sm:$0x3] %vm1359, %v2919
    %v2922 = vrot.slane %v2909, 1
    %v2923 = vsel %vm1319, %v2922, %v2922
    %v2924 = vsel %vm1321, %v2922, %v2923
    %v2925 = vsel %vm1324, %v2910, %v2924
    %v2926 = vsel %vm1326, %v2910, %v2925
    %v2927 = vsel %vm1328, %v2910, %v2926
    %v2928 = vsel %vm1330, %v2910, %v2927
    %2929 = vrot.lane.b32.xlu0 %v2928, 96
    %v2930 = vpop.permute.xlu0 %2929
    %2932 = vst.msk [vmem:[#allocation2 + $0x34] sm:$0x3] %vm1371, %v2930
    %v2933 = vcombine.high %v1284, %v1284
    %v2935 = vunpack.c.l.s4 1983009808
    %v2936 = vunpack.c.0.s8 %v2935
    %v2937 = vlaneseq
    %v2938 = vshrl.u32 %v2937, 7
    %v2939 = vsub.s32 %v2936, %v2938
    %v2940 = vrot.slane %v2933, %v2939
    %v2941 = vcombine.high %v1300, %v1300
    %v2943 = vunpack.c.l.s4 1983009808
    %v2944 = vunpack.c.0.s8 %v2943
    %v2945 = vlaneseq
    %v2946 = vshrl.u32 %v2945, 7
    %v2947 = vsub.s32 %v2944, %v2946
    %v2948 = vrot.slane %v2941, %v2947
    %v2949 = vsel %vm1319, %v2940, %v2940
    %v2950 = vsel %vm1321, %v2940, %v2949
    %v2951 = vrot.slane %v2948, 7
    %v2952 = vsel %vm1324, %v2951, %v2950
    %v2953 = vsel %vm1326, %v2951, %v2952
    %v2954 = vsel %vm1328, %v2951, %v2953
    %v2955 = vsel %vm1330, %v2951, %v2954
    %2957 = vst.msk [vmem:[#allocation2 + $0x36] sm:$0x3] %vm1333, %v2955
    %v2958 = vrot.slane %v2940, 1
    %v2959 = vsel %vm1319, %v2958, %v2958
    %v2960 = vsel %vm1321, %v2958, %v2959
    %v2961 = vsel %vm1324, %v2948, %v2960
    %v2962 = vsel %vm1326, %v2948, %v2961
    %v2963 = vsel %vm1328, %v2948, %v2962
    %v2964 = vsel %vm1330, %v2948, %v2963
    %2965 = vrot.lane.b32.xlu0 %v2964, 32
    %v2966 = vpop.permute.xlu0 %2965
    %2968 = vst.msk [vmem:[#allocation2 + $0x36] sm:$0x3] %vm1345, %v2966
    %v2969 = vcombine.high %v2940, %v2940
    %v2970 = vcombine.high %v2948, %v2948
    %v2971 = vsel %vm1319, %v2969, %v2969
    %v2972 = vsel %vm1321, %v2969, %v2971
    %v2973 = vrot.slane %v2970, 7
    %v2974 = vsel %vm1324, %v2973, %v2972
    %v2975 = vsel %vm1326, %v2973, %v2974
    %v2976 = vsel %vm1328, %v2973, %v2975
    %v2977 = vsel %vm1330, %v2973, %v2976
    %2978 = vrot.lane.b32.xlu0 %v2977, 64
    %v2979 = vpop.permute.xlu0 %2978
    %2981 = vst.msk [vmem:[#allocation2 + $0x36] sm:$0x3] %vm1359, %v2979
    %v2982 = vrot.slane %v2969, 1
    %v2983 = vsel %vm1319, %v2982, %v2982
    %v2984 = vsel %vm1321, %v2982, %v2983
    %v2985 = vsel %vm1324, %v2970, %v2984
    %v2986 = vsel %vm1326, %v2970, %v2985
    %v2987 = vsel %vm1328, %v2970, %v2986
    %v2988 = vsel %vm1330, %v2970, %v2987
    %2989 = vrot.lane.b32.xlu0 %v2988, 96
    %v2990 = vpop.permute.xlu0 %2989
    %2992 = vst.msk [vmem:[#allocation2 + $0x36] sm:$0x3] %vm1371, %v2990
    %v2996 = vunpack.c.l.s4 1983009808
    %v2997 = vunpack.c.0.s8 %v2996
    %v2998 = vlaneseq
    %v2999 = vshrl.u32 %v2998, 7
    %v3000 = vsub.s32 %v2997, %v2999
    %v3001 = vrot.slane %v1285, %v3000
    %v3003 = vunpack.c.l.s4 1983009808
    %v3004 = vunpack.c.0.s8 %v3003
    %v3005 = vlaneseq
    %v3006 = vshrl.u32 %v3005, 7
    %v3007 = vsub.s32 %v3004, %v3006
    %v3008 = vrot.slane %v1301, %v3007
    %v3009 = vsel %vm1319, %v3001, %v3001
    %v3010 = vsel %vm1321, %v3001, %v3009
    %v3011 = vrot.slane %v3008, 7
    %v3012 = vsel %vm1324, %v3011, %v3010
    %v3013 = vsel %vm1326, %v3011, %v3012
    %v3014 = vsel %vm1328, %v3011, %v3013
    %v3015 = vsel %vm1330, %v3011, %v3014
    %3017 = vst.msk [vmem:[#allocation2 + $0x38] sm:$0x3] %vm1333, %v3015
    %v3018 = vrot.slane %v3001, 1
    %v3019 = vsel %vm1319, %v3018, %v3018
    %v3020 = vsel %vm1321, %v3018, %v3019
    %v3021 = vsel %vm1324, %v3008, %v3020
    %v3022 = vsel %vm1326, %v3008, %v3021
    %v3023 = vsel %vm1328, %v3008, %v3022
    %v3024 = vsel %vm1330, %v3008, %v3023
    %3025 = vrot.lane.b32.xlu0 %v3024, 32
    %v3026 = vpop.permute.xlu0 %3025
    %3028 = vst.msk [vmem:[#allocation2 + $0x38] sm:$0x3] %vm1345, %v3026
    %v3029 = vcombine.high %v3001, %v3001
    %v3030 = vcombine.high %v3008, %v3008
    %v3031 = vsel %vm1319, %v3029, %v3029
    %v3032 = vsel %vm1321, %v3029, %v3031
    %v3033 = vrot.slane %v3030, 7
    %v3034 = vsel %vm1324, %v3033, %v3032
    %v3035 = vsel %vm1326, %v3033, %v3034
    %v3036 = vsel %vm1328, %v3033, %v3035
    %v3037 = vsel %vm1330, %v3033, %v3036
    %3038 = vrot.lane.b32.xlu0 %v3037, 64
    %v3039 = vpop.permute.xlu0 %3038
    %3041 = vst.msk [vmem:[#allocation2 + $0x38] sm:$0x3] %vm1359, %v3039
    %v3042 = vrot.slane %v3029, 1
    %v3043 = vsel %vm1319, %v3042, %v3042
    %v3044 = vsel %vm1321, %v3042, %v3043
    %v3045 = vsel %vm1324, %v3030, %v3044
    %v3046 = vsel %vm1326, %v3030, %v3045
    %v3047 = vsel %vm1328, %v3030, %v3046
    %v3048 = vsel %vm1330, %v3030, %v3047
    %3049 = vrot.lane.b32.xlu0 %v3048, 96
    %v3050 = vpop.permute.xlu0 %3049
    %3052 = vst.msk [vmem:[#allocation2 + $0x38] sm:$0x3] %vm1371, %v3050
    %v3053 = vcombine.high %v1285, %v1285
    %v3055 = vunpack.c.l.s4 1983009808
    %v3056 = vunpack.c.0.s8 %v3055
    %v3057 = vlaneseq
    %v3058 = vshrl.u32 %v3057, 7
    %v3059 = vsub.s32 %v3056, %v3058
    %v3060 = vrot.slane %v3053, %v3059
    %v3061 = vcombine.high %v1301, %v1301
    %v3063 = vunpack.c.l.s4 1983009808
    %v3064 = vunpack.c.0.s8 %v3063
    %v3065 = vlaneseq
    %v3066 = vshrl.u32 %v3065, 7
    %v3067 = vsub.s32 %v3064, %v3066
    %v3068 = vrot.slane %v3061, %v3067
    %v3069 = vsel %vm1319, %v3060, %v3060
    %v3070 = vsel %vm1321, %v3060, %v3069
    %v3071 = vrot.slane %v3068, 7
    %v3072 = vsel %vm1324, %v3071, %v3070
    %v3073 = vsel %vm1326, %v3071, %v3072
    %v3074 = vsel %vm1328, %v3071, %v3073
    %v3075 = vsel %vm1330, %v3071, %v3074
    %3077 = vst.msk [vmem:[#allocation2 + $0x3a] sm:$0x3] %vm1333, %v3075
    %v3078 = vrot.slane %v3060, 1
    %v3079 = vsel %vm1319, %v3078, %v3078
    %v3080 = vsel %vm1321, %v3078, %v3079
    %v3081 = vsel %vm1324, %v3068, %v3080
    %v3082 = vsel %vm1326, %v3068, %v3081
    %v3083 = vsel %vm1328, %v3068, %v3082
    %v3084 = vsel %vm1330, %v3068, %v3083
    %3085 = vrot.lane.b32.xlu0 %v3084, 32
    %v3086 = vpop.permute.xlu0 %3085
    %3088 = vst.msk [vmem:[#allocation2 + $0x3a] sm:$0x3] %vm1345, %v3086
    %v3089 = vcombine.high %v3060, %v3060
    %v3090 = vcombine.high %v3068, %v3068
    %v3091 = vsel %vm1319, %v3089, %v3089
    %v3092 = vsel %vm1321, %v3089, %v3091
    %v3093 = vrot.slane %v3090, 7
    %v3094 = vsel %vm1324, %v3093, %v3092
    %v3095 = vsel %vm1326, %v3093, %v3094
    %v3096 = vsel %vm1328, %v3093, %v3095
    %v3097 = vsel %vm1330, %v3093, %v3096
    %3098 = vrot.lane.b32.xlu0 %v3097, 64
    %v3099 = vpop.permute.xlu0 %3098
    %3101 = vst.msk [vmem:[#allocation2 + $0x3a] sm:$0x3] %vm1359, %v3099
    %v3102 = vrot.slane %v3089, 1
    %v3103 = vsel %vm1319, %v3102, %v3102
    %v3104 = vsel %vm1321, %v3102, %v3103
    %v3105 = vsel %vm1324, %v3090, %v3104
    %v3106 = vsel %vm1326, %v3090, %v3105
    %v3107 = vsel %vm1328, %v3090, %v3106
    %v3108 = vsel %vm1330, %v3090, %v3107
    %3109 = vrot.lane.b32.xlu0 %v3108, 96
    %v3110 = vpop.permute.xlu0 %3109
    %3112 = vst.msk [vmem:[#allocation2 + $0x3a] sm:$0x3] %vm1371, %v3110
    %v3116 = vunpack.c.l.s4 1983009808
    %v3117 = vunpack.c.0.s8 %v3116
    %v3118 = vlaneseq
    %v3119 = vshrl.u32 %v3118, 7
    %v3120 = vsub.s32 %v3117, %v3119
    %v3121 = vrot.slane %v1286, %v3120
    %v3123 = vunpack.c.l.s4 1983009808
    %v3124 = vunpack.c.0.s8 %v3123
    %v3125 = vlaneseq
    %v3126 = vshrl.u32 %v3125, 7
    %v3127 = vsub.s32 %v3124, %v3126
    %v3128 = vrot.slane %v1302, %v3127
    %v3129 = vsel %vm1319, %v3121, %v3121
    %v3130 = vsel %vm1321, %v3121, %v3129
    %v3131 = vrot.slane %v3128, 7
    %v3132 = vsel %vm1324, %v3131, %v3130
    %v3133 = vsel %vm1326, %v3131, %v3132
    %v3134 = vsel %vm1328, %v3131, %v3133
    %v3135 = vsel %vm1330, %v3131, %v3134
    %3137 = vst.msk [vmem:[#allocation2 + $0x3c] sm:$0x3] %vm1333, %v3135
    %v3138 = vrot.slane %v3121, 1
    %v3139 = vsel %vm1319, %v3138, %v3138
    %v3140 = vsel %vm1321, %v3138, %v3139
    %v3141 = vsel %vm1324, %v3128, %v3140
    %v3142 = vsel %vm1326, %v3128, %v3141
    %v3143 = vsel %vm1328, %v3128, %v3142
    %v3144 = vsel %vm1330, %v3128, %v3143
    %3145 = vrot.lane.b32.xlu0 %v3144, 32
    %v3146 = vpop.permute.xlu0 %3145
    %3148 = vst.msk [vmem:[#allocation2 + $0x3c] sm:$0x3] %vm1345, %v3146
    %v3149 = vcombine.high %v3121, %v3121
    %v3150 = vcombine.high %v3128, %v3128
    %v3151 = vsel %vm1319, %v3149, %v3149
    %v3152 = vsel %vm1321, %v3149, %v3151
    %v3153 = vrot.slane %v3150, 7
    %v3154 = vsel %vm1324, %v3153, %v3152
    %v3155 = vsel %vm1326, %v3153, %v3154
    %v3156 = vsel %vm1328, %v3153, %v3155
    %v3157 = vsel %vm1330, %v3153, %v3156
    %3158 = vrot.lane.b32.xlu0 %v3157, 64
    %v3159 = vpop.permute.xlu0 %3158
    %3161 = vst.msk [vmem:[#allocation2 + $0x3c] sm:$0x3] %vm1359, %v3159
    %v3162 = vrot.slane %v3149, 1
    %v3163 = vsel %vm1319, %v3162, %v3162
    %v3164 = vsel %vm1321, %v3162, %v3163
    %v3165 = vsel %vm1324, %v3150, %v3164
    %v3166 = vsel %vm1326, %v3150, %v3165
    %v3167 = vsel %vm1328, %v3150, %v3166
    %v3168 = vsel %vm1330, %v3150, %v3167
    %3169 = vrot.lane.b32.xlu0 %v3168, 96
    %v3170 = vpop.permute.xlu0 %3169
    %3172 = vst.msk [vmem:[#allocation2 + $0x3c] sm:$0x3] %vm1371, %v3170
    %v3173 = vcombine.high %v1286, %v1286
    %v3175 = vunpack.c.l.s4 1983009808
    %v3176 = vunpack.c.0.s8 %v3175
    %v3177 = vlaneseq
    %v3178 = vshrl.u32 %v3177, 7
    %v3179 = vsub.s32 %v3176, %v3178
    %v3180 = vrot.slane %v3173, %v3179
    %v3181 = vcombine.high %v1302, %v1302
    %v3183 = vunpack.c.l.s4 1983009808
    %v3184 = vunpack.c.0.s8 %v3183
    %v3185 = vlaneseq
    %v3186 = vshrl.u32 %v3185, 7
    %v3187 = vsub.s32 %v3184, %v3186
    %v3188 = vrot.slane %v3181, %v3187
    %v3189 = vsel %vm1319, %v3180, %v3180
    %v3190 = vsel %vm1321, %v3180, %v3189
    %v3191 = vrot.slane %v3188, 7
    %v3192 = vsel %vm1324, %v3191, %v3190
    %v3193 = vsel %vm1326, %v3191, %v3192
    %v3194 = vsel %vm1328, %v3191, %v3193
    %v3195 = vsel %vm1330, %v3191, %v3194
    %3197 = vst.msk [vmem:[#allocation2 + $0x3e] sm:$0x3] %vm1333, %v3195
    %v3198 = vrot.slane %v3180, 1
    %v3199 = vsel %vm1319, %v3198, %v3198
    %v3200 = vsel %vm1321, %v3198, %v3199
    %v3201 = vsel %vm1324, %v3188, %v3200
    %v3202 = vsel %vm1326, %v3188, %v3201
    %v3203 = vsel %vm1328, %v3188, %v3202
    %v3204 = vsel %vm1330, %v3188, %v3203
    %3205 = vrot.lane.b32.xlu0 %v3204, 32
    %v3206 = vpop.permute.xlu0 %3205
    %3208 = vst.msk [vmem:[#allocation2 + $0x3e] sm:$0x3] %vm1345, %v3206
    %v3209 = vcombine.high %v3180, %v3180
    %v3210 = vcombine.high %v3188, %v3188
    %v3211 = vsel %vm1319, %v3209, %v3209
    %v3212 = vsel %vm1321, %v3209, %v3211
    %v3213 = vrot.slane %v3210, 7
    %v3214 = vsel %vm1324, %v3213, %v3212
    %v3215 = vsel %vm1326, %v3213, %v3214
    %v3216 = vsel %vm1328, %v3213, %v3215
    %v3217 = vsel %vm1330, %v3213, %v3216
    %3218 = vrot.lane.b32.xlu0 %v3217, 64
    %v3219 = vpop.permute.xlu0 %3218
    %3221 = vst.msk [vmem:[#allocation2 + $0x3e] sm:$0x3] %vm1359, %v3219
    %v3222 = vrot.slane %v3209, 1
    %v3223 = vsel %vm1319, %v3222, %v3222
    %v3224 = vsel %vm1321, %v3222, %v3223
    %v3225 = vsel %vm1324, %v3210, %v3224
    %v3226 = vsel %vm1326, %v3210, %v3225
    %v3227 = vsel %vm1328, %v3210, %v3226
    %v3228 = vsel %vm1330, %v3210, %v3227
    %3229 = vrot.lane.b32.xlu0 %v3228, 96
    %v3230 = vpop.permute.xlu0 %3229
    %3232 = vst.msk [vmem:[#allocation2 + $0x3e] sm:$0x3] %vm1371, %v3230
    %v3233 = vld [vmem:[#allocation2] sm:$0xff]
    %v3234 = vld [vmem:[#allocation2 + $0x8] sm:$0xff]
    %v3235 = vld [vmem:[#allocation2 + $0x10] sm:$0xff]
    %v3236 = vld [vmem:[#allocation2 + $0x18] sm:$0xff]
    %v3237 = vld [vmem:[#allocation2 + $0x20] sm:$0xff]
    %v3238 = vld [vmem:[#allocation2 + $0x28] sm:$0xff]
    %v3239 = vld [vmem:[#allocation2 + $0x30] sm:$0xff]
    %v3240 = vld [vmem:[#allocation2 + $0x38] sm:$0xff]
    %v3249 = vcombine.high %v3233, %v3233
    %v3251 = vunpack.c.l.s4 1983009808
    %v3252 = vunpack.c.0.s8 %v3251
    %v3253 = vlaneseq
    %v3254 = vshrl.u32 %v3253, 7
    %v3255 = vsub.s32 %v3252, %v3254
    %v3256 = vrot.slane %v3233, %v3255
    %v3258 = vunpack.c.l.s4 1983009808
    %v3259 = vunpack.c.0.s8 %v3258
    %v3260 = vlaneseq
    %v3261 = vshrl.u32 %v3260, 7
    %v3262 = vsub.s32 %v3259, %v3261
    %v3263 = vrot.slane %v3249, %v3262
    %v3264 = vcombine.high %v3256, %v3256
    %v3265 = vcombine.high %v3263, %v3263
    %v3266 = vcombine.high %v3234, %v3234
    %v3268 = vunpack.c.l.s4 1983009808
    %v3269 = vunpack.c.0.s8 %v3268
    %v3270 = vlaneseq
    %v3271 = vshrl.u32 %v3270, 7
    %v3272 = vsub.s32 %v3269, %v3271
    %v3273 = vrot.slane %v3234, %v3272
    %v3275 = vunpack.c.l.s4 1983009808
    %v3276 = vunpack.c.0.s8 %v3275
    %v3277 = vlaneseq
    %v3278 = vshrl.u32 %v3277, 7
    %v3279 = vsub.s32 %v3276, %v3278
    %v3280 = vrot.slane %v3266, %v3279
    %v3281 = vcombine.high %v3273, %v3273
    %v3282 = vcombine.high %v3280, %v3280
    %v3283 = vcombine.high %v3235, %v3235
    %v3285 = vunpack.c.l.s4 1983009808
    %v3286 = vunpack.c.0.s8 %v3285
    %v3287 = vlaneseq
    %v3288 = vshrl.u32 %v3287, 7
    %v3289 = vsub.s32 %v3286, %v3288
    %v3290 = vrot.slane %v3235, %v3289
    %v3292 = vunpack.c.l.s4 1983009808
    %v3293 = vunpack.c.0.s8 %v3292
    %v3294 = vlaneseq
    %v3295 = vshrl.u32 %v3294, 7
    %v3296 = vsub.s32 %v3293, %v3295
    %v3297 = vrot.slane %v3283, %v3296
    %v3298 = vcombine.high %v3290, %v3290
    %v3299 = vcombine.high %v3297, %v3297
    %v3300 = vcombine.high %v3236, %v3236
    %v3302 = vunpack.c.l.s4 1983009808
    %v3303 = vunpack.c.0.s8 %v3302
    %v3304 = vlaneseq
    %v3305 = vshrl.u32 %v3304, 7
    %v3306 = vsub.s32 %v3303, %v3305
    %v3307 = vrot.slane %v3236, %v3306
    %v3309 = vunpack.c.l.s4 1983009808
    %v3310 = vunpack.c.0.s8 %v3309
    %v3311 = vlaneseq
    %v3312 = vshrl.u32 %v3311, 7
    %v3313 = vsub.s32 %v3310, %v3312
    %v3314 = vrot.slane %v3300, %v3313
    %v3315 = vcombine.high %v3307, %v3307
    %v3316 = vcombine.high %v3314, %v3314
    %v3317 = vcombine.high %v3237, %v3237
    %v3319 = vunpack.c.l.s4 1983009808
    %v3320 = vunpack.c.0.s8 %v3319
    %v3321 = vlaneseq
    %v3322 = vshrl.u32 %v3321, 7
    %v3323 = vsub.s32 %v3320, %v3322
    %v3324 = vrot.slane %v3237, %v3323
    %v3326 = vunpack.c.l.s4 1983009808
    %v3327 = vunpack.c.0.s8 %v3326
    %v3328 = vlaneseq
    %v3329 = vshrl.u32 %v3328, 7
    %v3330 = vsub.s32 %v3327, %v3329
    %v3331 = vrot.slane %v3317, %v3330
    %v3332 = vcombine.high %v3324, %v3324
    %v3333 = vcombine.high %v3331, %v3331
    %v3334 = vcombine.high %v3238, %v3238
    %v3336 = vunpack.c.l.s4 1983009808
    %v3337 = vunpack.c.0.s8 %v3336
    %v3338 = vlaneseq
    %v3339 = vshrl.u32 %v3338, 7
    %v3340 = vsub.s32 %v3337, %v3339
    %v3341 = vrot.slane %v3238, %v3340
    %v3343 = vunpack.c.l.s4 1983009808
    %v3344 = vunpack.c.0.s8 %v3343
    %v3345 = vlaneseq
    %v3346 = vshrl.u32 %v3345, 7
    %v3347 = vsub.s32 %v3344, %v3346
    %v3348 = vrot.slane %v3334, %v3347
    %v3349 = vcombine.high %v3341, %v3341
    %v3350 = vcombine.high %v3348, %v3348
    %v3351 = vcombine.high %v3239, %v3239
    %v3353 = vunpack.c.l.s4 1983009808
    %v3354 = vunpack.c.0.s8 %v3353
    %v3355 = vlaneseq
    %v3356 = vshrl.u32 %v3355, 7
    %v3357 = vsub.s32 %v3354, %v3356
    %v3358 = vrot.slane %v3239, %v3357
    %v3360 = vunpack.c.l.s4 1983009808
    %v3361 = vunpack.c.0.s8 %v3360
    %v3362 = vlaneseq
    %v3363 = vshrl.u32 %v3362, 7
    %v3364 = vsub.s32 %v3361, %v3363
    %v3365 = vrot.slane %v3351, %v3364
    %v3366 = vcombine.high %v3358, %v3358
    %v3367 = vcombine.high %v3365, %v3365
    %v3368 = vcombine.high %v3240, %v3240
    %v3370 = vunpack.c.l.s4 1983009808
    %v3371 = vunpack.c.0.s8 %v3370
    %v3372 = vlaneseq
    %v3373 = vshrl.u32 %v3372, 7
    %v3374 = vsub.s32 %v3371, %v3373
    %v3375 = vrot.slane %v3240, %v3374
    %v3377 = vunpack.c.l.s4 1983009808
    %v3378 = vunpack.c.0.s8 %v3377
    %v3379 = vlaneseq
    %v3380 = vshrl.u32 %v3379, 7
    %v3381 = vsub.s32 %v3378, %v3380
    %v3382 = vrot.slane %v3368, %v3381
    %v3383 = vcombine.high %v3375, %v3375
    %v3384 = vcombine.high %v3382, %v3382
    %v3417 = vpack.c.bf16 %v3256, %v3256
    %v3418 = vpack.c.bf16 %v3264, %v3264
    %v3419 = vpack.c.bf16 %v3263, %v3263
    %v3420 = vpack.c.bf16 %v3265, %v3265
    %v3421 = vpack.c.bf16 %v3273, %v3273
    %v3422 = vpack.c.bf16 %v3281, %v3281
    %v3423 = vpack.c.bf16 %v3280, %v3280
    %v3424 = vpack.c.bf16 %v3282, %v3282
    %v3425 = vpack.c.bf16 %v3290, %v3290
    %v3426 = vpack.c.bf16 %v3298, %v3298
    %v3427 = vpack.c.bf16 %v3297, %v3297
    %v3428 = vpack.c.bf16 %v3299, %v3299
    %v3429 = vpack.c.bf16 %v3307, %v3307
    %v3430 = vpack.c.bf16 %v3315, %v3315
    %v3431 = vpack.c.bf16 %v3314, %v3314
    %v3432 = vpack.c.bf16 %v3316, %v3316
    %v3433 = vpack.c.bf16 %v3324, %v3324
    %v3434 = vpack.c.bf16 %v3332, %v3332
    %v3435 = vpack.c.bf16 %v3331, %v3331
    %v3436 = vpack.c.bf16 %v3333, %v3333
    %v3437 = vpack.c.bf16 %v3341, %v3341
    %v3438 = vpack.c.bf16 %v3349, %v3349
    %v3439 = vpack.c.bf16 %v3348, %v3348
    %v3440 = vpack.c.bf16 %v3350, %v3350
    %v3441 = vpack.c.bf16 %v3358, %v3358
    %v3442 = vpack.c.bf16 %v3366, %v3366
    %v3443 = vpack.c.bf16 %v3365, %v3365
    %v3444 = vpack.c.bf16 %v3367, %v3367
    %v3445 = vpack.c.bf16 %v3375, %v3375
    %v3446 = vpack.c.bf16 %v3383, %v3383
    %v3447 = vpack.c.bf16 %v3382, %v3382
    %v3448 = vpack.c.bf16 %v3384, %v3384
    %v3449 = vld [vmem:[#allocation3] sm:$0xf]
    %v3450 = vld [vmem:[#allocation3 + $0x4] sm:$0xf]
    %v3451 = vld [vmem:[#allocation3 + $0x8] sm:$0xf]
    %v3452 = vld [vmem:[#allocation3 + $0xc] sm:$0xf]
    %v3453 = vld [vmem:[#allocation3 + $0x10] sm:$0xf]
    %v3454 = vld [vmem:[#allocation3 + $0x14] sm:$0xf]
    %v3455 = vld [vmem:[#allocation3 + $0x18] sm:$0xf]
    %v3456 = vld [vmem:[#allocation3 + $0x1c] sm:$0xf]
    %v3457 = vld [vmem:[#allocation3 + $0x20] sm:$0xf]
    %v3458 = vld [vmem:[#allocation3 + $0x24] sm:$0xf]
    %v3459 = vld [vmem:[#allocation3 + $0x28] sm:$0xf]
    %v3460 = vld [vmem:[#allocation3 + $0x2c] sm:$0xf]
    %v3461 = vld [vmem:[#allocation3 + $0x30] sm:$0xf]
    %v3462 = vld [vmem:[#allocation3 + $0x34] sm:$0xf]
    %v3463 = vld [vmem:[#allocation3 + $0x38] sm:$0xf]
    %v3464 = vld [vmem:[#allocation3 + $0x3c] sm:$0xf]
    %v3465 = vld [vmem:[#allocation3 + $0x40] sm:$0xf]
    %v3466 = vld [vmem:[#allocation3 + $0x44] sm:$0xf]
    %v3467 = vld [vmem:[#allocation3 + $0x48] sm:$0xf]
    %v3468 = vld [vmem:[#allocation3 + $0x4c] sm:$0xf]
    %v3469 = vld [vmem:[#allocation3 + $0x50] sm:$0xf]
    %v3470 = vld [vmem:[#allocation3 + $0x54] sm:$0xf]
    %v3471 = vld [vmem:[#allocation3 + $0x58] sm:$0xf]
    %v3472 = vld [vmem:[#allocation3 + $0x5c] sm:$0xf]
    %v3473 = vld [vmem:[#allocation3 + $0x60] sm:$0xf]
    %v3474 = vld [vmem:[#allocation3 + $0x64] sm:$0xf]
    %v3475 = vld [vmem:[#allocation3 + $0x68] sm:$0xf]
    %v3476 = vld [vmem:[#allocation3 + $0x6c] sm:$0xf]
    %v3477 = vld [vmem:[#allocation3 + $0x70] sm:$0xf]
    %v3478 = vld [vmem:[#allocation3 + $0x74] sm:$0xf]
    %v3479 = vld [vmem:[#allocation3 + $0x78] sm:$0xf]
    %v3480 = vld [vmem:[#allocation3 + $0x7c] sm:$0xf]
    %v3481 = vld [vmem:[#allocation3 + $0x80] sm:$0xf]
    %v3482 = vld [vmem:[#allocation3 + $0x84] sm:$0xf]
    %v3483 = vld [vmem:[#allocation3 + $0x88] sm:$0xf]
    %v3484 = vld [vmem:[#allocation3 + $0x8c] sm:$0xf]
    %v3485 = vld [vmem:[#allocation3 + $0x90] sm:$0xf]
    %v3486 = vld [vmem:[#allocation3 + $0x94] sm:$0xf]
    %v3487 = vld [vmem:[#allocation3 + $0x98] sm:$0xf]
    %v3488 = vld [vmem:[#allocation3 + $0x9c] sm:$0xf]
    %v3489 = vld [vmem:[#allocation3 + $0xa0] sm:$0xf]
    %v3490 = vld [vmem:[#allocation3 + $0xa4] sm:$0xf]
    %v3491 = vld [vmem:[#allocation3 + $0xa8] sm:$0xf]
    %v3492 = vld [vmem:[#allocation3 + $0xac] sm:$0xf]
    %v3493 = vld [vmem:[#allocation3 + $0xb0] sm:$0xf]
    %v3494 = vld [vmem:[#allocation3 + $0xb4] sm:$0xf]
    %v3495 = vld [vmem:[#allocation3 + $0xb8] sm:$0xf]
    %v3496 = vld [vmem:[#allocation3 + $0xbc] sm:$0xf]
    %v3497 = vld [vmem:[#allocation3 + $0xc0] sm:$0xf]
    %v3498 = vld [vmem:[#allocation3 + $0xc4] sm:$0xf]
    %v3499 = vld [vmem:[#allocation3 + $0xc8] sm:$0xf]
    %v3500 = vld [vmem:[#allocation3 + $0xcc] sm:$0xf]
    %v3501 = vld [vmem:[#allocation3 + $0xd0] sm:$0xf]
    %v3502 = vld [vmem:[#allocation3 + $0xd4] sm:$0xf]
    %v3503 = vld [vmem:[#allocation3 + $0xd8] sm:$0xf]
    %v3504 = vld [vmem:[#allocation3 + $0xdc] sm:$0xf]
    %v3505 = vld [vmem:[#allocation3 + $0xe0] sm:$0xf]
    %v3506 = vld [vmem:[#allocation3 + $0xe4] sm:$0xf]
    %v3507 = vld [vmem:[#allocation3 + $0xe8] sm:$0xf]
    %v3508 = vld [vmem:[#allocation3 + $0xec] sm:$0xf]
    %v3509 = vld [vmem:[#allocation3 + $0xf0] sm:$0xf]
    %v3510 = vld [vmem:[#allocation3 + $0xf4] sm:$0xf]
    %v3511 = vld [vmem:[#allocation3 + $0xf8] sm:$0xf]
    %v3512 = vld [vmem:[#allocation3 + $0xfc] sm:$0xf]
    %v3513 = vld [vmem:[#allocation3 + $0x100] sm:$0xf]
    %v3514 = vld [vmem:[#allocation3 + $0x104] sm:$0xf]
    %v3515 = vld [vmem:[#allocation3 + $0x108] sm:$0xf]
    %v3516 = vld [vmem:[#allocation3 + $0x10c] sm:$0xf]
    %v3517 = vld [vmem:[#allocation3 + $0x110] sm:$0xf]
    %v3518 = vld [vmem:[#allocation3 + $0x114] sm:$0xf]
    %v3519 = vld [vmem:[#allocation3 + $0x118] sm:$0xf]
    %v3520 = vld [vmem:[#allocation3 + $0x11c] sm:$0xf]
    %v3521 = vld [vmem:[#allocation3 + $0x120] sm:$0xf]
    %v3522 = vld [vmem:[#allocation3 + $0x124] sm:$0xf]
    %v3523 = vld [vmem:[#allocation3 + $0x128] sm:$0xf]
    %v3524 = vld [vmem:[#allocation3 + $0x12c] sm:$0xf]
    %v3525 = vld [vmem:[#allocation3 + $0x130] sm:$0xf]
    %v3526 = vld [vmem:[#allocation3 + $0x134] sm:$0xf]
    %v3527 = vld [vmem:[#allocation3 + $0x138] sm:$0xf]
    %v3528 = vld [vmem:[#allocation3 + $0x13c] sm:$0xf]
    %v3529 = vld [vmem:[#allocation3 + $0x140] sm:$0xf]
    %v3530 = vld [vmem:[#allocation3 + $0x144] sm:$0xf]
    %v3531 = vld [vmem:[#allocation3 + $0x148] sm:$0xf]
    %v3532 = vld [vmem:[#allocation3 + $0x14c] sm:$0xf]
    %v3533 = vld [vmem:[#allocation3 + $0x150] sm:$0xf]
    %v3534 = vld [vmem:[#allocation3 + $0x154] sm:$0xf]
    %v3535 = vld [vmem:[#allocation3 + $0x158] sm:$0xf]
    %v3536 = vld [vmem:[#allocation3 + $0x15c] sm:$0xf]
    %v3537 = vld [vmem:[#allocation3 + $0x160] sm:$0xf]
    %v3538 = vld [vmem:[#allocation3 + $0x164] sm:$0xf]
    %v3539 = vld [vmem:[#allocation3 + $0x168] sm:$0xf]
    %v3540 = vld [vmem:[#allocation3 + $0x16c] sm:$0xf]
    %v3541 = vld [vmem:[#allocation3 + $0x170] sm:$0xf]
    %v3542 = vld [vmem:[#allocation3 + $0x174] sm:$0xf]
    %v3543 = vld [vmem:[#allocation3 + $0x178] sm:$0xf]
    %v3544 = vld [vmem:[#allocation3 + $0x17c] sm:$0xf]
    %v3545 = vld [vmem:[#allocation3 + $0x180] sm:$0xf]
    %v3546 = vld [vmem:[#allocation3 + $0x184] sm:$0xf]
    %v3547 = vld [vmem:[#allocation3 + $0x188] sm:$0xf]
    %v3548 = vld [vmem:[#allocation3 + $0x18c] sm:$0xf]
    %v3549 = vld [vmem:[#allocation3 + $0x190] sm:$0xf]
    %v3550 = vld [vmem:[#allocation3 + $0x194] sm:$0xf]
    %v3551 = vld [vmem:[#allocation3 + $0x198] sm:$0xf]
    %v3552 = vld [vmem:[#allocation3 + $0x19c] sm:$0xf]
    %v3553 = vld [vmem:[#allocation3 + $0x1a0] sm:$0xf]
    %v3554 = vld [vmem:[#allocation3 + $0x1a4] sm:$0xf]
    %v3555 = vld [vmem:[#allocation3 + $0x1a8] sm:$0xf]
    %v3556 = vld [vmem:[#allocation3 + $0x1ac] sm:$0xf]
    %v3557 = vld [vmem:[#allocation3 + $0x1b0] sm:$0xf]
    %v3558 = vld [vmem:[#allocation3 + $0x1b4] sm:$0xf]
    %v3559 = vld [vmem:[#allocation3 + $0x1b8] sm:$0xf]
    %v3560 = vld [vmem:[#allocation3 + $0x1bc] sm:$0xf]
    %v3561 = vld [vmem:[#allocation3 + $0x1c0] sm:$0xf]
    %v3562 = vld [vmem:[#allocation3 + $0x1c4] sm:$0xf]
    %v3563 = vld [vmem:[#allocation3 + $0x1c8] sm:$0xf]
    %v3564 = vld [vmem:[#allocation3 + $0x1cc] sm:$0xf]
    %v3565 = vld [vmem:[#allocation3 + $0x1d0] sm:$0xf]
    %v3566 = vld [vmem:[#allocation3 + $0x1d4] sm:$0xf]
    %v3567 = vld [vmem:[#allocation3 + $0x1d8] sm:$0xf]
    %v3568 = vld [vmem:[#allocation3 + $0x1dc] sm:$0xf]
    %v3569 = vld [vmem:[#allocation3 + $0x1e0] sm:$0xf]
    %v3570 = vld [vmem:[#allocation3 + $0x1e4] sm:$0xf]
    %v3571 = vld [vmem:[#allocation3 + $0x1e8] sm:$0xf]
    %v3572 = vld [vmem:[#allocation3 + $0x1ec] sm:$0xf]
    %v3573 = vld [vmem:[#allocation3 + $0x1f0] sm:$0xf]
    %v3574 = vld [vmem:[#allocation3 + $0x1f4] sm:$0xf]
    %v3575 = vld [vmem:[#allocation3 + $0x1f8] sm:$0xf]
    %v3576 = vld [vmem:[#allocation3 + $0x1fc] sm:$0xf]
    %v3577 = vld [vmem:[#allocation3 + $0x200] sm:$0xf]
    %v3578 = vld [vmem:[#allocation3 + $0x204] sm:$0xf]
    %v3579 = vld [vmem:[#allocation3 + $0x208] sm:$0xf]
    %v3580 = vld [vmem:[#allocation3 + $0x20c] sm:$0xf]
    %v3581 = vld [vmem:[#allocation3 + $0x210] sm:$0xf]
    %v3582 = vld [vmem:[#allocation3 + $0x214] sm:$0xf]
    %v3583 = vld [vmem:[#allocation3 + $0x218] sm:$0xf]
    %v3584 = vld [vmem:[#allocation3 + $0x21c] sm:$0xf]
    %v3585 = vld [vmem:[#allocation3 + $0x220] sm:$0xf]
    %v3586 = vld [vmem:[#allocation3 + $0x224] sm:$0xf]
    %v3587 = vld [vmem:[#allocation3 + $0x228] sm:$0xf]
    %v3588 = vld [vmem:[#allocation3 + $0x22c] sm:$0xf]
    %v3589 = vld [vmem:[#allocation3 + $0x230] sm:$0xf]
    %v3590 = vld [vmem:[#allocation3 + $0x234] sm:$0xf]
    %v3591 = vld [vmem:[#allocation3 + $0x238] sm:$0xf]
    %v3592 = vld [vmem:[#allocation3 + $0x23c] sm:$0xf]
    %v3593 = vld [vmem:[#allocation3 + $0x240] sm:$0xf]
    %v3594 = vld [vmem:[#allocation3 + $0x244] sm:$0xf]
    %v3595 = vld [vmem:[#allocation3 + $0x248] sm:$0xf]
    %v3596 = vld [vmem:[#allocation3 + $0x24c] sm:$0xf]
    %v3597 = vld [vmem:[#allocation3 + $0x250] sm:$0xf]
    %v3598 = vld [vmem:[#allocation3 + $0x254] sm:$0xf]
    %v3599 = vld [vmem:[#allocation3 + $0x258] sm:$0xf]
    %v3600 = vld [vmem:[#allocation3 + $0x25c] sm:$0xf]
    %v3601 = vld [vmem:[#allocation3 + $0x260] sm:$0xf]
    %v3602 = vld [vmem:[#allocation3 + $0x264] sm:$0xf]
    %v3603 = vld [vmem:[#allocation3 + $0x268] sm:$0xf]
    %v3604 = vld [vmem:[#allocation3 + $0x26c] sm:$0xf]
    %v3605 = vld [vmem:[#allocation3 + $0x270] sm:$0xf]
    %v3606 = vld [vmem:[#allocation3 + $0x274] sm:$0xf]
    %v3607 = vld [vmem:[#allocation3 + $0x278] sm:$0xf]
    %v3608 = vld [vmem:[#allocation3 + $0x27c] sm:$0xf]
    %v3609 = vld [vmem:[#allocation3 + $0x280] sm:$0xf]
    %v3610 = vld [vmem:[#allocation3 + $0x284] sm:$0xf]
    %v3611 = vld [vmem:[#allocation3 + $0x288] sm:$0xf]
    %v3612 = vld [vmem:[#allocation3 + $0x28c] sm:$0xf]
    %v3613 = vld [vmem:[#allocation3 + $0x290] sm:$0xf]
    %v3614 = vld [vmem:[#allocation3 + $0x294] sm:$0xf]
    %v3615 = vld [vmem:[#allocation3 + $0x298] sm:$0xf]
    %v3616 = vld [vmem:[#allocation3 + $0x29c] sm:$0xf]
    %v3617 = vld [vmem:[#allocation3 + $0x2a0] sm:$0xf]
    %v3618 = vld [vmem:[#allocation3 + $0x2a4] sm:$0xf]
    %v3619 = vld [vmem:[#allocation3 + $0x2a8] sm:$0xf]
    %v3620 = vld [vmem:[#allocation3 + $0x2ac] sm:$0xf]
    %v3621 = vld [vmem:[#allocation3 + $0x2b0] sm:$0xf]
    %v3622 = vld [vmem:[#allocation3 + $0x2b4] sm:$0xf]
    %v3623 = vld [vmem:[#allocation3 + $0x2b8] sm:$0xf]
    %v3624 = vld [vmem:[#allocation3 + $0x2bc] sm:$0xf]
    %v3625 = vld [vmem:[#allocation3 + $0x2c0] sm:$0xf]
    %v3626 = vld [vmem:[#allocation3 + $0x2c4] sm:$0xf]
    %v3627 = vld [vmem:[#allocation3 + $0x2c8] sm:$0xf]
    %v3628 = vld [vmem:[#allocation3 + $0x2cc] sm:$0xf]
    %v3629 = vld [vmem:[#allocation3 + $0x2d0] sm:$0xf]
    %v3630 = vld [vmem:[#allocation3 + $0x2d4] sm:$0xf]
    %v3631 = vld [vmem:[#allocation3 + $0x2d8] sm:$0xf]
    %v3632 = vld [vmem:[#allocation3 + $0x2dc] sm:$0xf]
    %v3633 = vld [vmem:[#allocation3 + $0x2e0] sm:$0xf]
    %v3634 = vld [vmem:[#allocation3 + $0x2e4] sm:$0xf]
    %v3635 = vld [vmem:[#allocation3 + $0x2e8] sm:$0xf]
    %v3636 = vld [vmem:[#allocation3 + $0x2ec] sm:$0xf]
    %v3637 = vld [vmem:[#allocation3 + $0x2f0] sm:$0xf]
    %v3638 = vld [vmem:[#allocation3 + $0x2f4] sm:$0xf]
    %v3639 = vld [vmem:[#allocation3 + $0x2f8] sm:$0xf]
    %v3640 = vld [vmem:[#allocation3 + $0x2fc] sm:$0xf]
    %v3641 = vld [vmem:[#allocation3 + $0x300] sm:$0xf]
    %v3642 = vld [vmem:[#allocation3 + $0x304] sm:$0xf]
    %v3643 = vld [vmem:[#allocation3 + $0x308] sm:$0xf]
    %v3644 = vld [vmem:[#allocation3 + $0x30c] sm:$0xf]
    %v3645 = vld [vmem:[#allocation3 + $0x310] sm:$0xf]
    %v3646 = vld [vmem:[#allocation3 + $0x314] sm:$0xf]
    %v3647 = vld [vmem:[#allocation3 + $0x318] sm:$0xf]
    %v3648 = vld [vmem:[#allocation3 + $0x31c] sm:$0xf]
    %v3649 = vld [vmem:[#allocation3 + $0x320] sm:$0xf]
    %v3650 = vld [vmem:[#allocation3 + $0x324] sm:$0xf]
    %v3651 = vld [vmem:[#allocation3 + $0x328] sm:$0xf]
    %v3652 = vld [vmem:[#allocation3 + $0x32c] sm:$0xf]
    %v3653 = vld [vmem:[#allocation3 + $0x330] sm:$0xf]
    %v3654 = vld [vmem:[#allocation3 + $0x334] sm:$0xf]
    %v3655 = vld [vmem:[#allocation3 + $0x338] sm:$0xf]
    %v3656 = vld [vmem:[#allocation3 + $0x33c] sm:$0xf]
    %v3657 = vld [vmem:[#allocation3 + $0x340] sm:$0xf]
    %v3658 = vld [vmem:[#allocation3 + $0x344] sm:$0xf]
    %v3659 = vld [vmem:[#allocation3 + $0x348] sm:$0xf]
    %v3660 = vld [vmem:[#allocation3 + $0x34c] sm:$0xf]
    %v3661 = vld [vmem:[#allocation3 + $0x350] sm:$0xf]
    %v3662 = vld [vmem:[#allocation3 + $0x354] sm:$0xf]
    %v3663 = vld [vmem:[#allocation3 + $0x358] sm:$0xf]
    %v3664 = vld [vmem:[#allocation3 + $0x35c] sm:$0xf]
    %v3665 = vld [vmem:[#allocation3 + $0x360] sm:$0xf]
    %v3666 = vld [vmem:[#allocation3 + $0x364] sm:$0xf]
    %v3667 = vld [vmem:[#allocation3 + $0x368] sm:$0xf]
    %v3668 = vld [vmem:[#allocation3 + $0x36c] sm:$0xf]
    %v3669 = vld [vmem:[#allocation3 + $0x370] sm:$0xf]
    %v3670 = vld [vmem:[#allocation3 + $0x374] sm:$0xf]
    %v3671 = vld [vmem:[#allocation3 + $0x378] sm:$0xf]
    %v3672 = vld [vmem:[#allocation3 + $0x37c] sm:$0xf]
    %v3673 = vld [vmem:[#allocation3 + $0x380] sm:$0xf]
    %v3674 = vld [vmem:[#allocation3 + $0x384] sm:$0xf]
    %v3675 = vld [vmem:[#allocation3 + $0x388] sm:$0xf]
    %v3676 = vld [vmem:[#allocation3 + $0x38c] sm:$0xf]
    %v3677 = vld [vmem:[#allocation3 + $0x390] sm:$0xf]
    %v3678 = vld [vmem:[#allocation3 + $0x394] sm:$0xf]
    %v3679 = vld [vmem:[#allocation3 + $0x398] sm:$0xf]
    %v3680 = vld [vmem:[#allocation3 + $0x39c] sm:$0xf]
    %v3681 = vld [vmem:[#allocation3 + $0x3a0] sm:$0xf]
    %v3682 = vld [vmem:[#allocation3 + $0x3a4] sm:$0xf]
    %v3683 = vld [vmem:[#allocation3 + $0x3a8] sm:$0xf]
    %v3684 = vld [vmem:[#allocation3 + $0x3ac] sm:$0xf]
    %v3685 = vld [vmem:[#allocation3 + $0x3b0] sm:$0xf]
    %v3686 = vld [vmem:[#allocation3 + $0x3b4] sm:$0xf]
    %v3687 = vld [vmem:[#allocation3 + $0x3b8] sm:$0xf]
    %v3688 = vld [vmem:[#allocation3 + $0x3bc] sm:$0xf]
    %v3689 = vld [vmem:[#allocation3 + $0x3c0] sm:$0xf]
    %v3690 = vld [vmem:[#allocation3 + $0x3c4] sm:$0xf]
    %v3691 = vld [vmem:[#allocation3 + $0x3c8] sm:$0xf]
    %v3692 = vld [vmem:[#allocation3 + $0x3cc] sm:$0xf]
    %v3693 = vld [vmem:[#allocation3 + $0x3d0] sm:$0xf]
    %v3694 = vld [vmem:[#allocation3 + $0x3d4] sm:$0xf]
    %v3695 = vld [vmem:[#allocation3 + $0x3d8] sm:$0xf]
    %v3696 = vld [vmem:[#allocation3 + $0x3dc] sm:$0xf]
    %v3697 = vld [vmem:[#allocation3 + $0x3e0] sm:$0xf]
    %v3698 = vld [vmem:[#allocation3 + $0x3e4] sm:$0xf]
    %v3699 = vld [vmem:[#allocation3 + $0x3e8] sm:$0xf]
    %v3700 = vld [vmem:[#allocation3 + $0x3ec] sm:$0xf]
    %v3701 = vld [vmem:[#allocation3 + $0x3f0] sm:$0xf]
    %v3702 = vld [vmem:[#allocation3 + $0x3f4] sm:$0xf]
    %v3703 = vld [vmem:[#allocation3 + $0x3f8] sm:$0xf]
    %v3704 = vld [vmem:[#allocation3 + $0x3fc] sm:$0xf]
    %v3705 = vld [vmem:[#allocation3 + $0x400] sm:$0xf]
    %v3706 = vld [vmem:[#allocation3 + $0x404] sm:$0xf]
    %v3707 = vld [vmem:[#allocation3 + $0x408] sm:$0xf]
    %v3708 = vld [vmem:[#allocation3 + $0x40c] sm:$0xf]
    %v3709 = vld [vmem:[#allocation3 + $0x410] sm:$0xf]
    %v3710 = vld [vmem:[#allocation3 + $0x414] sm:$0xf]
    %v3711 = vld [vmem:[#allocation3 + $0x418] sm:$0xf]
    %v3712 = vld [vmem:[#allocation3 + $0x41c] sm:$0xf]
    %v3713 = vld [vmem:[#allocation3 + $0x420] sm:$0xf]
    %v3714 = vld [vmem:[#allocation3 + $0x424] sm:$0xf]
    %v3715 = vld [vmem:[#allocation3 + $0x428] sm:$0xf]
    %v3716 = vld [vmem:[#allocation3 + $0x42c] sm:$0xf]
    %v3717 = vld [vmem:[#allocation3 + $0x430] sm:$0xf]
    %v3718 = vld [vmem:[#allocation3 + $0x434] sm:$0xf]
    %v3719 = vld [vmem:[#allocation3 + $0x438] sm:$0xf]
    %v3720 = vld [vmem:[#allocation3 + $0x43c] sm:$0xf]
    %v3721 = vld [vmem:[#allocation3 + $0x440] sm:$0xf]
    %v3722 = vld [vmem:[#allocation3 + $0x444] sm:$0xf]
    %v3723 = vld [vmem:[#allocation3 + $0x448] sm:$0xf]
    %v3724 = vld [vmem:[#allocation3 + $0x44c] sm:$0xf]
    %v3725 = vld [vmem:[#allocation3 + $0x450] sm:$0xf]
    %v3726 = vld [vmem:[#allocation3 + $0x454] sm:$0xf]
    %v3727 = vld [vmem:[#allocation3 + $0x458] sm:$0xf]
    %v3728 = vld [vmem:[#allocation3 + $0x45c] sm:$0xf]
    %v3729 = vld [vmem:[#allocation3 + $0x460] sm:$0xf]
    %v3730 = vld [vmem:[#allocation3 + $0x464] sm:$0xf]
    %v3731 = vld [vmem:[#allocation3 + $0x468] sm:$0xf]
    %v3732 = vld [vmem:[#allocation3 + $0x46c] sm:$0xf]
    %v3733 = vld [vmem:[#allocation3 + $0x470] sm:$0xf]
    %v3734 = vld [vmem:[#allocation3 + $0x474] sm:$0xf]
    %v3735 = vld [vmem:[#allocation3 + $0x478] sm:$0xf]
    %v3736 = vld [vmem:[#allocation3 + $0x47c] sm:$0xf]
    %v3737 = vld [vmem:[#allocation3 + $0x480] sm:$0xf]
    %v3738 = vld [vmem:[#allocation3 + $0x484] sm:$0xf]
    %v3739 = vld [vmem:[#allocation3 + $0x488] sm:$0xf]
    %v3740 = vld [vmem:[#allocation3 + $0x48c] sm:$0xf]
    %v3741 = vld [vmem:[#allocation3 + $0x490] sm:$0xf]
    %v3742 = vld [vmem:[#allocation3 + $0x494] sm:$0xf]
    %v3743 = vld [vmem:[#allocation3 + $0x498] sm:$0xf]
    %v3744 = vld [vmem:[#allocation3 + $0x49c] sm:$0xf]
    %v3745 = vld [vmem:[#allocation3 + $0x4a0] sm:$0xf]
    %v3746 = vld [vmem:[#allocation3 + $0x4a4] sm:$0xf]
    %v3747 = vld [vmem:[#allocation3 + $0x4a8] sm:$0xf]
    %v3748 = vld [vmem:[#allocation3 + $0x4ac] sm:$0xf]
    %v3749 = vld [vmem:[#allocation3 + $0x4b0] sm:$0xf]
    %v3750 = vld [vmem:[#allocation3 + $0x4b4] sm:$0xf]
    %v3751 = vld [vmem:[#allocation3 + $0x4b8] sm:$0xf]
    %v3752 = vld [vmem:[#allocation3 + $0x4bc] sm:$0xf]
    %v3753 = vld [vmem:[#allocation3 + $0x4c0] sm:$0xf]
    %v3754 = vld [vmem:[#allocation3 + $0x4c4] sm:$0xf]
    %v3755 = vld [vmem:[#allocation3 + $0x4c8] sm:$0xf]
    %v3756 = vld [vmem:[#allocation3 + $0x4cc] sm:$0xf]
    %v3757 = vld [vmem:[#allocation3 + $0x4d0] sm:$0xf]
    %v3758 = vld [vmem:[#allocation3 + $0x4d4] sm:$0xf]
    %v3759 = vld [vmem:[#allocation3 + $0x4d8] sm:$0xf]
    %v3760 = vld [vmem:[#allocation3 + $0x4dc] sm:$0xf]
    %v3761 = vld [vmem:[#allocation3 + $0x4e0] sm:$0xf]
    %v3762 = vld [vmem:[#allocation3 + $0x4e4] sm:$0xf]
    %v3763 = vld [vmem:[#allocation3 + $0x4e8] sm:$0xf]
    %v3764 = vld [vmem:[#allocation3 + $0x4ec] sm:$0xf]
    %v3765 = vld [vmem:[#allocation3 + $0x4f0] sm:$0xf]
    %v3766 = vld [vmem:[#allocation3 + $0x4f4] sm:$0xf]
    %v3767 = vld [vmem:[#allocation3 + $0x4f8] sm:$0xf]
    %v3768 = vld [vmem:[#allocation3 + $0x4fc] sm:$0xf]
    %v3769 = vld [vmem:[#allocation3 + $0x500] sm:$0xf]
    %v3770 = vld [vmem:[#allocation3 + $0x504] sm:$0xf]
    %v3771 = vld [vmem:[#allocation3 + $0x508] sm:$0xf]
    %v3772 = vld [vmem:[#allocation3 + $0x50c] sm:$0xf]
    %v3773 = vld [vmem:[#allocation3 + $0x510] sm:$0xf]
    %v3774 = vld [vmem:[#allocation3 + $0x514] sm:$0xf]
    %v3775 = vld [vmem:[#allocation3 + $0x518] sm:$0xf]
    %v3776 = vld [vmem:[#allocation3 + $0x51c] sm:$0xf]
    %v3777 = vld [vmem:[#allocation3 + $0x520] sm:$0xf]
    %v3778 = vld [vmem:[#allocation3 + $0x524] sm:$0xf]
    %v3779 = vld [vmem:[#allocation3 + $0x528] sm:$0xf]
    %v3780 = vld [vmem:[#allocation3 + $0x52c] sm:$0xf]
    %v3781 = vld [vmem:[#allocation3 + $0x530] sm:$0xf]
    %v3782 = vld [vmem:[#allocation3 + $0x534] sm:$0xf]
    %v3783 = vld [vmem:[#allocation3 + $0x538] sm:$0xf]
    %v3784 = vld [vmem:[#allocation3 + $0x53c] sm:$0xf]
    %v3785 = vld [vmem:[#allocation3 + $0x540] sm:$0xf]
    %v3786 = vld [vmem:[#allocation3 + $0x544] sm:$0xf]
    %v3787 = vld [vmem:[#allocation3 + $0x548] sm:$0xf]
    %v3788 = vld [vmem:[#allocation3 + $0x54c] sm:$0xf]
    %v3789 = vld [vmem:[#allocation3 + $0x550] sm:$0xf]
    %v3790 = vld [vmem:[#allocation3 + $0x554] sm:$0xf]
    %v3791 = vld [vmem:[#allocation3 + $0x558] sm:$0xf]
    %v3792 = vld [vmem:[#allocation3 + $0x55c] sm:$0xf]
    %v3793 = vld [vmem:[#allocation3 + $0x560] sm:$0xf]
    %v3794 = vld [vmem:[#allocation3 + $0x564] sm:$0xf]
    %v3795 = vld [vmem:[#allocation3 + $0x568] sm:$0xf]
    %v3796 = vld [vmem:[#allocation3 + $0x56c] sm:$0xf]
    %v3797 = vld [vmem:[#allocation3 + $0x570] sm:$0xf]
    %v3798 = vld [vmem:[#allocation3 + $0x574] sm:$0xf]
    %v3799 = vld [vmem:[#allocation3 + $0x578] sm:$0xf]
    %v3800 = vld [vmem:[#allocation3 + $0x57c] sm:$0xf]
    %v3801 = vld [vmem:[#allocation3 + $0x580] sm:$0xf]
    %v3802 = vld [vmem:[#allocation3 + $0x584] sm:$0xf]
    %v3803 = vld [vmem:[#allocation3 + $0x588] sm:$0xf]
    %v3804 = vld [vmem:[#allocation3 + $0x58c] sm:$0xf]
    %v3805 = vld [vmem:[#allocation3 + $0x590] sm:$0xf]
    %v3806 = vld [vmem:[#allocation3 + $0x594] sm:$0xf]
    %v3807 = vld [vmem:[#allocation3 + $0x598] sm:$0xf]
    %v3808 = vld [vmem:[#allocation3 + $0x59c] sm:$0xf]
    %v3809 = vld [vmem:[#allocation3 + $0x5a0] sm:$0xf]
    %v3810 = vld [vmem:[#allocation3 + $0x5a4] sm:$0xf]
    %v3811 = vld [vmem:[#allocation3 + $0x5a8] sm:$0xf]
    %v3812 = vld [vmem:[#allocation3 + $0x5ac] sm:$0xf]
    %v3813 = vld [vmem:[#allocation3 + $0x5b0] sm:$0xf]
    %v3814 = vld [vmem:[#allocation3 + $0x5b4] sm:$0xf]
    %v3815 = vld [vmem:[#allocation3 + $0x5b8] sm:$0xf]
    %v3816 = vld [vmem:[#allocation3 + $0x5bc] sm:$0xf]
    %v3817 = vld [vmem:[#allocation3 + $0x5c0] sm:$0xf]
    %v3818 = vld [vmem:[#allocation3 + $0x5c4] sm:$0xf]
    %v3819 = vld [vmem:[#allocation3 + $0x5c8] sm:$0xf]
    %v3820 = vld [vmem:[#allocation3 + $0x5cc] sm:$0xf]
    %v3821 = vld [vmem:[#allocation3 + $0x5d0] sm:$0xf]
    %v3822 = vld [vmem:[#allocation3 + $0x5d4] sm:$0xf]
    %v3823 = vld [vmem:[#allocation3 + $0x5d8] sm:$0xf]
    %v3824 = vld [vmem:[#allocation3 + $0x5dc] sm:$0xf]
    %v3825 = vld [vmem:[#allocation3 + $0x5e0] sm:$0xf]
    %v3826 = vld [vmem:[#allocation3 + $0x5e4] sm:$0xf]
    %v3827 = vld [vmem:[#allocation3 + $0x5e8] sm:$0xf]
    %v3828 = vld [vmem:[#allocation3 + $0x5ec] sm:$0xf]
    %v3829 = vld [vmem:[#allocation3 + $0x5f0] sm:$0xf]
    %v3830 = vld [vmem:[#allocation3 + $0x5f4] sm:$0xf]
    %v3831 = vld [vmem:[#allocation3 + $0x5f8] sm:$0xf]
    %v3832 = vld [vmem:[#allocation3 + $0x5fc] sm:$0xf]
    %v3833 = vld [vmem:[#allocation3 + $0x600] sm:$0xf]
    %v3834 = vld [vmem:[#allocation3 + $0x604] sm:$0xf]
    %v3835 = vld [vmem:[#allocation3 + $0x608] sm:$0xf]
    %v3836 = vld [vmem:[#allocation3 + $0x60c] sm:$0xf]
    %v3837 = vld [vmem:[#allocation3 + $0x610] sm:$0xf]
    %v3838 = vld [vmem:[#allocation3 + $0x614] sm:$0xf]
    %v3839 = vld [vmem:[#allocation3 + $0x618] sm:$0xf]
    %v3840 = vld [vmem:[#allocation3 + $0x61c] sm:$0xf]
    %v3841 = vld [vmem:[#allocation3 + $0x620] sm:$0xf]
    %v3842 = vld [vmem:[#allocation3 + $0x624] sm:$0xf]
    %v3843 = vld [vmem:[#allocation3 + $0x628] sm:$0xf]
    %v3844 = vld [vmem:[#allocation3 + $0x62c] sm:$0xf]
    %v3845 = vld [vmem:[#allocation3 + $0x630] sm:$0xf]
    %v3846 = vld [vmem:[#allocation3 + $0x634] sm:$0xf]
    %v3847 = vld [vmem:[#allocation3 + $0x638] sm:$0xf]
    %v3848 = vld [vmem:[#allocation3 + $0x63c] sm:$0xf]
    %v3849 = vld [vmem:[#allocation3 + $0x640] sm:$0xf]
    %v3850 = vld [vmem:[#allocation3 + $0x644] sm:$0xf]
    %v3851 = vld [vmem:[#allocation3 + $0x648] sm:$0xf]
    %v3852 = vld [vmem:[#allocation3 + $0x64c] sm:$0xf]
    %v3853 = vld [vmem:[#allocation3 + $0x650] sm:$0xf]
    %v3854 = vld [vmem:[#allocation3 + $0x654] sm:$0xf]
    %v3855 = vld [vmem:[#allocation3 + $0x658] sm:$0xf]
    %v3856 = vld [vmem:[#allocation3 + $0x65c] sm:$0xf]
    %v3857 = vld [vmem:[#allocation3 + $0x660] sm:$0xf]
    %v3858 = vld [vmem:[#allocation3 + $0x664] sm:$0xf]
    %v3859 = vld [vmem:[#allocation3 + $0x668] sm:$0xf]
    %v3860 = vld [vmem:[#allocation3 + $0x66c] sm:$0xf]
    %v3861 = vld [vmem:[#allocation3 + $0x670] sm:$0xf]
    %v3862 = vld [vmem:[#allocation3 + $0x674] sm:$0xf]
    %v3863 = vld [vmem:[#allocation3 + $0x678] sm:$0xf]
    %v3864 = vld [vmem:[#allocation3 + $0x67c] sm:$0xf]
    %v3865 = vld [vmem:[#allocation3 + $0x680] sm:$0xf]
    %v3866 = vld [vmem:[#allocation3 + $0x684] sm:$0xf]
    %v3867 = vld [vmem:[#allocation3 + $0x688] sm:$0xf]
    %v3868 = vld [vmem:[#allocation3 + $0x68c] sm:$0xf]
    %v3869 = vld [vmem:[#allocation3 + $0x690] sm:$0xf]
    %v3870 = vld [vmem:[#allocation3 + $0x694] sm:$0xf]
    %v3871 = vld [vmem:[#allocation3 + $0x698] sm:$0xf]
    %v3872 = vld [vmem:[#allocation3 + $0x69c] sm:$0xf]
    %v3873 = vld [vmem:[#allocation3 + $0x6a0] sm:$0xf]
    %v3874 = vld [vmem:[#allocation3 + $0x6a4] sm:$0xf]
    %v3875 = vld [vmem:[#allocation3 + $0x6a8] sm:$0xf]
    %v3876 = vld [vmem:[#allocation3 + $0x6ac] sm:$0xf]
    %v3877 = vld [vmem:[#allocation3 + $0x6b0] sm:$0xf]
    %v3878 = vld [vmem:[#allocation3 + $0x6b4] sm:$0xf]
    %v3879 = vld [vmem:[#allocation3 + $0x6b8] sm:$0xf]
    %v3880 = vld [vmem:[#allocation3 + $0x6bc] sm:$0xf]
    %v3881 = vld [vmem:[#allocation3 + $0x6c0] sm:$0xf]
    %v3882 = vld [vmem:[#allocation3 + $0x6c4] sm:$0xf]
    %v3883 = vld [vmem:[#allocation3 + $0x6c8] sm:$0xf]
    %v3884 = vld [vmem:[#allocation3 + $0x6cc] sm:$0xf]
    %v3885 = vld [vmem:[#allocation3 + $0x6d0] sm:$0xf]
    %v3886 = vld [vmem:[#allocation3 + $0x6d4] sm:$0xf]
    %v3887 = vld [vmem:[#allocation3 + $0x6d8] sm:$0xf]
    %v3888 = vld [vmem:[#allocation3 + $0x6dc] sm:$0xf]
    %v3889 = vld [vmem:[#allocation3 + $0x6e0] sm:$0xf]
    %v3890 = vld [vmem:[#allocation3 + $0x6e4] sm:$0xf]
    %v3891 = vld [vmem:[#allocation3 + $0x6e8] sm:$0xf]
    %v3892 = vld [vmem:[#allocation3 + $0x6ec] sm:$0xf]
    %v3893 = vld [vmem:[#allocation3 + $0x6f0] sm:$0xf]
    %v3894 = vld [vmem:[#allocation3 + $0x6f4] sm:$0xf]
    %v3895 = vld [vmem:[#allocation3 + $0x6f8] sm:$0xf]
    %v3896 = vld [vmem:[#allocation3 + $0x6fc] sm:$0xf]
    %v3897 = vld [vmem:[#allocation3 + $0x700] sm:$0xf]
    %v3898 = vld [vmem:[#allocation3 + $0x704] sm:$0xf]
    %v3899 = vld [vmem:[#allocation3 + $0x708] sm:$0xf]
    %v3900 = vld [vmem:[#allocation3 + $0x70c] sm:$0xf]
    %v3901 = vld [vmem:[#allocation3 + $0x710] sm:$0xf]
    %v3902 = vld [vmem:[#allocation3 + $0x714] sm:$0xf]
    %v3903 = vld [vmem:[#allocation3 + $0x718] sm:$0xf]
    %v3904 = vld [vmem:[#allocation3 + $0x71c] sm:$0xf]
    %v3905 = vld [vmem:[#allocation3 + $0x720] sm:$0xf]
    %v3906 = vld [vmem:[#allocation3 + $0x724] sm:$0xf]
    %v3907 = vld [vmem:[#allocation3 + $0x728] sm:$0xf]
    %v3908 = vld [vmem:[#allocation3 + $0x72c] sm:$0xf]
    %v3909 = vld [vmem:[#allocation3 + $0x730] sm:$0xf]
    %v3910 = vld [vmem:[#allocation3 + $0x734] sm:$0xf]
    %v3911 = vld [vmem:[#allocation3 + $0x738] sm:$0xf]
    %v3912 = vld [vmem:[#allocation3 + $0x73c] sm:$0xf]
    %v3913 = vld [vmem:[#allocation3 + $0x740] sm:$0xf]
    %v3914 = vld [vmem:[#allocation3 + $0x744] sm:$0xf]
    %v3915 = vld [vmem:[#allocation3 + $0x748] sm:$0xf]
    %v3916 = vld [vmem:[#allocation3 + $0x74c] sm:$0xf]
    %v3917 = vld [vmem:[#allocation3 + $0x750] sm:$0xf]
    %v3918 = vld [vmem:[#allocation3 + $0x754] sm:$0xf]
    %v3919 = vld [vmem:[#allocation3 + $0x758] sm:$0xf]
    %v3920 = vld [vmem:[#allocation3 + $0x75c] sm:$0xf]
    %v3921 = vld [vmem:[#allocation3 + $0x760] sm:$0xf]
    %v3922 = vld [vmem:[#allocation3 + $0x764] sm:$0xf]
    %v3923 = vld [vmem:[#allocation3 + $0x768] sm:$0xf]
    %v3924 = vld [vmem:[#allocation3 + $0x76c] sm:$0xf]
    %v3925 = vld [vmem:[#allocation3 + $0x770] sm:$0xf]
    %v3926 = vld [vmem:[#allocation3 + $0x774] sm:$0xf]
    %v3927 = vld [vmem:[#allocation3 + $0x778] sm:$0xf]
    %v3928 = vld [vmem:[#allocation3 + $0x77c] sm:$0xf]
    %v3929 = vld [vmem:[#allocation3 + $0x780] sm:$0xf]
    %v3930 = vld [vmem:[#allocation3 + $0x784] sm:$0xf]
    %v3931 = vld [vmem:[#allocation3 + $0x788] sm:$0xf]
    %v3932 = vld [vmem:[#allocation3 + $0x78c] sm:$0xf]
    %v3933 = vld [vmem:[#allocation3 + $0x790] sm:$0xf]
    %v3934 = vld [vmem:[#allocation3 + $0x794] sm:$0xf]
    %v3935 = vld [vmem:[#allocation3 + $0x798] sm:$0xf]
    %v3936 = vld [vmem:[#allocation3 + $0x79c] sm:$0xf]
    %v3937 = vld [vmem:[#allocation3 + $0x7a0] sm:$0xf]
    %v3938 = vld [vmem:[#allocation3 + $0x7a4] sm:$0xf]
    %v3939 = vld [vmem:[#allocation3 + $0x7a8] sm:$0xf]
    %v3940 = vld [vmem:[#allocation3 + $0x7ac] sm:$0xf]
    %v3941 = vld [vmem:[#allocation3 + $0x7b0] sm:$0xf]
    %v3942 = vld [vmem:[#allocation3 + $0x7b4] sm:$0xf]
    %v3943 = vld [vmem:[#allocation3 + $0x7b8] sm:$0xf]
    %v3944 = vld [vmem:[#allocation3 + $0x7bc] sm:$0xf]
    %v3945 = vld [vmem:[#allocation3 + $0x7c0] sm:$0xf]
    %v3946 = vld [vmem:[#allocation3 + $0x7c4] sm:$0xf]
    %v3947 = vld [vmem:[#allocation3 + $0x7c8] sm:$0xf]
    %v3948 = vld [vmem:[#allocation3 + $0x7cc] sm:$0xf]
    %v3949 = vld [vmem:[#allocation3 + $0x7d0] sm:$0xf]
    %v3950 = vld [vmem:[#allocation3 + $0x7d4] sm:$0xf]
    %v3951 = vld [vmem:[#allocation3 + $0x7d8] sm:$0xf]
    %v3952 = vld [vmem:[#allocation3 + $0x7dc] sm:$0xf]
    %v3953 = vld [vmem:[#allocation3 + $0x7e0] sm:$0xf]
    %v3954 = vld [vmem:[#allocation3 + $0x7e4] sm:$0xf]
    %v3955 = vld [vmem:[#allocation3 + $0x7e8] sm:$0xf]
    %v3956 = vld [vmem:[#allocation3 + $0x7ec] sm:$0xf]
    %v3957 = vld [vmem:[#allocation3 + $0x7f0] sm:$0xf]
    %v3958 = vld [vmem:[#allocation3 + $0x7f4] sm:$0xf]
    %v3959 = vld [vmem:[#allocation3 + $0x7f8] sm:$0xf]
    %v3960 = vld [vmem:[#allocation3 + $0x7fc] sm:$0xf]
    %v4473 = vunpack.c.l.b16 %v3449
    %v4474 = vunpack.c.l.b16 %v3450
    %v4475 = vunpack.c.l.b16 %v3451
    %v4476 = vunpack.c.l.b16 %v3452
    %v4477 = vunpack.c.l.b16 %v3453
    %v4478 = vunpack.c.l.b16 %v3454
    %v4479 = vunpack.c.l.b16 %v3455
    %v4480 = vunpack.c.l.b16 %v3456
    %v4481 = vunpack.c.l.b16 %v3457
    %v4482 = vunpack.c.l.b16 %v3458
    %v4483 = vunpack.c.l.b16 %v3459
    %v4484 = vunpack.c.l.b16 %v3460
    %v4485 = vunpack.c.l.b16 %v3461
    %v4486 = vunpack.c.l.b16 %v3462
    %v4487 = vunpack.c.l.b16 %v3463
    %v4488 = vunpack.c.l.b16 %v3464
    %v4489 = vunpack.c.l.b16 %v3465
    %v4490 = vunpack.c.l.b16 %v3466
    %v4491 = vunpack.c.l.b16 %v3467
    %v4492 = vunpack.c.l.b16 %v3468
    %v4493 = vunpack.c.l.b16 %v3469
    %v4494 = vunpack.c.l.b16 %v3470
    %v4495 = vunpack.c.l.b16 %v3471
    %v4496 = vunpack.c.l.b16 %v3472
    %v4497 = vunpack.c.l.b16 %v3473
    %v4498 = vunpack.c.l.b16 %v3474
    %v4499 = vunpack.c.l.b16 %v3475
    %v4500 = vunpack.c.l.b16 %v3476
    %v4501 = vunpack.c.l.b16 %v3477
    %v4502 = vunpack.c.l.b16 %v3478
    %v4503 = vunpack.c.l.b16 %v3479
    %v4504 = vunpack.c.l.b16 %v3480
    %v4505 = vunpack.c.l.b16 %v3481
    %v4506 = vunpack.c.l.b16 %v3482
    %v4507 = vunpack.c.l.b16 %v3483
    %v4508 = vunpack.c.l.b16 %v3484
    %v4509 = vunpack.c.l.b16 %v3485
    %v4510 = vunpack.c.l.b16 %v3486
    %v4511 = vunpack.c.l.b16 %v3487
    %v4512 = vunpack.c.l.b16 %v3488
    %v4513 = vunpack.c.l.b16 %v3489
    %v4514 = vunpack.c.l.b16 %v3490
    %v4515 = vunpack.c.l.b16 %v3491
    %v4516 = vunpack.c.l.b16 %v3492
    %v4517 = vunpack.c.l.b16 %v3493
    %v4518 = vunpack.c.l.b16 %v3494
    %v4519 = vunpack.c.l.b16 %v3495
    %v4520 = vunpack.c.l.b16 %v3496
    %v4521 = vunpack.c.l.b16 %v3497
    %v4522 = vunpack.c.l.b16 %v3498
    %v4523 = vunpack.c.l.b16 %v3499
    %v4524 = vunpack.c.l.b16 %v3500
    %v4525 = vunpack.c.l.b16 %v3501
    %v4526 = vunpack.c.l.b16 %v3502
    %v4527 = vunpack.c.l.b16 %v3503
    %v4528 = vunpack.c.l.b16 %v3504
    %v4529 = vunpack.c.l.b16 %v3505
    %v4530 = vunpack.c.l.b16 %v3506
    %v4531 = vunpack.c.l.b16 %v3507
    %v4532 = vunpack.c.l.b16 %v3508
    %v4533 = vunpack.c.l.b16 %v3509
    %v4534 = vunpack.c.l.b16 %v3510
    %v4535 = vunpack.c.l.b16 %v3511
    %v4536 = vunpack.c.l.b16 %v3512
    %v4537 = vunpack.c.l.b16 %v3513
    %v4538 = vunpack.c.l.b16 %v3514
    %v4539 = vunpack.c.l.b16 %v3515
    %v4540 = vunpack.c.l.b16 %v3516
    %v4541 = vunpack.c.l.b16 %v3517
    %v4542 = vunpack.c.l.b16 %v3518
    %v4543 = vunpack.c.l.b16 %v3519
    %v4544 = vunpack.c.l.b16 %v3520
    %v4545 = vunpack.c.l.b16 %v3521
    %v4546 = vunpack.c.l.b16 %v3522
    %v4547 = vunpack.c.l.b16 %v3523
    %v4548 = vunpack.c.l.b16 %v3524
    %v4549 = vunpack.c.l.b16 %v3525
    %v4550 = vunpack.c.l.b16 %v3526
    %v4551 = vunpack.c.l.b16 %v3527
    %v4552 = vunpack.c.l.b16 %v3528
    %v4553 = vunpack.c.l.b16 %v3529
    %v4554 = vunpack.c.l.b16 %v3530
    %v4555 = vunpack.c.l.b16 %v3531
    %v4556 = vunpack.c.l.b16 %v3532
    %v4557 = vunpack.c.l.b16 %v3533
    %v4558 = vunpack.c.l.b16 %v3534
    %v4559 = vunpack.c.l.b16 %v3535
    %v4560 = vunpack.c.l.b16 %v3536
    %v4561 = vunpack.c.l.b16 %v3537
    %v4562 = vunpack.c.l.b16 %v3538
    %v4563 = vunpack.c.l.b16 %v3539
    %v4564 = vunpack.c.l.b16 %v3540
    %v4565 = vunpack.c.l.b16 %v3541
    %v4566 = vunpack.c.l.b16 %v3542
    %v4567 = vunpack.c.l.b16 %v3543
    %v4568 = vunpack.c.l.b16 %v3544
    %v4569 = vunpack.c.l.b16 %v3545
    %v4570 = vunpack.c.l.b16 %v3546
    %v4571 = vunpack.c.l.b16 %v3547
    %v4572 = vunpack.c.l.b16 %v3548
    %v4573 = vunpack.c.l.b16 %v3549
    %v4574 = vunpack.c.l.b16 %v3550
    %v4575 = vunpack.c.l.b16 %v3551
    %v4576 = vunpack.c.l.b16 %v3552
    %v4577 = vunpack.c.l.b16 %v3553
    %v4578 = vunpack.c.l.b16 %v3554
    %v4579 = vunpack.c.l.b16 %v3555
    %v4580 = vunpack.c.l.b16 %v3556
    %v4581 = vunpack.c.l.b16 %v3557
    %v4582 = vunpack.c.l.b16 %v3558
    %v4583 = vunpack.c.l.b16 %v3559
    %v4584 = vunpack.c.l.b16 %v3560
    %v4585 = vunpack.c.l.b16 %v3561
    %v4586 = vunpack.c.l.b16 %v3562
    %v4587 = vunpack.c.l.b16 %v3563
    %v4588 = vunpack.c.l.b16 %v3564
    %v4589 = vunpack.c.l.b16 %v3565
    %v4590 = vunpack.c.l.b16 %v3566
    %v4591 = vunpack.c.l.b16 %v3567
    %v4592 = vunpack.c.l.b16 %v3568
    %v4593 = vunpack.c.l.b16 %v3569
    %v4594 = vunpack.c.l.b16 %v3570
    %v4595 = vunpack.c.l.b16 %v3571
    %v4596 = vunpack.c.l.b16 %v3572
    %v4597 = vunpack.c.l.b16 %v3573
    %v4598 = vunpack.c.l.b16 %v3574
    %v4599 = vunpack.c.l.b16 %v3575
    %v4600 = vunpack.c.l.b16 %v3576
    %v4601 = vunpack.c.l.b16 %v3577
    %v4602 = vunpack.c.l.b16 %v3578
    %v4603 = vunpack.c.l.b16 %v3579
    %v4604 = vunpack.c.l.b16 %v3580
    %v4605 = vunpack.c.l.b16 %v3581
    %v4606 = vunpack.c.l.b16 %v3582
    %v4607 = vunpack.c.l.b16 %v3583
    %v4608 = vunpack.c.l.b16 %v3584
    %v4609 = vunpack.c.l.b16 %v3585
    %v4610 = vunpack.c.l.b16 %v3586
    %v4611 = vunpack.c.l.b16 %v3587
    %v4612 = vunpack.c.l.b16 %v3588
    %v4613 = vunpack.c.l.b16 %v3589
    %v4614 = vunpack.c.l.b16 %v3590
    %v4615 = vunpack.c.l.b16 %v3591
    %v4616 = vunpack.c.l.b16 %v3592
    %v4617 = vunpack.c.l.b16 %v3593
    %v4618 = vunpack.c.l.b16 %v3594
    %v4619 = vunpack.c.l.b16 %v3595
    %v4620 = vunpack.c.l.b16 %v3596
    %v4621 = vunpack.c.l.b16 %v3597
    %v4622 = vunpack.c.l.b16 %v3598
    %v4623 = vunpack.c.l.b16 %v3599
    %v4624 = vunpack.c.l.b16 %v3600
    %v4625 = vunpack.c.l.b16 %v3601
    %v4626 = vunpack.c.l.b16 %v3602
    %v4627 = vunpack.c.l.b16 %v3603
    %v4628 = vunpack.c.l.b16 %v3604
    %v4629 = vunpack.c.l.b16 %v3605
    %v4630 = vunpack.c.l.b16 %v3606
    %v4631 = vunpack.c.l.b16 %v3607
    %v4632 = vunpack.c.l.b16 %v3608
    %v4633 = vunpack.c.l.b16 %v3609
    %v4634 = vunpack.c.l.b16 %v3610
    %v4635 = vunpack.c.l.b16 %v3611
    %v4636 = vunpack.c.l.b16 %v3612
    %v4637 = vunpack.c.l.b16 %v3613
    %v4638 = vunpack.c.l.b16 %v3614
    %v4639 = vunpack.c.l.b16 %v3615
    %v4640 = vunpack.c.l.b16 %v3616
    %v4641 = vunpack.c.l.b16 %v3617
    %v4642 = vunpack.c.l.b16 %v3618
    %v4643 = vunpack.c.l.b16 %v3619
    %v4644 = vunpack.c.l.b16 %v3620
    %v4645 = vunpack.c.l.b16 %v3621
    %v4646 = vunpack.c.l.b16 %v3622
    %v4647 = vunpack.c.l.b16 %v3623
    %v4648 = vunpack.c.l.b16 %v3624
    %v4649 = vunpack.c.l.b16 %v3625
    %v4650 = vunpack.c.l.b16 %v3626
    %v4651 = vunpack.c.l.b16 %v3627
    %v4652 = vunpack.c.l.b16 %v3628
    %v4653 = vunpack.c.l.b16 %v3629
    %v4654 = vunpack.c.l.b16 %v3630
    %v4655 = vunpack.c.l.b16 %v3631
    %v4656 = vunpack.c.l.b16 %v3632
    %v4657 = vunpack.c.l.b16 %v3633
    %v4658 = vunpack.c.l.b16 %v3634
    %v4659 = vunpack.c.l.b16 %v3635
    %v4660 = vunpack.c.l.b16 %v3636
    %v4661 = vunpack.c.l.b16 %v3637
    %v4662 = vunpack.c.l.b16 %v3638
    %v4663 = vunpack.c.l.b16 %v3639
    %v4664 = vunpack.c.l.b16 %v3640
    %v4665 = vunpack.c.l.b16 %v3641
    %v4666 = vunpack.c.l.b16 %v3642
    %v4667 = vunpack.c.l.b16 %v3643
    %v4668 = vunpack.c.l.b16 %v3644
    %v4669 = vunpack.c.l.b16 %v3645
    %v4670 = vunpack.c.l.b16 %v3646
    %v4671 = vunpack.c.l.b16 %v3647
    %v4672 = vunpack.c.l.b16 %v3648
    %v4673 = vunpack.c.l.b16 %v3649
    %v4674 = vunpack.c.l.b16 %v3650
    %v4675 = vunpack.c.l.b16 %v3651
    %v4676 = vunpack.c.l.b16 %v3652
    %v4677 = vunpack.c.l.b16 %v3653
    %v4678 = vunpack.c.l.b16 %v3654
    %v4679 = vunpack.c.l.b16 %v3655
    %v4680 = vunpack.c.l.b16 %v3656
    %v4681 = vunpack.c.l.b16 %v3657
    %v4682 = vunpack.c.l.b16 %v3658
    %v4683 = vunpack.c.l.b16 %v3659
    %v4684 = vunpack.c.l.b16 %v3660
    %v4685 = vunpack.c.l.b16 %v3661
    %v4686 = vunpack.c.l.b16 %v3662
    %v4687 = vunpack.c.l.b16 %v3663
    %v4688 = vunpack.c.l.b16 %v3664
    %v4689 = vunpack.c.l.b16 %v3665
    %v4690 = vunpack.c.l.b16 %v3666
    %v4691 = vunpack.c.l.b16 %v3667
    %v4692 = vunpack.c.l.b16 %v3668
    %v4693 = vunpack.c.l.b16 %v3669
    %v4694 = vunpack.c.l.b16 %v3670
    %v4695 = vunpack.c.l.b16 %v3671
    %v4696 = vunpack.c.l.b16 %v3672
    %v4697 = vunpack.c.l.b16 %v3673
    %v4698 = vunpack.c.l.b16 %v3674
    %v4699 = vunpack.c.l.b16 %v3675
    %v4700 = vunpack.c.l.b16 %v3676
    %v4701 = vunpack.c.l.b16 %v3677
    %v4702 = vunpack.c.l.b16 %v3678
    %v4703 = vunpack.c.l.b16 %v3679
    %v4704 = vunpack.c.l.b16 %v3680
    %v4705 = vunpack.c.l.b16 %v3681
    %v4706 = vunpack.c.l.b16 %v3682
    %v4707 = vunpack.c.l.b16 %v3683
    %v4708 = vunpack.c.l.b16 %v3684
    %v4709 = vunpack.c.l.b16 %v3685
    %v4710 = vunpack.c.l.b16 %v3686
    %v4711 = vunpack.c.l.b16 %v3687
    %v4712 = vunpack.c.l.b16 %v3688
    %v4713 = vunpack.c.l.b16 %v3689
    %v4714 = vunpack.c.l.b16 %v3690
    %v4715 = vunpack.c.l.b16 %v3691
    %v4716 = vunpack.c.l.b16 %v3692
    %v4717 = vunpack.c.l.b16 %v3693
    %v4718 = vunpack.c.l.b16 %v3694
    %v4719 = vunpack.c.l.b16 %v3695
    %v4720 = vunpack.c.l.b16 %v3696
    %v4721 = vunpack.c.l.b16 %v3697
    %v4722 = vunpack.c.l.b16 %v3698
    %v4723 = vunpack.c.l.b16 %v3699
    %v4724 = vunpack.c.l.b16 %v3700
    %v4725 = vunpack.c.l.b16 %v3701
    %v4726 = vunpack.c.l.b16 %v3702
    %v4727 = vunpack.c.l.b16 %v3703
    %v4728 = vunpack.c.l.b16 %v3704
    %v4729 = vunpack.c.l.b16 %v3705
    %v4730 = vunpack.c.l.b16 %v3706
    %v4731 = vunpack.c.l.b16 %v3707
    %v4732 = vunpack.c.l.b16 %v3708
    %v4733 = vunpack.c.l.b16 %v3709
    %v4734 = vunpack.c.l.b16 %v3710
    %v4735 = vunpack.c.l.b16 %v3711
    %v4736 = vunpack.c.l.b16 %v3712
    %v4737 = vunpack.c.l.b16 %v3713
    %v4738 = vunpack.c.l.b16 %v3714
    %v4739 = vunpack.c.l.b16 %v3715
    %v4740 = vunpack.c.l.b16 %v3716
    %v4741 = vunpack.c.l.b16 %v3717
    %v4742 = vunpack.c.l.b16 %v3718
    %v4743 = vunpack.c.l.b16 %v3719
    %v4744 = vunpack.c.l.b16 %v3720
    %v4745 = vunpack.c.l.b16 %v3721
    %v4746 = vunpack.c.l.b16 %v3722
    %v4747 = vunpack.c.l.b16 %v3723
    %v4748 = vunpack.c.l.b16 %v3724
    %v4749 = vunpack.c.l.b16 %v3725
    %v4750 = vunpack.c.l.b16 %v3726
    %v4751 = vunpack.c.l.b16 %v3727
    %v4752 = vunpack.c.l.b16 %v3728
    %v4753 = vunpack.c.l.b16 %v3729
    %v4754 = vunpack.c.l.b16 %v3730
    %v4755 = vunpack.c.l.b16 %v3731
    %v4756 = vunpack.c.l.b16 %v3732
    %v4757 = vunpack.c.l.b16 %v3733
    %v4758 = vunpack.c.l.b16 %v3734
    %v4759 = vunpack.c.l.b16 %v3735
    %v4760 = vunpack.c.l.b16 %v3736
    %v4761 = vunpack.c.l.b16 %v3737
    %v4762 = vunpack.c.l.b16 %v3738
    %v4763 = vunpack.c.l.b16 %v3739
    %v4764 = vunpack.c.l.b16 %v3740
    %v4765 = vunpack.c.l.b16 %v3741
    %v4766 = vunpack.c.l.b16 %v3742
    %v4767 = vunpack.c.l.b16 %v3743
    %v4768 = vunpack.c.l.b16 %v3744
    %v4769 = vunpack.c.l.b16 %v3745
    %v4770 = vunpack.c.l.b16 %v3746
    %v4771 = vunpack.c.l.b16 %v3747
    %v4772 = vunpack.c.l.b16 %v3748
    %v4773 = vunpack.c.l.b16 %v3749
    %v4774 = vunpack.c.l.b16 %v3750
    %v4775 = vunpack.c.l.b16 %v3751
    %v4776 = vunpack.c.l.b16 %v3752
    %v4777 = vunpack.c.l.b16 %v3753
    %v4778 = vunpack.c.l.b16 %v3754
    %v4779 = vunpack.c.l.b16 %v3755
    %v4780 = vunpack.c.l.b16 %v3756
    %v4781 = vunpack.c.l.b16 %v3757
    %v4782 = vunpack.c.l.b16 %v3758
    %v4783 = vunpack.c.l.b16 %v3759
    %v4784 = vunpack.c.l.b16 %v3760
    %v4785 = vunpack.c.l.b16 %v3761
    %v4786 = vunpack.c.l.b16 %v3762
    %v4787 = vunpack.c.l.b16 %v3763
    %v4788 = vunpack.c.l.b16 %v3764
    %v4789 = vunpack.c.l.b16 %v3765
    %v4790 = vunpack.c.l.b16 %v3766
    %v4791 = vunpack.c.l.b16 %v3767
    %v4792 = vunpack.c.l.b16 %v3768
    %v4793 = vunpack.c.l.b16 %v3769
    %v4794 = vunpack.c.l.b16 %v3770
    %v4795 = vunpack.c.l.b16 %v3771
    %v4796 = vunpack.c.l.b16 %v3772
    %v4797 = vunpack.c.l.b16 %v3773
    %v4798 = vunpack.c.l.b16 %v3774
    %v4799 = vunpack.c.l.b16 %v3775
    %v4800 = vunpack.c.l.b16 %v3776
    %v4801 = vunpack.c.l.b16 %v3777
    %v4802 = vunpack.c.l.b16 %v3778
    %v4803 = vunpack.c.l.b16 %v3779
    %v4804 = vunpack.c.l.b16 %v3780
    %v4805 = vunpack.c.l.b16 %v3781
    %v4806 = vunpack.c.l.b16 %v3782
    %v4807 = vunpack.c.l.b16 %v3783
    %v4808 = vunpack.c.l.b16 %v3784
    %v4809 = vunpack.c.l.b16 %v3785
    %v4810 = vunpack.c.l.b16 %v3786
    %v4811 = vunpack.c.l.b16 %v3787
    %v4812 = vunpack.c.l.b16 %v3788
    %v4813 = vunpack.c.l.b16 %v3789
    %v4814 = vunpack.c.l.b16 %v3790
    %v4815 = vunpack.c.l.b16 %v3791
    %v4816 = vunpack.c.l.b16 %v3792
    %v4817 = vunpack.c.l.b16 %v3793
    %v4818 = vunpack.c.l.b16 %v3794
    %v4819 = vunpack.c.l.b16 %v3795
    %v4820 = vunpack.c.l.b16 %v3796
    %v4821 = vunpack.c.l.b16 %v3797
    %v4822 = vunpack.c.l.b16 %v3798
    %v4823 = vunpack.c.l.b16 %v3799
    %v4824 = vunpack.c.l.b16 %v3800
    %v4825 = vunpack.c.l.b16 %v3801
    %v4826 = vunpack.c.l.b16 %v3802
    %v4827 = vunpack.c.l.b16 %v3803
    %v4828 = vunpack.c.l.b16 %v3804
    %v4829 = vunpack.c.l.b16 %v3805
    %v4830 = vunpack.c.l.b16 %v3806
    %v4831 = vunpack.c.l.b16 %v3807
    %v4832 = vunpack.c.l.b16 %v3808
    %v4833 = vunpack.c.l.b16 %v3809
    %v4834 = vunpack.c.l.b16 %v3810
    %v4835 = vunpack.c.l.b16 %v3811
    %v4836 = vunpack.c.l.b16 %v3812
    %v4837 = vunpack.c.l.b16 %v3813
    %v4838 = vunpack.c.l.b16 %v3814
    %v4839 = vunpack.c.l.b16 %v3815
    %v4840 = vunpack.c.l.b16 %v3816
    %v4841 = vunpack.c.l.b16 %v3817
    %v4842 = vunpack.c.l.b16 %v3818
    %v4843 = vunpack.c.l.b16 %v3819
    %v4844 = vunpack.c.l.b16 %v3820
    %v4845 = vunpack.c.l.b16 %v3821
    %v4846 = vunpack.c.l.b16 %v3822
    %v4847 = vunpack.c.l.b16 %v3823
    %v4848 = vunpack.c.l.b16 %v3824
    %v4849 = vunpack.c.l.b16 %v3825
    %v4850 = vunpack.c.l.b16 %v3826
    %v4851 = vunpack.c.l.b16 %v3827
    %v4852 = vunpack.c.l.b16 %v3828
    %v4853 = vunpack.c.l.b16 %v3829
    %v4854 = vunpack.c.l.b16 %v3830
    %v4855 = vunpack.c.l.b16 %v3831
    %v4856 = vunpack.c.l.b16 %v3832
    %v4857 = vunpack.c.l.b16 %v3833
    %v4858 = vunpack.c.l.b16 %v3834
    %v4859 = vunpack.c.l.b16 %v3835
    %v4860 = vunpack.c.l.b16 %v3836
    %v4861 = vunpack.c.l.b16 %v3837
    %v4862 = vunpack.c.l.b16 %v3838
    %v4863 = vunpack.c.l.b16 %v3839
    %v4864 = vunpack.c.l.b16 %v3840
    %v4865 = vunpack.c.l.b16 %v3841
    %v4866 = vunpack.c.l.b16 %v3842
    %v4867 = vunpack.c.l.b16 %v3843
    %v4868 = vunpack.c.l.b16 %v3844
    %v4869 = vunpack.c.l.b16 %v3845
    %v4870 = vunpack.c.l.b16 %v3846
    %v4871 = vunpack.c.l.b16 %v3847
    %v4872 = vunpack.c.l.b16 %v3848
    %v4873 = vunpack.c.l.b16 %v3849
    %v4874 = vunpack.c.l.b16 %v3850
    %v4875 = vunpack.c.l.b16 %v3851
    %v4876 = vunpack.c.l.b16 %v3852
    %v4877 = vunpack.c.l.b16 %v3853
    %v4878 = vunpack.c.l.b16 %v3854
    %v4879 = vunpack.c.l.b16 %v3855
    %v4880 = vunpack.c.l.b16 %v3856
    %v4881 = vunpack.c.l.b16 %v3857
    %v4882 = vunpack.c.l.b16 %v3858
    %v4883 = vunpack.c.l.b16 %v3859
    %v4884 = vunpack.c.l.b16 %v3860
    %v4885 = vunpack.c.l.b16 %v3861
    %v4886 = vunpack.c.l.b16 %v3862
    %v4887 = vunpack.c.l.b16 %v3863
    %v4888 = vunpack.c.l.b16 %v3864
    %v4889 = vunpack.c.l.b16 %v3865
    %v4890 = vunpack.c.l.b16 %v3866
    %v4891 = vunpack.c.l.b16 %v3867
    %v4892 = vunpack.c.l.b16 %v3868
    %v4893 = vunpack.c.l.b16 %v3869
    %v4894 = vunpack.c.l.b16 %v3870
    %v4895 = vunpack.c.l.b16 %v3871
    %v4896 = vunpack.c.l.b16 %v3872
    %v4897 = vunpack.c.l.b16 %v3873
    %v4898 = vunpack.c.l.b16 %v3874
    %v4899 = vunpack.c.l.b16 %v3875
    %v4900 = vunpack.c.l.b16 %v3876
    %v4901 = vunpack.c.l.b16 %v3877
    %v4902 = vunpack.c.l.b16 %v3878
    %v4903 = vunpack.c.l.b16 %v3879
    %v4904 = vunpack.c.l.b16 %v3880
    %v4905 = vunpack.c.l.b16 %v3881
    %v4906 = vunpack.c.l.b16 %v3882
    %v4907 = vunpack.c.l.b16 %v3883
    %v4908 = vunpack.c.l.b16 %v3884
    %v4909 = vunpack.c.l.b16 %v3885
    %v4910 = vunpack.c.l.b16 %v3886
    %v4911 = vunpack.c.l.b16 %v3887
    %v4912 = vunpack.c.l.b16 %v3888
    %v4913 = vunpack.c.l.b16 %v3889
    %v4914 = vunpack.c.l.b16 %v3890
    %v4915 = vunpack.c.l.b16 %v3891
    %v4916 = vunpack.c.l.b16 %v3892
    %v4917 = vunpack.c.l.b16 %v3893
    %v4918 = vunpack.c.l.b16 %v3894
    %v4919 = vunpack.c.l.b16 %v3895
    %v4920 = vunpack.c.l.b16 %v3896
    %v4921 = vunpack.c.l.b16 %v3897
    %v4922 = vunpack.c.l.b16 %v3898
    %v4923 = vunpack.c.l.b16 %v3899
    %v4924 = vunpack.c.l.b16 %v3900
    %v4925 = vunpack.c.l.b16 %v3901
    %v4926 = vunpack.c.l.b16 %v3902
    %v4927 = vunpack.c.l.b16 %v3903
    %v4928 = vunpack.c.l.b16 %v3904
    %v4929 = vunpack.c.l.b16 %v3905
    %v4930 = vunpack.c.l.b16 %v3906
    %v4931 = vunpack.c.l.b16 %v3907
    %v4932 = vunpack.c.l.b16 %v3908
    %v4933 = vunpack.c.l.b16 %v3909
    %v4934 = vunpack.c.l.b16 %v3910
    %v4935 = vunpack.c.l.b16 %v3911
    %v4936 = vunpack.c.l.b16 %v3912
    %v4937 = vunpack.c.l.b16 %v3913
    %v4938 = vunpack.c.l.b16 %v3914
    %v4939 = vunpack.c.l.b16 %v3915
    %v4940 = vunpack.c.l.b16 %v3916
    %v4941 = vunpack.c.l.b16 %v3917
    %v4942 = vunpack.c.l.b16 %v3918
    %v4943 = vunpack.c.l.b16 %v3919
    %v4944 = vunpack.c.l.b16 %v3920
    %v4945 = vunpack.c.l.b16 %v3921
    %v4946 = vunpack.c.l.b16 %v3922
    %v4947 = vunpack.c.l.b16 %v3923
    %v4948 = vunpack.c.l.b16 %v3924
    %v4949 = vunpack.c.l.b16 %v3925
    %v4950 = vunpack.c.l.b16 %v3926
    %v4951 = vunpack.c.l.b16 %v3927
    %v4952 = vunpack.c.l.b16 %v3928
    %v4953 = vunpack.c.l.b16 %v3929
    %v4954 = vunpack.c.l.b16 %v3930
    %v4955 = vunpack.c.l.b16 %v3931
    %v4956 = vunpack.c.l.b16 %v3932
    %v4957 = vunpack.c.l.b16 %v3933
    %v4958 = vunpack.c.l.b16 %v3934
    %v4959 = vunpack.c.l.b16 %v3935
    %v4960 = vunpack.c.l.b16 %v3936
    %v4961 = vunpack.c.l.b16 %v3937
    %v4962 = vunpack.c.l.b16 %v3938
    %v4963 = vunpack.c.l.b16 %v3939
    %v4964 = vunpack.c.l.b16 %v3940
    %v4965 = vunpack.c.l.b16 %v3941
    %v4966 = vunpack.c.l.b16 %v3942
    %v4967 = vunpack.c.l.b16 %v3943
    %v4968 = vunpack.c.l.b16 %v3944
    %v4969 = vunpack.c.l.b16 %v3945
    %v4970 = vunpack.c.l.b16 %v3946
    %v4971 = vunpack.c.l.b16 %v3947
    %v4972 = vunpack.c.l.b16 %v3948
    %v4973 = vunpack.c.l.b16 %v3949
    %v4974 = vunpack.c.l.b16 %v3950
    %v4975 = vunpack.c.l.b16 %v3951
    %v4976 = vunpack.c.l.b16 %v3952
    %v4977 = vunpack.c.l.b16 %v3953
    %v4978 = vunpack.c.l.b16 %v3954
    %v4979 = vunpack.c.l.b16 %v3955
    %v4980 = vunpack.c.l.b16 %v3956
    %v4981 = vunpack.c.l.b16 %v3957
    %v4982 = vunpack.c.l.b16 %v3958
    %v4983 = vunpack.c.l.b16 %v3959
    %v4984 = vunpack.c.l.b16 %v3960
    %v4985 = vpack.c.b16 %v4474, %v4473
    %v4986 = vpack.c.b16 %v4476, %v4475
    %v4987 = vpack.c.b16 %v4478, %v4477
    %v4988 = vpack.c.b16 %v4480, %v4479
    %v4989 = vpack.c.b16 %v4482, %v4481
    %v4990 = vpack.c.b16 %v4484, %v4483
    %v4991 = vpack.c.b16 %v4486, %v4485
    %v4992 = vpack.c.b16 %v4488, %v4487
    %v4993 = vpack.c.b16 %v4490, %v4489
    %v4994 = vpack.c.b16 %v4492, %v4491
    %v4995 = vpack.c.b16 %v4494, %v4493
    %v4996 = vpack.c.b16 %v4496, %v4495
    %v4997 = vpack.c.b16 %v4498, %v4497
    %v4998 = vpack.c.b16 %v4500, %v4499
    %v4999 = vpack.c.b16 %v4502, %v4501
    %v5000 = vpack.c.b16 %v4504, %v4503
    %v5001 = vpack.c.b16 %v4506, %v4505
    %v5002 = vpack.c.b16 %v4508, %v4507
    %v5003 = vpack.c.b16 %v4510, %v4509
    %v5004 = vpack.c.b16 %v4512, %v4511
    %v5005 = vpack.c.b16 %v4514, %v4513
    %v5006 = vpack.c.b16 %v4516, %v4515
    %v5007 = vpack.c.b16 %v4518, %v4517
    %v5008 = vpack.c.b16 %v4520, %v4519
    %v5009 = vpack.c.b16 %v4522, %v4521
    %v5010 = vpack.c.b16 %v4524, %v4523
    %v5011 = vpack.c.b16 %v4526, %v4525
    %v5012 = vpack.c.b16 %v4528, %v4527
    %v5013 = vpack.c.b16 %v4530, %v4529
    %v5014 = vpack.c.b16 %v4532, %v4531
    %v5015 = vpack.c.b16 %v4534, %v4533
    %v5016 = vpack.c.b16 %v4536, %v4535
    %v5017 = vpack.c.b16 %v4538, %v4537
    %v5018 = vpack.c.b16 %v4540, %v4539
    %v5019 = vpack.c.b16 %v4542, %v4541
    %v5020 = vpack.c.b16 %v4544, %v4543
    %v5021 = vpack.c.b16 %v4546, %v4545
    %v5022 = vpack.c.b16 %v4548, %v4547
    %v5023 = vpack.c.b16 %v4550, %v4549
    %v5024 = vpack.c.b16 %v4552, %v4551
    %v5025 = vpack.c.b16 %v4554, %v4553
    %v5026 = vpack.c.b16 %v4556, %v4555
    %v5027 = vpack.c.b16 %v4558, %v4557
    %v5028 = vpack.c.b16 %v4560, %v4559
    %v5029 = vpack.c.b16 %v4562, %v4561
    %v5030 = vpack.c.b16 %v4564, %v4563
    %v5031 = vpack.c.b16 %v4566, %v4565
    %v5032 = vpack.c.b16 %v4568, %v4567
    %v5033 = vpack.c.b16 %v4570, %v4569
    %v5034 = vpack.c.b16 %v4572, %v4571
    %v5035 = vpack.c.b16 %v4574, %v4573
    %v5036 = vpack.c.b16 %v4576, %v4575
    %v5037 = vpack.c.b16 %v4578, %v4577
    %v5038 = vpack.c.b16 %v4580, %v4579
    %v5039 = vpack.c.b16 %v4582, %v4581
    %v5040 = vpack.c.b16 %v4584, %v4583
    %v5041 = vpack.c.b16 %v4586, %v4585
    %v5042 = vpack.c.b16 %v4588, %v4587
    %v5043 = vpack.c.b16 %v4590, %v4589
    %v5044 = vpack.c.b16 %v4592, %v4591
    %v5045 = vpack.c.b16 %v4594, %v4593
    %v5046 = vpack.c.b16 %v4596, %v4595
    %v5047 = vpack.c.b16 %v4598, %v4597
    %v5048 = vpack.c.b16 %v4600, %v4599
    %v5049 = vpack.c.b16 %v4602, %v4601
    %v5050 = vpack.c.b16 %v4604, %v4603
    %v5051 = vpack.c.b16 %v4606, %v4605
    %v5052 = vpack.c.b16 %v4608, %v4607
    %v5053 = vpack.c.b16 %v4610, %v4609
    %v5054 = vpack.c.b16 %v4612, %v4611
    %v5055 = vpack.c.b16 %v4614, %v4613
    %v5056 = vpack.c.b16 %v4616, %v4615
    %v5057 = vpack.c.b16 %v4618, %v4617
    %v5058 = vpack.c.b16 %v4620, %v4619
    %v5059 = vpack.c.b16 %v4622, %v4621
    %v5060 = vpack.c.b16 %v4624, %v4623
    %v5061 = vpack.c.b16 %v4626, %v4625
    %v5062 = vpack.c.b16 %v4628, %v4627
    %v5063 = vpack.c.b16 %v4630, %v4629
    %v5064 = vpack.c.b16 %v4632, %v4631
    %v5065 = vpack.c.b16 %v4634, %v4633
    %v5066 = vpack.c.b16 %v4636, %v4635
    %v5067 = vpack.c.b16 %v4638, %v4637
    %v5068 = vpack.c.b16 %v4640, %v4639
    %v5069 = vpack.c.b16 %v4642, %v4641
    %v5070 = vpack.c.b16 %v4644, %v4643
    %v5071 = vpack.c.b16 %v4646, %v4645
    %v5072 = vpack.c.b16 %v4648, %v4647
    %v5073 = vpack.c.b16 %v4650, %v4649
    %v5074 = vpack.c.b16 %v4652, %v4651
    %v5075 = vpack.c.b16 %v4654, %v4653
    %v5076 = vpack.c.b16 %v4656, %v4655
    %v5077 = vpack.c.b16 %v4658, %v4657
    %v5078 = vpack.c.b16 %v4660, %v4659
    %v5079 = vpack.c.b16 %v4662, %v4661
    %v5080 = vpack.c.b16 %v4664, %v4663
    %v5081 = vpack.c.b16 %v4666, %v4665
    %v5082 = vpack.c.b16 %v4668, %v4667
    %v5083 = vpack.c.b16 %v4670, %v4669
    %v5084 = vpack.c.b16 %v4672, %v4671
    %v5085 = vpack.c.b16 %v4674, %v4673
    %v5086 = vpack.c.b16 %v4676, %v4675
    %v5087 = vpack.c.b16 %v4678, %v4677
    %v5088 = vpack.c.b16 %v4680, %v4679
    %v5089 = vpack.c.b16 %v4682, %v4681
    %v5090 = vpack.c.b16 %v4684, %v4683
    %v5091 = vpack.c.b16 %v4686, %v4685
    %v5092 = vpack.c.b16 %v4688, %v4687
    %v5093 = vpack.c.b16 %v4690, %v4689
    %v5094 = vpack.c.b16 %v4692, %v4691
    %v5095 = vpack.c.b16 %v4694, %v4693
    %v5096 = vpack.c.b16 %v4696, %v4695
    %v5097 = vpack.c.b16 %v4698, %v4697
    %v5098 = vpack.c.b16 %v4700, %v4699
    %v5099 = vpack.c.b16 %v4702, %v4701
    %v5100 = vpack.c.b16 %v4704, %v4703
    %v5101 = vpack.c.b16 %v4706, %v4705
    %v5102 = vpack.c.b16 %v4708, %v4707
    %v5103 = vpack.c.b16 %v4710, %v4709
    %v5104 = vpack.c.b16 %v4712, %v4711
    %v5105 = vpack.c.b16 %v4714, %v4713
    %v5106 = vpack.c.b16 %v4716, %v4715
    %v5107 = vpack.c.b16 %v4718, %v4717
    %v5108 = vpack.c.b16 %v4720, %v4719
    %v5109 = vpack.c.b16 %v4722, %v4721
    %v5110 = vpack.c.b16 %v4724, %v4723
    %v5111 = vpack.c.b16 %v4726, %v4725
    %v5112 = vpack.c.b16 %v4728, %v4727
    %v5113 = vpack.c.b16 %v4730, %v4729
    %v5114 = vpack.c.b16 %v4732, %v4731
    %v5115 = vpack.c.b16 %v4734, %v4733
    %v5116 = vpack.c.b16 %v4736, %v4735
    %v5117 = vpack.c.b16 %v4738, %v4737
    %v5118 = vpack.c.b16 %v4740, %v4739
    %v5119 = vpack.c.b16 %v4742, %v4741
    %v5120 = vpack.c.b16 %v4744, %v4743
    %v5121 = vpack.c.b16 %v4746, %v4745
    %v5122 = vpack.c.b16 %v4748, %v4747
    %v5123 = vpack.c.b16 %v4750, %v4749
    %v5124 = vpack.c.b16 %v4752, %v4751
    %v5125 = vpack.c.b16 %v4754, %v4753
    %v5126 = vpack.c.b16 %v4756, %v4755
    %v5127 = vpack.c.b16 %v4758, %v4757
    %v5128 = vpack.c.b16 %v4760, %v4759
    %v5129 = vpack.c.b16 %v4762, %v4761
    %v5130 = vpack.c.b16 %v4764, %v4763
    %v5131 = vpack.c.b16 %v4766, %v4765
    %v5132 = vpack.c.b16 %v4768, %v4767
    %v5133 = vpack.c.b16 %v4770, %v4769
    %v5134 = vpack.c.b16 %v4772, %v4771
    %v5135 = vpack.c.b16 %v4774, %v4773
    %v5136 = vpack.c.b16 %v4776, %v4775
    %v5137 = vpack.c.b16 %v4778, %v4777
    %v5138 = vpack.c.b16 %v4780, %v4779
    %v5139 = vpack.c.b16 %v4782, %v4781
    %v5140 = vpack.c.b16 %v4784, %v4783
    %v5141 = vpack.c.b16 %v4786, %v4785
    %v5142 = vpack.c.b16 %v4788, %v4787
    %v5143 = vpack.c.b16 %v4790, %v4789
    %v5144 = vpack.c.b16 %v4792, %v4791
    %v5145 = vpack.c.b16 %v4794, %v4793
    %v5146 = vpack.c.b16 %v4796, %v4795
    %v5147 = vpack.c.b16 %v4798, %v4797
    %v5148 = vpack.c.b16 %v4800, %v4799
    %v5149 = vpack.c.b16 %v4802, %v4801
    %v5150 = vpack.c.b16 %v4804, %v4803
    %v5151 = vpack.c.b16 %v4806, %v4805
    %v5152 = vpack.c.b16 %v4808, %v4807
    %v5153 = vpack.c.b16 %v4810, %v4809
    %v5154 = vpack.c.b16 %v4812, %v4811
    %v5155 = vpack.c.b16 %v4814, %v4813
    %v5156 = vpack.c.b16 %v4816, %v4815
    %v5157 = vpack.c.b16 %v4818, %v4817
    %v5158 = vpack.c.b16 %v4820, %v4819
    %v5159 = vpack.c.b16 %v4822, %v4821
    %v5160 = vpack.c.b16 %v4824, %v4823
    %v5161 = vpack.c.b16 %v4826, %v4825
    %v5162 = vpack.c.b16 %v4828, %v4827
    %v5163 = vpack.c.b16 %v4830, %v4829
    %v5164 = vpack.c.b16 %v4832, %v4831
    %v5165 = vpack.c.b16 %v4834, %v4833
    %v5166 = vpack.c.b16 %v4836, %v4835
    %v5167 = vpack.c.b16 %v4838, %v4837
    %v5168 = vpack.c.b16 %v4840, %v4839
    %v5169 = vpack.c.b16 %v4842, %v4841
    %v5170 = vpack.c.b16 %v4844, %v4843
    %v5171 = vpack.c.b16 %v4846, %v4845
    %v5172 = vpack.c.b16 %v4848, %v4847
    %v5173 = vpack.c.b16 %v4850, %v4849
    %v5174 = vpack.c.b16 %v4852, %v4851
    %v5175 = vpack.c.b16 %v4854, %v4853
    %v5176 = vpack.c.b16 %v4856, %v4855
    %v5177 = vpack.c.b16 %v4858, %v4857
    %v5178 = vpack.c.b16 %v4860, %v4859
    %v5179 = vpack.c.b16 %v4862, %v4861
    %v5180 = vpack.c.b16 %v4864, %v4863
    %v5181 = vpack.c.b16 %v4866, %v4865
    %v5182 = vpack.c.b16 %v4868, %v4867
    %v5183 = vpack.c.b16 %v4870, %v4869
    %v5184 = vpack.c.b16 %v4872, %v4871
    %v5185 = vpack.c.b16 %v4874, %v4873
    %v5186 = vpack.c.b16 %v4876, %v4875
    %v5187 = vpack.c.b16 %v4878, %v4877
    %v5188 = vpack.c.b16 %v4880, %v4879
    %v5189 = vpack.c.b16 %v4882, %v4881
    %v5190 = vpack.c.b16 %v4884, %v4883
    %v5191 = vpack.c.b16 %v4886, %v4885
    %v5192 = vpack.c.b16 %v4888, %v4887
    %v5193 = vpack.c.b16 %v4890, %v4889
    %v5194 = vpack.c.b16 %v4892, %v4891
    %v5195 = vpack.c.b16 %v4894, %v4893
    %v5196 = vpack.c.b16 %v4896, %v4895
    %v5197 = vpack.c.b16 %v4898, %v4897
    %v5198 = vpack.c.b16 %v4900, %v4899
    %v5199 = vpack.c.b16 %v4902, %v4901
    %v5200 = vpack.c.b16 %v4904, %v4903
    %v5201 = vpack.c.b16 %v4906, %v4905
    %v5202 = vpack.c.b16 %v4908, %v4907
    %v5203 = vpack.c.b16 %v4910, %v4909
    %v5204 = vpack.c.b16 %v4912, %v4911
    %v5205 = vpack.c.b16 %v4914, %v4913
    %v5206 = vpack.c.b16 %v4916, %v4915
    %v5207 = vpack.c.b16 %v4918, %v4917
    %v5208 = vpack.c.b16 %v4920, %v4919
    %v5209 = vpack.c.b16 %v4922, %v4921
    %v5210 = vpack.c.b16 %v4924, %v4923
    %v5211 = vpack.c.b16 %v4926, %v4925
    %v5212 = vpack.c.b16 %v4928, %v4927
    %v5213 = vpack.c.b16 %v4930, %v4929
    %v5214 = vpack.c.b16 %v4932, %v4931
    %v5215 = vpack.c.b16 %v4934, %v4933
    %v5216 = vpack.c.b16 %v4936, %v4935
    %v5217 = vpack.c.b16 %v4938, %v4937
    %v5218 = vpack.c.b16 %v4940, %v4939
    %v5219 = vpack.c.b16 %v4942, %v4941
    %v5220 = vpack.c.b16 %v4944, %v4943
    %v5221 = vpack.c.b16 %v4946, %v4945
    %v5222 = vpack.c.b16 %v4948, %v4947
    %v5223 = vpack.c.b16 %v4950, %v4949
    %v5224 = vpack.c.b16 %v4952, %v4951
    %v5225 = vpack.c.b16 %v4954, %v4953
    %v5226 = vpack.c.b16 %v4956, %v4955
    %v5227 = vpack.c.b16 %v4958, %v4957
    %v5228 = vpack.c.b16 %v4960, %v4959
    %v5229 = vpack.c.b16 %v4962, %v4961
    %v5230 = vpack.c.b16 %v4964, %v4963
    %v5231 = vpack.c.b16 %v4966, %v4965
    %v5232 = vpack.c.b16 %v4968, %v4967
    %v5233 = vpack.c.b16 %v4970, %v4969
    %v5234 = vpack.c.b16 %v4972, %v4971
    %v5235 = vpack.c.b16 %v4974, %v4973
    %v5236 = vpack.c.b16 %v4976, %v4975
    %v5237 = vpack.c.b16 %v4978, %v4977
    %v5238 = vpack.c.b16 %v4980, %v4979
    %v5239 = vpack.c.b16 %v4982, %v4981
    %v5240 = vpack.c.b16 %v4984, %v4983
    %5497 = vmatprep.subr.bf16.mxu0 0
    %5498 = vmatpush1.bf16.msra.mxu0 %v4992
    %5499 = vmatprep.subr.bf16.mxu0 0
    %5500 = vmatpush1.bf16.msra.mxu0 %v4991
    %5501 = vmatprep.subr.bf16.mxu0 0
    %5502 = vmatpush1.bf16.msra.mxu0 %v4990
    %5503 = vmatprep.subr.bf16.mxu0 0
    %5504 = vmatpush1.bf16.msra.mxu0 %v4989
    %5505 = vmatprep.subr.bf16.mxu0 0
    %5506 = vmatpush1.bf16.msra.mxu0 %v4988
    %5507 = vmatprep.subr.bf16.mxu0 0
    %5508 = vmatpush1.bf16.msra.mxu0 %v4987
    %5509 = vmatprep.subr.bf16.mxu0 0
    %5510 = vmatpush1.bf16.msra.mxu0 %v4986
    %5511 = vmatprep.subr.bf16.mxu0 0
    %5512 = vmatpush1.bf16.msra.mxu0 %v4985
    %5513 = vmatprep.subr.bf16.mxu0 0
    %5514 = vmatpush2.bf16.msra.mxu0 %v5000
    %5515 = vmatprep.subr.bf16.mxu0 0
    %5516 = vmatpush2.bf16.msra.mxu0 %v4999
    %5517 = vmatprep.subr.bf16.mxu0 0
    %5518 = vmatpush2.bf16.msra.mxu0 %v4998
    %5519 = vmatprep.subr.bf16.mxu0 0
    %5520 = vmatpush2.bf16.msra.mxu0 %v4997
    %5521 = vmatprep.subr.bf16.mxu0 0
    %5522 = vmatpush2.bf16.msra.mxu0 %v4996
    %5523 = vmatprep.subr.bf16.mxu0 0
    %5524 = vmatpush2.bf16.msra.mxu0 %v4995
    %5525 = vmatprep.subr.bf16.mxu0 0
    %5526 = vmatpush2.bf16.msra.mxu0 %v4994
    %5527 = vmatprep.subr.bf16.mxu0 0
    %5528 = vmatpush2.bf16.msra.mxu0 %v4993
    %5529 = vmatprep.mubr.bf16.mxu0 %v3418
    %5530 = vmatmul.mubr.bf16.gmra.mxu0 %v3417
    %v5531 = vpop.f32.mrf.mxu0
    %v5532 = vadd.f32 0.0, %v5531
    %v5533 = vpop.f32.mrf.mxu0
    %v5534 = vpop.f32.mrf.mxu0
    %v5535 = vpop.f32.mrf.mxu0
    %5536 = vdwg.mxu0
    %5537 = vmatprep.subr.bf16.mxu0 0
    %5538 = vmatpush1.bf16.msra.mxu0 %v5008
    %5539 = vmatprep.subr.bf16.mxu0 0
    %5540 = vmatpush1.bf16.msra.mxu0 %v5007
    %5541 = vmatprep.subr.bf16.mxu0 0
    %5542 = vmatpush1.bf16.msra.mxu0 %v5006
    %5543 = vmatprep.subr.bf16.mxu0 0
    %5544 = vmatpush1.bf16.msra.mxu0 %v5005
    %5545 = vmatprep.subr.bf16.mxu0 0
    %5546 = vmatpush1.bf16.msra.mxu0 %v5004
    %5547 = vmatprep.subr.bf16.mxu0 0
    %5548 = vmatpush1.bf16.msra.mxu0 %v5003
    %5549 = vmatprep.subr.bf16.mxu0 0
    %5550 = vmatpush1.bf16.msra.mxu0 %v5002
    %5551 = vmatprep.subr.bf16.mxu0 0
    %5552 = vmatpush1.bf16.msra.mxu0 %v5001
    %5553 = vmatprep.subr.bf16.mxu0 0
    %5554 = vmatpush2.bf16.msra.mxu0 %v5016
    %5555 = vmatprep.subr.bf16.mxu0 0
    %5556 = vmatpush2.bf16.msra.mxu0 %v5015
    %5557 = vmatprep.subr.bf16.mxu0 0
    %5558 = vmatpush2.bf16.msra.mxu0 %v5014
    %5559 = vmatprep.subr.bf16.mxu0 0
    %5560 = vmatpush2.bf16.msra.mxu0 %v5013
    %5561 = vmatprep.subr.bf16.mxu0 0
    %5562 = vmatpush2.bf16.msra.mxu0 %v5012
    %5563 = vmatprep.subr.bf16.mxu0 0
    %5564 = vmatpush2.bf16.msra.mxu0 %v5011
    %5565 = vmatprep.subr.bf16.mxu0 0
    %5566 = vmatpush2.bf16.msra.mxu0 %v5010
    %5567 = vmatprep.subr.bf16.mxu0 0
    %5568 = vmatpush2.bf16.msra.mxu0 %v5009
    %5569 = vmatprep.mubr.bf16.mxu0 %v3420
    %5570 = vmatmul.mubr.bf16.gmra.mxu0 %v3419
    %v5571 = vpop.f32.mrf.mxu0
    %v5572 = vadd.f32 %v5532, %v5571
    %v5573 = vpop.f32.mrf.mxu0
    %v5574 = vpop.f32.mrf.mxu0
    %v5575 = vpop.f32.mrf.mxu0
    %5576 = vdwg.mxu0
    %5577 = vmatprep.subr.bf16.mxu0 0
    %5578 = vmatpush1.bf16.msra.mxu0 %v5024
    %5579 = vmatprep.subr.bf16.mxu0 0
    %5580 = vmatpush1.bf16.msra.mxu0 %v5023
    %5581 = vmatprep.subr.bf16.mxu0 0
    %5582 = vmatpush1.bf16.msra.mxu0 %v5022
    %5583 = vmatprep.subr.bf16.mxu0 0
    %5584 = vmatpush1.bf16.msra.mxu0 %v5021
    %5585 = vmatprep.subr.bf16.mxu0 0
    %5586 = vmatpush1.bf16.msra.mxu0 %v5020
    %5587 = vmatprep.subr.bf16.mxu0 0
    %5588 = vmatpush1.bf16.msra.mxu0 %v5019
    %5589 = vmatprep.subr.bf16.mxu0 0
    %5590 = vmatpush1.bf16.msra.mxu0 %v5018
    %5591 = vmatprep.subr.bf16.mxu0 0
    %5592 = vmatpush1.bf16.msra.mxu0 %v5017
    %5593 = vmatprep.subr.bf16.mxu0 0
    %5594 = vmatpush2.bf16.msra.mxu0 %v5032
    %5595 = vmatprep.subr.bf16.mxu0 0
    %5596 = vmatpush2.bf16.msra.mxu0 %v5031
    %5597 = vmatprep.subr.bf16.mxu0 0
    %5598 = vmatpush2.bf16.msra.mxu0 %v5030
    %5599 = vmatprep.subr.bf16.mxu0 0
    %5600 = vmatpush2.bf16.msra.mxu0 %v5029
    %5601 = vmatprep.subr.bf16.mxu0 0
    %5602 = vmatpush2.bf16.msra.mxu0 %v5028
    %5603 = vmatprep.subr.bf16.mxu0 0
    %5604 = vmatpush2.bf16.msra.mxu0 %v5027
    %5605 = vmatprep.subr.bf16.mxu0 0
    %5606 = vmatpush2.bf16.msra.mxu0 %v5026
    %5607 = vmatprep.subr.bf16.mxu0 0
    %5608 = vmatpush2.bf16.msra.mxu0 %v5025
    %5609 = vmatprep.mubr.bf16.mxu0 %v3422
    %5610 = vmatmul.mubr.bf16.gmra.mxu0 %v3421
    %v5611 = vpop.f32.mrf.mxu0
    %v5612 = vadd.f32 %v5572, %v5611
    %v5613 = vpop.f32.mrf.mxu0
    %v5614 = vpop.f32.mrf.mxu0
    %v5615 = vpop.f32.mrf.mxu0
    %5616 = vdwg.mxu0
    %5617 = vmatprep.subr.bf16.mxu0 0
    %5618 = vmatpush1.bf16.msra.mxu0 %v5040
    %5619 = vmatprep.subr.bf16.mxu0 0
    %5620 = vmatpush1.bf16.msra.mxu0 %v5039
    %5621 = vmatprep.subr.bf16.mxu0 0
    %5622 = vmatpush1.bf16.msra.mxu0 %v5038
    %5623 = vmatprep.subr.bf16.mxu0 0
    %5624 = vmatpush1.bf16.msra.mxu0 %v5037
    %5625 = vmatprep.subr.bf16.mxu0 0
    %5626 = vmatpush1.bf16.msra.mxu0 %v5036
    %5627 = vmatprep.subr.bf16.mxu0 0
    %5628 = vmatpush1.bf16.msra.mxu0 %v5035
    %5629 = vmatprep.subr.bf16.mxu0 0
    %5630 = vmatpush1.bf16.msra.mxu0 %v5034
    %5631 = vmatprep.subr.bf16.mxu0 0
    %5632 = vmatpush1.bf16.msra.mxu0 %v5033
    %5633 = vmatprep.subr.bf16.mxu0 0
    %5634 = vmatpush2.bf16.msra.mxu0 %v5048
    %5635 = vmatprep.subr.bf16.mxu0 0
    %5636 = vmatpush2.bf16.msra.mxu0 %v5047
    %5637 = vmatprep.subr.bf16.mxu0 0
    %5638 = vmatpush2.bf16.msra.mxu0 %v5046
    %5639 = vmatprep.subr.bf16.mxu0 0
    %5640 = vmatpush2.bf16.msra.mxu0 %v5045
    %5641 = vmatprep.subr.bf16.mxu0 0
    %5642 = vmatpush2.bf16.msra.mxu0 %v5044
    %5643 = vmatprep.subr.bf16.mxu0 0
    %5644 = vmatpush2.bf16.msra.mxu0 %v5043
    %5645 = vmatprep.subr.bf16.mxu0 0
    %5646 = vmatpush2.bf16.msra.mxu0 %v5042
    %5647 = vmatprep.subr.bf16.mxu0 0
    %5648 = vmatpush2.bf16.msra.mxu0 %v5041
    %5649 = vmatprep.mubr.bf16.mxu0 %v3424
    %5650 = vmatmul.mubr.bf16.gmra.mxu0 %v3423
    %v5651 = vpop.f32.mrf.mxu0
    %v5652 = vadd.f32 %v5612, %v5651
    %v5653 = vpop.f32.mrf.mxu0
    %v5654 = vpop.f32.mrf.mxu0
    %v5655 = vpop.f32.mrf.mxu0
    %5656 = vdwg.mxu0
    %5657 = vmatprep.subr.bf16.mxu0 0
    %5658 = vmatpush1.bf16.msra.mxu0 %v5056
    %5659 = vmatprep.subr.bf16.mxu0 0
    %5660 = vmatpush1.bf16.msra.mxu0 %v5055
    %5661 = vmatprep.subr.bf16.mxu0 0
    %5662 = vmatpush1.bf16.msra.mxu0 %v5054
    %5663 = vmatprep.subr.bf16.mxu0 0
    %5664 = vmatpush1.bf16.msra.mxu0 %v5053
    %5665 = vmatprep.subr.bf16.mxu0 0
    %5666 = vmatpush1.bf16.msra.mxu0 %v5052
    %5667 = vmatprep.subr.bf16.mxu0 0
    %5668 = vmatpush1.bf16.msra.mxu0 %v5051
    %5669 = vmatprep.subr.bf16.mxu0 0
    %5670 = vmatpush1.bf16.msra.mxu0 %v5050
    %5671 = vmatprep.subr.bf16.mxu0 0
    %5672 = vmatpush1.bf16.msra.mxu0 %v5049
    %5673 = vmatprep.subr.bf16.mxu0 0
    %5674 = vmatpush2.bf16.msra.mxu0 %v5064
    %5675 = vmatprep.subr.bf16.mxu0 0
    %5676 = vmatpush2.bf16.msra.mxu0 %v5063
    %5677 = vmatprep.subr.bf16.mxu0 0
    %5678 = vmatpush2.bf16.msra.mxu0 %v5062
    %5679 = vmatprep.subr.bf16.mxu0 0
    %5680 = vmatpush2.bf16.msra.mxu0 %v5061
    %5681 = vmatprep.subr.bf16.mxu0 0
    %5682 = vmatpush2.bf16.msra.mxu0 %v5060
    %5683 = vmatprep.subr.bf16.mxu0 0
    %5684 = vmatpush2.bf16.msra.mxu0 %v5059
    %5685 = vmatprep.subr.bf16.mxu0 0
    %5686 = vmatpush2.bf16.msra.mxu0 %v5058
    %5687 = vmatprep.subr.bf16.mxu0 0
    %5688 = vmatpush2.bf16.msra.mxu0 %v5057
    %5689 = vmatprep.mubr.bf16.mxu0 %v3426
    %5690 = vmatmul.mubr.bf16.gmra.mxu0 %v3425
    %v5691 = vpop.f32.mrf.mxu0
    %v5692 = vadd.f32 %v5652, %v5691
    %v5693 = vpop.f32.mrf.mxu0
    %v5694 = vpop.f32.mrf.mxu0
    %v5695 = vpop.f32.mrf.mxu0
    %5696 = vdwg.mxu0
    %5697 = vmatprep.subr.bf16.mxu0 0
    %5698 = vmatpush1.bf16.msra.mxu0 %v5072
    %5699 = vmatprep.subr.bf16.mxu0 0
    %5700 = vmatpush1.bf16.msra.mxu0 %v5071
    %5701 = vmatprep.subr.bf16.mxu0 0
    %5702 = vmatpush1.bf16.msra.mxu0 %v5070
    %5703 = vmatprep.subr.bf16.mxu0 0
    %5704 = vmatpush1.bf16.msra.mxu0 %v5069
    %5705 = vmatprep.subr.bf16.mxu0 0
    %5706 = vmatpush1.bf16.msra.mxu0 %v5068
    %5707 = vmatprep.subr.bf16.mxu0 0
    %5708 = vmatpush1.bf16.msra.mxu0 %v5067
    %5709 = vmatprep.subr.bf16.mxu0 0
    %5710 = vmatpush1.bf16.msra.mxu0 %v5066
    %5711 = vmatprep.subr.bf16.mxu0 0
    %5712 = vmatpush1.bf16.msra.mxu0 %v5065
    %5713 = vmatprep.subr.bf16.mxu0 0
    %5714 = vmatpush2.bf16.msra.mxu0 %v5080
    %5715 = vmatprep.subr.bf16.mxu0 0
    %5716 = vmatpush2.bf16.msra.mxu0 %v5079
    %5717 = vmatprep.subr.bf16.mxu0 0
    %5718 = vmatpush2.bf16.msra.mxu0 %v5078
    %5719 = vmatprep.subr.bf16.mxu0 0
    %5720 = vmatpush2.bf16.msra.mxu0 %v5077
    %5721 = vmatprep.subr.bf16.mxu0 0
    %5722 = vmatpush2.bf16.msra.mxu0 %v5076
    %5723 = vmatprep.subr.bf16.mxu0 0
    %5724 = vmatpush2.bf16.msra.mxu0 %v5075
    %5725 = vmatprep.subr.bf16.mxu0 0
    %5726 = vmatpush2.bf16.msra.mxu0 %v5074
    %5727 = vmatprep.subr.bf16.mxu0 0
    %5728 = vmatpush2.bf16.msra.mxu0 %v5073
    %5729 = vmatprep.mubr.bf16.mxu0 %v3428
    %5730 = vmatmul.mubr.bf16.gmra.mxu0 %v3427
    %v5731 = vpop.f32.mrf.mxu0
    %v5732 = vadd.f32 %v5692, %v5731
    %v5733 = vpop.f32.mrf.mxu0
    %v5734 = vpop.f32.mrf.mxu0
    %v5735 = vpop.f32.mrf.mxu0
    %5736 = vdwg.mxu0
    %5737 = vmatprep.subr.bf16.mxu0 0
    %5738 = vmatpush1.bf16.msra.mxu0 %v5088
    %5739 = vmatprep.subr.bf16.mxu0 0
    %5740 = vmatpush1.bf16.msra.mxu0 %v5087
    %5741 = vmatprep.subr.bf16.mxu0 0
    %5742 = vmatpush1.bf16.msra.mxu0 %v5086
    %5743 = vmatprep.subr.bf16.mxu0 0
    %5744 = vmatpush1.bf16.msra.mxu0 %v5085
    %5745 = vmatprep.subr.bf16.mxu0 0
    %5746 = vmatpush1.bf16.msra.mxu0 %v5084
    %5747 = vmatprep.subr.bf16.mxu0 0
    %5748 = vmatpush1.bf16.msra.mxu0 %v5083
    %5749 = vmatprep.subr.bf16.mxu0 0
    %5750 = vmatpush1.bf16.msra.mxu0 %v5082
    %5751 = vmatprep.subr.bf16.mxu0 0
    %5752 = vmatpush1.bf16.msra.mxu0 %v5081
    %5753 = vmatprep.subr.bf16.mxu0 0
    %5754 = vmatpush2.bf16.msra.mxu0 %v5096
    %5755 = vmatprep.subr.bf16.mxu0 0
    %5756 = vmatpush2.bf16.msra.mxu0 %v5095
    %5757 = vmatprep.subr.bf16.mxu0 0
    %5758 = vmatpush2.bf16.msra.mxu0 %v5094
    %5759 = vmatprep.subr.bf16.mxu0 0
    %5760 = vmatpush2.bf16.msra.mxu0 %v5093
    %5761 = vmatprep.subr.bf16.mxu0 0
    %5762 = vmatpush2.bf16.msra.mxu0 %v5092
    %5763 = vmatprep.subr.bf16.mxu0 0
    %5764 = vmatpush2.bf16.msra.mxu0 %v5091
    %5765 = vmatprep.subr.bf16.mxu0 0
    %5766 = vmatpush2.bf16.msra.mxu0 %v5090
    %5767 = vmatprep.subr.bf16.mxu0 0
    %5768 = vmatpush2.bf16.msra.mxu0 %v5089
    %5769 = vmatprep.mubr.bf16.mxu0 %v3430
    %5770 = vmatmul.mubr.bf16.gmra.mxu0 %v3429
    %v5771 = vpop.f32.mrf.mxu0
    %v5772 = vadd.f32 %v5732, %v5771
    %v5773 = vpop.f32.mrf.mxu0
    %v5774 = vpop.f32.mrf.mxu0
    %v5775 = vpop.f32.mrf.mxu0
    %5776 = vdwg.mxu0
    %5777 = vmatprep.subr.bf16.mxu0 0
    %5778 = vmatpush1.bf16.msra.mxu0 %v5104
    %5779 = vmatprep.subr.bf16.mxu0 0
    %5780 = vmatpush1.bf16.msra.mxu0 %v5103
    %5781 = vmatprep.subr.bf16.mxu0 0
    %5782 = vmatpush1.bf16.msra.mxu0 %v5102
    %5783 = vmatprep.subr.bf16.mxu0 0
    %5784 = vmatpush1.bf16.msra.mxu0 %v5101
    %5785 = vmatprep.subr.bf16.mxu0 0
    %5786 = vmatpush1.bf16.msra.mxu0 %v5100
    %5787 = vmatprep.subr.bf16.mxu0 0
    %5788 = vmatpush1.bf16.msra.mxu0 %v5099
    %5789 = vmatprep.subr.bf16.mxu0 0
    %5790 = vmatpush1.bf16.msra.mxu0 %v5098
    %5791 = vmatprep.subr.bf16.mxu0 0
    %5792 = vmatpush1.bf16.msra.mxu0 %v5097
    %5793 = vmatprep.subr.bf16.mxu0 0
    %5794 = vmatpush2.bf16.msra.mxu0 %v5112
    %5795 = vmatprep.subr.bf16.mxu0 0
    %5796 = vmatpush2.bf16.msra.mxu0 %v5111
    %5797 = vmatprep.subr.bf16.mxu0 0
    %5798 = vmatpush2.bf16.msra.mxu0 %v5110
    %5799 = vmatprep.subr.bf16.mxu0 0
    %5800 = vmatpush2.bf16.msra.mxu0 %v5109
    %5801 = vmatprep.subr.bf16.mxu0 0
    %5802 = vmatpush2.bf16.msra.mxu0 %v5108
    %5803 = vmatprep.subr.bf16.mxu0 0
    %5804 = vmatpush2.bf16.msra.mxu0 %v5107
    %5805 = vmatprep.subr.bf16.mxu0 0
    %5806 = vmatpush2.bf16.msra.mxu0 %v5106
    %5807 = vmatprep.subr.bf16.mxu0 0
    %5808 = vmatpush2.bf16.msra.mxu0 %v5105
    %5809 = vmatprep.mubr.bf16.mxu0 %v3432
    %5810 = vmatmul.mubr.bf16.gmra.mxu0 %v3431
    %v5811 = vpop.f32.mrf.mxu0
    %v5812 = vadd.f32 %v5772, %v5811
    %v5813 = vpop.f32.mrf.mxu0
    %v5814 = vpop.f32.mrf.mxu0
    %v5815 = vpop.f32.mrf.mxu0
    %5816 = vdwg.mxu0
    %5817 = vmatprep.subr.bf16.mxu0 0
    %5818 = vmatpush1.bf16.msra.mxu0 %v5120
    %5819 = vmatprep.subr.bf16.mxu0 0
    %5820 = vmatpush1.bf16.msra.mxu0 %v5119
    %5821 = vmatprep.subr.bf16.mxu0 0
    %5822 = vmatpush1.bf16.msra.mxu0 %v5118
    %5823 = vmatprep.subr.bf16.mxu0 0
    %5824 = vmatpush1.bf16.msra.mxu0 %v5117
    %5825 = vmatprep.subr.bf16.mxu0 0
    %5826 = vmatpush1.bf16.msra.mxu0 %v5116
    %5827 = vmatprep.subr.bf16.mxu0 0
    %5828 = vmatpush1.bf16.msra.mxu0 %v5115
    %5829 = vmatprep.subr.bf16.mxu0 0
    %5830 = vmatpush1.bf16.msra.mxu0 %v5114
    %5831 = vmatprep.subr.bf16.mxu0 0
    %5832 = vmatpush1.bf16.msra.mxu0 %v5113
    %5833 = vmatprep.subr.bf16.mxu0 0
    %5834 = vmatpush2.bf16.msra.mxu0 %v5128
    %5835 = vmatprep.subr.bf16.mxu0 0
    %5836 = vmatpush2.bf16.msra.mxu0 %v5127
    %5837 = vmatprep.subr.bf16.mxu0 0
    %5838 = vmatpush2.bf16.msra.mxu0 %v5126
    %5839 = vmatprep.subr.bf16.mxu0 0
    %5840 = vmatpush2.bf16.msra.mxu0 %v5125
    %5841 = vmatprep.subr.bf16.mxu0 0
    %5842 = vmatpush2.bf16.msra.mxu0 %v5124
    %5843 = vmatprep.subr.bf16.mxu0 0
    %5844 = vmatpush2.bf16.msra.mxu0 %v5123
    %5845 = vmatprep.subr.bf16.mxu0 0
    %5846 = vmatpush2.bf16.msra.mxu0 %v5122
    %5847 = vmatprep.subr.bf16.mxu0 0
    %5848 = vmatpush2.bf16.msra.mxu0 %v5121
    %5849 = vmatprep.mubr.bf16.mxu0 %v3434
    %5850 = vmatmul.mubr.bf16.gmra.mxu0 %v3433
    %v5851 = vpop.f32.mrf.mxu0
    %v5852 = vadd.f32 %v5812, %v5851
    %v5853 = vpop.f32.mrf.mxu0
    %v5854 = vpop.f32.mrf.mxu0
    %v5855 = vpop.f32.mrf.mxu0
    %5856 = vdwg.mxu0
    %5857 = vmatprep.subr.bf16.mxu0 0
    %5858 = vmatpush1.bf16.msra.mxu0 %v5136
    %5859 = vmatprep.subr.bf16.mxu0 0
    %5860 = vmatpush1.bf16.msra.mxu0 %v5135
    %5861 = vmatprep.subr.bf16.mxu0 0
    %5862 = vmatpush1.bf16.msra.mxu0 %v5134
    %5863 = vmatprep.subr.bf16.mxu0 0
    %5864 = vmatpush1.bf16.msra.mxu0 %v5133
    %5865 = vmatprep.subr.bf16.mxu0 0
    %5866 = vmatpush1.bf16.msra.mxu0 %v5132
    %5867 = vmatprep.subr.bf16.mxu0 0
    %5868 = vmatpush1.bf16.msra.mxu0 %v5131
    %5869 = vmatprep.subr.bf16.mxu0 0
    %5870 = vmatpush1.bf16.msra.mxu0 %v5130
    %5871 = vmatprep.subr.bf16.mxu0 0
    %5872 = vmatpush1.bf16.msra.mxu0 %v5129
    %5873 = vmatprep.subr.bf16.mxu0 0
    %5874 = vmatpush2.bf16.msra.mxu0 %v5144
    %5875 = vmatprep.subr.bf16.mxu0 0
    %5876 = vmatpush2.bf16.msra.mxu0 %v5143
    %5877 = vmatprep.subr.bf16.mxu0 0
    %5878 = vmatpush2.bf16.msra.mxu0 %v5142
    %5879 = vmatprep.subr.bf16.mxu0 0
    %5880 = vmatpush2.bf16.msra.mxu0 %v5141
    %5881 = vmatprep.subr.bf16.mxu0 0
    %5882 = vmatpush2.bf16.msra.mxu0 %v5140
    %5883 = vmatprep.subr.bf16.mxu0 0
    %5884 = vmatpush2.bf16.msra.mxu0 %v5139
    %5885 = vmatprep.subr.bf16.mxu0 0
    %5886 = vmatpush2.bf16.msra.mxu0 %v5138
    %5887 = vmatprep.subr.bf16.mxu0 0
    %5888 = vmatpush2.bf16.msra.mxu0 %v5137
    %5889 = vmatprep.mubr.bf16.mxu0 %v3436
    %5890 = vmatmul.mubr.bf16.gmra.mxu0 %v3435
    %v5891 = vpop.f32.mrf.mxu0
    %v5892 = vadd.f32 %v5852, %v5891
    %v5893 = vpop.f32.mrf.mxu0
    %v5894 = vpop.f32.mrf.mxu0
    %v5895 = vpop.f32.mrf.mxu0
    %5896 = vdwg.mxu0
    %5897 = vmatprep.subr.bf16.mxu0 0
    %5898 = vmatpush1.bf16.msra.mxu0 %v5152
    %5899 = vmatprep.subr.bf16.mxu0 0
    %5900 = vmatpush1.bf16.msra.mxu0 %v5151
    %5901 = vmatprep.subr.bf16.mxu0 0
    %5902 = vmatpush1.bf16.msra.mxu0 %v5150
    %5903 = vmatprep.subr.bf16.mxu0 0
    %5904 = vmatpush1.bf16.msra.mxu0 %v5149
    %5905 = vmatprep.subr.bf16.mxu0 0
    %5906 = vmatpush1.bf16.msra.mxu0 %v5148
    %5907 = vmatprep.subr.bf16.mxu0 0
    %5908 = vmatpush1.bf16.msra.mxu0 %v5147
    %5909 = vmatprep.subr.bf16.mxu0 0
    %5910 = vmatpush1.bf16.msra.mxu0 %v5146
    %5911 = vmatprep.subr.bf16.mxu0 0
    %5912 = vmatpush1.bf16.msra.mxu0 %v5145
    %5913 = vmatprep.subr.bf16.mxu0 0
    %5914 = vmatpush2.bf16.msra.mxu0 %v5160
    %5915 = vmatprep.subr.bf16.mxu0 0
    %5916 = vmatpush2.bf16.msra.mxu0 %v5159
    %5917 = vmatprep.subr.bf16.mxu0 0
    %5918 = vmatpush2.bf16.msra.mxu0 %v5158
    %5919 = vmatprep.subr.bf16.mxu0 0
    %5920 = vmatpush2.bf16.msra.mxu0 %v5157
    %5921 = vmatprep.subr.bf16.mxu0 0
    %5922 = vmatpush2.bf16.msra.mxu0 %v5156
    %5923 = vmatprep.subr.bf16.mxu0 0
    %5924 = vmatpush2.bf16.msra.mxu0 %v5155
    %5925 = vmatprep.subr.bf16.mxu0 0
    %5926 = vmatpush2.bf16.msra.mxu0 %v5154
    %5927 = vmatprep.subr.bf16.mxu0 0
    %5928 = vmatpush2.bf16.msra.mxu0 %v5153
    %5929 = vmatprep.mubr.bf16.mxu0 %v3438
    %5930 = vmatmul.mubr.bf16.gmra.mxu0 %v3437
    %v5931 = vpop.f32.mrf.mxu0
    %v5932 = vadd.f32 %v5892, %v5931
    %v5933 = vpop.f32.mrf.mxu0
    %v5934 = vpop.f32.mrf.mxu0
    %v5935 = vpop.f32.mrf.mxu0
    %5936 = vdwg.mxu0
    %5937 = vmatprep.subr.bf16.mxu0 0
    %5938 = vmatpush1.bf16.msra.mxu0 %v5168
    %5939 = vmatprep.subr.bf16.mxu0 0
    %5940 = vmatpush1.bf16.msra.mxu0 %v5167
    %5941 = vmatprep.subr.bf16.mxu0 0
    %5942 = vmatpush1.bf16.msra.mxu0 %v5166
    %5943 = vmatprep.subr.bf16.mxu0 0
    %5944 = vmatpush1.bf16.msra.mxu0 %v5165
    %5945 = vmatprep.subr.bf16.mxu0 0
    %5946 = vmatpush1.bf16.msra.mxu0 %v5164
    %5947 = vmatprep.subr.bf16.mxu0 0
    %5948 = vmatpush1.bf16.msra.mxu0 %v5163
    %5949 = vmatprep.subr.bf16.mxu0 0
    %5950 = vmatpush1.bf16.msra.mxu0 %v5162
    %5951 = vmatprep.subr.bf16.mxu0 0
    %5952 = vmatpush1.bf16.msra.mxu0 %v5161
    %5953 = vmatprep.subr.bf16.mxu0 0
    %5954 = vmatpush2.bf16.msra.mxu0 %v5176
    %5955 = vmatprep.subr.bf16.mxu0 0
    %5956 = vmatpush2.bf16.msra.mxu0 %v5175
    %5957 = vmatprep.subr.bf16.mxu0 0
    %5958 = vmatpush2.bf16.msra.mxu0 %v5174
    %5959 = vmatprep.subr.bf16.mxu0 0
    %5960 = vmatpush2.bf16.msra.mxu0 %v5173
    %5961 = vmatprep.subr.bf16.mxu0 0
    %5962 = vmatpush2.bf16.msra.mxu0 %v5172
    %5963 = vmatprep.subr.bf16.mxu0 0
    %5964 = vmatpush2.bf16.msra.mxu0 %v5171
    %5965 = vmatprep.subr.bf16.mxu0 0
    %5966 = vmatpush2.bf16.msra.mxu0 %v5170
    %5967 = vmatprep.subr.bf16.mxu0 0
    %5968 = vmatpush2.bf16.msra.mxu0 %v5169
    %5969 = vmatprep.mubr.bf16.mxu0 %v3440
    %5970 = vmatmul.mubr.bf16.gmra.mxu0 %v3439
    %v5971 = vpop.f32.mrf.mxu0
    %v5972 = vadd.f32 %v5932, %v5971
    %v5973 = vpop.f32.mrf.mxu0
    %v5974 = vpop.f32.mrf.mxu0
    %v5975 = vpop.f32.mrf.mxu0
    %5976 = vdwg.mxu0
    %5977 = vmatprep.subr.bf16.mxu0 0
    %5978 = vmatpush1.bf16.msra.mxu0 %v5184
    %5979 = vmatprep.subr.bf16.mxu0 0
    %5980 = vmatpush1.bf16.msra.mxu0 %v5183
    %5981 = vmatprep.subr.bf16.mxu0 0
    %5982 = vmatpush1.bf16.msra.mxu0 %v5182
    %5983 = vmatprep.subr.bf16.mxu0 0
    %5984 = vmatpush1.bf16.msra.mxu0 %v5181
    %5985 = vmatprep.subr.bf16.mxu0 0
    %5986 = vmatpush1.bf16.msra.mxu0 %v5180
    %5987 = vmatprep.subr.bf16.mxu0 0
    %5988 = vmatpush1.bf16.msra.mxu0 %v5179
    %5989 = vmatprep.subr.bf16.mxu0 0
    %5990 = vmatpush1.bf16.msra.mxu0 %v5178
    %5991 = vmatprep.subr.bf16.mxu0 0
    %5992 = vmatpush1.bf16.msra.mxu0 %v5177
    %5993 = vmatprep.subr.bf16.mxu0 0
    %5994 = vmatpush2.bf16.msra.mxu0 %v5192
    %5995 = vmatprep.subr.bf16.mxu0 0
    %5996 = vmatpush2.bf16.msra.mxu0 %v5191
    %5997 = vmatprep.subr.bf16.mxu0 0
    %5998 = vmatpush2.bf16.msra.mxu0 %v5190
    %5999 = vmatprep.subr.bf16.mxu0 0
    %6000 = vmatpush2.bf16.msra.mxu0 %v5189
    %6001 = vmatprep.subr.bf16.mxu0 0
    %6002 = vmatpush2.bf16.msra.mxu0 %v5188
    %6003 = vmatprep.subr.bf16.mxu0 0
    %6004 = vmatpush2.bf16.msra.mxu0 %v5187
    %6005 = vmatprep.subr.bf16.mxu0 0
    %6006 = vmatpush2.bf16.msra.mxu0 %v5186
    %6007 = vmatprep.subr.bf16.mxu0 0
    %6008 = vmatpush2.bf16.msra.mxu0 %v5185
    %6009 = vmatprep.mubr.bf16.mxu0 %v3442
    %6010 = vmatmul.mubr.bf16.gmra.mxu0 %v3441
    %v6011 = vpop.f32.mrf.mxu0
    %v6012 = vadd.f32 %v5972, %v6011
    %v6013 = vpop.f32.mrf.mxu0
    %v6014 = vpop.f32.mrf.mxu0
    %v6015 = vpop.f32.mrf.mxu0
    %6016 = vdwg.mxu0
    %6017 = vmatprep.subr.bf16.mxu0 0
    %6018 = vmatpush1.bf16.msra.mxu0 %v5200
    %6019 = vmatprep.subr.bf16.mxu0 0
    %6020 = vmatpush1.bf16.msra.mxu0 %v5199
    %6021 = vmatprep.subr.bf16.mxu0 0
    %6022 = vmatpush1.bf16.msra.mxu0 %v5198
    %6023 = vmatprep.subr.bf16.mxu0 0
    %6024 = vmatpush1.bf16.msra.mxu0 %v5197
    %6025 = vmatprep.subr.bf16.mxu0 0
    %6026 = vmatpush1.bf16.msra.mxu0 %v5196
    %6027 = vmatprep.subr.bf16.mxu0 0
    %6028 = vmatpush1.bf16.msra.mxu0 %v5195
    %6029 = vmatprep.subr.bf16.mxu0 0
    %6030 = vmatpush1.bf16.msra.mxu0 %v5194
    %6031 = vmatprep.subr.bf16.mxu0 0
    %6032 = vmatpush1.bf16.msra.mxu0 %v5193
    %6033 = vmatprep.subr.bf16.mxu0 0
    %6034 = vmatpush2.bf16.msra.mxu0 %v5208
    %6035 = vmatprep.subr.bf16.mxu0 0
    %6036 = vmatpush2.bf16.msra.mxu0 %v5207
    %6037 = vmatprep.subr.bf16.mxu0 0
    %6038 = vmatpush2.bf16.msra.mxu0 %v5206
    %6039 = vmatprep.subr.bf16.mxu0 0
    %6040 = vmatpush2.bf16.msra.mxu0 %v5205
    %6041 = vmatprep.subr.bf16.mxu0 0
    %6042 = vmatpush2.bf16.msra.mxu0 %v5204
    %6043 = vmatprep.subr.bf16.mxu0 0
    %6044 = vmatpush2.bf16.msra.mxu0 %v5203
    %6045 = vmatprep.subr.bf16.mxu0 0
    %6046 = vmatpush2.bf16.msra.mxu0 %v5202
    %6047 = vmatprep.subr.bf16.mxu0 0
    %6048 = vmatpush2.bf16.msra.mxu0 %v5201
    %6049 = vmatprep.mubr.bf16.mxu0 %v3444
    %6050 = vmatmul.mubr.bf16.gmra.mxu0 %v3443
    %v6051 = vpop.f32.mrf.mxu0
    %v6052 = vadd.f32 %v6012, %v6051
    %v6053 = vpop.f32.mrf.mxu0
    %v6054 = vpop.f32.mrf.mxu0
    %v6055 = vpop.f32.mrf.mxu0
    %6056 = vdwg.mxu0
    %6057 = vmatprep.subr.bf16.mxu0 0
    %6058 = vmatpush1.bf16.msra.mxu0 %v5216
    %6059 = vmatprep.subr.bf16.mxu0 0
    %6060 = vmatpush1.bf16.msra.mxu0 %v5215
    %6061 = vmatprep.subr.bf16.mxu0 0
    %6062 = vmatpush1.bf16.msra.mxu0 %v5214
    %6063 = vmatprep.subr.bf16.mxu0 0
    %6064 = vmatpush1.bf16.msra.mxu0 %v5213
    %6065 = vmatprep.subr.bf16.mxu0 0
    %6066 = vmatpush1.bf16.msra.mxu0 %v5212
    %6067 = vmatprep.subr.bf16.mxu0 0
    %6068 = vmatpush1.bf16.msra.mxu0 %v5211
    %6069 = vmatprep.subr.bf16.mxu0 0
    %6070 = vmatpush1.bf16.msra.mxu0 %v5210
    %6071 = vmatprep.subr.bf16.mxu0 0
    %6072 = vmatpush1.bf16.msra.mxu0 %v5209
    %6073 = vmatprep.subr.bf16.mxu0 0
    %6074 = vmatpush2.bf16.msra.mxu0 %v5224
    %6075 = vmatprep.subr.bf16.mxu0 0
    %6076 = vmatpush2.bf16.msra.mxu0 %v5223
    %6077 = vmatprep.subr.bf16.mxu0 0
    %6078 = vmatpush2.bf16.msra.mxu0 %v5222
    %6079 = vmatprep.subr.bf16.mxu0 0
    %6080 = vmatpush2.bf16.msra.mxu0 %v5221
    %6081 = vmatprep.subr.bf16.mxu0 0
    %6082 = vmatpush2.bf16.msra.mxu0 %v5220
    %6083 = vmatprep.subr.bf16.mxu0 0
    %6084 = vmatpush2.bf16.msra.mxu0 %v5219
    %6085 = vmatprep.subr.bf16.mxu0 0
    %6086 = vmatpush2.bf16.msra.mxu0 %v5218
    %6087 = vmatprep.subr.bf16.mxu0 0
    %6088 = vmatpush2.bf16.msra.mxu0 %v5217
    %6089 = vmatprep.mubr.bf16.mxu0 %v3446
    %6090 = vmatmul.mubr.bf16.gmra.mxu0 %v3445
    %v6091 = vpop.f32.mrf.mxu0
    %v6092 = vadd.f32 %v6052, %v6091
    %v6093 = vpop.f32.mrf.mxu0
    %v6094 = vpop.f32.mrf.mxu0
    %v6095 = vpop.f32.mrf.mxu0
    %6096 = vdwg.mxu0
    %6097 = vmatprep.subr.bf16.mxu0 0
    %6098 = vmatpush1.bf16.msra.mxu0 %v5232
    %6099 = vmatprep.subr.bf16.mxu0 0
    %6100 = vmatpush1.bf16.msra.mxu0 %v5231
    %6101 = vmatprep.subr.bf16.mxu0 0
    %6102 = vmatpush1.bf16.msra.mxu0 %v5230
    %6103 = vmatprep.subr.bf16.mxu0 0
    %6104 = vmatpush1.bf16.msra.mxu0 %v5229
    %6105 = vmatprep.subr.bf16.mxu0 0
    %6106 = vmatpush1.bf16.msra.mxu0 %v5228
    %6107 = vmatprep.subr.bf16.mxu0 0
    %6108 = vmatpush1.bf16.msra.mxu0 %v5227
    %6109 = vmatprep.subr.bf16.mxu0 0
    %6110 = vmatpush1.bf16.msra.mxu0 %v5226
    %6111 = vmatprep.subr.bf16.mxu0 0
    %6112 = vmatpush1.bf16.msra.mxu0 %v5225
    %6113 = vmatprep.subr.bf16.mxu0 0
    %6114 = vmatpush2.bf16.msra.mxu0 %v5240
    %6115 = vmatprep.subr.bf16.mxu0 0
    %6116 = vmatpush2.bf16.msra.mxu0 %v5239
    %6117 = vmatprep.subr.bf16.mxu0 0
    %6118 = vmatpush2.bf16.msra.mxu0 %v5238
    %6119 = vmatprep.subr.bf16.mxu0 0
    %6120 = vmatpush2.bf16.msra.mxu0 %v5237
    %6121 = vmatprep.subr.bf16.mxu0 0
    %6122 = vmatpush2.bf16.msra.mxu0 %v5236
    %6123 = vmatprep.subr.bf16.mxu0 0
    %6124 = vmatpush2.bf16.msra.mxu0 %v5235
    %6125 = vmatprep.subr.bf16.mxu0 0
    %6126 = vmatpush2.bf16.msra.mxu0 %v5234
    %6127 = vmatprep.subr.bf16.mxu0 0
    %6128 = vmatpush2.bf16.msra.mxu0 %v5233
    %6129 = vmatprep.mubr.bf16.mxu0 %v3448
    %6130 = vmatmul.mubr.bf16.gmra.mxu0 %v3447
    %v6131 = vpop.f32.mrf.mxu0
    %v6132 = vadd.f32 %v6092, %v6131
    %v6133 = vpop.f32.mrf.mxu0
    %v6134 = vpop.f32.mrf.mxu0
    %v6135 = vpop.f32.mrf.mxu0
    %6136 = vdwg.mxu0
    %v6137 = vld [vmem:[%s6] sm:$0xf]
    %vm6138 = vcmask 1041408
    %v6139 = vsel %vm6138, %v6132, 0.0
    %v6140 = vrot.slane %v6139, 4
    %v6141 = vadd.f32 %v6139, %v6140
    %v6142 = vrot.slane %v6141, 2
    %v6143 = vadd.f32 %v6141, %v6142
    %v6144 = vrot.slane %v6143, 1
    %v6145 = vadd.f32 %v6143, %v6144
    %v6146 = vmul.f32 %v6132, %v6132
    %v6147 = vsel %vm6138, %v6146, 0.0
    %v6148 = vrot.slane %v6147, 4
    %v6149 = vadd.f32 %v6147, %v6148
    %v6150 = vrot.slane %v6149, 2
    %v6151 = vadd.f32 %v6149, %v6150
    %v6152 = vrot.slane %v6151, 1
    %v6153 = vadd.f32 %v6151, %v6152
    %v6154 = vmul.f32 %v6145, 0.5
    %v6155 = vmul.f32 %v6153, 0.5
    %v6156 = vmul.f32 %v6154, %v6154
    %v6157 = vsub.f32 %v6155, %v6156
    %v6158 = vmax.f32 %v6157, 0.0
    %v6159 = vadd.f32 %v6158, 1e-05
    %v6160 = vrsqrt.pop %v6159
    %v6161 = vmul.f32 %v6137, %v6160
    %v6162 = vlaneseq
    %v6163 = vshrl.u32 %v6162, 7
    %v6164 = vsub.s32 0, %v6163
    %v6165 = vrot.slane %v6161, %v6164
    %v6166 = vmul.f32 %v6132, %v6165
    %v6167 = vmul.f32 %v6154, %v6161
    %v6169 = vrot.slane %v6167, 7
    %v6171 = vsub.f32 %v6137, %v6169
    %v6172 = vlaneseq
    %v6173 = vshrl.u32 %v6172, 7
    %v6174 = vsub.s32 1, %v6173
    %v6175 = vrot.slane %v6171, %v6174
    %v6176 = vadd.f32 %v6166, %v6175
    %v6177 = vpack.c.bf16 %v6176, %v6176
    %v6178 = vld [vmem:[%s4] sm:$0xf]
    %v6179 = vld [vmem:[%s4 + $0x4] sm:$0xf]
    %v6180 = vld [vmem:[%s4 + $0x8] sm:$0xf]
    %v6181 = vld [vmem:[%s4 + $0xc] sm:$0xf]
    %v6182 = vld [vmem:[%s4 + $0x10] sm:$0xf]
    %v6183 = vld [vmem:[%s4 + $0x14] sm:$0xf]
    %v6184 = vld [vmem:[%s4 + $0x18] sm:$0xf]
    %v6185 = vld [vmem:[%s4 + $0x1c] sm:$0xf]
    %v6186 = vld [vmem:[%s4 + $0x20] sm:$0xf]
    %v6187 = vld [vmem:[%s4 + $0x24] sm:$0xf]
    %v6188 = vld [vmem:[%s4 + $0x28] sm:$0xf]
    %v6189 = vld [vmem:[%s4 + $0x2c] sm:$0xf]
    %v6190 = vld [vmem:[%s4 + $0x30] sm:$0xf]
    %v6191 = vld [vmem:[%s4 + $0x34] sm:$0xf]
    %v6192 = vld [vmem:[%s4 + $0x38] sm:$0xf]
    %v6193 = vld [vmem:[%s4 + $0x3c] sm:$0xf]
    %v6210 = vunpack.c.l.b16 %v6178
    %v6211 = vunpack.c.l.b16 %v6179
    %v6212 = vunpack.c.l.b16 %v6180
    %v6213 = vunpack.c.l.b16 %v6181
    %v6214 = vunpack.c.l.b16 %v6182
    %v6215 = vunpack.c.l.b16 %v6183
    %v6216 = vunpack.c.l.b16 %v6184
    %v6217 = vunpack.c.l.b16 %v6185
    %v6218 = vunpack.c.l.b16 %v6186
    %v6219 = vunpack.c.l.b16 %v6187
    %v6220 = vunpack.c.l.b16 %v6188
    %v6221 = vunpack.c.l.b16 %v6189
    %v6222 = vunpack.c.l.b16 %v6190
    %v6223 = vunpack.c.l.b16 %v6191
    %v6224 = vunpack.c.l.b16 %v6192
    %v6225 = vunpack.c.l.b16 %v6193
    %v6226 = vpack.c.b16 %v6211, %v6210
    %v6227 = vpack.c.b16 %v6213, %v6212
    %v6228 = vpack.c.b16 %v6215, %v6214
    %v6229 = vpack.c.b16 %v6217, %v6216
    %v6230 = vpack.c.b16 %v6219, %v6218
    %v6231 = vpack.c.b16 %v6221, %v6220
    %v6232 = vpack.c.b16 %v6223, %v6222
    %v6233 = vpack.c.b16 %v6225, %v6224
    %6242 = vmatprep.subr.bf16.mxu0 0
    %6243 = vmatpush1.bf16.msra.mxu0 %v6233
    %6244 = vmatprep.subr.bf16.mxu0 0
    %6245 = vmatpush1.bf16.msra.mxu0 %v6232
    %6246 = vmatprep.subr.bf16.mxu0 0
    %6247 = vmatpush1.bf16.msra.mxu0 %v6231
    %6248 = vmatprep.subr.bf16.mxu0 0
    %6249 = vmatpush1.bf16.msra.mxu0 %v6230
    %6250 = vmatprep.subr.bf16.mxu0 0
    %6251 = vmatpush1.bf16.msra.mxu0 %v6229
    %6252 = vmatprep.subr.bf16.mxu0 0
    %6253 = vmatpush1.bf16.msra.mxu0 %v6228
    %6254 = vmatprep.subr.bf16.mxu0 0
    %6255 = vmatpush1.bf16.msra.mxu0 %v6227
    %6256 = vmatprep.subr.bf16.mxu0 0
    %6257 = vmatpush1.bf16.msra.mxu0 %v6226
    %6258 = vmatprep.subr.bf16.mxu0 0
    %6259 = vmatpush2.bf16.msra.mxu0 0
    %6260 = vmatprep.subr.bf16.mxu0 0
    %6261 = vmatpush2.bf16.msra.mxu0 0
    %6262 = vmatprep.subr.bf16.mxu0 0
    %6263 = vmatpush2.bf16.msra.mxu0 0
    %6264 = vmatprep.subr.bf16.mxu0 0
    %6265 = vmatpush2.bf16.msra.mxu0 0
    %6266 = vmatprep.subr.bf16.mxu0 0
    %6267 = vmatpush2.bf16.msra.mxu0 0
    %6268 = vmatprep.subr.bf16.mxu0 0
    %6269 = vmatpush2.bf16.msra.mxu0 0
    %6270 = vmatprep.subr.bf16.mxu0 0
    %6271 = vmatpush2.bf16.msra.mxu0 0
    %6272 = vmatprep.subr.bf16.mxu0 0
    %6273 = vmatpush2.bf16.msra.mxu0 0
    %6274 = vmatprep.mubr.bf16.mxu0 0
    %6275 = vmatmul.mubr.bf16.gmra.mxu0 %v6177
    %v6276 = vpop.f32.mrf.mxu0
    %v6277 = vadd.f32 0.0, %v6276
    %v6278 = vpop.f32.mrf.mxu0
    %v6279 = vpop.f32.mrf.mxu0
    %v6280 = vpop.f32.mrf.mxu0
    %6281 = vdwg.mxu0
    %v6282 = vsel %vm6138, %v6277, 0.0
    %v6283 = vrot.slane %v6282, 4
    %v6284 = vadd.f32 %v6282, %v6283
    %v6285 = vrot.slane %v6284, 2
    %v6286 = vadd.f32 %v6284, %v6285
    %v6287 = vrot.slane %v6286, 1
    %v6288 = vadd.f32 %v6286, %v6287
    %v6289 = vmul.f32 %v6277, %v6277
    %v6290 = vsel %vm6138, %v6289, 0.0
    %v6291 = vrot.slane %v6290, 4
    %v6292 = vadd.f32 %v6290, %v6291
    %v6293 = vrot.slane %v6292, 2
    %v6294 = vadd.f32 %v6292, %v6293
    %v6295 = vrot.slane %v6294, 1
    %v6296 = vadd.f32 %v6294, %v6295
    %v6297 = vmul.f32 %v6288, 0.5
    %v6298 = vmul.f32 %v6296, 0.5
    %v6299 = vmul.f32 %v6297, %v6297
    %v6300 = vsub.f32 %v6298, %v6299
    %v6301 = vmax.f32 %v6300, 0.0
    %v6302 = vadd.f32 %v6301, 1e-05
    %v6303 = vrsqrt.pop %v6302
    %v6304 = vmul.f32 %v6137, %v6303
    %v6305 = vlaneseq
    %v6306 = vshrl.u32 %v6305, 7
    %v6307 = vsub.s32 2, %v6306
    %v6308 = vrot.slane %v6304, %v6307
    %v6309 = vmul.f32 %v6277, %v6308
    %v6310 = vmul.f32 %v6297, %v6304
    %v6312 = vrot.slane %v6310, 7
    %v6314 = vsub.f32 %v6137, %v6312
    %v6315 = vlaneseq
    %v6316 = vshrl.u32 %v6315, 7
    %v6317 = vsub.s32 3, %v6316
    %v6318 = vrot.slane %v6314, %v6317
    %v6319 = vadd.f32 %v6309, %v6318
    %v6320 = vsub.f32 0.0, %v6319
    %v6321 = vmul.f32 %v6320, 1.442695
    %v6322 = vpow.pop %v6321
    %v6323 = vadd.f32 %v6322, 1.0
    %v6324 = vrcp.pop %v6323
    %v6325 = vmul.f32 %v6176, %v6324
    %6326 = vst [vmem:[#allocation6] sm:$0x3] %v6325
    // Predicated region
    $region34: #{tpu_custom_call.1} parent=1 // pred_check
      _
    $region35: #{tpu_custom_call.1} parent=1 // pred_check_branch
      %6328 = sbr.rel (0) target = $region37
    $region36: #{tpu_custom_call.1} parent=1 // pred_region
      %s6330 = ssub.s32 32, 32
      %6331 = vsyncadd [#allocation5], %s6330
      %s6333 = sshll.u32 [#allocation6], 4
      %s6334 = int_to_ptr.vmem [resolvable:$true] %s6333
      %6336 = dma.vmem_to_hbm [thread:$0]  %s6334, 32, %s7, [#allocation5]
    $region37: #{tpu_custom_call.1} parent=1 // pred_fallthru
      _
    // Predicated region
    $region38: #{tpu_custom_call.1} parent=1 // pred_check
      _
    $region39: #{tpu_custom_call.1} parent=1 // pred_check_branch
      %6338 = sbr.rel (0) target = $region41
    $region40: #{tpu_custom_call.1} parent=1 // pred_region
      %6339 = dma.done [#allocation5], 32
    $region41: #{tpu_custom_call.1} parent=1 // pred_fallthru
      _
    %6340 = vsyncpa [#allocation4], 1
    %6341 = vsyncpa [#allocation5], 1

</llo_original>
